<compile_context>
chip_gen: v6e
topology: v6e:2x2x1
jax: 0.10.0
libtpu: 0.0.40
codegen_flags: <defaults>
</compile_context>

<pallas_src>
import functools
import math

import jax
import jax.numpy as jnp
from jax.experimental import pallas as pl
from jax.experimental.pallas import tpu as pltpu

EPS = 1e-5  # nn.LayerNorm default eps
# Softmax denominator: the EUP reciprocal (approx=True) is essentially free but
# not bit-exact vs. exact division / the PyTorch reference. Flip off for parity.
APPROX_SOFTMAX_RECIPROCAL = True


# ----------------------------- small helpers --------------------------------

def _round_up(x, m):
    return ((x + m - 1) // m) * m


@functools.lru_cache(maxsize=None)
def _vmem_capacity_bytes():
    try:
        return int(pltpu.get_tpu_info().vmem_capacity_bytes)
    except Exception:
        # unknown generation / older jax: assume the smallest (v7x, 64 MiB)
        return 64 << 20


def _row_tile_cap():
    # 512-row tiles reach ~85% of HBM roofline on the 128-MiB VMEM parts
    # (v5e/v6e); keep 256 on v7x (64 MiB VMEM) so the f32 FFN intermediate fits.
    return 512 if _vmem_capacity_bytes() >= (96 << 20) else 256


def _vmem_limit_bytes():
    return min(_vmem_capacity_bytes() * 3 // 4, 96 << 20)


def _choose_tile(n, cap):
    """Largest power-of-two-ish tile <= cap that evenly divides n (else n)."""
    for t in (512, 256, 128, 64, 32, 16, 8):
        if t <= cap and t <= n and n % t == 0:
            return t
    return n


def _compiler_params(*semantics):
    return pltpu.CompilerParams(dimension_semantics=tuple(semantics),
                                vmem_limit_bytes=_vmem_limit_bytes())


def _const_spec(shape, single_buffer):
    """BlockSpec for a grid-invariant (weight/bias) operand.

    Single-buffering (pl.Buffered(1)) halves the VMEM held by constant blocks;
    most valuable on v7x where double-buffered weights alone can exhaust the
    scoped VMEM limit.  Falls back to default double-buffering if unsupported
    (see main()).
    """
    index_map = lambda *_: (0,) * len(shape)
    if single_buffer:
        return pl.BlockSpec(shape, index_map, pipeline_mode=pl.Buffered(1))
    return pl.BlockSpec(shape, index_map)


def _layernorm_f32(h, g, b):
    # PyTorch LayerNorm semantics: biased variance, eps inside rsqrt; f32 stats.
    mu = jnp.mean(h, axis=-1, keepdims=True)
    var = jnp.mean(jnp.square(h - mu), axis=-1, keepdims=True)
    return (h - mu) * jax.lax.rsqrt(var + EPS) * g + b


def _softmax_rows_f32(s):
    s = s - jnp.max(s, axis=-1, keepdims=True)
    p = jnp.exp(s)
    denom = jnp.sum(p, axis=-1, keepdims=True)
    if APPROX_SOFTMAX_RECIPROCAL:
        return p * pl.reciprocal(denom, approx=True)
    return p / denom


# ----------------------------- Pallas kernels -------------------------------

def _linear_kernel(x_ref, w_ref, b_ref, o_ref, *, relu):
    acc = jnp.dot(x_ref[...], w_ref[...],
                  preferred_element_type=jnp.float32) + b_ref[...]
    if relu:
        acc = jnp.maximum(acc, 0.0)
    o_ref[...] = acc.astype(o_ref.dtype)


def _ffn_add_ln_kernel(x_ref, w1_ref, b1_ref, w2_ref, b2_ref, g_ref, beta_ref,
                       o_ref):
    # linear1 -> relu -> linear2 -> +residual -> LayerNorm (dropout = identity)
    x = x_ref[...]                                                # (tm, D) bf16
    h = jnp.dot(x, w1_ref[...], preferred_element_type=jnp.float32) + b1_ref[...]
    h = jnp.maximum(h, 0.0)
    y = jnp.dot(h.astype(jnp.bfloat16), w2_ref[...],
                preferred_element_type=jnp.float32) + b2_ref[...]
    res = x.astype(jnp.float32) + y
    o_ref[...] = _layernorm_f32(res, g_ref[...], beta_ref[...]).astype(o_ref.dtype)


def _attn_add_ln_kernel(xq_ref, xkv_ref, wq_ref, bq_ref, wk_ref, bk_ref,
                        wv_ref, bv_ref, wo_ref, bo_ref, g_ref, beta_ref,
                        o_ref, k_scr, v_scr, attn_scr, *, nhead):
    """One (batch element, query tile) per grid step.

    Fuses: Q/K/V projections, per-head softmax(QK^T)V, head combine, output
    projection, residual add and LayerNorm.  K/V are projected once per batch
    element (query-tile 0) into head-major VMEM scratch and reused by every
    query tile, so only (tq, S) scores per head are ever materialized.
    """
    hd = wq_ref.shape[-1]

    # --- project K / V for the whole (memory) sequence once per batch element
    @pl.when(pl.program_id(1) == 0)
    def _project_kv():
        xkv = xkv_ref[0]                                          # (S, D) bf16
        for h in range(nhead):      # static unroll; weight slices are leading-axis
            k_scr[h] = (jnp.dot(xkv, wk_ref[h], preferred_element_type=jnp.float32)
                        + bk_ref[h]).astype(jnp.bfloat16)
            v_scr[h] = (jnp.dot(xkv, wv_ref[h], preferred_element_type=jnp.float32)
                        + bv_ref[h]).astype(jnp.bfloat16)

    # --- attention for this query tile --------------------------------------
    xq = xq_ref[0]                                                # (tq, D) bf16
    for h in range(nhead):
        # 1/sqrt(hd) scale is pre-folded into wq / bq at init time.
        q_h = (jnp.dot(xq, wq_ref[h], preferred_element_type=jnp.float32)
               + bq_ref[h]).astype(jnp.bfloat16)                  # (tq, hd)
        # contraction on the last axis of both operands: K^T absorbed by the MXU
        s = jax.lax.dot_general(q_h, k_scr[h], (((1,), (1,)), ((), ())),
                                preferred_element_type=jnp.float32)   # (tq, S)
        p = _softmax_rows_f32(s)
        o_h = jnp.dot(p.astype(jnp.bfloat16), v_scr[h],
                      preferred_element_type=jnp.float32)         # (tq, hd)
        attn_scr[:, h * hd:(h + 1) * hd] = o_h.astype(jnp.bfloat16)

    # single full-depth output projection (not per-head) + residual + LayerNorm
    y = jnp.dot(attn_scr[...], wo_ref[...],
                preferred_element_type=jnp.float32) + bo_ref[...]
    res = xq.astype(jnp.float32) + y
    o_ref[0] = _layernorm_f32(res, g_ref[...], beta_ref[...]).astype(o_ref.dtype)


def _mean_fc_kernel(y_ref, w_ref, b_ref, o_ref, acc_ref, *, inv_b):
    # mean over the batch axis (reference `x.mean(dim=1)` with (S,B,*) layout)
    # fused with the classifier matmul; logits written 128-lane padded.
    b = pl.program_id(1)

    @pl.when(b == 0)
    def _init():
        acc_ref[...] = jnp.zeros_like(acc_ref)

    acc_ref[...] += y_ref[0].astype(jnp.float32)

    @pl.when(b == pl.num_programs(1) - 1)
    def _finalize():
        pooled = (acc_ref[...] * inv_b).astype(jnp.bfloat16)       # (ts, D)
        o_ref[...] = (jnp.dot(pooled, w_ref[...],
                              preferred_element_type=jnp.float32)
                      + b_ref[...]).astype(o_ref.dtype)


# ----------------------------- kernel wrappers -------------------------------

def pallas_linear(x, w, b, *, relu=False, single_buffer=True):
    M, K = x.shape
    N = w.shape[1]
    tm = min(_row_tile_cap(), _round_up(M, 8))
    Mp = _round_up(M, tm)
    xp = jnp.pad(x, ((0, Mp - M), (0, 0))) if Mp != M else x
    out = pl.pallas_call(
        functools.partial(_linear_kernel, relu=relu),
        grid=(Mp // tm,),
        in_specs=[pl.BlockSpec((tm, K), lambda i: (i, 0)),
                  _const_spec((K, N), single_buffer),
                  _const_spec((1, N), single_buffer)],
        out_specs=pl.BlockSpec((tm, N), lambda i: (i, 0)),
        out_shape=jax.ShapeDtypeStruct((Mp, N), jnp.bfloat16),
        compiler_params=_compiler_params("parallel"),
    )(xp, w, b)
    return out[:M] if Mp != M else out


def pallas_ffn_add_ln(x, ffn, g, beta, *, single_buffer=True):
    M, D = x.shape
    F = ffn["w1"].shape[1]
    tm = min(_row_tile_cap(), _round_up(M, 8))
    Mp = _round_up(M, tm)
    xp = jnp.pad(x, ((0, Mp - M), (0, 0))) if Mp != M else x
    out = pl.pallas_call(
        _ffn_add_ln_kernel,
        grid=(Mp // tm,),
        in_specs=[pl.BlockSpec((tm, D), lambda i: (i, 0)),
                  _const_spec((D, F), single_buffer),
                  _const_spec((1, F), single_buffer),
                  _const_spec((F, D), single_buffer),
                  _const_spec((1, D), single_buffer),
                  _const_spec((1, D), single_buffer),
                  _const_spec((1, D), single_buffer)],
        out_specs=pl.BlockSpec((tm, D), lambda i: (i, 0)),
        out_shape=jax.ShapeDtypeStruct((Mp, D), jnp.bfloat16),
        compiler_params=_compiler_params("parallel"),
    )(xp, ffn["w1"], ffn["b1"], ffn["w2"], ffn["b2"], g, beta)
    return out[:M] if Mp != M else out


def pallas_attn_add_ln(x_q, x_kv, attn, g, beta, *, nhead, single_buffer=True):
    B, S, D = x_q.shape
    Skv = x_kv.shape[1]
    hd = D // nhead
    tq = _choose_tile(S, 256)
    return pl.pallas_call(
        functools.partial(_attn_add_ln_kernel, nhead=nhead),
        grid=(B, S // tq),
        in_specs=[pl.BlockSpec((1, tq, D), lambda b, q: (b, q, 0)),
                  pl.BlockSpec((1, Skv, D), lambda b, q: (b, 0, 0)),
                  _const_spec((nhead, D, hd), single_buffer),   # wq (head-major)
                  _const_spec((nhead, 1, hd), single_buffer),   # bq
                  _const_spec((nhead, D, hd), single_buffer),   # wk
                  _const_spec((nhead, 1, hd), single_buffer),   # bk
                  _const_spec((nhead, D, hd), single_buffer),   # wv
                  _const_spec((nhead, 1, hd), single_buffer),   # bv
                  _const_spec((D, D), single_buffer),           # wo
                  _const_spec((1, D), single_buffer),           # bo
                  _const_spec((1, D), single_buffer),           # ln gamma
                  _const_spec((1, D), single_buffer)],          # ln beta
        out_specs=pl.BlockSpec((1, tq, D), lambda b, q: (b, q, 0)),
        out_shape=jax.ShapeDtypeStruct((B, S, D), jnp.bfloat16),
        scratch_shapes=[pltpu.VMEM((nhead, Skv, hd), jnp.bfloat16),  # K head-major
                        pltpu.VMEM((nhead, Skv, hd), jnp.bfloat16),  # V head-major
                        pltpu.VMEM((tq, D), jnp.bfloat16)],          # head-combine
        # batch axis "parallel" (megacore); the query-tile axis must stay
        # "arbitrary" because the K/V scratch is reused across query tiles of
        # a single batch element.
        compiler_params=_compiler_params("parallel", "arbitrary"),
    )(x_q, x_kv, attn["wq"], attn["bq"], attn["wk"], attn["bk"],
      attn["wv"], attn["bv"], attn["wo"], attn["bo"], g, beta)


def pallas_mean_fc(y, w_pad, b_pad, *, num_classes, single_buffer=True):
    B, S, D = y.shape
    Cpad = w_pad.shape[1]
    ts = _choose_tile(S, 256)
    out = pl.pallas_call(
        functools.partial(_mean_fc_kernel, inv_b=1.0 / B),
        grid=(S // ts, B),
        in_specs=[pl.BlockSpec((1, ts, D), lambda s, b: (b, s, 0)),
                  _const_spec((D, Cpad), single_buffer),
                  _const_spec((1, Cpad), single_buffer)],
        out_specs=pl.BlockSpec((ts, Cpad), lambda s, b: (s, 0)),
        out_shape=jax.ShapeDtypeStruct((S, Cpad), jnp.float32),
        scratch_shapes=[pltpu.VMEM((ts, D), jnp.float32)],
        compiler_params=_compiler_params("parallel", "arbitrary"),
    )(y, w_pad, b_pad)
    return out[:, :num_classes]


# ----------------------------- model forward ---------------------------------

def _encoder_layer(x3, p, nhead, sb):
    B, S, D = x3.shape
    x3 = pallas_attn_add_ln(x3, x3, p["attn"], p["norm1_g"], p["norm1_b"],
                            nhead=nhead, single_buffer=sb)
    x2 = pallas_ffn_add_ln(x3.reshape(B * S, D), p["ffn"],
                           p["norm2_g"], p["norm2_b"], single_buffer=sb)
    return x2.reshape(B, S, D)


def _decoder_layer(x3, mem3, p, nhead, sb):
    B, S, D = x3.shape
    x3 = pallas_attn_add_ln(x3, x3, p["self_attn"], p["norm1_g"], p["norm1_b"],
                            nhead=nhead, single_buffer=sb)
    x3 = pallas_attn_add_ln(x3, mem3, p["cross_attn"], p["norm2_g"], p["norm2_b"],
                            nhead=nhead, single_buffer=sb)
    x2 = pallas_ffn_add_ln(x3.reshape(B * S, D), p["ffn"],
                           p["norm3_g"], p["norm3_b"], single_buffer=sb)
    return x2.reshape(B, S, D)


def transformer_classifier_forward(params, x, *, nhead, num_classes,
                                   single_buffer=True):
    S, B, input_dim = x.shape
    D = params["input_fc_w"].shape[1]

    # (B, S, feature) layout: per-batch attention tiles are contiguous and all
    # later reshapes are free; only this tiny raw-input transpose touches HBM.
    xb = jnp.transpose(x, (1, 0, 2)).reshape(B * S, input_dim).astype(jnp.bfloat16)
    h = pallas_linear(xb, params["input_fc_w"], params["input_fc_b"],
                      relu=True, single_buffer=single_buffer)
    h3 = h.reshape(B, S, D)

    # encoder stack (post-norm TransformerEncoderLayer, no final norm)
    mem3 = h3
    for p in params["encoder_layers"]:
        mem3 = _encoder_layer(mem3, p, nhead, single_buffer)

    # decoder stack: tgt is the *pre-encoder* activation, as in the reference
    y3 = h3
    for p in params["decoder_layers"]:
        y3 = _decoder_layer(y3, mem3, p, nhead, single_buffer)

    # x.mean(dim=1): with the (S, B, *) reference layout this averages over the
    # batch axis.  dropout: eval-mode identity.
    return pallas_mean_fc(y3, params["fc_out_w"], params["fc_out_b"],
                          num_classes=num_classes, single_buffer=single_buffer)


# ----------------------------- parameter init --------------------------------

def _init_linear(key, fan_in, fan_out):
    # matches nn.Linear default uniform(-1/sqrt(fan_in), 1/sqrt(fan_in)) bounds
    kw, kb = jax.random.split(key)
    bound = 1.0 / math.sqrt(fan_in)
    w = jax.random.uniform(kw, (fan_in, fan_out), jnp.float32, -bound, bound)
    b = jax.random.uniform(kb, (fan_out,), jnp.float32, -bound, bound)
    return w, b


def _init_mha(key, d_model, nhead):
    hd = d_model // nhead
    scale = 1.0 / math.sqrt(hd)
    ks = jax.random.split(key, 4)
    wq, bq = _init_linear(ks[0], d_model, d_model)
    wk, bk = _init_linear(ks[1], d_model, d_model)
    wv, bv = _init_linear(ks[2], d_model, d_model)
    wo, bo = _init_linear(ks[3], d_model, d_model)
    hm = lambda w: jnp.transpose(w.reshape(d_model, nhead, hd), (1, 0, 2))  # head-major
    hb = lambda b: b.reshape(nhead, 1, hd)
    return dict(wq=(hm(wq) * scale).astype(jnp.bfloat16),   # 1/sqrt(hd) folded in
                bq=hb(bq) * scale,
                wk=hm(wk).astype(jnp.bfloat16), bk=hb(bk),
                wv=hm(wv).astype(jnp.bfloat16), bv=hb(bv),
                wo=wo.astype(jnp.bfloat16), bo=bo.reshape(1, d_model))


def _init_ffn(key, d_model, dff):
    k1, k2 = jax.random.split(key)
    w1, b1 = _init_linear(k1, d_model, dff)
    w2, b2 = _init_linear(k2, dff, d_model)
    return dict(w1=w1.astype(jnp.bfloat16), b1=b1.reshape(1, dff),
                w2=w2.astype(jnp.bfloat16), b2=b2.reshape(1, d_model))


def _norm_params(d_model):
    return (jnp.ones((1, d_model), jnp.float32),
            jnp.zeros((1, d_model), jnp.float32))


def _init_encoder_layer(key, d_model, nhead, dff):
    k0, k1 = jax.random.split(key)
    n1g, n1b = _norm_params(d_model)
    n2g, n2b = _norm_params(d_model)
    return dict(attn=_init_mha(k0, d_model, nhead),
                ffn=_init_ffn(k1, d_model, dff),
                norm1_g=n1g, norm1_b=n1b, norm2_g=n2g, norm2_b=n2b)


def _init_decoder_layer(key, d_model, nhead, dff):
    k0, k1, k2 = jax.random.split(key, 3)
    n1g, n1b = _norm_params(d_model)
    n2g, n2b = _norm_params(d_model)
    n3g, n3b = _norm_params(d_model)
    return dict(self_attn=_init_mha(k0, d_model, nhead),
                cross_attn=_init_mha(k1, d_model, nhead),
                ffn=_init_ffn(k2, d_model, dff),
                norm1_g=n1g, norm1_b=n1b, norm2_g=n2g, norm2_b=n2b,
                norm3_g=n3g, norm3_b=n3b)


def init_params(key, input_dim, num_classes, d_model, nhead, dff, num_layers):
    keys = jax.random.split(key, 2 + 2 * num_layers)
    in_w, in_b = _init_linear(keys[0], input_dim, d_model)
    out_w, out_b = _init_linear(keys[1], d_model, num_classes)
    cpad = _round_up(num_classes, 128)                 # lane-dense logits tile
    out_w = jnp.pad(out_w, ((0, 0), (0, cpad - num_classes)))
    out_b = jnp.pad(out_b, (0, cpad - num_classes)).reshape(1, cpad)
    enc = [_init_encoder_layer(keys[2 + i], d_model, nhead, dff)
           for i in range(num_layers)]
    dec = [_init_decoder_layer(keys[2 + num_layers + i], d_model, nhead, dff)
           for i in range(num_layers)]
    return dict(input_fc_w=in_w.astype(jnp.bfloat16),
                input_fc_b=in_b.reshape(1, d_model),
                fc_out_w=out_w.astype(jnp.bfloat16),
                fc_out_b=out_b,
                encoder_layers=enc, decoder_layers=dec)


# --------------------------------- main ---------------------------------------

if __name__ == "__main__":
    # small shapes consistent with the module (d_model, nhead, ff, layers scaled down)
    S, B = 8, 2
    input_dim, num_classes = 16, 10
    d_model, nhead, dim_feedforward, num_layers = 32, 4, 64, 2

    key = jax.random.PRNGKey(0)
    kx, kp = jax.random.split(key)
    x = jax.random.normal(kx, (S, B, input_dim), jnp.float32)
    params = init_params(kp, input_dim, num_classes, d_model, nhead,
                         dim_feedforward, num_layers)

    def build_fwd(single_buffer):
        return jax.jit(functools.partial(
            transformer_classifier_forward, nhead=nhead,
            num_classes=num_classes, single_buffer=single_buffer))

    try:
        logits = build_fwd(True)(params, x)
        jax.block_until_ready(logits)
    except Exception:
        # Fallback if pl.Buffered(1) single-buffering is unsupported by this
        # JAX version: identical math with default double-buffered weights.
        logits = build_fwd(False)(params, x)
        jax.block_until_ready(logits)

    assert logits.shape == (S, num_classes), logits.shape
    assert bool(jnp.all(jnp.isfinite(logits)))
    print("KERNEL_OK")
</pallas_src>

<mosaic_0001>
module attributes {stable_mosaic.version = 11 : i64} {
  func.func @_linear_kernel(%arg0: i32, %arg1: memref<16x16xbf16, #tpu.memory_space<vmem>>, %arg2: memref<16x32xbf16, #tpu.memory_space<vmem>>, %arg3: memref<1x32xf32, #tpu.memory_space<vmem>>, %arg4: memref<16x32xbf16, #tpu.memory_space<vmem>>) attributes {dimension_semantics = [#tpu.dimension_semantics<parallel>], iteration_bounds = array<i64: 1>, scalar_prefetch = 0 : i64, scratch_operands = 0 : i64, tpu.core_type = #tpu.core_type<tc>, window_params = [{transform_indices = @transform_0, window_bounds = array<i64: 16, 16>}, {pipeline_mode = #tpu.pipeline_mode<synchronous>, transform_indices = @transform_1, window_bounds = array<i64: 16, 32>}, {pipeline_mode = #tpu.pipeline_mode<synchronous>, transform_indices = @transform_2, window_bounds = array<i64: 1, 32>}, {transform_indices = @transform_3, window_bounds = array<i64: 16, 32>}]} {
    %c0 = arith.constant 0 : index
    %c0_0 = arith.constant 0 : index
    %0 = vector.load %arg1[%c0, %c0_0] : memref<16x16xbf16, #tpu.memory_space<vmem>>, vector<16x16xbf16>
    %c0_1 = arith.constant 0 : index
    %c0_2 = arith.constant 0 : index
    %1 = vector.load %arg2[%c0_1, %c0_2] : memref<16x32xbf16, #tpu.memory_space<vmem>>, vector<16x32xbf16>
    %cst = arith.constant dense<0.000000e+00> : vector<16x32xf32>
    %2 = tpu.matmul %0, %1, %cst {dimension_numbers = #tpu.dot_dimension_numbers<[1], [0], [0], [1], [0, 0, 1, 1], [], []>} : vector<16x16xbf16>, vector<16x32xbf16>, vector<16x32xf32> -> vector<16x32xf32>
    %c0_3 = arith.constant 0 : index
    %c0_4 = arith.constant 0 : index
    %3 = vector.load %arg3[%c0_3, %c0_4] : memref<1x32xf32, #tpu.memory_space<vmem>>, vector<1x32xf32>
    %4 = vector.broadcast %3 : vector<1x32xf32> to vector<16x32xf32>
    %5 = arith.addf %2, %4 : vector<16x32xf32>
    %cst_5 = arith.constant 0.000000e+00 : f32
    %6 = vector.broadcast %cst_5 : f32 to vector<16x32xf32>
    %7 = arith.maximumf %5, %6 : vector<16x32xf32>
    %8 = arith.truncf %7 : vector<16x32xf32> to vector<16x32xbf16>
    %c0_6 = arith.constant 0 : index
    %c0_7 = arith.constant 0 : index
    %9 = vector.load %arg4[%c0_6, %c0_7] : memref<16x32xbf16, #tpu.memory_space<vmem>>, vector<16x32xbf16>
    tpu.vector_store %arg4[%c0_6, %c0_7], %8 {strides = array<i32>} : memref<16x32xbf16, #tpu.memory_space<vmem>>, vector<16x32xbf16>,
    return
  }
  func.func @transform_0(%arg0: i32) -> (i32, i32) {
    %c0_i32 = arith.constant 0 : i32
    %c0_i32_0 = arith.constant 0 : i32
    return %arg0, %c0_i32 : i32, i32
  }
  func.func @transform_1(%arg0: i32) -> (i32, i32) {
    %c0_i32 = arith.constant 0 : i32
    %c0_i32_0 = arith.constant 0 : i32
    %c0_i32_1 = arith.constant 0 : i32
    return %c0_i32, %c0_i32_0 : i32, i32
  }
  func.func @transform_2(%arg0: i32) -> (i32, i32) {
    %c0_i32 = arith.constant 0 : i32
    %c0_i32_0 = arith.constant 0 : i32
    %c0_i32_1 = arith.constant 0 : i32
    return %c0_i32, %c0_i32_0 : i32, i32
  }
  func.func @transform_3(%arg0: i32) -> (i32, i32) {
    %c0_i32 = arith.constant 0 : i32
    %c0_i32_0 = arith.constant 0 : i32
    return %arg0, %c0_i32 : i32, i32
  }
}

module attributes {stable_mosaic.version = 11 : i64} {
  func.func @_ffn_add_ln_kernel(%arg0: i32, %arg1: memref<16x32xbf16, #tpu.memory_space<vmem>>, %arg2: memref<32x64xbf16, #tpu.memory_space<vmem>>, %arg3: memref<1x64xf32, #tpu.memory_space<vmem>>, %arg4: memref<64x32xbf16, #tpu.memory_space<vmem>>, %arg5: memref<1x32xf32, #tpu.memory_space<vmem>>, %arg6: memref<1x32xf32, #tpu.memory_space<vmem>>, %arg7: memref<1x32xf32, #tpu.memory_space<vmem>>, %arg8: memref<16x32xbf16, #tpu.memory_space<vmem>>) attributes {dimension_semantics = [#tpu.dimension_semantics<parallel>], iteration_bounds = array<i64: 1>, scalar_prefetch = 0 : i64, scratch_operands = 0 : i64, tpu.core_type = #tpu.core_type<tc>, window_params = [{transform_indices = @transform_0, window_bounds = array<i64: 16, 32>}, {pipeline_mode = #tpu.pipeline_mode<synchronous>, transform_indices = @transform_1, window_bounds = array<i64: 32, 64>}, {pipeline_mode = #tpu.pipeline_mode<synchronous>, transform_indices = @transform_2, window_bounds = array<i64: 1, 64>}, {pipeline_mode = #tpu.pipeline_mode<synchronous>, transform_indices = @transform_3, window_bounds = array<i64: 64, 32>}, {pipeline_mode = #tpu.pipeline_mode<synchronous>, transform_indices = @transform_4, window_bounds = array<i64: 1, 32>}, {pipeline_mode = #tpu.pipeline_mode<synchronous>, transform_indices = @transform_5, window_bounds = array<i64: 1, 32>}, {pipeline_mode = #tpu.pipeline_mode<synchronous>, transform_indices = @transform_6, window_bounds = array<i64: 1, 32>}, {transform_indices = @transform_7, window_bounds = array<i64: 16, 32>}]} {
    %c0 = arith.constant 0 : index
    %c0_0 = arith.constant 0 : index
    %0 = vector.load %arg1[%c0, %c0_0] : memref<16x32xbf16, #tpu.memory_space<vmem>>, vector<16x32xbf16>
    %c0_1 = arith.constant 0 : index
    %c0_2 = arith.constant 0 : index
    %1 = vector.load %arg2[%c0_1, %c0_2] : memref<32x64xbf16, #tpu.memory_space<vmem>>, vector<32x64xbf16>
    %cst = arith.constant dense<0.000000e+00> : vector<16x64xf32>
    %2 = tpu.matmul %0, %1, %cst {dimension_numbers = #tpu.dot_dimension_numbers<[1], [0], [0], [1], [0, 0, 1, 1], [], []>} : vector<16x32xbf16>, vector<32x64xbf16>, vector<16x64xf32> -> vector<16x64xf32>
    %c0_3 = arith.constant 0 : index
    %c0_4 = arith.constant 0 : index
    %3 = vector.load %arg3[%c0_3, %c0_4] : memref<1x64xf32, #tpu.memory_space<vmem>>, vector<1x64xf32>
    %4 = vector.broadcast %3 : vector<1x64xf32> to vector<16x64xf32>
    %5 = arith.addf %2, %4 : vector<16x64xf32>
    %cst_5 = arith.constant 0.000000e+00 : f32
    %6 = vector.broadcast %cst_5 : f32 to vector<16x64xf32>
    %7 = arith.maximumf %5, %6 : vector<16x64xf32>
    %8 = arith.truncf %7 : vector<16x64xf32> to vector<16x64xbf16>
    %c0_6 = arith.constant 0 : index
    %c0_7 = arith.constant 0 : index
    %9 = vector.load %arg4[%c0_6, %c0_7] : memref<64x32xbf16, #tpu.memory_space<vmem>>, vector<64x32xbf16>
    %cst_8 = arith.constant dense<0.000000e+00> : vector<16x32xf32>
    %10 = tpu.matmul %8, %9, %cst_8 {dimension_numbers = #tpu.dot_dimension_numbers<[1], [0], [0], [1], [0, 0, 1, 1], [], []>} : vector<16x64xbf16>, vector<64x32xbf16>, vector<16x32xf32> -> vector<16x32xf32>
    %c0_9 = arith.constant 0 : index
    %c0_10 = arith.constant 0 : index
    %11 = vector.load %arg5[%c0_9, %c0_10] : memref<1x32xf32, #tpu.memory_space<vmem>>, vector<1x32xf32>
    %12 = vector.broadcast %11 : vector<1x32xf32> to vector<16x32xf32>
    %13 = arith.addf %10, %12 : vector<16x32xf32>
    %14 = arith.extf %0 : vector<16x32xbf16> to vector<16x32xf32>
    %15 = arith.addf %14, %13 : vector<16x32xf32>
    %c0_11 = arith.constant 0 : index
    %c0_12 = arith.constant 0 : index
    %16 = vector.load %arg6[%c0_11, %c0_12] : memref<1x32xf32, #tpu.memory_space<vmem>>, vector<1x32xf32>
    %c0_13 = arith.constant 0 : index
    %c0_14 = arith.constant 0 : index
    %17 = vector.load %arg7[%c0_13, %c0_14] : memref<1x32xf32, #tpu.memory_space<vmem>>, vector<1x32xf32>
    %cst_15 = arith.constant dense<0.000000e+00> : vector<16xf32>
    %18 = vector.multi_reduction <add>, %15, %cst_15 [1] : vector<16x32xf32> to vector<16xf32>
    %19 = vector.shape_cast %18 : vector<16xf32> to vector<16x1xf32>
    %cst_16 = arith.constant 3.200000e+01 : f32
    %20 = vector.broadcast %cst_16 : f32 to vector<16x1xf32>
    %21 = arith.divf %19, %20 : vector<16x1xf32>
    %22 = vector.broadcast %21 : vector<16x1xf32> to vector<16x32xf32>
    %23 = arith.subf %15, %22 : vector<16x32xf32>
    %24 = arith.mulf %23, %23 : vector<16x32xf32>
    %cst_17 = arith.constant dense<0.000000e+00> : vector<16xf32>
    %25 = vector.multi_reduction <add>, %24, %cst_17 [1] : vector<16x32xf32> to vector<16xf32>
    %26 = vector.shape_cast %25 : vector<16xf32> to vector<16x1xf32>
    %cst_18 = arith.constant 3.200000e+01 : f32
    %27 = vector.broadcast %cst_18 : f32 to vector<16x1xf32>
    %28 = arith.divf %26, %27 : vector<16x1xf32>
    %29 = vector.broadcast %21 : vector<16x1xf32> to vector<16x32xf32>
    %30 = arith.subf %15, %29 : vector<16x32xf32>
    %cst_19 = arith.constant 9.99999974E-6 : f32
    %31 = vector.broadcast %cst_19 : f32 to vector<16x1xf32>
    %32 = arith.addf %28, %31 : vector<16x1xf32>
    %33 = math.rsqrt %32 : vector<16x1xf32>
    %34 = vector.broadcast %33 : vector<16x1xf32> to vector<16x32xf32>
    %35 = arith.mulf %30, %34 : vector<16x32xf32>
    %36 = vector.broadcast %16 : vector<1x32xf32> to vector<16x32xf32>
    %37 = arith.mulf %35, %36 : vector<16x32xf32>
    %38 = vector.broadcast %17 : vector<1x32xf32> to vector<16x32xf32>
    %39 = arith.addf %37, %38 : vector<16x32xf32>
    %40 = arith.truncf %39 : vector<16x32xf32> to vector<16x32xbf16>
    %c0_20 = arith.constant 0 : index
    %c0_21 = arith.constant 0 : index
    %41 = vector.load %arg8[%c0_20, %c0_21] : memref<16x32xbf16, #tpu.memory_space<vmem>>, vector<16x32xbf16>
    tpu.vector_store %arg8[%c0_20, %c0_21], %40 {strides = array<i32>} : memref<16x32xbf16, #tpu.memory_space<vmem>>, vector<16x32xbf16>,
    return
  }
  func.func @transform_0(%arg0: i32) -> (i32, i32) {
    %c0_i32 = arith.constant 0 : i32
    %c0_i32_0 = arith.constant 0 : i32
    return %arg0, %c0_i32 : i32, i32
  }
  func.func @transform_1(%arg0: i32) -> (i32, i32) {
    %c0_i32 = arith.constant 0 : i32
    %c0_i32_0 = arith.constant 0 : i32
    %c0_i32_1 = arith.constant 0 : i32
    return %c0_i32, %c0_i32_0 : i32, i32
  }
  func.func @transform_2(%arg0: i32) -> (i32, i32) {
    %c0_i32 = arith.constant 0 : i32
    %c0_i32_0 = arith.constant 0 : i32
    %c0_i32_1 = arith.constant 0 : i32
    return %c0_i32, %c0_i32_0 : i32, i32
  }
  func.func @transform_3(%arg0: i32) -> (i32, i32) {
    %c0_i32 = arith.constant 0 : i32
    %c0_i32_0 = arith.constant 0 : i32
    %c0_i32_1 = arith.constant 0 : i32
    return %c0_i32, %c0_i32_0 : i32, i32
  }
  func.func @transform_4(%arg0: i32) -> (i32, i32) {
    %c0_i32 = arith.constant 0 : i32
    %c0_i32_0 = arith.constant 0 : i32
    %c0_i32_1 = arith.constant 0 : i32
    return %c0_i32, %c0_i32_0 : i32, i32
  }
  func.func @transform_5(%arg0: i32) -> (i32, i32) {
    %c0_i32 = arith.constant 0 : i32
    %c0_i32_0 = arith.constant 0 : i32
    %c0_i32_1 = arith.constant 0 : i32
    return %c0_i32, %c0_i32_0 : i32, i32
  }
  func.func @transform_6(%arg0: i32) -> (i32, i32) {
    %c0_i32 = arith.constant 0 : i32
    %c0_i32_0 = arith.constant 0 : i32
    %c0_i32_1 = arith.constant 0 : i32
    return %c0_i32, %c0_i32_0 : i32, i32
  }
  func.func @transform_7(%arg0: i32) -> (i32, i32) {
    %c0_i32 = arith.constant 0 : i32
    %c0_i32_0 = arith.constant 0 : i32
    return %arg0, %c0_i32 : i32, i32
  }
}

module attributes {stable_mosaic.version = 11 : i64} {
  func.func @_attn_add_ln_kernel(%arg0: i32, %arg1: i32, %arg2: memref<1x8x32xbf16, #tpu.memory_space<vmem>>, %arg3: memref<1x8x32xbf16, #tpu.memory_space<vmem>>, %arg4: memref<4x32x8xbf16, #tpu.memory_space<vmem>>, %arg5: memref<4x1x8xf32, #tpu.memory_space<vmem>>, %arg6: memref<4x32x8xbf16, #tpu.memory_space<vmem>>, %arg7: memref<4x1x8xf32, #tpu.memory_space<vmem>>, %arg8: memref<4x32x8xbf16, #tpu.memory_space<vmem>>, %arg9: memref<4x1x8xf32, #tpu.memory_space<vmem>>, %arg10: memref<32x32xbf16, #tpu.memory_space<vmem>>, %arg11: memref<1x32xf32, #tpu.memory_space<vmem>>, %arg12: memref<1x32xf32, #tpu.memory_space<vmem>>, %arg13: memref<1x32xf32, #tpu.memory_space<vmem>>, %arg14: memref<1x8x32xbf16, #tpu.memory_space<vmem>>, %arg15: memref<4x8x8xbf16, #tpu.memory_space<vmem>>, %arg16: memref<4x8x8xbf16, #tpu.memory_space<vmem>>, %arg17: memref<8x32xbf16, #tpu.memory_space<vmem>>) attributes {dimension_semantics = [#tpu.dimension_semantics<parallel>, #tpu.dimension_semantics<arbitrary>], iteration_bounds = array<i64: 2, 1>, scalar_prefetch = 0 : i64, scratch_operands = 3 : i64, tpu.core_type = #tpu.core_type<tc>, window_params = [{transform_indices = @transform_0, window_bounds = array<i64: 1, 8, 32>}, {transform_indices = @transform_1, window_bounds = array<i64: 1, 8, 32>}, {pipeline_mode = #tpu.pipeline_mode<synchronous>, transform_indices = @transform_2, window_bounds = array<i64: 4, 32, 8>}, {pipeline_mode = #tpu.pipeline_mode<synchronous>, transform_indices = @transform_3, window_bounds = array<i64: 4, 1, 8>}, {pipeline_mode = #tpu.pipeline_mode<synchronous>, transform_indices = @transform_4, window_bounds = array<i64: 4, 32, 8>}, {pipeline_mode = #tpu.pipeline_mode<synchronous>, transform_indices = @transform_5, window_bounds = array<i64: 4, 1, 8>}, {pipeline_mode = #tpu.pipeline_mode<synchronous>, transform_indices = @transform_6, window_bounds = array<i64: 4, 32, 8>}, {pipeline_mode = #tpu.pipeline_mode<synchronous>, transform_indices = @transform_7, window_bounds = array<i64: 4, 1, 8>}, {pipeline_mode = #tpu.pipeline_mode<synchronous>, transform_indices = @transform_8, window_bounds = array<i64: 32, 32>}, {pipeline_mode = #tpu.pipeline_mode<synchronous>, transform_indices = @transform_9, window_bounds = array<i64: 1, 32>}, {pipeline_mode = #tpu.pipeline_mode<synchronous>, transform_indices = @transform_10, window_bounds = array<i64: 1, 32>}, {pipeline_mode = #tpu.pipeline_mode<synchronous>, transform_indices = @transform_11, window_bounds = array<i64: 1, 32>}, {transform_indices = @transform_12, window_bounds = array<i64: 1, 8, 32>}]} {
    %c0_i32 = arith.constant 0 : i32
    %0 = arith.cmpi eq, %arg1, %c0_i32 : i32
    %1 = arith.extui %0 : i1 to i32
    %c0_i32_0 = arith.constant 0 : i32
    %2 = arith.cmpi ne, %1, %c0_i32_0 : i32
    scf.if %2 {
      %c0_91 = arith.constant 0 : index
      %c0_92 = arith.constant 0 : index
      %c0_93 = arith.constant 0 : index
      %149 = vector.load %arg3[%c0_91, %c0_92, %c0_93] : memref<1x8x32xbf16, #tpu.memory_space<vmem>>, vector<1x8x32xbf16>
      %150 = vector.shape_cast %149 : vector<1x8x32xbf16> to vector<8x32xbf16>
      %c0_94 = arith.constant 0 : index
      %c0_95 = arith.constant 0 : index
      %c0_96 = arith.constant 0 : index
      %151 = vector.load %arg6[%c0_94, %c0_95, %c0_96] : memref<4x32x8xbf16, #tpu.memory_space<vmem>>, vector<1x32x8xbf16>
      %152 = vector.shape_cast %151 : vector<1x32x8xbf16> to vector<32x8xbf16>
      %cst_97 = arith.constant dense<0.000000e+00> : vector<8x8xf32>
      %153 = tpu.matmul %150, %152, %cst_97 {dimension_numbers = #tpu.dot_dimension_numbers<[1], [0], [0], [1], [0, 0, 1, 1], [], []>} : vector<8x32xbf16>, vector<32x8xbf16>, vector<8x8xf32> -> vector<8x8xf32>
      %c0_98 = arith.constant 0 : index
      %c0_99 = arith.constant 0 : index
      %c0_100 = arith.constant 0 : index
      %154 = vector.load %arg7[%c0_98, %c0_99, %c0_100] : memref<4x1x8xf32, #tpu.memory_space<vmem>>, vector<1x1x8xf32>
      %155 = vector.shape_cast %154 : vector<1x1x8xf32> to vector<1x8xf32>
      %156 = vector.broadcast %155 : vector<1x8xf32> to vector<8x8xf32>
      %157 = arith.addf %153, %156 : vector<8x8xf32>
      %158 = arith.truncf %157 : vector<8x8xf32> to vector<8x8xbf16>
      %c0_101 = arith.constant 0 : index
      %c0_102 = arith.constant 0 : index
      %c0_103 = arith.constant 0 : index
      %159 = vector.load %arg15[%c0_101, %c0_102, %c0_103] : memref<4x8x8xbf16, #tpu.memory_space<vmem>>, vector<1x8x8xbf16>
      %160 = vector.shape_cast %159 : vector<1x8x8xbf16> to vector<8x8xbf16>
      %161 = vector.shape_cast %158 : vector<8x8xbf16> to vector<1x8x8xbf16>
      tpu.vector_store %arg15[%c0_101, %c0_102, %c0_103], %161 {strides = array<i32>} : memref<4x8x8xbf16, #tpu.memory_space<vmem>>, vector<1x8x8xbf16>,
      %c0_104 = arith.constant 0 : index
      %c0_105 = arith.constant 0 : index
      %c0_106 = arith.constant 0 : index
      %162 = vector.load %arg8[%c0_104, %c0_105, %c0_106] : memref<4x32x8xbf16, #tpu.memory_space<vmem>>, vector<1x32x8xbf16>
      %163 = vector.shape_cast %162 : vector<1x32x8xbf16> to vector<32x8xbf16>
      %cst_107 = arith.constant dense<0.000000e+00> : vector<8x8xf32>
      %164 = tpu.matmul %150, %163, %cst_107 {dimension_numbers = #tpu.dot_dimension_numbers<[1], [0], [0], [1], [0, 0, 1, 1], [], []>} : vector<8x32xbf16>, vector<32x8xbf16>, vector<8x8xf32> -> vector<8x8xf32>
      %c0_108 = arith.constant 0 : index
      %c0_109 = arith.constant 0 : index
      %c0_110 = arith.constant 0 : index
      %165 = vector.load %arg9[%c0_108, %c0_109, %c0_110] : memref<4x1x8xf32, #tpu.memory_space<vmem>>, vector<1x1x8xf32>
      %166 = vector.shape_cast %165 : vector<1x1x8xf32> to vector<1x8xf32>
      %167 = vector.broadcast %166 : vector<1x8xf32> to vector<8x8xf32>
      %168 = arith.addf %164, %167 : vector<8x8xf32>
      %169 = arith.truncf %168 : vector<8x8xf32> to vector<8x8xbf16>
      %c0_111 = arith.constant 0 : index
      %c0_112 = arith.constant 0 : index
      %c0_113 = arith.constant 0 : index
      %170 = vector.load %arg16[%c0_111, %c0_112, %c0_113] : memref<4x8x8xbf16, #tpu.memory_space<vmem>>, vector<1x8x8xbf16>
      %171 = vector.shape_cast %170 : vector<1x8x8xbf16> to vector<8x8xbf16>
      %172 = vector.shape_cast %169 : vector<8x8xbf16> to vector<1x8x8xbf16>
      tpu.vector_store %arg16[%c0_111, %c0_112, %c0_113], %172 {strides = array<i32>} : memref<4x8x8xbf16, #tpu.memory_space<vmem>>, vector<1x8x8xbf16>,
      %c1_114 = arith.constant 1 : index
      %c0_115 = arith.constant 0 : index
      %c0_116 = arith.constant 0 : index
      %173 = vector.load %arg6[%c1_114, %c0_115, %c0_116] : memref<4x32x8xbf16, #tpu.memory_space<vmem>>, vector<1x32x8xbf16>
      %174 = vector.shape_cast %173 : vector<1x32x8xbf16> to vector<32x8xbf16>
      %cst_117 = arith.constant dense<0.000000e+00> : vector<8x8xf32>
      %175 = tpu.matmul %150, %174, %cst_117 {dimension_numbers = #tpu.dot_dimension_numbers<[1], [0], [0], [1], [0, 0, 1, 1], [], []>} : vector<8x32xbf16>, vector<32x8xbf16>, vector<8x8xf32> -> vector<8x8xf32>
      %c1_118 = arith.constant 1 : index
      %c0_119 = arith.constant 0 : index
      %c0_120 = arith.constant 0 : index
      %176 = vector.load %arg7[%c1_118, %c0_119, %c0_120] : memref<4x1x8xf32, #tpu.memory_space<vmem>>, vector<1x1x8xf32>
      %177 = vector.shape_cast %176 : vector<1x1x8xf32> to vector<1x8xf32>
      %178 = vector.broadcast %177 : vector<1x8xf32> to vector<8x8xf32>
      %179 = arith.addf %175, %178 : vector<8x8xf32>
      %180 = arith.truncf %179 : vector<8x8xf32> to vector<8x8xbf16>
      %c1_121 = arith.constant 1 : index
      %c0_122 = arith.constant 0 : index
      %c0_123 = arith.constant 0 : index
      %181 = vector.load %arg15[%c1_121, %c0_122, %c0_123] : memref<4x8x8xbf16, #tpu.memory_space<vmem>>, vector<1x8x8xbf16>
      %182 = vector.shape_cast %181 : vector<1x8x8xbf16> to vector<8x8xbf16>
      %183 = vector.shape_cast %180 : vector<8x8xbf16> to vector<1x8x8xbf16>
      tpu.vector_store %arg15[%c1_121, %c0_122, %c0_123], %183 {strides = array<i32>} : memref<4x8x8xbf16, #tpu.memory_space<vmem>>, vector<1x8x8xbf16>,
      %c1_124 = arith.constant 1 : index
      %c0_125 = arith.constant 0 : index
      %c0_126 = arith.constant 0 : index
      %184 = vector.load %arg8[%c1_124, %c0_125, %c0_126] : memref<4x32x8xbf16, #tpu.memory_space<vmem>>, vector<1x32x8xbf16>
      %185 = vector.shape_cast %184 : vector<1x32x8xbf16> to vector<32x8xbf16>
      %cst_127 = arith.constant dense<0.000000e+00> : vector<8x8xf32>
      %186 = tpu.matmul %150, %185, %cst_127 {dimension_numbers = #tpu.dot_dimension_numbers<[1], [0], [0], [1], [0, 0, 1, 1], [], []>} : vector<8x32xbf16>, vector<32x8xbf16>, vector<8x8xf32> -> vector<8x8xf32>
      %c1_128 = arith.constant 1 : index
      %c0_129 = arith.constant 0 : index
      %c0_130 = arith.constant 0 : index
      %187 = vector.load %arg9[%c1_128, %c0_129, %c0_130] : memref<4x1x8xf32, #tpu.memory_space<vmem>>, vector<1x1x8xf32>
      %188 = vector.shape_cast %187 : vector<1x1x8xf32> to vector<1x8xf32>
      %189 = vector.broadcast %188 : vector<1x8xf32> to vector<8x8xf32>
      %190 = arith.addf %186, %189 : vector<8x8xf32>
      %191 = arith.truncf %190 : vector<8x8xf32> to vector<8x8xbf16>
      %c1_131 = arith.constant 1 : index
      %c0_132 = arith.constant 0 : index
      %c0_133 = arith.constant 0 : index
      %192 = vector.load %arg16[%c1_131, %c0_132, %c0_133] : memref<4x8x8xbf16, #tpu.memory_space<vmem>>, vector<1x8x8xbf16>
      %193 = vector.shape_cast %192 : vector<1x8x8xbf16> to vector<8x8xbf16>
      %194 = vector.shape_cast %191 : vector<8x8xbf16> to vector<1x8x8xbf16>
      tpu.vector_store %arg16[%c1_131, %c0_132, %c0_133], %194 {strides = array<i32>} : memref<4x8x8xbf16, #tpu.memory_space<vmem>>, vector<1x8x8xbf16>,
      %c2_134 = arith.constant 2 : index
      %c0_135 = arith.constant 0 : index
      %c0_136 = arith.constant 0 : index
      %195 = vector.load %arg6[%c2_134, %c0_135, %c0_136] : memref<4x32x8xbf16, #tpu.memory_space<vmem>>, vector<1x32x8xbf16>
      %196 = vector.shape_cast %195 : vector<1x32x8xbf16> to vector<32x8xbf16>
      %cst_137 = arith.constant dense<0.000000e+00> : vector<8x8xf32>
      %197 = tpu.matmul %150, %196, %cst_137 {dimension_numbers = #tpu.dot_dimension_numbers<[1], [0], [0], [1], [0, 0, 1, 1], [], []>} : vector<8x32xbf16>, vector<32x8xbf16>, vector<8x8xf32> -> vector<8x8xf32>
      %c2_138 = arith.constant 2 : index
      %c0_139 = arith.constant 0 : index
      %c0_140 = arith.constant 0 : index
      %198 = vector.load %arg7[%c2_138, %c0_139, %c0_140] : memref<4x1x8xf32, #tpu.memory_space<vmem>>, vector<1x1x8xf32>
      %199 = vector.shape_cast %198 : vector<1x1x8xf32> to vector<1x8xf32>
      %200 = vector.broadcast %199 : vector<1x8xf32> to vector<8x8xf32>
      %201 = arith.addf %197, %200 : vector<8x8xf32>
      %202 = arith.truncf %201 : vector<8x8xf32> to vector<8x8xbf16>
      %c2_141 = arith.constant 2 : index
      %c0_142 = arith.constant 0 : index
      %c0_143 = arith.constant 0 : index
      %203 = vector.load %arg15[%c2_141, %c0_142, %c0_143] : memref<4x8x8xbf16, #tpu.memory_space<vmem>>, vector<1x8x8xbf16>
      %204 = vector.shape_cast %203 : vector<1x8x8xbf16> to vector<8x8xbf16>
      %205 = vector.shape_cast %202 : vector<8x8xbf16> to vector<1x8x8xbf16>
      tpu.vector_store %arg15[%c2_141, %c0_142, %c0_143], %205 {strides = array<i32>} : memref<4x8x8xbf16, #tpu.memory_space<vmem>>, vector<1x8x8xbf16>,
      %c2_144 = arith.constant 2 : index
      %c0_145 = arith.constant 0 : index
      %c0_146 = arith.constant 0 : index
      %206 = vector.load %arg8[%c2_144, %c0_145, %c0_146] : memref<4x32x8xbf16, #tpu.memory_space<vmem>>, vector<1x32x8xbf16>
      %207 = vector.shape_cast %206 : vector<1x32x8xbf16> to vector<32x8xbf16>
      %cst_147 = arith.constant dense<0.000000e+00> : vector<8x8xf32>
      %208 = tpu.matmul %150, %207, %cst_147 {dimension_numbers = #tpu.dot_dimension_numbers<[1], [0], [0], [1], [0, 0, 1, 1], [], []>} : vector<8x32xbf16>, vector<32x8xbf16>, vector<8x8xf32> -> vector<8x8xf32>
      %c2_148 = arith.constant 2 : index
      %c0_149 = arith.constant 0 : index
      %c0_150 = arith.constant 0 : index
      %209 = vector.load %arg9[%c2_148, %c0_149, %c0_150] : memref<4x1x8xf32, #tpu.memory_space<vmem>>, vector<1x1x8xf32>
      %210 = vector.shape_cast %209 : vector<1x1x8xf32> to vector<1x8xf32>
      %211 = vector.broadcast %210 : vector<1x8xf32> to vector<8x8xf32>
      %212 = arith.addf %208, %211 : vector<8x8xf32>
      %213 = arith.truncf %212 : vector<8x8xf32> to vector<8x8xbf16>
      %c2_151 = arith.constant 2 : index
      %c0_152 = arith.constant 0 : index
      %c0_153 = arith.constant 0 : index
      %214 = vector.load %arg16[%c2_151, %c0_152, %c0_153] : memref<4x8x8xbf16, #tpu.memory_space<vmem>>, vector<1x8x8xbf16>
      %215 = vector.shape_cast %214 : vector<1x8x8xbf16> to vector<8x8xbf16>
      %216 = vector.shape_cast %213 : vector<8x8xbf16> to vector<1x8x8xbf16>
      tpu.vector_store %arg16[%c2_151, %c0_152, %c0_153], %216 {strides = array<i32>} : memref<4x8x8xbf16, #tpu.memory_space<vmem>>, vector<1x8x8xbf16>,
      %c3_154 = arith.constant 3 : index
      %c0_155 = arith.constant 0 : index
      %c0_156 = arith.constant 0 : index
      %217 = vector.load %arg6[%c3_154, %c0_155, %c0_156] : memref<4x32x8xbf16, #tpu.memory_space<vmem>>, vector<1x32x8xbf16>
      %218 = vector.shape_cast %217 : vector<1x32x8xbf16> to vector<32x8xbf16>
      %cst_157 = arith.constant dense<0.000000e+00> : vector<8x8xf32>
      %219 = tpu.matmul %150, %218, %cst_157 {dimension_numbers = #tpu.dot_dimension_numbers<[1], [0], [0], [1], [0, 0, 1, 1], [], []>} : vector<8x32xbf16>, vector<32x8xbf16>, vector<8x8xf32> -> vector<8x8xf32>
      %c3_158 = arith.constant 3 : index
      %c0_159 = arith.constant 0 : index
      %c0_160 = arith.constant 0 : index
      %220 = vector.load %arg7[%c3_158, %c0_159, %c0_160] : memref<4x1x8xf32, #tpu.memory_space<vmem>>, vector<1x1x8xf32>
      %221 = vector.shape_cast %220 : vector<1x1x8xf32> to vector<1x8xf32>
      %222 = vector.broadcast %221 : vector<1x8xf32> to vector<8x8xf32>
      %223 = arith.addf %219, %222 : vector<8x8xf32>
      %224 = arith.truncf %223 : vector<8x8xf32> to vector<8x8xbf16>
      %c3_161 = arith.constant 3 : index
      %c0_162 = arith.constant 0 : index
      %c0_163 = arith.constant 0 : index
      %225 = vector.load %arg15[%c3_161, %c0_162, %c0_163] : memref<4x8x8xbf16, #tpu.memory_space<vmem>>, vector<1x8x8xbf16>
      %226 = vector.shape_cast %225 : vector<1x8x8xbf16> to vector<8x8xbf16>
      %227 = vector.shape_cast %224 : vector<8x8xbf16> to vector<1x8x8xbf16>
      tpu.vector_store %arg15[%c3_161, %c0_162, %c0_163], %227 {strides = array<i32>} : memref<4x8x8xbf16, #tpu.memory_space<vmem>>, vector<1x8x8xbf16>,
      %c3_164 = arith.constant 3 : index
      %c0_165 = arith.constant 0 : index
      %c0_166 = arith.constant 0 : index
      %228 = vector.load %arg8[%c3_164, %c0_165, %c0_166] : memref<4x32x8xbf16, #tpu.memory_space<vmem>>, vector<1x32x8xbf16>
      %229 = vector.shape_cast %228 : vector<1x32x8xbf16> to vector<32x8xbf16>
      %cst_167 = arith.constant dense<0.000000e+00> : vector<8x8xf32>
      %230 = tpu.matmul %150, %229, %cst_167 {dimension_numbers = #tpu.dot_dimension_numbers<[1], [0], [0], [1], [0, 0, 1, 1], [], []>} : vector<8x32xbf16>, vector<32x8xbf16>, vector<8x8xf32> -> vector<8x8xf32>
      %c3_168 = arith.constant 3 : index
      %c0_169 = arith.constant 0 : index
      %c0_170 = arith.constant 0 : index
      %231 = vector.load %arg9[%c3_168, %c0_169, %c0_170] : memref<4x1x8xf32, #tpu.memory_space<vmem>>, vector<1x1x8xf32>
      %232 = vector.shape_cast %231 : vector<1x1x8xf32> to vector<1x8xf32>
      %233 = vector.broadcast %232 : vector<1x8xf32> to vector<8x8xf32>
      %234 = arith.addf %230, %233 : vector<8x8xf32>
      %235 = arith.truncf %234 : vector<8x8xf32> to vector<8x8xbf16>
      %c3_171 = arith.constant 3 : index
      %c0_172 = arith.constant 0 : index
      %c0_173 = arith.constant 0 : index
      %236 = vector.load %arg16[%c3_171, %c0_172, %c0_173] : memref<4x8x8xbf16, #tpu.memory_space<vmem>>, vector<1x8x8xbf16>
      %237 = vector.shape_cast %236 : vector<1x8x8xbf16> to vector<8x8xbf16>
      %238 = vector.shape_cast %235 : vector<8x8xbf16> to vector<1x8x8xbf16>
      tpu.vector_store %arg16[%c3_171, %c0_172, %c0_173], %238 {strides = array<i32>} : memref<4x8x8xbf16, #tpu.memory_space<vmem>>, vector<1x8x8xbf16>,
    } else {
    }
    %c0 = arith.constant 0 : index
    %c0_1 = arith.constant 0 : index
    %c0_2 = arith.constant 0 : index
    %3 = vector.load %arg2[%c0, %c0_1, %c0_2] : memref<1x8x32xbf16, #tpu.memory_space<vmem>>, vector<1x8x32xbf16>
    %4 = vector.shape_cast %3 : vector<1x8x32xbf16> to vector<8x32xbf16>
    %c0_3 = arith.constant 0 : index
    %c0_4 = arith.constant 0 : index
    %c0_5 = arith.constant 0 : index
    %5 = vector.load %arg4[%c0_3, %c0_4, %c0_5] : memref<4x32x8xbf16, #tpu.memory_space<vmem>>, vector<1x32x8xbf16>
    %6 = vector.shape_cast %5 : vector<1x32x8xbf16> to vector<32x8xbf16>
    %cst = arith.constant dense<0.000000e+00> : vector<8x8xf32>
    %7 = tpu.matmul %4, %6, %cst {dimension_numbers = #tpu.dot_dimension_numbers<[1], [0], [0], [1], [0, 0, 1, 1], [], []>} : vector<8x32xbf16>, vector<32x8xbf16>, vector<8x8xf32> -> vector<8x8xf32>
    %c0_6 = arith.constant 0 : index
    %c0_7 = arith.constant 0 : index
    %c0_8 = arith.constant 0 : index
    %8 = vector.load %arg5[%c0_6, %c0_7, %c0_8] : memref<4x1x8xf32, #tpu.memory_space<vmem>>, vector<1x1x8xf32>
    %9 = vector.shape_cast %8 : vector<1x1x8xf32> to vector<1x8xf32>
    %10 = vector.broadcast %9 : vector<1x8xf32> to vector<8x8xf32>
    %11 = arith.addf %7, %10 : vector<8x8xf32>
    %12 = arith.truncf %11 : vector<8x8xf32> to vector<8x8xbf16>
    %c0_9 = arith.constant 0 : index
    %c0_10 = arith.constant 0 : index
    %c0_11 = arith.constant 0 : index
    %13 = vector.load %arg15[%c0_9, %c0_10, %c0_11] : memref<4x8x8xbf16, #tpu.memory_space<vmem>>, vector<1x8x8xbf16>
    %14 = vector.shape_cast %13 : vector<1x8x8xbf16> to vector<8x8xbf16>
    %cst_12 = arith.constant dense<0.000000e+00> : vector<8x8xf32>
    %15 = tpu.matmul %12, %14, %cst_12 {dimension_numbers = #tpu.dot_dimension_numbers<[1], [1], [0], [0], [0, 0, 1, 0], [], []>} : vector<8x8xbf16>, vector<8x8xbf16>, vector<8x8xf32> -> vector<8x8xf32>
    %cst_13 = arith.constant dense<0xFF800000> : vector<8xf32>
    %16 = vector.multi_reduction <maximumf>, %15, %cst_13 [1] : vector<8x8xf32> to vector<8xf32>
    %17 = vector.shape_cast %16 : vector<8xf32> to vector<8x1xf32>
    %18 = vector.broadcast %17 : vector<8x1xf32> to vector<8x8xf32>
    %19 = arith.subf %15, %18 : vector<8x8xf32>
    %20 = math.exp %19 : vector<8x8xf32>
    %cst_14 = arith.constant dense<0.000000e+00> : vector<8xf32>
    %21 = vector.multi_reduction <add>, %20, %cst_14 [1] : vector<8x8xf32> to vector<8xf32>
    %22 = vector.shape_cast %21 : vector<8xf32> to vector<8x1xf32>
    %23 = tpu.reciprocal %22 {approx = true} : vector<8x1xf32> -> vector<8x1xf32>
    %24 = vector.broadcast %23 : vector<8x1xf32> to vector<8x8xf32>
    %25 = arith.mulf %20, %24 : vector<8x8xf32>
    %26 = arith.truncf %25 : vector<8x8xf32> to vector<8x8xbf16>
    %c0_15 = arith.constant 0 : index
    %c0_16 = arith.constant 0 : index
    %c0_17 = arith.constant 0 : index
    %27 = vector.load %arg16[%c0_15, %c0_16, %c0_17] : memref<4x8x8xbf16, #tpu.memory_space<vmem>>, vector<1x8x8xbf16>
    %28 = vector.shape_cast %27 : vector<1x8x8xbf16> to vector<8x8xbf16>
    %cst_18 = arith.constant dense<0.000000e+00> : vector<8x8xf32>
    %29 = tpu.matmul %26, %28, %cst_18 {dimension_numbers = #tpu.dot_dimension_numbers<[1], [0], [0], [1], [0, 0, 1, 1], [], []>} : vector<8x8xbf16>, vector<8x8xbf16>, vector<8x8xf32> -> vector<8x8xf32>
    %30 = arith.truncf %29 : vector<8x8xf32> to vector<8x8xbf16>
    %c0_19 = arith.constant 0 : index
    %c0_20 = arith.constant 0 : index
    %31 = vector.load %arg17[%c0_19, %c0_20] : memref<8x32xbf16, #tpu.memory_space<vmem>>, vector<8x8xbf16>
    tpu.vector_store %arg17[%c0_19, %c0_20], %30 {strides = array<i32>} : memref<8x32xbf16, #tpu.memory_space<vmem>>, vector<8x8xbf16>,
    %c1 = arith.constant 1 : index
    %c0_21 = arith.constant 0 : index
    %c0_22 = arith.constant 0 : index
    %32 = vector.load %arg4[%c1, %c0_21, %c0_22] : memref<4x32x8xbf16, #tpu.memory_space<vmem>>, vector<1x32x8xbf16>
    %33 = vector.shape_cast %32 : vector<1x32x8xbf16> to vector<32x8xbf16>
    %cst_23 = arith.constant dense<0.000000e+00> : vector<8x8xf32>
    %34 = tpu.matmul %4, %33, %cst_23 {dimension_numbers = #tpu.dot_dimension_numbers<[1], [0], [0], [1], [0, 0, 1, 1], [], []>} : vector<8x32xbf16>, vector<32x8xbf16>, vector<8x8xf32> -> vector<8x8xf32>
    %c1_24 = arith.constant 1 : index
    %c0_25 = arith.constant 0 : index
    %c0_26 = arith.constant 0 : index
    %35 = vector.load %arg5[%c1_24, %c0_25, %c0_26] : memref<4x1x8xf32, #tpu.memory_space<vmem>>, vector<1x1x8xf32>
    %36 = vector.shape_cast %35 : vector<1x1x8xf32> to vector<1x8xf32>
    %37 = vector.broadcast %36 : vector<1x8xf32> to vector<8x8xf32>
    %38 = arith.addf %34, %37 : vector<8x8xf32>
    %39 = arith.truncf %38 : vector<8x8xf32> to vector<8x8xbf16>
    %c1_27 = arith.constant 1 : index
    %c0_28 = arith.constant 0 : index
    %c0_29 = arith.constant 0 : index
    %40 = vector.load %arg15[%c1_27, %c0_28, %c0_29] : memref<4x8x8xbf16, #tpu.memory_space<vmem>>, vector<1x8x8xbf16>
    %41 = vector.shape_cast %40 : vector<1x8x8xbf16> to vector<8x8xbf16>
    %cst_30 = arith.constant dense<0.000000e+00> : vector<8x8xf32>
    %42 = tpu.matmul %39, %41, %cst_30 {dimension_numbers = #tpu.dot_dimension_numbers<[1], [1], [0], [0], [0, 0, 1, 0], [], []>} : vector<8x8xbf16>, vector<8x8xbf16>, vector<8x8xf32> -> vector<8x8xf32>
    %cst_31 = arith.constant dense<0xFF800000> : vector<8xf32>
    %43 = vector.multi_reduction <maximumf>, %42, %cst_31 [1] : vector<8x8xf32> to vector<8xf32>
    %44 = vector.shape_cast %43 : vector<8xf32> to vector<8x1xf32>
    %45 = vector.broadcast %44 : vector<8x1xf32> to vector<8x8xf32>
    %46 = arith.subf %42, %45 : vector<8x8xf32>
    %47 = math.exp %46 : vector<8x8xf32>
    %cst_32 = arith.constant dense<0.000000e+00> : vector<8xf32>
    %48 = vector.multi_reduction <add>, %47, %cst_32 [1] : vector<8x8xf32> to vector<8xf32>
    %49 = vector.shape_cast %48 : vector<8xf32> to vector<8x1xf32>
    %50 = tpu.reciprocal %49 {approx = true} : vector<8x1xf32> -> vector<8x1xf32>
    %51 = vector.broadcast %50 : vector<8x1xf32> to vector<8x8xf32>
    %52 = arith.mulf %47, %51 : vector<8x8xf32>
    %53 = arith.truncf %52 : vector<8x8xf32> to vector<8x8xbf16>
    %c1_33 = arith.constant 1 : index
    %c0_34 = arith.constant 0 : index
    %c0_35 = arith.constant 0 : index
    %54 = vector.load %arg16[%c1_33, %c0_34, %c0_35] : memref<4x8x8xbf16, #tpu.memory_space<vmem>>, vector<1x8x8xbf16>
    %55 = vector.shape_cast %54 : vector<1x8x8xbf16> to vector<8x8xbf16>
    %cst_36 = arith.constant dense<0.000000e+00> : vector<8x8xf32>
    %56 = tpu.matmul %53, %55, %cst_36 {dimension_numbers = #tpu.dot_dimension_numbers<[1], [0], [0], [1], [0, 0, 1, 1], [], []>} : vector<8x8xbf16>, vector<8x8xbf16>, vector<8x8xf32> -> vector<8x8xf32>
    %57 = arith.truncf %56 : vector<8x8xf32> to vector<8x8xbf16>
    %c0_37 = arith.constant 0 : index
    %c8 = arith.constant 8 : index
    %58 = vector.load %arg17[%c0_37, %c8] : memref<8x32xbf16, #tpu.memory_space<vmem>>, vector<8x8xbf16>
    tpu.vector_store %arg17[%c0_37, %c8], %57 {strides = array<i32>} : memref<8x32xbf16, #tpu.memory_space<vmem>>, vector<8x8xbf16>,
    %c2 = arith.constant 2 : index
    %c0_38 = arith.constant 0 : index
    %c0_39 = arith.constant 0 : index
    %59 = vector.load %arg4[%c2, %c0_38, %c0_39] : memref<4x32x8xbf16, #tpu.memory_space<vmem>>, vector<1x32x8xbf16>
    %60 = vector.shape_cast %59 : vector<1x32x8xbf16> to vector<32x8xbf16>
    %cst_40 = arith.constant dense<0.000000e+00> : vector<8x8xf32>
    %61 = tpu.matmul %4, %60, %cst_40 {dimension_numbers = #tpu.dot_dimension_numbers<[1], [0], [0], [1], [0, 0, 1, 1], [], []>} : vector<8x32xbf16>, vector<32x8xbf16>, vector<8x8xf32> -> vector<8x8xf32>
    %c2_41 = arith.constant 2 : index
    %c0_42 = arith.constant 0 : index
    %c0_43 = arith.constant 0 : index
    %62 = vector.load %arg5[%c2_41, %c0_42, %c0_43] : memref<4x1x8xf32, #tpu.memory_space<vmem>>, vector<1x1x8xf32>
    %63 = vector.shape_cast %62 : vector<1x1x8xf32> to vector<1x8xf32>
    %64 = vector.broadcast %63 : vector<1x8xf32> to vector<8x8xf32>
    %65 = arith.addf %61, %64 : vector<8x8xf32>
    %66 = arith.truncf %65 : vector<8x8xf32> to vector<8x8xbf16>
    %c2_44 = arith.constant 2 : index
    %c0_45 = arith.constant 0 : index
    %c0_46 = arith.constant 0 : index
    %67 = vector.load %arg15[%c2_44, %c0_45, %c0_46] : memref<4x8x8xbf16, #tpu.memory_space<vmem>>, vector<1x8x8xbf16>
    %68 = vector.shape_cast %67 : vector<1x8x8xbf16> to vector<8x8xbf16>
    %cst_47 = arith.constant dense<0.000000e+00> : vector<8x8xf32>
    %69 = tpu.matmul %66, %68, %cst_47 {dimension_numbers = #tpu.dot_dimension_numbers<[1], [1], [0], [0], [0, 0, 1, 0], [], []>} : vector<8x8xbf16>, vector<8x8xbf16>, vector<8x8xf32> -> vector<8x8xf32>
    %cst_48 = arith.constant dense<0xFF800000> : vector<8xf32>
    %70 = vector.multi_reduction <maximumf>, %69, %cst_48 [1] : vector<8x8xf32> to vector<8xf32>
    %71 = vector.shape_cast %70 : vector<8xf32> to vector<8x1xf32>
    %72 = vector.broadcast %71 : vector<8x1xf32> to vector<8x8xf32>
    %73 = arith.subf %69, %72 : vector<8x8xf32>
    %74 = math.exp %73 : vector<8x8xf32>
    %cst_49 = arith.constant dense<0.000000e+00> : vector<8xf32>
    %75 = vector.multi_reduction <add>, %74, %cst_49 [1] : vector<8x8xf32> to vector<8xf32>
    %76 = vector.shape_cast %75 : vector<8xf32> to vector<8x1xf32>
    %77 = tpu.reciprocal %76 {approx = true} : vector<8x1xf32> -> vector<8x1xf32>
    %78 = vector.broadcast %77 : vector<8x1xf32> to vector<8x8xf32>
    %79 = arith.mulf %74, %78 : vector<8x8xf32>
    %80 = arith.truncf %79 : vector<8x8xf32> to vector<8x8xbf16>
    %c2_50 = arith.constant 2 : index
    %c0_51 = arith.constant 0 : index
    %c0_52 = arith.constant 0 : index
    %81 = vector.load %arg16[%c2_50, %c0_51, %c0_52] : memref<4x8x8xbf16, #tpu.memory_space<vmem>>, vector<1x8x8xbf16>
    %82 = vector.shape_cast %81 : vector<1x8x8xbf16> to vector<8x8xbf16>
    %cst_53 = arith.constant dense<0.000000e+00> : vector<8x8xf32>
    %83 = tpu.matmul %80, %82, %cst_53 {dimension_numbers = #tpu.dot_dimension_numbers<[1], [0], [0], [1], [0, 0, 1, 1], [], []>} : vector<8x8xbf16>, vector<8x8xbf16>, vector<8x8xf32> -> vector<8x8xf32>
    %84 = arith.truncf %83 : vector<8x8xf32> to vector<8x8xbf16>
    %c0_54 = arith.constant 0 : index
    %c16 = arith.constant 16 : index
    %85 = vector.load %arg17[%c0_54, %c16] : memref<8x32xbf16, #tpu.memory_space<vmem>>, vector<8x8xbf16>
    tpu.vector_store %arg17[%c0_54, %c16], %84 {strides = array<i32>} : memref<8x32xbf16, #tpu.memory_space<vmem>>, vector<8x8xbf16>,
    %c3 = arith.constant 3 : index
    %c0_55 = arith.constant 0 : index
    %c0_56 = arith.constant 0 : index
    %86 = vector.load %arg4[%c3, %c0_55, %c0_56] : memref<4x32x8xbf16, #tpu.memory_space<vmem>>, vector<1x32x8xbf16>
    %87 = vector.shape_cast %86 : vector<1x32x8xbf16> to vector<32x8xbf16>
    %cst_57 = arith.constant dense<0.000000e+00> : vector<8x8xf32>
    %88 = tpu.matmul %4, %87, %cst_57 {dimension_numbers = #tpu.dot_dimension_numbers<[1], [0], [0], [1], [0, 0, 1, 1], [], []>} : vector<8x32xbf16>, vector<32x8xbf16>, vector<8x8xf32> -> vector<8x8xf32>
    %c3_58 = arith.constant 3 : index
    %c0_59 = arith.constant 0 : index
    %c0_60 = arith.constant 0 : index
    %89 = vector.load %arg5[%c3_58, %c0_59, %c0_60] : memref<4x1x8xf32, #tpu.memory_space<vmem>>, vector<1x1x8xf32>
    %90 = vector.shape_cast %89 : vector<1x1x8xf32> to vector<1x8xf32>
    %91 = vector.broadcast %90 : vector<1x8xf32> to vector<8x8xf32>
    %92 = arith.addf %88, %91 : vector<8x8xf32>
    %93 = arith.truncf %92 : vector<8x8xf32> to vector<8x8xbf16>
    %c3_61 = arith.constant 3 : index
    %c0_62 = arith.constant 0 : index
    %c0_63 = arith.constant 0 : index
    %94 = vector.load %arg15[%c3_61, %c0_62, %c0_63] : memref<4x8x8xbf16, #tpu.memory_space<vmem>>, vector<1x8x8xbf16>
    %95 = vector.shape_cast %94 : vector<1x8x8xbf16> to vector<8x8xbf16>
    %cst_64 = arith.constant dense<0.000000e+00> : vector<8x8xf32>
    %96 = tpu.matmul %93, %95, %cst_64 {dimension_numbers = #tpu.dot_dimension_numbers<[1], [1], [0], [0], [0, 0, 1, 0], [], []>} : vector<8x8xbf16>, vector<8x8xbf16>, vector<8x8xf32> -> vector<8x8xf32>
    %cst_65 = arith.constant dense<0xFF800000> : vector<8xf32>
    %97 = vector.multi_reduction <maximumf>, %96, %cst_65 [1] : vector<8x8xf32> to vector<8xf32>
    %98 = vector.shape_cast %97 : vector<8xf32> to vector<8x1xf32>
    %99 = vector.broadcast %98 : vector<8x1xf32> to vector<8x8xf32>
    %100 = arith.subf %96, %99 : vector<8x8xf32>
    %101 = math.exp %100 : vector<8x8xf32>
    %cst_66 = arith.constant dense<0.000000e+00> : vector<8xf32>
    %102 = vector.multi_reduction <add>, %101, %cst_66 [1] : vector<8x8xf32> to vector<8xf32>
    %103 = vector.shape_cast %102 : vector<8xf32> to vector<8x1xf32>
    %104 = tpu.reciprocal %103 {approx = true} : vector<8x1xf32> -> vector<8x1xf32>
    %105 = vector.broadcast %104 : vector<8x1xf32> to vector<8x8xf32>
    %106 = arith.mulf %101, %105 : vector<8x8xf32>
    %107 = arith.truncf %106 : vector<8x8xf32> to vector<8x8xbf16>
    %c3_67 = arith.constant 3 : index
    %c0_68 = arith.constant 0 : index
    %c0_69 = arith.constant 0 : index
    %108 = vector.load %arg16[%c3_67, %c0_68, %c0_69] : memref<4x8x8xbf16, #tpu.memory_space<vmem>>, vector<1x8x8xbf16>
    %109 = vector.shape_cast %108 : vector<1x8x8xbf16> to vector<8x8xbf16>
    %cst_70 = arith.constant dense<0.000000e+00> : vector<8x8xf32>
    %110 = tpu.matmul %107, %109, %cst_70 {dimension_numbers = #tpu.dot_dimension_numbers<[1], [0], [0], [1], [0, 0, 1, 1], [], []>} : vector<8x8xbf16>, vector<8x8xbf16>, vector<8x8xf32> -> vector<8x8xf32>
    %111 = arith.truncf %110 : vector<8x8xf32> to vector<8x8xbf16>
    %c0_71 = arith.constant 0 : index
    %c24 = arith.constant 24 : index
    %112 = vector.load %arg17[%c0_71, %c24] : memref<8x32xbf16, #tpu.memory_space<vmem>>, vector<8x8xbf16>
    tpu.vector_store %arg17[%c0_71, %c24], %111 {strides = array<i32>} : memref<8x32xbf16, #tpu.memory_space<vmem>>, vector<8x8xbf16>,
    %c0_72 = arith.constant 0 : index
    %c0_73 = arith.constant 0 : index
    %113 = vector.load %arg17[%c0_72, %c0_73] : memref<8x32xbf16, #tpu.memory_space<vmem>>, vector<8x32xbf16>
    %c0_74 = arith.constant 0 : index
    %c0_75 = arith.constant 0 : index
    %114 = vector.load %arg10[%c0_74, %c0_75] : memref<32x32xbf16, #tpu.memory_space<vmem>>, vector<32x32xbf16>
    %cst_76 = arith.constant dense<0.000000e+00> : vector<8x32xf32>
    %115 = tpu.matmul %113, %114, %cst_76 {dimension_numbers = #tpu.dot_dimension_numbers<[1], [0], [0], [1], [0, 0, 1, 1], [], []>} : vector<8x32xbf16>, vector<32x32xbf16>, vector<8x32xf32> -> vector<8x32xf32>
    %c0_77 = arith.constant 0 : index
    %c0_78 = arith.constant 0 : index
    %116 = vector.load %arg11[%c0_77, %c0_78] : memref<1x32xf32, #tpu.memory_space<vmem>>, vector<1x32xf32>
    %117 = vector.broadcast %116 : vector<1x32xf32> to vector<8x32xf32>
    %118 = arith.addf %115, %117 : vector<8x32xf32>
    %119 = arith.extf %4 : vector<8x32xbf16> to vector<8x32xf32>
    %120 = arith.addf %119, %118 : vector<8x32xf32>
    %c0_79 = arith.constant 0 : index
    %c0_80 = arith.constant 0 : index
    %121 = vector.load %arg12[%c0_79, %c0_80] : memref<1x32xf32, #tpu.memory_space<vmem>>, vector<1x32xf32>
    %c0_81 = arith.constant 0 : index
    %c0_82 = arith.constant 0 : index
    %122 = vector.load %arg13[%c0_81, %c0_82] : memref<1x32xf32, #tpu.memory_space<vmem>>, vector<1x32xf32>
    %cst_83 = arith.constant dense<0.000000e+00> : vector<8xf32>
    %123 = vector.multi_reduction <add>, %120, %cst_83 [1] : vector<8x32xf32> to vector<8xf32>
    %124 = vector.shape_cast %123 : vector<8xf32> to vector<8x1xf32>
    %cst_84 = arith.constant 3.200000e+01 : f32
    %125 = vector.broadcast %cst_84 : f32 to vector<8x1xf32>
    %126 = arith.divf %124, %125 : vector<8x1xf32>
    %127 = vector.broadcast %126 : vector<8x1xf32> to vector<8x32xf32>
    %128 = arith.subf %120, %127 : vector<8x32xf32>
    %129 = arith.mulf %128, %128 : vector<8x32xf32>
    %cst_85 = arith.constant dense<0.000000e+00> : vector<8xf32>
    %130 = vector.multi_reduction <add>, %129, %cst_85 [1] : vector<8x32xf32> to vector<8xf32>
    %131 = vector.shape_cast %130 : vector<8xf32> to vector<8x1xf32>
    %cst_86 = arith.constant 3.200000e+01 : f32
    %132 = vector.broadcast %cst_86 : f32 to vector<8x1xf32>
    %133 = arith.divf %131, %132 : vector<8x1xf32>
    %134 = vector.broadcast %126 : vector<8x1xf32> to vector<8x32xf32>
    %135 = arith.subf %120, %134 : vector<8x32xf32>
    %cst_87 = arith.constant 9.99999974E-6 : f32
    %136 = vector.broadcast %cst_87 : f32 to vector<8x1xf32>
    %137 = arith.addf %133, %136 : vector<8x1xf32>
    %138 = math.rsqrt %137 : vector<8x1xf32>
    %139 = vector.broadcast %138 : vector<8x1xf32> to vector<8x32xf32>
    %140 = arith.mulf %135, %139 : vector<8x32xf32>
    %141 = vector.broadcast %121 : vector<1x32xf32> to vector<8x32xf32>
    %142 = arith.mulf %140, %141 : vector<8x32xf32>
    %143 = vector.broadcast %122 : vector<1x32xf32> to vector<8x32xf32>
    %144 = arith.addf %142, %143 : vector<8x32xf32>
    %145 = arith.truncf %144 : vector<8x32xf32> to vector<8x32xbf16>
    %c0_88 = arith.constant 0 : index
    %c0_89 = arith.constant 0 : index
    %c0_90 = arith.constant 0 : index
    %146 = vector.load %arg14[%c0_88, %c0_89, %c0_90] : memref<1x8x32xbf16, #tpu.memory_space<vmem>>, vector<1x8x32xbf16>
    %147 = vector.shape_cast %146 : vector<1x8x32xbf16> to vector<8x32xbf16>
    %148 = vector.shape_cast %145 : vector<8x32xbf16> to vector<1x8x32xbf16>
    tpu.vector_store %arg14[%c0_88, %c0_89, %c0_90], %148 {strides = array<i32>} : memref<1x8x32xbf16, #tpu.memory_space<vmem>>, vector<1x8x32xbf16>,
    return
  }
  func.func @transform_0(%arg0: i32, %arg1: i32) -> (i32, i32, i32) {
    %c0_i32 = arith.constant 0 : i32
    %c0_i32_0 = arith.constant 0 : i32
    return %arg0, %arg1, %c0_i32 : i32, i32, i32
  }
  func.func @transform_1(%arg0: i32, %arg1: i32) -> (i32, i32, i32) {
    %c0_i32 = arith.constant 0 : i32
    %c0_i32_0 = arith.constant 0 : i32
    %c0_i32_1 = arith.constant 0 : i32
    return %arg0, %c0_i32, %c0_i32_0 : i32, i32, i32
  }
  func.func @transform_2(%arg0: i32, %arg1: i32) -> (i32, i32, i32) {
    %c0_i32 = arith.constant 0 : i32
    %c0_i32_0 = arith.constant 0 : i32
    %c0_i32_1 = arith.constant 0 : i32
    %c0_i32_2 = arith.constant 0 : i32
    return %c0_i32, %c0_i32_0, %c0_i32_1 : i32, i32, i32
  }
  func.func @transform_3(%arg0: i32, %arg1: i32) -> (i32, i32, i32) {
    %c0_i32 = arith.constant 0 : i32
    %c0_i32_0 = arith.constant 0 : i32
    %c0_i32_1 = arith.constant 0 : i32
    %c0_i32_2 = arith.constant 0 : i32
    return %c0_i32, %c0_i32_0, %c0_i32_1 : i32, i32, i32
  }
  func.func @transform_4(%arg0: i32, %arg1: i32) -> (i32, i32, i32) {
    %c0_i32 = arith.constant 0 : i32
    %c0_i32_0 = arith.constant 0 : i32
    %c0_i32_1 = arith.constant 0 : i32
    %c0_i32_2 = arith.constant 0 : i32
    return %c0_i32, %c0_i32_0, %c0_i32_1 : i32, i32, i32
  }
  func.func @transform_5(%arg0: i32, %arg1: i32) -> (i32, i32, i32) {
    %c0_i32 = arith.constant 0 : i32
    %c0_i32_0 = arith.constant 0 : i32
    %c0_i32_1 = arith.constant 0 : i32
    %c0_i32_2 = arith.constant 0 : i32
    return %c0_i32, %c0_i32_0, %c0_i32_1 : i32, i32, i32
  }
  func.func @transform_6(%arg0: i32, %arg1: i32) -> (i32, i32, i32) {
    %c0_i32 = arith.constant 0 : i32
    %c0_i32_0 = arith.constant 0 : i32
    %c0_i32_1 = arith.constant 0 : i32
    %c0_i32_2 = arith.constant 0 : i32
    return %c0_i32, %c0_i32_0, %c0_i32_1 : i32, i32, i32
  }
  func.func @transform_7(%arg0: i32, %arg1: i32) -> (i32, i32, i32) {
    %c0_i32 = arith.constant 0 : i32
    %c0_i32_0 = arith.constant 0 : i32
    %c0_i32_1 = arith.constant 0 : i32
    %c0_i32_2 = arith.constant 0 : i32
    return %c0_i32, %c0_i32_0, %c0_i32_1 : i32, i32, i32
  }
  func.func @transform_8(%arg0: i32, %arg1: i32) -> (i32, i32) {
    %c0_i32 = arith.constant 0 : i32
    %c0_i32_0 = arith.constant 0 : i32
    %c0_i32_1 = arith.constant 0 : i32
    return %c0_i32, %c0_i32_0 : i32, i32
  }
  func.func @transform_9(%arg0: i32, %arg1: i32) -> (i32, i32) {
    %c0_i32 = arith.constant 0 : i32
    %c0_i32_0 = arith.constant 0 : i32
    %c0_i32_1 = arith.constant 0 : i32
    return %c0_i32, %c0_i32_0 : i32, i32
  }
  func.func @transform_10(%arg0: i32, %arg1: i32) -> (i32, i32) {
    %c0_i32 = arith.constant 0 : i32
    %c0_i32_0 = arith.constant 0 : i32
    %c0_i32_1 = arith.constant 0 : i32
    return %c0_i32, %c0_i32_0 : i32, i32
  }
  func.func @transform_11(%arg0: i32, %arg1: i32) -> (i32, i32) {
    %c0_i32 = arith.constant 0 : i32
    %c0_i32_0 = arith.constant 0 : i32
    %c0_i32_1 = arith.constant 0 : i32
    return %c0_i32, %c0_i32_0 : i32, i32
  }
  func.func @transform_12(%arg0: i32, %arg1: i32) -> (i32, i32, i32) {
    %c0_i32 = arith.constant 0 : i32
    %c0_i32_0 = arith.constant 0 : i32
    return %arg0, %arg1, %c0_i32 : i32, i32, i32
  }
}

module attributes {stable_mosaic.version = 11 : i64} {
  func.func @_mean_fc_kernel(%arg0: i32, %arg1: i32, %arg2: memref<1x8x32xbf16, #tpu.memory_space<vmem>>, %arg3: memref<32x128xbf16, #tpu.memory_space<vmem>>, %arg4: memref<1x128xf32, #tpu.memory_space<vmem>>, %arg5: memref<8x128xf32, #tpu.memory_space<vmem>>, %arg6: memref<8x32xf32, #tpu.memory_space<vmem>>) attributes {dimension_semantics = [#tpu.dimension_semantics<parallel>, #tpu.dimension_semantics<arbitrary>], iteration_bounds = array<i64: 1, 2>, scalar_prefetch = 0 : i64, scratch_operands = 1 : i64, tpu.core_type = #tpu.core_type<tc>, window_params = [{transform_indices = @transform_0, window_bounds = array<i64: 1, 8, 32>}, {pipeline_mode = #tpu.pipeline_mode<synchronous>, transform_indices = @transform_1, window_bounds = array<i64: 32, 128>}, {pipeline_mode = #tpu.pipeline_mode<synchronous>, transform_indices = @transform_2, window_bounds = array<i64: 1, 128>}, {transform_indices = @transform_3, window_bounds = array<i64: 8, 128>}]} {
    %c0_i32 = arith.constant 0 : i32
    %0 = arith.cmpi eq, %arg1, %c0_i32 : i32
    %1 = arith.extui %0 : i1 to i32
    %c0_i32_0 = arith.constant 0 : i32
    %2 = arith.cmpi ne, %1, %c0_i32_0 : i32
    scf.if %2 {
      %cst = arith.constant 0.000000e+00 : f32
      %12 = vector.broadcast %cst : f32 to vector<8x32xf32>
      %c0_8 = arith.constant 0 : index
      %c0_9 = arith.constant 0 : index
      %13 = vector.load %arg6[%c0_8, %c0_9] : memref<8x32xf32, #tpu.memory_space<vmem>>, vector<8x32xf32>
      tpu.vector_store %arg6[%c0_8, %c0_9], %12 {strides = array<i32>} : memref<8x32xf32, #tpu.memory_space<vmem>>, vector<8x32xf32>,
    } else {
    }
    %c0 = arith.constant 0 : index
    %c0_1 = arith.constant 0 : index
    %3 = vector.load %arg6[%c0, %c0_1] : memref<8x32xf32, #tpu.memory_space<vmem>>, vector<8x32xf32>
    %c0_2 = arith.constant 0 : index
    %c0_3 = arith.constant 0 : index
    %c0_4 = arith.constant 0 : index
    %4 = vector.load %arg2[%c0_2, %c0_3, %c0_4] : memref<1x8x32xbf16, #tpu.memory_space<vmem>>, vector<1x8x32xbf16>
    %5 = vector.shape_cast %4 : vector<1x8x32xbf16> to vector<8x32xbf16>
    %6 = arith.extf %5 : vector<8x32xbf16> to vector<8x32xf32>
    %7 = arith.addf %3, %6 : vector<8x32xf32>
    %c0_5 = arith.constant 0 : index
    %c0_6 = arith.constant 0 : index
    %8 = vector.load %arg6[%c0_5, %c0_6] : memref<8x32xf32, #tpu.memory_space<vmem>>, vector<8x32xf32>
    tpu.vector_store %arg6[%c0_5, %c0_6], %7 {strides = array<i32>} : memref<8x32xf32, #tpu.memory_space<vmem>>, vector<8x32xf32>,
    %c1_i32 = arith.constant 1 : i32
    %9 = arith.cmpi eq, %arg1, %c1_i32 : i32
    %10 = arith.extui %9 : i1 to i32
    %c0_i32_7 = arith.constant 0 : i32
    %11 = arith.cmpi ne, %10, %c0_i32_7 : i32
    scf.if %11 {
      %c0_8 = arith.constant 0 : index
      %c0_9 = arith.constant 0 : index
      %12 = vector.load %arg6[%c0_8, %c0_9] : memref<8x32xf32, #tpu.memory_space<vmem>>, vector<8x32xf32>
      %cst = arith.constant 5.000000e-01 : f32
      %13 = vector.broadcast %cst : f32 to vector<8x32xf32>
      %14 = arith.mulf %12, %13 : vector<8x32xf32>
      %15 = arith.truncf %14 : vector<8x32xf32> to vector<8x32xbf16>
      %c0_10 = arith.constant 0 : index
      %c0_11 = arith.constant 0 : index
      %16 = vector.load %arg3[%c0_10, %c0_11] : memref<32x128xbf16, #tpu.memory_space<vmem>>, vector<32x128xbf16>
      %cst_12 = arith.constant dense<0.000000e+00> : vector<8x128xf32>
      %17 = tpu.matmul %15, %16, %cst_12 {dimension_numbers = #tpu.dot_dimension_numbers<[1], [0], [0], [1], [0, 0, 1, 1], [], []>} : vector<8x32xbf16>, vector<32x128xbf16>, vector<8x128xf32> -> vector<8x128xf32>
      %c0_13 = arith.constant 0 : index
      %c0_14 = arith.constant 0 : index
      %18 = vector.load %arg4[%c0_13, %c0_14] : memref<1x128xf32, #tpu.memory_space<vmem>>, vector<1x128xf32>
      %19 = vector.broadcast %18 : vector<1x128xf32> to vector<8x128xf32>
      %20 = arith.addf %17, %19 : vector<8x128xf32>
      %c0_15 = arith.constant 0 : index
      %c0_16 = arith.constant 0 : index
      %21 = vector.load %arg5[%c0_15, %c0_16] : memref<8x128xf32, #tpu.memory_space<vmem>>, vector<8x128xf32>
      tpu.vector_store %arg5[%c0_15, %c0_16], %20 {strides = array<i32>} : memref<8x128xf32, #tpu.memory_space<vmem>>, vector<8x128xf32>,
    } else {
    }
    return
  }
  func.func @transform_0(%arg0: i32, %arg1: i32) -> (i32, i32, i32) {
    %c0_i32 = arith.constant 0 : i32
    %c0_i32_0 = arith.constant 0 : i32
    return %arg1, %arg0, %c0_i32 : i32, i32, i32
  }
  func.func @transform_1(%arg0: i32, %arg1: i32) -> (i32, i32) {
    %c0_i32 = arith.constant 0 : i32
    %c0_i32_0 = arith.constant 0 : i32
    %c0_i32_1 = arith.constant 0 : i32
    return %c0_i32, %c0_i32_0 : i32, i32
  }
  func.func @transform_2(%arg0: i32, %arg1: i32) -> (i32, i32) {
    %c0_i32 = arith.constant 0 : i32
    %c0_i32_0 = arith.constant 0 : i32
    %c0_i32_1 = arith.constant 0 : i32
    return %c0_i32, %c0_i32_0 : i32, i32
  }
  func.func @transform_3(%arg0: i32, %arg1: i32) -> (i32, i32) {
    %c0_i32 = arith.constant 0 : i32
    %c0_i32_0 = arith.constant 0 : i32
    return %arg0, %c0_i32 : i32, i32
  }
}

module attributes {stable_mosaic.version = 11 : i64} {
  func.func @_linear_kernel(%arg0: i32, %arg1: memref<16x16xbf16, #tpu.memory_space<vmem>>, %arg2: memref<16x32xbf16, #tpu.memory_space<vmem>>, %arg3: memref<1x32xf32, #tpu.memory_space<vmem>>, %arg4: memref<16x32xbf16, #tpu.memory_space<vmem>>) attributes {dimension_semantics = [#tpu.dimension_semantics<parallel>], iteration_bounds = array<i64: 1>, scalar_prefetch = 0 : i64, scratch_operands = 0 : i64, tpu.core_type = #tpu.core_type<tc>, window_params = [{transform_indices = @transform_0, window_bounds = array<i64: 16, 16>}, {pipeline_mode = #tpu.pipeline_mode<synchronous>, transform_indices = @transform_1, window_bounds = array<i64: 16, 32>}, {pipeline_mode = #tpu.pipeline_mode<synchronous>, transform_indices = @transform_2, window_bounds = array<i64: 1, 32>}, {transform_indices = @transform_3, window_bounds = array<i64: 16, 32>}]} {
    %c0 = arith.constant 0 : index
    %c0_0 = arith.constant 0 : index
    %0 = vector.load %arg1[%c0, %c0_0] : memref<16x16xbf16, #tpu.memory_space<vmem>>, vector<16x16xbf16>
    %c0_1 = arith.constant 0 : index
    %c0_2 = arith.constant 0 : index
    %1 = vector.load %arg2[%c0_1, %c0_2] : memref<16x32xbf16, #tpu.memory_space<vmem>>, vector<16x32xbf16>
    %cst = arith.constant dense<0.000000e+00> : vector<16x32xf32>
    %2 = tpu.matmul %0, %1, %cst {dimension_numbers = #tpu.dot_dimension_numbers<[1], [0], [0], [1], [0, 0, 1, 1], [], []>} : vector<16x16xbf16>, vector<16x32xbf16>, vector<16x32xf32> -> vector<16x32xf32>
    %c0_3 = arith.constant 0 : index
    %c0_4 = arith.constant 0 : index
    %3 = vector.load %arg3[%c0_3, %c0_4] : memref<1x32xf32, #tpu.memory_space<vmem>>, vector<1x32xf32>
    %4 = vector.broadcast %3 : vector<1x32xf32> to vector<16x32xf32>
    %5 = arith.addf %2, %4 : vector<16x32xf32>
    %cst_5 = arith.constant 0.000000e+00 : f32
    %6 = vector.broadcast %cst_5 : f32 to vector<16x32xf32>
    %7 = arith.maximumf %5, %6 : vector<16x32xf32>
    %8 = arith.truncf %7 : vector<16x32xf32> to vector<16x32xbf16>
    %c0_6 = arith.constant 0 : index
    %c0_7 = arith.constant 0 : index
    %9 = vector.load %arg4[%c0_6, %c0_7] : memref<16x32xbf16, #tpu.memory_space<vmem>>, vector<16x32xbf16>
    tpu.vector_store %arg4[%c0_6, %c0_7], %8 {strides = array<i32>} : memref<16x32xbf16, #tpu.memory_space<vmem>>, vector<16x32xbf16>,
    return
  }
  func.func @transform_0(%arg0: i32) -> (i32, i32) {
    %c0_i32 = arith.constant 0 : i32
    %c0_i32_0 = arith.constant 0 : i32
    return %arg0, %c0_i32 : i32, i32
  }
  func.func @transform_1(%arg0: i32) -> (i32, i32) {
    %c0_i32 = arith.constant 0 : i32
    %c0_i32_0 = arith.constant 0 : i32
    %c0_i32_1 = arith.constant 0 : i32
    return %c0_i32, %c0_i32_0 : i32, i32
  }
  func.func @transform_2(%arg0: i32) -> (i32, i32) {
    %c0_i32 = arith.constant 0 : i32
    %c0_i32_0 = arith.constant 0 : i32
    %c0_i32_1 = arith.constant 0 : i32
    return %c0_i32, %c0_i32_0 : i32, i32
  }
  func.func @transform_3(%arg0: i32) -> (i32, i32) {
    %c0_i32 = arith.constant 0 : i32
    %c0_i32_0 = arith.constant 0 : i32
    return %arg0, %c0_i32 : i32, i32
  }
}

module attributes {stable_mosaic.version = 11 : i64} {
  func.func @_attn_add_ln_kernel(%arg0: i32, %arg1: i32, %arg2: memref<1x8x32xbf16, #tpu.memory_space<vmem>>, %arg3: memref<1x8x32xbf16, #tpu.memory_space<vmem>>, %arg4: memref<4x32x8xbf16, #tpu.memory_space<vmem>>, %arg5: memref<4x1x8xf32, #tpu.memory_space<vmem>>, %arg6: memref<4x32x8xbf16, #tpu.memory_space<vmem>>, %arg7: memref<4x1x8xf32, #tpu.memory_space<vmem>>, %arg8: memref<4x32x8xbf16, #tpu.memory_space<vmem>>, %arg9: memref<4x1x8xf32, #tpu.memory_space<vmem>>, %arg10: memref<32x32xbf16, #tpu.memory_space<vmem>>, %arg11: memref<1x32xf32, #tpu.memory_space<vmem>>, %arg12: memref<1x32xf32, #tpu.memory_space<vmem>>, %arg13: memref<1x32xf32, #tpu.memory_space<vmem>>, %arg14: memref<1x8x32xbf16, #tpu.memory_space<vmem>>, %arg15: memref<4x8x8xbf16, #tpu.memory_space<vmem>>, %arg16: memref<4x8x8xbf16, #tpu.memory_space<vmem>>, %arg17: memref<8x32xbf16, #tpu.memory_space<vmem>>) attributes {dimension_semantics = [#tpu.dimension_semantics<parallel>, #tpu.dimension_semantics<arbitrary>], iteration_bounds = array<i64: 2, 1>, scalar_prefetch = 0 : i64, scratch_operands = 3 : i64, tpu.core_type = #tpu.core_type<tc>, window_params = [{transform_indices = @transform_0, window_bounds = array<i64: 1, 8, 32>}, {transform_indices = @transform_1, window_bounds = array<i64: 1, 8, 32>}, {pipeline_mode = #tpu.pipeline_mode<synchronous>, transform_indices = @transform_2, window_bounds = array<i64: 4, 32, 8>}, {pipeline_mode = #tpu.pipeline_mode<synchronous>, transform_indices = @transform_3, window_bounds = array<i64: 4, 1, 8>}, {pipeline_mode = #tpu.pipeline_mode<synchronous>, transform_indices = @transform_4, window_bounds = array<i64: 4, 32, 8>}, {pipeline_mode = #tpu.pipeline_mode<synchronous>, transform_indices = @transform_5, window_bounds = array<i64: 4, 1, 8>}, {pipeline_mode = #tpu.pipeline_mode<synchronous>, transform_indices = @transform_6, window_bounds = array<i64: 4, 32, 8>}, {pipeline_mode = #tpu.pipeline_mode<synchronous>, transform_indices = @transform_7, window_bounds = array<i64: 4, 1, 8>}, {pipeline_mode = #tpu.pipeline_mode<synchronous>, transform_indices = @transform_8, window_bounds = array<i64: 32, 32>}, {pipeline_mode = #tpu.pipeline_mode<synchronous>, transform_indices = @transform_9, window_bounds = array<i64: 1, 32>}, {pipeline_mode = #tpu.pipeline_mode<synchronous>, transform_indices = @transform_10, window_bounds = array<i64: 1, 32>}, {pipeline_mode = #tpu.pipeline_mode<synchronous>, transform_indices = @transform_11, window_bounds = array<i64: 1, 32>}, {transform_indices = @transform_12, window_bounds = array<i64: 1, 8, 32>}]} {
    %c0_i32 = arith.constant 0 : i32
    %0 = arith.cmpi eq, %arg1, %c0_i32 : i32
    %1 = arith.extui %0 : i1 to i32
    %c0_i32_0 = arith.constant 0 : i32
    %2 = arith.cmpi ne, %1, %c0_i32_0 : i32
    scf.if %2 {
      %c0_91 = arith.constant 0 : index
      %c0_92 = arith.constant 0 : index
      %c0_93 = arith.constant 0 : index
      %149 = vector.load %arg3[%c0_91, %c0_92, %c0_93] : memref<1x8x32xbf16, #tpu.memory_space<vmem>>, vector<1x8x32xbf16>
      %150 = vector.shape_cast %149 : vector<1x8x32xbf16> to vector<8x32xbf16>
      %c0_94 = arith.constant 0 : index
      %c0_95 = arith.constant 0 : index
      %c0_96 = arith.constant 0 : index
      %151 = vector.load %arg6[%c0_94, %c0_95, %c0_96] : memref<4x32x8xbf16, #tpu.memory_space<vmem>>, vector<1x32x8xbf16>
      %152 = vector.shape_cast %151 : vector<1x32x8xbf16> to vector<32x8xbf16>
      %cst_97 = arith.constant dense<0.000000e+00> : vector<8x8xf32>
      %153 = tpu.matmul %150, %152, %cst_97 {dimension_numbers = #tpu.dot_dimension_numbers<[1], [0], [0], [1], [0, 0, 1, 1], [], []>} : vector<8x32xbf16>, vector<32x8xbf16>, vector<8x8xf32> -> vector<8x8xf32>
      %c0_98 = arith.constant 0 : index
      %c0_99 = arith.constant 0 : index
      %c0_100 = arith.constant 0 : index
      %154 = vector.load %arg7[%c0_98, %c0_99, %c0_100] : memref<4x1x8xf32, #tpu.memory_space<vmem>>, vector<1x1x8xf32>
      %155 = vector.shape_cast %154 : vector<1x1x8xf32> to vector<1x8xf32>
      %156 = vector.broadcast %155 : vector<1x8xf32> to vector<8x8xf32>
      %157 = arith.addf %153, %156 : vector<8x8xf32>
      %158 = arith.truncf %157 : vector<8x8xf32> to vector<8x8xbf16>
      %c0_101 = arith.constant 0 : index
      %c0_102 = arith.constant 0 : index
      %c0_103 = arith.constant 0 : index
      %159 = vector.load %arg15[%c0_101, %c0_102, %c0_103] : memref<4x8x8xbf16, #tpu.memory_space<vmem>>, vector<1x8x8xbf16>
      %160 = vector.shape_cast %159 : vector<1x8x8xbf16> to vector<8x8xbf16>
      %161 = vector.shape_cast %158 : vector<8x8xbf16> to vector<1x8x8xbf16>
      tpu.vector_store %arg15[%c0_101, %c0_102, %c0_103], %161 {strides = array<i32>} : memref<4x8x8xbf16, #tpu.memory_space<vmem>>, vector<1x8x8xbf16>,
      %c0_104 = arith.constant 0 : index
      %c0_105 = arith.constant 0 : index
      %c0_106 = arith.constant 0 : index
      %162 = vector.load %arg8[%c0_104, %c0_105, %c0_106] : memref<4x32x8xbf16, #tpu.memory_space<vmem>>, vector<1x32x8xbf16>
      %163 = vector.shape_cast %162 : vector<1x32x8xbf16> to vector<32x8xbf16>
      %cst_107 = arith.constant dense<0.000000e+00> : vector<8x8xf32>
      %164 = tpu.matmul %150, %163, %cst_107 {dimension_numbers = #tpu.dot_dimension_numbers<[1], [0], [0], [1], [0, 0, 1, 1], [], []>} : vector<8x32xbf16>, vector<32x8xbf16>, vector<8x8xf32> -> vector<8x8xf32>
      %c0_108 = arith.constant 0 : index
      %c0_109 = arith.constant 0 : index
      %c0_110 = arith.constant 0 : index
      %165 = vector.load %arg9[%c0_108, %c0_109, %c0_110] : memref<4x1x8xf32, #tpu.memory_space<vmem>>, vector<1x1x8xf32>
      %166 = vector.shape_cast %165 : vector<1x1x8xf32> to vector<1x8xf32>
      %167 = vector.broadcast %166 : vector<1x8xf32> to vector<8x8xf32>
      %168 = arith.addf %164, %167 : vector<8x8xf32>
      %169 = arith.truncf %168 : vector<8x8xf32> to vector<8x8xbf16>
      %c0_111 = arith.constant 0 : index
      %c0_112 = arith.constant 0 : index
      %c0_113 = arith.constant 0 : index
      %170 = vector.load %arg16[%c0_111, %c0_112, %c0_113] : memref<4x8x8xbf16, #tpu.memory_space<vmem>>, vector<1x8x8xbf16>
      %171 = vector.shape_cast %170 : vector<1x8x8xbf16> to vector<8x8xbf16>
      %172 = vector.shape_cast %169 : vector<8x8xbf16> to vector<1x8x8xbf16>
      tpu.vector_store %arg16[%c0_111, %c0_112, %c0_113], %172 {strides = array<i32>} : memref<4x8x8xbf16, #tpu.memory_space<vmem>>, vector<1x8x8xbf16>,
      %c1_114 = arith.constant 1 : index
      %c0_115 = arith.constant 0 : index
      %c0_116 = arith.constant 0 : index
      %173 = vector.load %arg6[%c1_114, %c0_115, %c0_116] : memref<4x32x8xbf16, #tpu.memory_space<vmem>>, vector<1x32x8xbf16>
      %174 = vector.shape_cast %173 : vector<1x32x8xbf16> to vector<32x8xbf16>
      %cst_117 = arith.constant dense<0.000000e+00> : vector<8x8xf32>
      %175 = tpu.matmul %150, %174, %cst_117 {dimension_numbers = #tpu.dot_dimension_numbers<[1], [0], [0], [1], [0, 0, 1, 1], [], []>} : vector<8x32xbf16>, vector<32x8xbf16>, vector<8x8xf32> -> vector<8x8xf32>
      %c1_118 = arith.constant 1 : index
      %c0_119 = arith.constant 0 : index
      %c0_120 = arith.constant 0 : index
      %176 = vector.load %arg7[%c1_118, %c0_119, %c0_120] : memref<4x1x8xf32, #tpu.memory_space<vmem>>, vector<1x1x8xf32>
      %177 = vector.shape_cast %176 : vector<1x1x8xf32> to vector<1x8xf32>
      %178 = vector.broadcast %177 : vector<1x8xf32> to vector<8x8xf32>
      %179 = arith.addf %175, %178 : vector<8x8xf32>
      %180 = arith.truncf %179 : vector<8x8xf32> to vector<8x8xbf16>
      %c1_121 = arith.constant 1 : index
      %c0_122 = arith.constant 0 : index
      %c0_123 = arith.constant 0 : index
      %181 = vector.load %arg15[%c1_121, %c0_122, %c0_123] : memref<4x8x8xbf16, #tpu.memory_space<vmem>>, vector<1x8x8xbf16>
      %182 = vector.shape_cast %181 : vector<1x8x8xbf16> to vector<8x8xbf16>
      %183 = vector.shape_cast %180 : vector<8x8xbf16> to vector<1x8x8xbf16>
      tpu.vector_store %arg15[%c1_121, %c0_122, %c0_123], %183 {strides = array<i32>} : memref<4x8x8xbf16, #tpu.memory_space<vmem>>, vector<1x8x8xbf16>,
      %c1_124 = arith.constant 1 : index
      %c0_125 = arith.constant 0 : index
      %c0_126 = arith.constant 0 : index
      %184 = vector.load %arg8[%c1_124, %c0_125, %c0_126] : memref<4x32x8xbf16, #tpu.memory_space<vmem>>, vector<1x32x8xbf16>
      %185 = vector.shape_cast %184 : vector<1x32x8xbf16> to vector<32x8xbf16>
      %cst_127 = arith.constant dense<0.000000e+00> : vector<8x8xf32>
      %186 = tpu.matmul %150, %185, %cst_127 {dimension_numbers = #tpu.dot_dimension_numbers<[1], [0], [0], [1], [0, 0, 1, 1], [], []>} : vector<8x32xbf16>, vector<32x8xbf16>, vector<8x8xf32> -> vector<8x8xf32>
      %c1_128 = arith.constant 1 : index
      %c0_129 = arith.constant 0 : index
      %c0_130 = arith.constant 0 : index
      %187 = vector.load %arg9[%c1_128, %c0_129, %c0_130] : memref<4x1x8xf32, #tpu.memory_space<vmem>>, vector<1x1x8xf32>
      %188 = vector.shape_cast %187 : vector<1x1x8xf32> to vector<1x8xf32>
      %189 = vector.broadcast %188 : vector<1x8xf32> to vector<8x8xf32>
      %190 = arith.addf %186, %189 : vector<8x8xf32>
      %191 = arith.truncf %190 : vector<8x8xf32> to vector<8x8xbf16>
      %c1_131 = arith.constant 1 : index
      %c0_132 = arith.constant 0 : index
      %c0_133 = arith.constant 0 : index
      %192 = vector.load %arg16[%c1_131, %c0_132, %c0_133] : memref<4x8x8xbf16, #tpu.memory_space<vmem>>, vector<1x8x8xbf16>
      %193 = vector.shape_cast %192 : vector<1x8x8xbf16> to vector<8x8xbf16>
      %194 = vector.shape_cast %191 : vector<8x8xbf16> to vector<1x8x8xbf16>
      tpu.vector_store %arg16[%c1_131, %c0_132, %c0_133], %194 {strides = array<i32>} : memref<4x8x8xbf16, #tpu.memory_space<vmem>>, vector<1x8x8xbf16>,
      %c2_134 = arith.constant 2 : index
      %c0_135 = arith.constant 0 : index
      %c0_136 = arith.constant 0 : index
      %195 = vector.load %arg6[%c2_134, %c0_135, %c0_136] : memref<4x32x8xbf16, #tpu.memory_space<vmem>>, vector<1x32x8xbf16>
      %196 = vector.shape_cast %195 : vector<1x32x8xbf16> to vector<32x8xbf16>
      %cst_137 = arith.constant dense<0.000000e+00> : vector<8x8xf32>
      %197 = tpu.matmul %150, %196, %cst_137 {dimension_numbers = #tpu.dot_dimension_numbers<[1], [0], [0], [1], [0, 0, 1, 1], [], []>} : vector<8x32xbf16>, vector<32x8xbf16>, vector<8x8xf32> -> vector<8x8xf32>
      %c2_138 = arith.constant 2 : index
      %c0_139 = arith.constant 0 : index
      %c0_140 = arith.constant 0 : index
      %198 = vector.load %arg7[%c2_138, %c0_139, %c0_140] : memref<4x1x8xf32, #tpu.memory_space<vmem>>, vector<1x1x8xf32>
      %199 = vector.shape_cast %198 : vector<1x1x8xf32> to vector<1x8xf32>
      %200 = vector.broadcast %199 : vector<1x8xf32> to vector<8x8xf32>
      %201 = arith.addf %197, %200 : vector<8x8xf32>
      %202 = arith.truncf %201 : vector<8x8xf32> to vector<8x8xbf16>
      %c2_141 = arith.constant 2 : index
      %c0_142 = arith.constant 0 : index
      %c0_143 = arith.constant 0 : index
      %203 = vector.load %arg15[%c2_141, %c0_142, %c0_143] : memref<4x8x8xbf16, #tpu.memory_space<vmem>>, vector<1x8x8xbf16>
      %204 = vector.shape_cast %203 : vector<1x8x8xbf16> to vector<8x8xbf16>
      %205 = vector.shape_cast %202 : vector<8x8xbf16> to vector<1x8x8xbf16>
      tpu.vector_store %arg15[%c2_141, %c0_142, %c0_143], %205 {strides = array<i32>} : memref<4x8x8xbf16, #tpu.memory_space<vmem>>, vector<1x8x8xbf16>,
      %c2_144 = arith.constant 2 : index
      %c0_145 = arith.constant 0 : index
      %c0_146 = arith.constant 0 : index
      %206 = vector.load %arg8[%c2_144, %c0_145, %c0_146] : memref<4x32x8xbf16, #tpu.memory_space<vmem>>, vector<1x32x8xbf16>
      %207 = vector.shape_cast %206 : vector<1x32x8xbf16> to vector<32x8xbf16>
      %cst_147 = arith.constant dense<0.000000e+00> : vector<8x8xf32>
      %208 = tpu.matmul %150, %207, %cst_147 {dimension_numbers = #tpu.dot_dimension_numbers<[1], [0], [0], [1], [0, 0, 1, 1], [], []>} : vector<8x32xbf16>, vector<32x8xbf16>, vector<8x8xf32> -> vector<8x8xf32>
      %c2_148 = arith.constant 2 : index
      %c0_149 = arith.constant 0 : index
      %c0_150 = arith.constant 0 : index
      %209 = vector.load %arg9[%c2_148, %c0_149, %c0_150] : memref<4x1x8xf32, #tpu.memory_space<vmem>>, vector<1x1x8xf32>
      %210 = vector.shape_cast %209 : vector<1x1x8xf32> to vector<1x8xf32>
      %211 = vector.broadcast %210 : vector<1x8xf32> to vector<8x8xf32>
      %212 = arith.addf %208, %211 : vector<8x8xf32>
      %213 = arith.truncf %212 : vector<8x8xf32> to vector<8x8xbf16>
      %c2_151 = arith.constant 2 : index
      %c0_152 = arith.constant 0 : index
      %c0_153 = arith.constant 0 : index
      %214 = vector.load %arg16[%c2_151, %c0_152, %c0_153] : memref<4x8x8xbf16, #tpu.memory_space<vmem>>, vector<1x8x8xbf16>
      %215 = vector.shape_cast %214 : vector<1x8x8xbf16> to vector<8x8xbf16>
      %216 = vector.shape_cast %213 : vector<8x8xbf16> to vector<1x8x8xbf16>
      tpu.vector_store %arg16[%c2_151, %c0_152, %c0_153], %216 {strides = array<i32>} : memref<4x8x8xbf16, #tpu.memory_space<vmem>>, vector<1x8x8xbf16>,
      %c3_154 = arith.constant 3 : index
      %c0_155 = arith.constant 0 : index
      %c0_156 = arith.constant 0 : index
      %217 = vector.load %arg6[%c3_154, %c0_155, %c0_156] : memref<4x32x8xbf16, #tpu.memory_space<vmem>>, vector<1x32x8xbf16>
      %218 = vector.shape_cast %217 : vector<1x32x8xbf16> to vector<32x8xbf16>
      %cst_157 = arith.constant dense<0.000000e+00> : vector<8x8xf32>
      %219 = tpu.matmul %150, %218, %cst_157 {dimension_numbers = #tpu.dot_dimension_numbers<[1], [0], [0], [1], [0, 0, 1, 1], [], []>} : vector<8x32xbf16>, vector<32x8xbf16>, vector<8x8xf32> -> vector<8x8xf32>
      %c3_158 = arith.constant 3 : index
      %c0_159 = arith.constant 0 : index
      %c0_160 = arith.constant 0 : index
      %220 = vector.load %arg7[%c3_158, %c0_159, %c0_160] : memref<4x1x8xf32, #tpu.memory_space<vmem>>, vector<1x1x8xf32>
      %221 = vector.shape_cast %220 : vector<1x1x8xf32> to vector<1x8xf32>
      %222 = vector.broadcast %221 : vector<1x8xf32> to vector<8x8xf32>
      %223 = arith.addf %219, %222 : vector<8x8xf32>
      %224 = arith.truncf %223 : vector<8x8xf32> to vector<8x8xbf16>
      %c3_161 = arith.constant 3 : index
      %c0_162 = arith.constant 0 : index
      %c0_163 = arith.constant 0 : index
      %225 = vector.load %arg15[%c3_161, %c0_162, %c0_163] : memref<4x8x8xbf16, #tpu.memory_space<vmem>>, vector<1x8x8xbf16>
      %226 = vector.shape_cast %225 : vector<1x8x8xbf16> to vector<8x8xbf16>
      %227 = vector.shape_cast %224 : vector<8x8xbf16> to vector<1x8x8xbf16>
      tpu.vector_store %arg15[%c3_161, %c0_162, %c0_163], %227 {strides = array<i32>} : memref<4x8x8xbf16, #tpu.memory_space<vmem>>, vector<1x8x8xbf16>,
      %c3_164 = arith.constant 3 : index
      %c0_165 = arith.constant 0 : index
      %c0_166 = arith.constant 0 : index
      %228 = vector.load %arg8[%c3_164, %c0_165, %c0_166] : memref<4x32x8xbf16, #tpu.memory_space<vmem>>, vector<1x32x8xbf16>
      %229 = vector.shape_cast %228 : vector<1x32x8xbf16> to vector<32x8xbf16>
      %cst_167 = arith.constant dense<0.000000e+00> : vector<8x8xf32>
      %230 = tpu.matmul %150, %229, %cst_167 {dimension_numbers = #tpu.dot_dimension_numbers<[1], [0], [0], [1], [0, 0, 1, 1], [], []>} : vector<8x32xbf16>, vector<32x8xbf16>, vector<8x8xf32> -> vector<8x8xf32>
      %c3_168 = arith.constant 3 : index
      %c0_169 = arith.constant 0 : index
      %c0_170 = arith.constant 0 : index
      %231 = vector.load %arg9[%c3_168, %c0_169, %c0_170] : memref<4x1x8xf32, #tpu.memory_space<vmem>>, vector<1x1x8xf32>
      %232 = vector.shape_cast %231 : vector<1x1x8xf32> to vector<1x8xf32>
      %233 = vector.broadcast %232 : vector<1x8xf32> to vector<8x8xf32>
      %234 = arith.addf %230, %233 : vector<8x8xf32>
      %235 = arith.truncf %234 : vector<8x8xf32> to vector<8x8xbf16>
      %c3_171 = arith.constant 3 : index
      %c0_172 = arith.constant 0 : index
      %c0_173 = arith.constant 0 : index
      %236 = vector.load %arg16[%c3_171, %c0_172, %c0_173] : memref<4x8x8xbf16, #tpu.memory_space<vmem>>, vector<1x8x8xbf16>
      %237 = vector.shape_cast %236 : vector<1x8x8xbf16> to vector<8x8xbf16>
      %238 = vector.shape_cast %235 : vector<8x8xbf16> to vector<1x8x8xbf16>
      tpu.vector_store %arg16[%c3_171, %c0_172, %c0_173], %238 {strides = array<i32>} : memref<4x8x8xbf16, #tpu.memory_space<vmem>>, vector<1x8x8xbf16>,
    } else {
    }
    %c0 = arith.constant 0 : index
    %c0_1 = arith.constant 0 : index
    %c0_2 = arith.constant 0 : index
    %3 = vector.load %arg2[%c0, %c0_1, %c0_2] : memref<1x8x32xbf16, #tpu.memory_space<vmem>>, vector<1x8x32xbf16>
    %4 = vector.shape_cast %3 : vector<1x8x32xbf16> to vector<8x32xbf16>
    %c0_3 = arith.constant 0 : index
    %c0_4 = arith.constant 0 : index
    %c0_5 = arith.constant 0 : index
    %5 = vector.load %arg4[%c0_3, %c0_4, %c0_5] : memref<4x32x8xbf16, #tpu.memory_space<vmem>>, vector<1x32x8xbf16>
    %6 = vector.shape_cast %5 : vector<1x32x8xbf16> to vector<32x8xbf16>
    %cst = arith.constant dense<0.000000e+00> : vector<8x8xf32>
    %7 = tpu.matmul %4, %6, %cst {dimension_numbers = #tpu.dot_dimension_numbers<[1], [0], [0], [1], [0, 0, 1, 1], [], []>} : vector<8x32xbf16>, vector<32x8xbf16>, vector<8x8xf32> -> vector<8x8xf32>
    %c0_6 = arith.constant 0 : index
    %c0_7 = arith.constant 0 : index
    %c0_8 = arith.constant 0 : index
    %8 = vector.load %arg5[%c0_6, %c0_7, %c0_8] : memref<4x1x8xf32, #tpu.memory_space<vmem>>, vector<1x1x8xf32>
    %9 = vector.shape_cast %8 : vector<1x1x8xf32> to vector<1x8xf32>
    %10 = vector.broadcast %9 : vector<1x8xf32> to vector<8x8xf32>
    %11 = arith.addf %7, %10 : vector<8x8xf32>
    %12 = arith.truncf %11 : vector<8x8xf32> to vector<8x8xbf16>
    %c0_9 = arith.constant 0 : index
    %c0_10 = arith.constant 0 : index
    %c0_11 = arith.constant 0 : index
    %13 = vector.load %arg15[%c0_9, %c0_10, %c0_11] : memref<4x8x8xbf16, #tpu.memory_space<vmem>>, vector<1x8x8xbf16>
    %14 = vector.shape_cast %13 : vector<1x8x8xbf16> to vector<8x8xbf16>
    %cst_12 = arith.constant dense<0.000000e+00> : vector<8x8xf32>
    %15 = tpu.matmul %12, %14, %cst_12 {dimension_numbers = #tpu.dot_dimension_numbers<[1], [1], [0], [0], [0, 0, 1, 0], [], []>} : vector<8x8xbf16>, vector<8x8xbf16>, vector<8x8xf32> -> vector<8x8xf32>
    %cst_13 = arith.constant dense<0xFF800000> : vector<8xf32>
    %16 = vector.multi_reduction <maximumf>, %15, %cst_13 [1] : vector<8x8xf32> to vector<8xf32>
    %17 = vector.shape_cast %16 : vector<8xf32> to vector<8x1xf32>
    %18 = vector.broadcast %17 : vector<8x1xf32> to vector<8x8xf32>
    %19 = arith.subf %15, %18 : vector<8x8xf32>
    %20 = math.exp %19 : vector<8x8xf32>
    %cst_14 = arith.constant dense<0.000000e+00> : vector<8xf32>
    %21 = vector.multi_reduction <add>, %20, %cst_14 [1] : vector<8x8xf32> to vector<8xf32>
    %22 = vector.shape_cast %21 : vector<8xf32> to vector<8x1xf32>
    %23 = tpu.reciprocal %22 {approx = true} : vector<8x1xf32> -> vector<8x1xf32>
    %24 = vector.broadcast %23 : vector<8x1xf32> to vector<8x8xf32>
    %25 = arith.mulf %20, %24 : vector<8x8xf32>
    %26 = arith.truncf %25 : vector<8x8xf32> to vector<8x8xbf16>
    %c0_15 = arith.constant 0 : index
    %c0_16 = arith.constant 0 : index
    %c0_17 = arith.constant 0 : index
    %27 = vector.load %arg16[%c0_15, %c0_16, %c0_17] : memref<4x8x8xbf16, #tpu.memory_space<vmem>>, vector<1x8x8xbf16>
    %28 = vector.shape_cast %27 : vector<1x8x8xbf16> to vector<8x8xbf16>
    %cst_18 = arith.constant dense<0.000000e+00> : vector<8x8xf32>
    %29 = tpu.matmul %26, %28, %cst_18 {dimension_numbers = #tpu.dot_dimension_numbers<[1], [0], [0], [1], [0, 0, 1, 1], [], []>} : vector<8x8xbf16>, vector<8x8xbf16>, vector<8x8xf32> -> vector<8x8xf32>
    %30 = arith.truncf %29 : vector<8x8xf32> to vector<8x8xbf16>
    %c0_19 = arith.constant 0 : index
    %c0_20 = arith.constant 0 : index
    %31 = vector.load %arg17[%c0_19, %c0_20] : memref<8x32xbf16, #tpu.memory_space<vmem>>, vector<8x8xbf16>
    tpu.vector_store %arg17[%c0_19, %c0_20], %30 {strides = array<i32>} : memref<8x32xbf16, #tpu.memory_space<vmem>>, vector<8x8xbf16>,
    %c1 = arith.constant 1 : index
    %c0_21 = arith.constant 0 : index
    %c0_22 = arith.constant 0 : index
    %32 = vector.load %arg4[%c1, %c0_21, %c0_22] : memref<4x32x8xbf16, #tpu.memory_space<vmem>>, vector<1x32x8xbf16>
    %33 = vector.shape_cast %32 : vector<1x32x8xbf16> to vector<32x8xbf16>
    %cst_23 = arith.constant dense<0.000000e+00> : vector<8x8xf32>
    %34 = tpu.matmul %4, %33, %cst_23 {dimension_numbers = #tpu.dot_dimension_numbers<[1], [0], [0], [1], [0, 0, 1, 1], [], []>} : vector<8x32xbf16>, vector<32x8xbf16>, vector<8x8xf32> -> vector<8x8xf32>
    %c1_24 = arith.constant 1 : index
    %c0_25 = arith.constant 0 : index
    %c0_26 = arith.constant 0 : index
    %35 = vector.load %arg5[%c1_24, %c0_25, %c0_26] : memref<4x1x8xf32, #tpu.memory_space<vmem>>, vector<1x1x8xf32>
    %36 = vector.shape_cast %35 : vector<1x1x8xf32> to vector<1x8xf32>
    %37 = vector.broadcast %36 : vector<1x8xf32> to vector<8x8xf32>
    %38 = arith.addf %34, %37 : vector<8x8xf32>
    %39 = arith.truncf %38 : vector<8x8xf32> to vector<8x8xbf16>
    %c1_27 = arith.constant 1 : index
    %c0_28 = arith.constant 0 : index
    %c0_29 = arith.constant 0 : index
    %40 = vector.load %arg15[%c1_27, %c0_28, %c0_29] : memref<4x8x8xbf16, #tpu.memory_space<vmem>>, vector<1x8x8xbf16>
    %41 = vector.shape_cast %40 : vector<1x8x8xbf16> to vector<8x8xbf16>
    %cst_30 = arith.constant dense<0.000000e+00> : vector<8x8xf32>
    %42 = tpu.matmul %39, %41, %cst_30 {dimension_numbers = #tpu.dot_dimension_numbers<[1], [1], [0], [0], [0, 0, 1, 0], [], []>} : vector<8x8xbf16>, vector<8x8xbf16>, vector<8x8xf32> -> vector<8x8xf32>
    %cst_31 = arith.constant dense<0xFF800000> : vector<8xf32>
    %43 = vector.multi_reduction <maximumf>, %42, %cst_31 [1] : vector<8x8xf32> to vector<8xf32>
    %44 = vector.shape_cast %43 : vector<8xf32> to vector<8x1xf32>
    %45 = vector.broadcast %44 : vector<8x1xf32> to vector<8x8xf32>
    %46 = arith.subf %42, %45 : vector<8x8xf32>
    %47 = math.exp %46 : vector<8x8xf32>
    %cst_32 = arith.constant dense<0.000000e+00> : vector<8xf32>
    %48 = vector.multi_reduction <add>, %47, %cst_32 [1] : vector<8x8xf32> to vector<8xf32>
    %49 = vector.shape_cast %48 : vector<8xf32> to vector<8x1xf32>
    %50 = tpu.reciprocal %49 {approx = true} : vector<8x1xf32> -> vector<8x1xf32>
    %51 = vector.broadcast %50 : vector<8x1xf32> to vector<8x8xf32>
    %52 = arith.mulf %47, %51 : vector<8x8xf32>
    %53 = arith.truncf %52 : vector<8x8xf32> to vector<8x8xbf16>
    %c1_33 = arith.constant 1 : index
    %c0_34 = arith.constant 0 : index
    %c0_35 = arith.constant 0 : index
    %54 = vector.load %arg16[%c1_33, %c0_34, %c0_35] : memref<4x8x8xbf16, #tpu.memory_space<vmem>>, vector<1x8x8xbf16>
    %55 = vector.shape_cast %54 : vector<1x8x8xbf16> to vector<8x8xbf16>
    %cst_36 = arith.constant dense<0.000000e+00> : vector<8x8xf32>
    %56 = tpu.matmul %53, %55, %cst_36 {dimension_numbers = #tpu.dot_dimension_numbers<[1], [0], [0], [1], [0, 0, 1, 1], [], []>} : vector<8x8xbf16>, vector<8x8xbf16>, vector<8x8xf32> -> vector<8x8xf32>
    %57 = arith.truncf %56 : vector<8x8xf32> to vector<8x8xbf16>
    %c0_37 = arith.constant 0 : index
    %c8 = arith.constant 8 : index
    %58 = vector.load %arg17[%c0_37, %c8] : memref<8x32xbf16, #tpu.memory_space<vmem>>, vector<8x8xbf16>
    tpu.vector_store %arg17[%c0_37, %c8], %57 {strides = array<i32>} : memref<8x32xbf16, #tpu.memory_space<vmem>>, vector<8x8xbf16>,
    %c2 = arith.constant 2 : index
    %c0_38 = arith.constant 0 : index
    %c0_39 = arith.constant 0 : index
    %59 = vector.load %arg4[%c2, %c0_38, %c0_39] : memref<4x32x8xbf16, #tpu.memory_space<vmem>>, vector<1x32x8xbf16>
    %60 = vector.shape_cast %59 : vector<1x32x8xbf16> to vector<32x8xbf16>
    %cst_40 = arith.constant dense<0.000000e+00> : vector<8x8xf32>
    %61 = tpu.matmul %4, %60, %cst_40 {dimension_numbers = #tpu.dot_dimension_numbers<[1], [0], [0], [1], [0, 0, 1, 1], [], []>} : vector<8x32xbf16>, vector<32x8xbf16>, vector<8x8xf32> -> vector<8x8xf32>
    %c2_41 = arith.constant 2 : index
    %c0_42 = arith.constant 0 : index
    %c0_43 = arith.constant 0 : index
    %62 = vector.load %arg5[%c2_41, %c0_42, %c0_43] : memref<4x1x8xf32, #tpu.memory_space<vmem>>, vector<1x1x8xf32>
    %63 = vector.shape_cast %62 : vector<1x1x8xf32> to vector<1x8xf32>
    %64 = vector.broadcast %63 : vector<1x8xf32> to vector<8x8xf32>
    %65 = arith.addf %61, %64 : vector<8x8xf32>
    %66 = arith.truncf %65 : vector<8x8xf32> to vector<8x8xbf16>
    %c2_44 = arith.constant 2 : index
    %c0_45 = arith.constant 0 : index
    %c0_46 = arith.constant 0 : index
    %67 = vector.load %arg15[%c2_44, %c0_45, %c0_46] : memref<4x8x8xbf16, #tpu.memory_space<vmem>>, vector<1x8x8xbf16>
    %68 = vector.shape_cast %67 : vector<1x8x8xbf16> to vector<8x8xbf16>
    %cst_47 = arith.constant dense<0.000000e+00> : vector<8x8xf32>
    %69 = tpu.matmul %66, %68, %cst_47 {dimension_numbers = #tpu.dot_dimension_numbers<[1], [1], [0], [0], [0, 0, 1, 0], [], []>} : vector<8x8xbf16>, vector<8x8xbf16>, vector<8x8xf32> -> vector<8x8xf32>
    %cst_48 = arith.constant dense<0xFF800000> : vector<8xf32>
    %70 = vector.multi_reduction <maximumf>, %69, %cst_48 [1] : vector<8x8xf32> to vector<8xf32>
    %71 = vector.shape_cast %70 : vector<8xf32> to vector<8x1xf32>
    %72 = vector.broadcast %71 : vector<8x1xf32> to vector<8x8xf32>
    %73 = arith.subf %69, %72 : vector<8x8xf32>
    %74 = math.exp %73 : vector<8x8xf32>
    %cst_49 = arith.constant dense<0.000000e+00> : vector<8xf32>
    %75 = vector.multi_reduction <add>, %74, %cst_49 [1] : vector<8x8xf32> to vector<8xf32>
    %76 = vector.shape_cast %75 : vector<8xf32> to vector<8x1xf32>
    %77 = tpu.reciprocal %76 {approx = true} : vector<8x1xf32> -> vector<8x1xf32>
    %78 = vector.broadcast %77 : vector<8x1xf32> to vector<8x8xf32>
    %79 = arith.mulf %74, %78 : vector<8x8xf32>
    %80 = arith.truncf %79 : vector<8x8xf32> to vector<8x8xbf16>
    %c2_50 = arith.constant 2 : index
    %c0_51 = arith.constant 0 : index
    %c0_52 = arith.constant 0 : index
    %81 = vector.load %arg16[%c2_50, %c0_51, %c0_52] : memref<4x8x8xbf16, #tpu.memory_space<vmem>>, vector<1x8x8xbf16>
    %82 = vector.shape_cast %81 : vector<1x8x8xbf16> to vector<8x8xbf16>
    %cst_53 = arith.constant dense<0.000000e+00> : vector<8x8xf32>
    %83 = tpu.matmul %80, %82, %cst_53 {dimension_numbers = #tpu.dot_dimension_numbers<[1], [0], [0], [1], [0, 0, 1, 1], [], []>} : vector<8x8xbf16>, vector<8x8xbf16>, vector<8x8xf32> -> vector<8x8xf32>
    %84 = arith.truncf %83 : vector<8x8xf32> to vector<8x8xbf16>
    %c0_54 = arith.constant 0 : index
    %c16 = arith.constant 16 : index
    %85 = vector.load %arg17[%c0_54, %c16] : memref<8x32xbf16, #tpu.memory_space<vmem>>, vector<8x8xbf16>
    tpu.vector_store %arg17[%c0_54, %c16], %84 {strides = array<i32>} : memref<8x32xbf16, #tpu.memory_space<vmem>>, vector<8x8xbf16>,
    %c3 = arith.constant 3 : index
    %c0_55 = arith.constant 0 : index
    %c0_56 = arith.constant 0 : index
    %86 = vector.load %arg4[%c3, %c0_55, %c0_56] : memref<4x32x8xbf16, #tpu.memory_space<vmem>>, vector<1x32x8xbf16>
    %87 = vector.shape_cast %86 : vector<1x32x8xbf16> to vector<32x8xbf16>
    %cst_57 = arith.constant dense<0.000000e+00> : vector<8x8xf32>
    %88 = tpu.matmul %4, %87, %cst_57 {dimension_numbers = #tpu.dot_dimension_numbers<[1], [0], [0], [1], [0, 0, 1, 1], [], []>} : vector<8x32xbf16>, vector<32x8xbf16>, vector<8x8xf32> -> vector<8x8xf32>
    %c3_58 = arith.constant 3 : index
    %c0_59 = arith.constant 0 : index
    %c0_60 = arith.constant 0 : index
    %89 = vector.load %arg5[%c3_58, %c0_59, %c0_60] : memref<4x1x8xf32, #tpu.memory_space<vmem>>, vector<1x1x8xf32>
    %90 = vector.shape_cast %89 : vector<1x1x8xf32> to vector<1x8xf32>
    %91 = vector.broadcast %90 : vector<1x8xf32> to vector<8x8xf32>
    %92 = arith.addf %88, %91 : vector<8x8xf32>
    %93 = arith.truncf %92 : vector<8x8xf32> to vector<8x8xbf16>
    %c3_61 = arith.constant 3 : index
    %c0_62 = arith.constant 0 : index
    %c0_63 = arith.constant 0 : index
    %94 = vector.load %arg15[%c3_61, %c0_62, %c0_63] : memref<4x8x8xbf16, #tpu.memory_space<vmem>>, vector<1x8x8xbf16>
    %95 = vector.shape_cast %94 : vector<1x8x8xbf16> to vector<8x8xbf16>
    %cst_64 = arith.constant dense<0.000000e+00> : vector<8x8xf32>
    %96 = tpu.matmul %93, %95, %cst_64 {dimension_numbers = #tpu.dot_dimension_numbers<[1], [1], [0], [0], [0, 0, 1, 0], [], []>} : vector<8x8xbf16>, vector<8x8xbf16>, vector<8x8xf32> -> vector<8x8xf32>
    %cst_65 = arith.constant dense<0xFF800000> : vector<8xf32>
    %97 = vector.multi_reduction <maximumf>, %96, %cst_65 [1] : vector<8x8xf32> to vector<8xf32>
    %98 = vector.shape_cast %97 : vector<8xf32> to vector<8x1xf32>
    %99 = vector.broadcast %98 : vector<8x1xf32> to vector<8x8xf32>
    %100 = arith.subf %96, %99 : vector<8x8xf32>
    %101 = math.exp %100 : vector<8x8xf32>
    %cst_66 = arith.constant dense<0.000000e+00> : vector<8xf32>
    %102 = vector.multi_reduction <add>, %101, %cst_66 [1] : vector<8x8xf32> to vector<8xf32>
    %103 = vector.shape_cast %102 : vector<8xf32> to vector<8x1xf32>
    %104 = tpu.reciprocal %103 {approx = true} : vector<8x1xf32> -> vector<8x1xf32>
    %105 = vector.broadcast %104 : vector<8x1xf32> to vector<8x8xf32>
    %106 = arith.mulf %101, %105 : vector<8x8xf32>
    %107 = arith.truncf %106 : vector<8x8xf32> to vector<8x8xbf16>
    %c3_67 = arith.constant 3 : index
    %c0_68 = arith.constant 0 : index
    %c0_69 = arith.constant 0 : index
    %108 = vector.load %arg16[%c3_67, %c0_68, %c0_69] : memref<4x8x8xbf16, #tpu.memory_space<vmem>>, vector<1x8x8xbf16>
    %109 = vector.shape_cast %108 : vector<1x8x8xbf16> to vector<8x8xbf16>
    %cst_70 = arith.constant dense<0.000000e+00> : vector<8x8xf32>
    %110 = tpu.matmul %107, %109, %cst_70 {dimension_numbers = #tpu.dot_dimension_numbers<[1], [0], [0], [1], [0, 0, 1, 1], [], []>} : vector<8x8xbf16>, vector<8x8xbf16>, vector<8x8xf32> -> vector<8x8xf32>
    %111 = arith.truncf %110 : vector<8x8xf32> to vector<8x8xbf16>
    %c0_71 = arith.constant 0 : index
    %c24 = arith.constant 24 : index
    %112 = vector.load %arg17[%c0_71, %c24] : memref<8x32xbf16, #tpu.memory_space<vmem>>, vector<8x8xbf16>
    tpu.vector_store %arg17[%c0_71, %c24], %111 {strides = array<i32>} : memref<8x32xbf16, #tpu.memory_space<vmem>>, vector<8x8xbf16>,
    %c0_72 = arith.constant 0 : index
    %c0_73 = arith.constant 0 : index
    %113 = vector.load %arg17[%c0_72, %c0_73] : memref<8x32xbf16, #tpu.memory_space<vmem>>, vector<8x32xbf16>
    %c0_74 = arith.constant 0 : index
    %c0_75 = arith.constant 0 : index
    %114 = vector.load %arg10[%c0_74, %c0_75] : memref<32x32xbf16, #tpu.memory_space<vmem>>, vector<32x32xbf16>
    %cst_76 = arith.constant dense<0.000000e+00> : vector<8x32xf32>
    %115 = tpu.matmul %113, %114, %cst_76 {dimension_numbers = #tpu.dot_dimension_numbers<[1], [0], [0], [1], [0, 0, 1, 1], [], []>} : vector<8x32xbf16>, vector<32x32xbf16>, vector<8x32xf32> -> vector<8x32xf32>
    %c0_77 = arith.constant 0 : index
    %c0_78 = arith.constant 0 : index
    %116 = vector.load %arg11[%c0_77, %c0_78] : memref<1x32xf32, #tpu.memory_space<vmem>>, vector<1x32xf32>
    %117 = vector.broadcast %116 : vector<1x32xf32> to vector<8x32xf32>
    %118 = arith.addf %115, %117 : vector<8x32xf32>
    %119 = arith.extf %4 : vector<8x32xbf16> to vector<8x32xf32>
    %120 = arith.addf %119, %118 : vector<8x32xf32>
    %c0_79 = arith.constant 0 : index
    %c0_80 = arith.constant 0 : index
    %121 = vector.load %arg12[%c0_79, %c0_80] : memref<1x32xf32, #tpu.memory_space<vmem>>, vector<1x32xf32>
    %c0_81 = arith.constant 0 : index
    %c0_82 = arith.constant 0 : index
    %122 = vector.load %arg13[%c0_81, %c0_82] : memref<1x32xf32, #tpu.memory_space<vmem>>, vector<1x32xf32>
    %cst_83 = arith.constant dense<0.000000e+00> : vector<8xf32>
    %123 = vector.multi_reduction <add>, %120, %cst_83 [1] : vector<8x32xf32> to vector<8xf32>
    %124 = vector.shape_cast %123 : vector<8xf32> to vector<8x1xf32>
    %cst_84 = arith.constant 3.200000e+01 : f32
    %125 = vector.broadcast %cst_84 : f32 to vector<8x1xf32>
    %126 = arith.divf %124, %125 : vector<8x1xf32>
    %127 = vector.broadcast %126 : vector<8x1xf32> to vector<8x32xf32>
    %128 = arith.subf %120, %127 : vector<8x32xf32>
    %129 = arith.mulf %128, %128 : vector<8x32xf32>
    %cst_85 = arith.constant dense<0.000000e+00> : vector<8xf32>
    %130 = vector.multi_reduction <add>, %129, %cst_85 [1] : vector<8x32xf32> to vector<8xf32>
    %131 = vector.shape_cast %130 : vector<8xf32> to vector<8x1xf32>
    %cst_86 = arith.constant 3.200000e+01 : f32
    %132 = vector.broadcast %cst_86 : f32 to vector<8x1xf32>
    %133 = arith.divf %131, %132 : vector<8x1xf32>
    %134 = vector.broadcast %126 : vector<8x1xf32> to vector<8x32xf32>
    %135 = arith.subf %120, %134 : vector<8x32xf32>
    %cst_87 = arith.constant 9.99999974E-6 : f32
    %136 = vector.broadcast %cst_87 : f32 to vector<8x1xf32>
    %137 = arith.addf %133, %136 : vector<8x1xf32>
    %138 = math.rsqrt %137 : vector<8x1xf32>
    %139 = vector.broadcast %138 : vector<8x1xf32> to vector<8x32xf32>
    %140 = arith.mulf %135, %139 : vector<8x32xf32>
    %141 = vector.broadcast %121 : vector<1x32xf32> to vector<8x32xf32>
    %142 = arith.mulf %140, %141 : vector<8x32xf32>
    %143 = vector.broadcast %122 : vector<1x32xf32> to vector<8x32xf32>
    %144 = arith.addf %142, %143 : vector<8x32xf32>
    %145 = arith.truncf %144 : vector<8x32xf32> to vector<8x32xbf16>
    %c0_88 = arith.constant 0 : index
    %c0_89 = arith.constant 0 : index
    %c0_90 = arith.constant 0 : index
    %146 = vector.load %arg14[%c0_88, %c0_89, %c0_90] : memref<1x8x32xbf16, #tpu.memory_space<vmem>>, vector<1x8x32xbf16>
    %147 = vector.shape_cast %146 : vector<1x8x32xbf16> to vector<8x32xbf16>
    %148 = vector.shape_cast %145 : vector<8x32xbf16> to vector<1x8x32xbf16>
    tpu.vector_store %arg14[%c0_88, %c0_89, %c0_90], %148 {strides = array<i32>} : memref<1x8x32xbf16, #tpu.memory_space<vmem>>, vector<1x8x32xbf16>,
    return
  }
  func.func @transform_0(%arg0: i32, %arg1: i32) -> (i32, i32, i32) {
    %c0_i32 = arith.constant 0 : i32
    %c0_i32_0 = arith.constant 0 : i32
    return %arg0, %arg1, %c0_i32 : i32, i32, i32
  }
  func.func @transform_1(%arg0: i32, %arg1: i32) -> (i32, i32, i32) {
    %c0_i32 = arith.constant 0 : i32
    %c0_i32_0 = arith.constant 0 : i32
    %c0_i32_1 = arith.constant 0 : i32
    return %arg0, %c0_i32, %c0_i32_0 : i32, i32, i32
  }
  func.func @transform_2(%arg0: i32, %arg1: i32) -> (i32, i32, i32) {
    %c0_i32 = arith.constant 0 : i32
    %c0_i32_0 = arith.constant 0 : i32
    %c0_i32_1 = arith.constant 0 : i32
    %c0_i32_2 = arith.constant 0 : i32
    return %c0_i32, %c0_i32_0, %c0_i32_1 : i32, i32, i32
  }
  func.func @transform_3(%arg0: i32, %arg1: i32) -> (i32, i32, i32) {
    %c0_i32 = arith.constant 0 : i32
    %c0_i32_0 = arith.constant 0 : i32
    %c0_i32_1 = arith.constant 0 : i32
    %c0_i32_2 = arith.constant 0 : i32
    return %c0_i32, %c0_i32_0, %c0_i32_1 : i32, i32, i32
  }
  func.func @transform_4(%arg0: i32, %arg1: i32) -> (i32, i32, i32) {
    %c0_i32 = arith.constant 0 : i32
    %c0_i32_0 = arith.constant 0 : i32
    %c0_i32_1 = arith.constant 0 : i32
    %c0_i32_2 = arith.constant 0 : i32
    return %c0_i32, %c0_i32_0, %c0_i32_1 : i32, i32, i32
  }
  func.func @transform_5(%arg0: i32, %arg1: i32) -> (i32, i32, i32) {
    %c0_i32 = arith.constant 0 : i32
    %c0_i32_0 = arith.constant 0 : i32
    %c0_i32_1 = arith.constant 0 : i32
    %c0_i32_2 = arith.constant 0 : i32
    return %c0_i32, %c0_i32_0, %c0_i32_1 : i32, i32, i32
  }
  func.func @transform_6(%arg0: i32, %arg1: i32) -> (i32, i32, i32) {
    %c0_i32 = arith.constant 0 : i32
    %c0_i32_0 = arith.constant 0 : i32
    %c0_i32_1 = arith.constant 0 : i32
    %c0_i32_2 = arith.constant 0 : i32
    return %c0_i32, %c0_i32_0, %c0_i32_1 : i32, i32, i32
  }
  func.func @transform_7(%arg0: i32, %arg1: i32) -> (i32, i32, i32) {
    %c0_i32 = arith.constant 0 : i32
    %c0_i32_0 = arith.constant 0 : i32
    %c0_i32_1 = arith.constant 0 : i32
    %c0_i32_2 = arith.constant 0 : i32
    return %c0_i32, %c0_i32_0, %c0_i32_1 : i32, i32, i32
  }
  func.func @transform_8(%arg0: i32, %arg1: i32) -> (i32, i32) {
    %c0_i32 = arith.constant 0 : i32
    %c0_i32_0 = arith.constant 0 : i32
    %c0_i32_1 = arith.constant 0 : i32
    return %c0_i32, %c0_i32_0 : i32, i32
  }
  func.func @transform_9(%arg0: i32, %arg1: i32) -> (i32, i32) {
    %c0_i32 = arith.constant 0 : i32
    %c0_i32_0 = arith.constant 0 : i32
    %c0_i32_1 = arith.constant 0 : i32
    return %c0_i32, %c0_i32_0 : i32, i32
  }
  func.func @transform_10(%arg0: i32, %arg1: i32) -> (i32, i32) {
    %c0_i32 = arith.constant 0 : i32
    %c0_i32_0 = arith.constant 0 : i32
    %c0_i32_1 = arith.constant 0 : i32
    return %c0_i32, %c0_i32_0 : i32, i32
  }
  func.func @transform_11(%arg0: i32, %arg1: i32) -> (i32, i32) {
    %c0_i32 = arith.constant 0 : i32
    %c0_i32_0 = arith.constant 0 : i32
    %c0_i32_1 = arith.constant 0 : i32
    return %c0_i32, %c0_i32_0 : i32, i32
  }
  func.func @transform_12(%arg0: i32, %arg1: i32) -> (i32, i32, i32) {
    %c0_i32 = arith.constant 0 : i32
    %c0_i32_0 = arith.constant 0 : i32
    return %arg0, %arg1, %c0_i32 : i32, i32, i32
  }
}

module attributes {stable_mosaic.version = 11 : i64} {
  func.func @_ffn_add_ln_kernel(%arg0: i32, %arg1: memref<16x32xbf16, #tpu.memory_space<vmem>>, %arg2: memref<32x64xbf16, #tpu.memory_space<vmem>>, %arg3: memref<1x64xf32, #tpu.memory_space<vmem>>, %arg4: memref<64x32xbf16, #tpu.memory_space<vmem>>, %arg5: memref<1x32xf32, #tpu.memory_space<vmem>>, %arg6: memref<1x32xf32, #tpu.memory_space<vmem>>, %arg7: memref<1x32xf32, #tpu.memory_space<vmem>>, %arg8: memref<16x32xbf16, #tpu.memory_space<vmem>>) attributes {dimension_semantics = [#tpu.dimension_semantics<parallel>], iteration_bounds = array<i64: 1>, scalar_prefetch = 0 : i64, scratch_operands = 0 : i64, tpu.core_type = #tpu.core_type<tc>, window_params = [{transform_indices = @transform_0, window_bounds = array<i64: 16, 32>}, {pipeline_mode = #tpu.pipeline_mode<synchronous>, transform_indices = @transform_1, window_bounds = array<i64: 32, 64>}, {pipeline_mode = #tpu.pipeline_mode<synchronous>, transform_indices = @transform_2, window_bounds = array<i64: 1, 64>}, {pipeline_mode = #tpu.pipeline_mode<synchronous>, transform_indices = @transform_3, window_bounds = array<i64: 64, 32>}, {pipeline_mode = #tpu.pipeline_mode<synchronous>, transform_indices = @transform_4, window_bounds = array<i64: 1, 32>}, {pipeline_mode = #tpu.pipeline_mode<synchronous>, transform_indices = @transform_5, window_bounds = array<i64: 1, 32>}, {pipeline_mode = #tpu.pipeline_mode<synchronous>, transform_indices = @transform_6, window_bounds = array<i64: 1, 32>}, {transform_indices = @transform_7, window_bounds = array<i64: 16, 32>}]} {
    %c0 = arith.constant 0 : index
    %c0_0 = arith.constant 0 : index
    %0 = vector.load %arg1[%c0, %c0_0] : memref<16x32xbf16, #tpu.memory_space<vmem>>, vector<16x32xbf16>
    %c0_1 = arith.constant 0 : index
    %c0_2 = arith.constant 0 : index
    %1 = vector.load %arg2[%c0_1, %c0_2] : memref<32x64xbf16, #tpu.memory_space<vmem>>, vector<32x64xbf16>
    %cst = arith.constant dense<0.000000e+00> : vector<16x64xf32>
    %2 = tpu.matmul %0, %1, %cst {dimension_numbers = #tpu.dot_dimension_numbers<[1], [0], [0], [1], [0, 0, 1, 1], [], []>} : vector<16x32xbf16>, vector<32x64xbf16>, vector<16x64xf32> -> vector<16x64xf32>
    %c0_3 = arith.constant 0 : index
    %c0_4 = arith.constant 0 : index
    %3 = vector.load %arg3[%c0_3, %c0_4] : memref<1x64xf32, #tpu.memory_space<vmem>>, vector<1x64xf32>
    %4 = vector.broadcast %3 : vector<1x64xf32> to vector<16x64xf32>
    %5 = arith.addf %2, %4 : vector<16x64xf32>
    %cst_5 = arith.constant 0.000000e+00 : f32
    %6 = vector.broadcast %cst_5 : f32 to vector<16x64xf32>
    %7 = arith.maximumf %5, %6 : vector<16x64xf32>
    %8 = arith.truncf %7 : vector<16x64xf32> to vector<16x64xbf16>
    %c0_6 = arith.constant 0 : index
    %c0_7 = arith.constant 0 : index
    %9 = vector.load %arg4[%c0_6, %c0_7] : memref<64x32xbf16, #tpu.memory_space<vmem>>, vector<64x32xbf16>
    %cst_8 = arith.constant dense<0.000000e+00> : vector<16x32xf32>
    %10 = tpu.matmul %8, %9, %cst_8 {dimension_numbers = #tpu.dot_dimension_numbers<[1], [0], [0], [1], [0, 0, 1, 1], [], []>} : vector<16x64xbf16>, vector<64x32xbf16>, vector<16x32xf32> -> vector<16x32xf32>
    %c0_9 = arith.constant 0 : index
    %c0_10 = arith.constant 0 : index
    %11 = vector.load %arg5[%c0_9, %c0_10] : memref<1x32xf32, #tpu.memory_space<vmem>>, vector<1x32xf32>
    %12 = vector.broadcast %11 : vector<1x32xf32> to vector<16x32xf32>
    %13 = arith.addf %10, %12 : vector<16x32xf32>
    %14 = arith.extf %0 : vector<16x32xbf16> to vector<16x32xf32>
    %15 = arith.addf %14, %13 : vector<16x32xf32>
    %c0_11 = arith.constant 0 : index
    %c0_12 = arith.constant 0 : index
    %16 = vector.load %arg6[%c0_11, %c0_12] : memref<1x32xf32, #tpu.memory_space<vmem>>, vector<1x32xf32>
    %c0_13 = arith.constant 0 : index
    %c0_14 = arith.constant 0 : index
    %17 = vector.load %arg7[%c0_13, %c0_14] : memref<1x32xf32, #tpu.memory_space<vmem>>, vector<1x32xf32>
    %cst_15 = arith.constant dense<0.000000e+00> : vector<16xf32>
    %18 = vector.multi_reduction <add>, %15, %cst_15 [1] : vector<16x32xf32> to vector<16xf32>
    %19 = vector.shape_cast %18 : vector<16xf32> to vector<16x1xf32>
    %cst_16 = arith.constant 3.200000e+01 : f32
    %20 = vector.broadcast %cst_16 : f32 to vector<16x1xf32>
    %21 = arith.divf %19, %20 : vector<16x1xf32>
    %22 = vector.broadcast %21 : vector<16x1xf32> to vector<16x32xf32>
    %23 = arith.subf %15, %22 : vector<16x32xf32>
    %24 = arith.mulf %23, %23 : vector<16x32xf32>
    %cst_17 = arith.constant dense<0.000000e+00> : vector<16xf32>
    %25 = vector.multi_reduction <add>, %24, %cst_17 [1] : vector<16x32xf32> to vector<16xf32>
    %26 = vector.shape_cast %25 : vector<16xf32> to vector<16x1xf32>
    %cst_18 = arith.constant 3.200000e+01 : f32
    %27 = vector.broadcast %cst_18 : f32 to vector<16x1xf32>
    %28 = arith.divf %26, %27 : vector<16x1xf32>
    %29 = vector.broadcast %21 : vector<16x1xf32> to vector<16x32xf32>
    %30 = arith.subf %15, %29 : vector<16x32xf32>
    %cst_19 = arith.constant 9.99999974E-6 : f32
    %31 = vector.broadcast %cst_19 : f32 to vector<16x1xf32>
    %32 = arith.addf %28, %31 : vector<16x1xf32>
    %33 = math.rsqrt %32 : vector<16x1xf32>
    %34 = vector.broadcast %33 : vector<16x1xf32> to vector<16x32xf32>
    %35 = arith.mulf %30, %34 : vector<16x32xf32>
    %36 = vector.broadcast %16 : vector<1x32xf32> to vector<16x32xf32>
    %37 = arith.mulf %35, %36 : vector<16x32xf32>
    %38 = vector.broadcast %17 : vector<1x32xf32> to vector<16x32xf32>
    %39 = arith.addf %37, %38 : vector<16x32xf32>
    %40 = arith.truncf %39 : vector<16x32xf32> to vector<16x32xbf16>
    %c0_20 = arith.constant 0 : index
    %c0_21 = arith.constant 0 : index
    %41 = vector.load %arg8[%c0_20, %c0_21] : memref<16x32xbf16, #tpu.memory_space<vmem>>, vector<16x32xbf16>
    tpu.vector_store %arg8[%c0_20, %c0_21], %40 {strides = array<i32>} : memref<16x32xbf16, #tpu.memory_space<vmem>>, vector<16x32xbf16>,
    return
  }
  func.func @transform_0(%arg0: i32) -> (i32, i32) {
    %c0_i32 = arith.constant 0 : i32
    %c0_i32_0 = arith.constant 0 : i32
    return %arg0, %c0_i32 : i32, i32
  }
  func.func @transform_1(%arg0: i32) -> (i32, i32) {
    %c0_i32 = arith.constant 0 : i32
    %c0_i32_0 = arith.constant 0 : i32
    %c0_i32_1 = arith.constant 0 : i32
    return %c0_i32, %c0_i32_0 : i32, i32
  }
  func.func @transform_2(%arg0: i32) -> (i32, i32) {
    %c0_i32 = arith.constant 0 : i32
    %c0_i32_0 = arith.constant 0 : i32
    %c0_i32_1 = arith.constant 0 : i32
    return %c0_i32, %c0_i32_0 : i32, i32
  }
  func.func @transform_3(%arg0: i32) -> (i32, i32) {
    %c0_i32 = arith.constant 0 : i32
    %c0_i32_0 = arith.constant 0 : i32
    %c0_i32_1 = arith.constant 0 : i32
    return %c0_i32, %c0_i32_0 : i32, i32
  }
  func.func @transform_4(%arg0: i32) -> (i32, i32) {
    %c0_i32 = arith.constant 0 : i32
    %c0_i32_0 = arith.constant 0 : i32
    %c0_i32_1 = arith.constant 0 : i32
    return %c0_i32, %c0_i32_0 : i32, i32
  }
  func.func @transform_5(%arg0: i32) -> (i32, i32) {
    %c0_i32 = arith.constant 0 : i32
    %c0_i32_0 = arith.constant 0 : i32
    %c0_i32_1 = arith.constant 0 : i32
    return %c0_i32, %c0_i32_0 : i32, i32
  }
  func.func @transform_6(%arg0: i32) -> (i32, i32) {
    %c0_i32 = arith.constant 0 : i32
    %c0_i32_0 = arith.constant 0 : i32
    %c0_i32_1 = arith.constant 0 : i32
    return %c0_i32, %c0_i32_0 : i32, i32
  }
  func.func @transform_7(%arg0: i32) -> (i32, i32) {
    %c0_i32 = arith.constant 0 : i32
    %c0_i32_0 = arith.constant 0 : i32
    return %arg0, %c0_i32 : i32, i32
  }
}

module attributes {stable_mosaic.version = 11 : i64} {
  func.func @_mean_fc_kernel(%arg0: i32, %arg1: i32, %arg2: memref<1x8x32xbf16, #tpu.memory_space<vmem>>, %arg3: memref<32x128xbf16, #tpu.memory_space<vmem>>, %arg4: memref<1x128xf32, #tpu.memory_space<vmem>>, %arg5: memref<8x128xf32, #tpu.memory_space<vmem>>, %arg6: memref<8x32xf32, #tpu.memory_space<vmem>>) attributes {dimension_semantics = [#tpu.dimension_semantics<parallel>, #tpu.dimension_semantics<arbitrary>], iteration_bounds = array<i64: 1, 2>, scalar_prefetch = 0 : i64, scratch_operands = 1 : i64, tpu.core_type = #tpu.core_type<tc>, window_params = [{transform_indices = @transform_0, window_bounds = array<i64: 1, 8, 32>}, {pipeline_mode = #tpu.pipeline_mode<synchronous>, transform_indices = @transform_1, window_bounds = array<i64: 32, 128>}, {pipeline_mode = #tpu.pipeline_mode<synchronous>, transform_indices = @transform_2, window_bounds = array<i64: 1, 128>}, {transform_indices = @transform_3, window_bounds = array<i64: 8, 128>}]} {
    %c0_i32 = arith.constant 0 : i32
    %0 = arith.cmpi eq, %arg1, %c0_i32 : i32
    %1 = arith.extui %0 : i1 to i32
    %c0_i32_0 = arith.constant 0 : i32
    %2 = arith.cmpi ne, %1, %c0_i32_0 : i32
    scf.if %2 {
      %cst = arith.constant 0.000000e+00 : f32
      %12 = vector.broadcast %cst : f32 to vector<8x32xf32>
      %c0_8 = arith.constant 0 : index
      %c0_9 = arith.constant 0 : index
      %13 = vector.load %arg6[%c0_8, %c0_9] : memref<8x32xf32, #tpu.memory_space<vmem>>, vector<8x32xf32>
      tpu.vector_store %arg6[%c0_8, %c0_9], %12 {strides = array<i32>} : memref<8x32xf32, #tpu.memory_space<vmem>>, vector<8x32xf32>,
    } else {
    }
    %c0 = arith.constant 0 : index
    %c0_1 = arith.constant 0 : index
    %3 = vector.load %arg6[%c0, %c0_1] : memref<8x32xf32, #tpu.memory_space<vmem>>, vector<8x32xf32>
    %c0_2 = arith.constant 0 : index
    %c0_3 = arith.constant 0 : index
    %c0_4 = arith.constant 0 : index
    %4 = vector.load %arg2[%c0_2, %c0_3, %c0_4] : memref<1x8x32xbf16, #tpu.memory_space<vmem>>, vector<1x8x32xbf16>
    %5 = vector.shape_cast %4 : vector<1x8x32xbf16> to vector<8x32xbf16>
    %6 = arith.extf %5 : vector<8x32xbf16> to vector<8x32xf32>
    %7 = arith.addf %3, %6 : vector<8x32xf32>
    %c0_5 = arith.constant 0 : index
    %c0_6 = arith.constant 0 : index
    %8 = vector.load %arg6[%c0_5, %c0_6] : memref<8x32xf32, #tpu.memory_space<vmem>>, vector<8x32xf32>
    tpu.vector_store %arg6[%c0_5, %c0_6], %7 {strides = array<i32>} : memref<8x32xf32, #tpu.memory_space<vmem>>, vector<8x32xf32>,
    %c1_i32 = arith.constant 1 : i32
    %9 = arith.cmpi eq, %arg1, %c1_i32 : i32
    %10 = arith.extui %9 : i1 to i32
    %c0_i32_7 = arith.constant 0 : i32
    %11 = arith.cmpi ne, %10, %c0_i32_7 : i32
    scf.if %11 {
      %c0_8 = arith.constant 0 : index
      %c0_9 = arith.constant 0 : index
      %12 = vector.load %arg6[%c0_8, %c0_9] : memref<8x32xf32, #tpu.memory_space<vmem>>, vector<8x32xf32>
      %cst = arith.constant 5.000000e-01 : f32
      %13 = vector.broadcast %cst : f32 to vector<8x32xf32>
      %14 = arith.mulf %12, %13 : vector<8x32xf32>
      %15 = arith.truncf %14 : vector<8x32xf32> to vector<8x32xbf16>
      %c0_10 = arith.constant 0 : index
      %c0_11 = arith.constant 0 : index
      %16 = vector.load %arg3[%c0_10, %c0_11] : memref<32x128xbf16, #tpu.memory_space<vmem>>, vector<32x128xbf16>
      %cst_12 = arith.constant dense<0.000000e+00> : vector<8x128xf32>
      %17 = tpu.matmul %15, %16, %cst_12 {dimension_numbers = #tpu.dot_dimension_numbers<[1], [0], [0], [1], [0, 0, 1, 1], [], []>} : vector<8x32xbf16>, vector<32x128xbf16>, vector<8x128xf32> -> vector<8x128xf32>
      %c0_13 = arith.constant 0 : index
      %c0_14 = arith.constant 0 : index
      %18 = vector.load %arg4[%c0_13, %c0_14] : memref<1x128xf32, #tpu.memory_space<vmem>>, vector<1x128xf32>
      %19 = vector.broadcast %18 : vector<1x128xf32> to vector<8x128xf32>
      %20 = arith.addf %17, %19 : vector<8x128xf32>
      %c0_15 = arith.constant 0 : index
      %c0_16 = arith.constant 0 : index
      %21 = vector.load %arg5[%c0_15, %c0_16] : memref<8x128xf32, #tpu.memory_space<vmem>>, vector<8x128xf32>
      tpu.vector_store %arg5[%c0_15, %c0_16], %20 {strides = array<i32>} : memref<8x128xf32, #tpu.memory_space<vmem>>, vector<8x128xf32>,
    } else {
    }
    return
  }
  func.func @transform_0(%arg0: i32, %arg1: i32) -> (i32, i32, i32) {
    %c0_i32 = arith.constant 0 : i32
    %c0_i32_0 = arith.constant 0 : i32
    return %arg1, %arg0, %c0_i32 : i32, i32, i32
  }
  func.func @transform_1(%arg0: i32, %arg1: i32) -> (i32, i32) {
    %c0_i32 = arith.constant 0 : i32
    %c0_i32_0 = arith.constant 0 : i32
    %c0_i32_1 = arith.constant 0 : i32
    return %c0_i32, %c0_i32_0 : i32, i32
  }
  func.func @transform_2(%arg0: i32, %arg1: i32) -> (i32, i32) {
    %c0_i32 = arith.constant 0 : i32
    %c0_i32_0 = arith.constant 0 : i32
    %c0_i32_1 = arith.constant 0 : i32
    return %c0_i32, %c0_i32_0 : i32, i32
  }
  func.func @transform_3(%arg0: i32, %arg1: i32) -> (i32, i32) {
    %c0_i32 = arith.constant 0 : i32
    %c0_i32_0 = arith.constant 0 : i32
    return %arg0, %c0_i32 : i32, i32
  }
}

</mosaic_0001>

<llo_original>
// kernel: transformer_classifier_forward.12
$region0: #{transformer_classifier_forward.12}
  #allocation0 [shape = 'u32[]', space=smem, size = 0x4, offset = 0x4, fixed_abs, tag = 'smem constant byte address 0x4 - core index']
  #allocation1 [shape = 'u32[144,128]{1,0:T(1,128)}', space=vmem, size = 0x12000, scoped, tag = 'internal scratch']
  %s0 = inlined_call_operand.vmem [shape: bf16[16,16], index: 0, kind: input, shape index: {}]
  %s1 = inlined_call_operand.vmem [shape: bf16[16,32], index: 1, kind: input, shape index: {}]
  %s2 = inlined_call_operand.vmem [shape: f32[1,32], index: 2, kind: input, shape index: {}]
  %s3 = inlined_call_operand.vmem [shape: bf16[16,32], index: 3, kind: output, shape index: {}]
  %s4 = sld [smem:[#allocation0]]
  $region22: #{transformer_classifier_forward.12} parent=0
    _
  %s6 = ssub.s32 1, %s4
  %s7 = scalar_select 0, %s6, %s4
  // Predicated region
  $region2: #{transformer_classifier_forward.12} parent=0 // pred_check
    _
  $region3: #{transformer_classifier_forward.12} parent=0 // pred_check_branch
    %9 = sbr.rel (0) target = $region5
  $region4: #{transformer_classifier_forward.12} parent=0 // pred_region
    _
  $region5: #{transformer_classifier_forward.12} parent=0 // pred_fallthru
    _
  // Predicated region
  $region6: #{transformer_classifier_forward.12} parent=0 // pred_check
    _
  $region7: #{transformer_classifier_forward.12} parent=0 // pred_check_branch
    %11 = sbr.rel (0) target = $region9
  $region8: #{transformer_classifier_forward.12} parent=0 // pred_region
    _
  $region9: #{transformer_classifier_forward.12} parent=0 // pred_fallthru
    _
  // Predicated region
  $region10: #{transformer_classifier_forward.12} parent=0 // pred_check
    _
  $region11: #{transformer_classifier_forward.12} parent=0 // pred_check_branch
    %13 = sbr.rel (0) target = $region13
  $region12: #{transformer_classifier_forward.12} parent=0 // pred_region
    _
  $region13: #{transformer_classifier_forward.12} parent=0 // pred_fallthru
    _
  %v15 = vld [vmem:[%s0] sm:$0xf]
  %v16 = vld [vmem:[%s0 + $0x4] sm:$0xf]
  %v17 = vld [vmem:[%s1] sm:$0xf]
  %v18 = vld [vmem:[%s1 + $0x4] sm:$0xf]
  %v19 = vld [vmem:[%s2] sm:$0x1]
  %v21 = vlaneseq
  %v22 = vshrl.u32 %v21, 7
  %v23 = vsub.s32 0, %v22
  %v24 = vrot.slane %v19, %v23
  %v28 = vunpack.c.l.b16 %v15
  %v29 = vunpack.c.l.b16 %v16
  %v30 = vpack.c.b16 %v29, %v28
  %v33 = vunpack.c.l.b16 %v17
  %v34 = vunpack.c.l.b16 %v18
  %v35 = vpack.c.b16 %v34, %v33
  %vm37 = vcmask 130048
  %v39 = vsel %vm37, %v30, 0
  %41 = vmatprep.subr.bf16.mxu0 0
  %42 = vmatpush1.bf16.msra.mxu0 0
  %43 = vmatprep.subr.bf16.mxu0 0
  %44 = vmatpush1.bf16.msra.mxu0 0
  %45 = vmatprep.subr.bf16.mxu0 0
  %46 = vmatpush1.bf16.msra.mxu0 0
  %47 = vmatprep.subr.bf16.mxu0 0
  %48 = vmatpush1.bf16.msra.mxu0 0
  %49 = vmatprep.subr.bf16.mxu0 0
  %50 = vmatpush1.bf16.msra.mxu0 0
  %51 = vmatprep.subr.bf16.mxu0 0
  %52 = vmatpush1.bf16.msra.mxu0 0
  %53 = vmatprep.subr.bf16.mxu0 0
  %54 = vmatpush1.bf16.msra.mxu0 0
  %55 = vmatprep.subr.bf16.mxu0 0
  %56 = vmatpush1.bf16.msra.mxu0 %v35
  %57 = vmatprep.subr.bf16.mxu0 0
  %58 = vmatpush2.bf16.msra.mxu0 0
  %59 = vmatprep.subr.bf16.mxu0 0
  %60 = vmatpush2.bf16.msra.mxu0 0
  %61 = vmatprep.subr.bf16.mxu0 0
  %62 = vmatpush2.bf16.msra.mxu0 0
  %63 = vmatprep.subr.bf16.mxu0 0
  %64 = vmatpush2.bf16.msra.mxu0 0
  %65 = vmatprep.subr.bf16.mxu0 0
  %66 = vmatpush2.bf16.msra.mxu0 0
  %67 = vmatprep.subr.bf16.mxu0 0
  %68 = vmatpush2.bf16.msra.mxu0 0
  %69 = vmatprep.subr.bf16.mxu0 0
  %70 = vmatpush2.bf16.msra.mxu0 0
  %71 = vmatprep.subr.bf16.mxu0 0
  %72 = vmatpush2.bf16.msra.mxu0 0
  %73 = vmatprep.mubr.bf16.mxu0 0
  %74 = vmatmul.mubr.bf16.gmra.mxu0 %v39
  %v75 = vpop.f32.mrf.mxu0
  %v76 = vadd.f32 %v24, %v75
  %v77 = vpop.f32.mrf.mxu0
  %v78 = vpop.f32.mrf.mxu0
  %v79 = vadd.f32 %v24, %v78
  %v80 = vpop.f32.mrf.mxu0
  %81 = vdwg.mxu0
  %v82 = vmax.f32 %v76, 0.0
  %v83 = vmax.f32 %v79, 0.0
  %v84 = vpack.c.bf16 %v83, %v82
  %v86 = vunpack.c.l.b16 %v84
  %v87 = vunpack.c.h.b16 %v84
  %v88 = vpack.c.b16 %v86, %v86
  %v89 = vpack.c.b16 %v87, %v87
  %vm92 = vcmask 257024
  %93 = vst.msk [vmem:[%s3] sm:$0xf] %vm92, %v88
  %94 = vst.msk [vmem:[%s3 + $0x4] sm:$0xf] %vm92, %v89
  // Predicated region
  $region14: #{transformer_classifier_forward.12} parent=0 // pred_check
    _
  $region15: #{transformer_classifier_forward.12} parent=0 // pred_check_branch
    %96 = sbr.rel (0) target = $region17
  $region16: #{transformer_classifier_forward.12} parent=0 // pred_region
    _
  $region17: #{transformer_classifier_forward.12} parent=0 // pred_fallthru
    _
  // Predicated region
  $region18: #{transformer_classifier_forward.12} parent=0 // pred_check
    _
  $region19: #{transformer_classifier_forward.12} parent=0 // pred_check_branch
    %98 = sbr.rel (0) target = $region21
  $region20: #{transformer_classifier_forward.12} parent=0 // pred_region
    _
  $region21: #{transformer_classifier_forward.12} parent=0 // pred_fallthru
    _

// kernel: transformer_classifier_forward.14
$region0: #{transformer_classifier_forward.14}
  #allocation0 [shape = 'u32[]', space=smem, size = 0x4, offset = 0x4, fixed_abs, tag = 'smem constant byte address 0x4 - core index']
  #allocation1 [shape = 'u32[144,128]{1,0:T(1,128)}', space=vmem, size = 0x12000, scoped, tag = 'internal scratch']
  %s0 = inlined_call_operand.vmem [shape: bf16[16,32], index: 0, kind: input, shape index: {}]
  %s1 = inlined_call_operand.vmem [shape: bf16[32,64], index: 1, kind: input, shape index: {}]
  %s2 = inlined_call_operand.vmem [shape: f32[1,64], index: 2, kind: input, shape index: {}]
  %s3 = inlined_call_operand.vmem [shape: bf16[64,32], index: 3, kind: input, shape index: {}]
  %s4 = inlined_call_operand.vmem [shape: f32[1,32], index: 4, kind: input, shape index: {}]
  %s5 = inlined_call_operand.vmem [shape: f32[1,32], index: 5, kind: input, shape index: {}]
  %s6 = inlined_call_operand.vmem [shape: f32[1,32], index: 6, kind: input, shape index: {}]
  %s7 = inlined_call_operand.vmem [shape: bf16[16,32], index: 7, kind: output, shape index: {}]
  %s8 = sld [smem:[#allocation0]]
  $region38: #{transformer_classifier_forward.14} parent=0
    _
  %s10 = ssub.s32 1, %s8
  %s11 = scalar_select 0, %s10, %s8
  // Predicated region
  $region2: #{transformer_classifier_forward.14} parent=0 // pred_check
    _
  $region3: #{transformer_classifier_forward.14} parent=0 // pred_check_branch
    %13 = sbr.rel (0) target = $region5
  $region4: #{transformer_classifier_forward.14} parent=0 // pred_region
    _
  $region5: #{transformer_classifier_forward.14} parent=0 // pred_fallthru
    _
  // Predicated region
  $region6: #{transformer_classifier_forward.14} parent=0 // pred_check
    _
  $region7: #{transformer_classifier_forward.14} parent=0 // pred_check_branch
    %15 = sbr.rel (0) target = $region9
  $region8: #{transformer_classifier_forward.14} parent=0 // pred_region
    _
  $region9: #{transformer_classifier_forward.14} parent=0 // pred_fallthru
    _
  // Predicated region
  $region10: #{transformer_classifier_forward.14} parent=0 // pred_check
    _
  $region11: #{transformer_classifier_forward.14} parent=0 // pred_check_branch
    %17 = sbr.rel (0) target = $region13
  $region12: #{transformer_classifier_forward.14} parent=0 // pred_region
    _
  $region13: #{transformer_classifier_forward.14} parent=0 // pred_fallthru
    _
  // Predicated region
  $region14: #{transformer_classifier_forward.14} parent=0 // pred_check
    _
  $region15: #{transformer_classifier_forward.14} parent=0 // pred_check_branch
    %19 = sbr.rel (0) target = $region17
  $region16: #{transformer_classifier_forward.14} parent=0 // pred_region
    _
  $region17: #{transformer_classifier_forward.14} parent=0 // pred_fallthru
    _
  // Predicated region
  $region18: #{transformer_classifier_forward.14} parent=0 // pred_check
    _
  $region19: #{transformer_classifier_forward.14} parent=0 // pred_check_branch
    %21 = sbr.rel (0) target = $region21
  $region20: #{transformer_classifier_forward.14} parent=0 // pred_region
    _
  $region21: #{transformer_classifier_forward.14} parent=0 // pred_fallthru
    _
  // Predicated region
  $region22: #{transformer_classifier_forward.14} parent=0 // pred_check
    _
  $region23: #{transformer_classifier_forward.14} parent=0 // pred_check_branch
    %23 = sbr.rel (0) target = $region25
  $region24: #{transformer_classifier_forward.14} parent=0 // pred_region
    _
  $region25: #{transformer_classifier_forward.14} parent=0 // pred_fallthru
    _
  // Predicated region
  $region26: #{transformer_classifier_forward.14} parent=0 // pred_check
    _
  $region27: #{transformer_classifier_forward.14} parent=0 // pred_check_branch
    %25 = sbr.rel (0) target = $region29
  $region28: #{transformer_classifier_forward.14} parent=0 // pred_region
    _
  $region29: #{transformer_classifier_forward.14} parent=0 // pred_fallthru
    _
  %v27 = vld [vmem:[%s0] sm:$0xf]
  %v28 = vld [vmem:[%s0 + $0x4] sm:$0xf]
  %v29 = vld [vmem:[%s1] sm:$0xf]
  %v30 = vld [vmem:[%s1 + $0x4] sm:$0xf]
  %v31 = vld [vmem:[%s1 + $0x8] sm:$0xf]
  %v32 = vld [vmem:[%s1 + $0xc] sm:$0xf]
  %v33 = vld [vmem:[%s2] sm:$0x1]
  %v35 = vlaneseq
  %v36 = vshrl.u32 %v35, 7
  %v37 = vsub.s32 0, %v36
  %v38 = vrot.slane %v33, %v37
  %v42 = vunpack.c.l.b16 %v27
  %v43 = vunpack.c.l.b16 %v28
  %v44 = vpack.c.b16 %v43, %v42
  %v49 = vunpack.c.l.b16 %v29
  %v50 = vunpack.c.l.b16 %v30
  %v51 = vunpack.c.l.b16 %v31
  %v52 = vunpack.c.l.b16 %v32
  %v53 = vpack.c.b16 %v50, %v49
  %v54 = vpack.c.b16 %v52, %v51
  %vm57 = vcmask 261120
  %v59 = vsel %vm57, %v44, 0
  %61 = vmatprep.subr.bf16.mxu0 0
  %62 = vmatpush1.bf16.msra.mxu0 0
  %63 = vmatprep.subr.bf16.mxu0 0
  %64 = vmatpush1.bf16.msra.mxu0 0
  %65 = vmatprep.subr.bf16.mxu0 0
  %66 = vmatpush1.bf16.msra.mxu0 0
  %67 = vmatprep.subr.bf16.mxu0 0
  %68 = vmatpush1.bf16.msra.mxu0 0
  %69 = vmatprep.subr.bf16.mxu0 0
  %70 = vmatpush1.bf16.msra.mxu0 0
  %71 = vmatprep.subr.bf16.mxu0 0
  %72 = vmatpush1.bf16.msra.mxu0 0
  %73 = vmatprep.subr.bf16.mxu0 0
  %74 = vmatpush1.bf16.msra.mxu0 %v54
  %75 = vmatprep.subr.bf16.mxu0 0
  %76 = vmatpush1.bf16.msra.mxu0 %v53
  %77 = vmatprep.subr.bf16.mxu0 0
  %78 = vmatpush2.bf16.msra.mxu0 0
  %79 = vmatprep.subr.bf16.mxu0 0
  %80 = vmatpush2.bf16.msra.mxu0 0
  %81 = vmatprep.subr.bf16.mxu0 0
  %82 = vmatpush2.bf16.msra.mxu0 0
  %83 = vmatprep.subr.bf16.mxu0 0
  %84 = vmatpush2.bf16.msra.mxu0 0
  %85 = vmatprep.subr.bf16.mxu0 0
  %86 = vmatpush2.bf16.msra.mxu0 0
  %87 = vmatprep.subr.bf16.mxu0 0
  %88 = vmatpush2.bf16.msra.mxu0 0
  %89 = vmatprep.subr.bf16.mxu0 0
  %90 = vmatpush2.bf16.msra.mxu0 0
  %91 = vmatprep.subr.bf16.mxu0 0
  %92 = vmatpush2.bf16.msra.mxu0 0
  %93 = vmatprep.mubr.bf16.mxu0 0
  %94 = vmatmul.mubr.bf16.gmra.mxu0 %v59
  %v95 = vpop.f32.mrf.mxu0
  %v96 = vadd.f32 %v38, %v95
  %v97 = vpop.f32.mrf.mxu0
  %v98 = vpop.f32.mrf.mxu0
  %v99 = vadd.f32 %v38, %v98
  %v100 = vpop.f32.mrf.mxu0
  %101 = vdwg.mxu0
  %v102 = vmax.f32 %v96, 0.0
  %v103 = vmax.f32 %v99, 0.0
  %v104 = vpack.c.bf16 %v103, %v102
  %v105 = vld [vmem:[%s3] sm:$0xf]
  %v106 = vld [vmem:[%s3 + $0x4] sm:$0xf]
  %v107 = vld [vmem:[%s3 + $0x8] sm:$0xf]
  %v108 = vld [vmem:[%s3 + $0xc] sm:$0xf]
  %v109 = vld [vmem:[%s3 + $0x10] sm:$0xf]
  %v110 = vld [vmem:[%s3 + $0x14] sm:$0xf]
  %v111 = vld [vmem:[%s3 + $0x18] sm:$0xf]
  %v112 = vld [vmem:[%s3 + $0x1c] sm:$0xf]
  %v113 = vld [vmem:[%s4] sm:$0x1]
  %v115 = vlaneseq
  %v116 = vshrl.u32 %v115, 7
  %v117 = vsub.s32 0, %v116
  %v118 = vrot.slane %v113, %v117
  %v128 = vunpack.c.l.b16 %v105
  %v129 = vunpack.c.l.b16 %v106
  %v130 = vunpack.c.l.b16 %v107
  %v131 = vunpack.c.l.b16 %v108
  %v132 = vunpack.c.l.b16 %v109
  %v133 = vunpack.c.l.b16 %v110
  %v134 = vunpack.c.l.b16 %v111
  %v135 = vunpack.c.l.b16 %v112
  %v136 = vpack.c.b16 %v129, %v128
  %v137 = vpack.c.b16 %v131, %v130
  %v138 = vpack.c.b16 %v133, %v132
  %v139 = vpack.c.b16 %v135, %v134
  %vm144 = vcmask 523264
  %v146 = vsel %vm144, %v104, 0
  %148 = vmatprep.subr.bf16.mxu0 0
  %149 = vmatpush1.bf16.msra.mxu0 0
  %150 = vmatprep.subr.bf16.mxu0 0
  %151 = vmatpush1.bf16.msra.mxu0 0
  %152 = vmatprep.subr.bf16.mxu0 0
  %153 = vmatpush1.bf16.msra.mxu0 0
  %154 = vmatprep.subr.bf16.mxu0 0
  %155 = vmatpush1.bf16.msra.mxu0 0
  %156 = vmatprep.subr.bf16.mxu0 0
  %157 = vmatpush1.bf16.msra.mxu0 %v139
  %158 = vmatprep.subr.bf16.mxu0 0
  %159 = vmatpush1.bf16.msra.mxu0 %v138
  %160 = vmatprep.subr.bf16.mxu0 0
  %161 = vmatpush1.bf16.msra.mxu0 %v137
  %162 = vmatprep.subr.bf16.mxu0 0
  %163 = vmatpush1.bf16.msra.mxu0 %v136
  %164 = vmatprep.subr.bf16.mxu0 0
  %165 = vmatpush2.bf16.msra.mxu0 0
  %166 = vmatprep.subr.bf16.mxu0 0
  %167 = vmatpush2.bf16.msra.mxu0 0
  %168 = vmatprep.subr.bf16.mxu0 0
  %169 = vmatpush2.bf16.msra.mxu0 0
  %170 = vmatprep.subr.bf16.mxu0 0
  %171 = vmatpush2.bf16.msra.mxu0 0
  %172 = vmatprep.subr.bf16.mxu0 0
  %173 = vmatpush2.bf16.msra.mxu0 0
  %174 = vmatprep.subr.bf16.mxu0 0
  %175 = vmatpush2.bf16.msra.mxu0 0
  %176 = vmatprep.subr.bf16.mxu0 0
  %177 = vmatpush2.bf16.msra.mxu0 0
  %178 = vmatprep.subr.bf16.mxu0 0
  %179 = vmatpush2.bf16.msra.mxu0 0
  %180 = vmatprep.mubr.bf16.mxu0 0
  %181 = vmatmul.mubr.bf16.gmra.mxu0 %v146
  %v182 = vpop.f32.mrf.mxu0
  %v183 = vadd.f32 %v118, %v182
  %v184 = vpop.f32.mrf.mxu0
  %v185 = vpop.f32.mrf.mxu0
  %v186 = vadd.f32 %v118, %v185
  %v187 = vpop.f32.mrf.mxu0
  %188 = vdwg.mxu0
  %v189 = vunpack.c.l.bf16 %v27
  %v190 = vunpack.c.l.bf16 %v28
  %v191 = vadd.f32 %v189, %v183
  %v192 = vadd.f32 %v190, %v186
  %v193 = vld [vmem:[%s5] sm:$0x1]
  %v194 = vld [vmem:[%s6] sm:$0x1]
  %v195 = vsel %vm57, %v191, 0.0
  %196 = vadd.xlane.f32.xlu0 %v195
  %v197 = vpop.xlane.xlu0 %196
  %v198 = vsel %vm57, %v192, 0.0
  %199 = vadd.xlane.f32.xlu0 %v198
  %v200 = vpop.xlane.xlu0 %199
  %v201 = vrcp.pop 32.0
  %v202 = vmul.f32 %v197, %v201
  %v203 = vmul.f32 %v200, %v201
  %v204 = vsub.f32 %v191, %v202
  %v205 = vsub.f32 %v192, %v203
  %v206 = vmul.f32 %v204, %v204
  %v207 = vmul.f32 %v205, %v205
  %v208 = vsel %vm57, %v206, 0.0
  %209 = vadd.xlane.f32.xlu0 %v208
  %v210 = vpop.xlane.xlu0 %209
  %v211 = vsel %vm57, %v207, 0.0
  %212 = vadd.xlane.f32.xlu0 %v211
  %v213 = vpop.xlane.xlu0 %212
  %v214 = vmul.f32 %v210, %v201
  %v215 = vmul.f32 %v213, %v201
  %v216 = vadd.f32 %v214, 1e-05
  %v217 = vadd.f32 %v215, 1e-05
  %v218 = vrsqrt.pop %v216
  %v219 = vrsqrt.pop %v217
  %v220 = vmul.f32 %v204, %v218
  %v221 = vmul.f32 %v205, %v219
  %v223 = vlaneseq
  %v224 = vshrl.u32 %v223, 7
  %v225 = vsub.s32 0, %v224
  %v226 = vrot.slane %v193, %v225
  %v228 = vmul.f32 %v220, %v226
  %v229 = vmul.f32 %v221, %v226
  %v231 = vlaneseq
  %v232 = vshrl.u32 %v231, 7
  %v233 = vsub.s32 0, %v232
  %v234 = vrot.slane %v194, %v233
  %v236 = vadd.f32 %v228, %v234
  %v237 = vadd.f32 %v229, %v234
  %v238 = vpack.c.bf16 %v237, %v236
  %v240 = vunpack.c.l.b16 %v238
  %v241 = vunpack.c.h.b16 %v238
  %v242 = vpack.c.b16 %v240, %v240
  %v243 = vpack.c.b16 %v241, %v241
  %vm246 = vcmask 257024
  %247 = vst.msk [vmem:[%s7] sm:$0xf] %vm246, %v242
  %248 = vst.msk [vmem:[%s7 + $0x4] sm:$0xf] %vm246, %v243
  // Predicated region
  $region30: #{transformer_classifier_forward.14} parent=0 // pred_check
    _
  $region31: #{transformer_classifier_forward.14} parent=0 // pred_check_branch
    %250 = sbr.rel (0) target = $region33
  $region32: #{transformer_classifier_forward.14} parent=0 // pred_region
    _
  $region33: #{transformer_classifier_forward.14} parent=0 // pred_fallthru
    _
  // Predicated region
  $region34: #{transformer_classifier_forward.14} parent=0 // pred_check
    _
  $region35: #{transformer_classifier_forward.14} parent=0 // pred_check_branch
    %252 = sbr.rel (0) target = $region37
  $region36: #{transformer_classifier_forward.14} parent=0 // pred_region
    _
  $region37: #{transformer_classifier_forward.14} parent=0 // pred_fallthru
    _

// kernel: transformer_classifier_forward.23
$region0: #{transformer_classifier_forward.23}
  #allocation0 [shape = 'u32[]', space=smem, size = 0x4, offset = 0x4, fixed_abs, tag = 'smem constant byte address 0x4 - core index']
  #allocation1 [shape = 'u32[144,128]{1,0:T(1,128)}', space=vmem, size = 0x12000, scoped, tag = 'internal scratch']
  #allocation2 [shape = 'f32[8,32]{1,0:T(8,128)}', space=vmem, size = 0x1000, scoped, tag = 'scratch operand']
  %s0 = inlined_call_operand.vmem [shape: bf16[2,8,32], index: 0, kind: input, shape index: {}]
  %s1 = inlined_call_operand.vmem [shape: bf16[32,128], index: 1, kind: input, shape index: {}]
  %s2 = inlined_call_operand.vmem [shape: f32[1,128], index: 2, kind: input, shape index: {}]
  %s3 = inlined_call_operand.hbm [shape: f32[8,128], index: 3, kind: output, shape index: {}]
  %s4 = sld [smem:[#allocation0]]
  $region53: #{transformer_classifier_forward.23} parent=0
    _
  %s6 = ssub.s32 1, %s4
  %s7 = scalar_select 0, %s6, %s4
  $region1: #{transformer_classifier_forward.23} parent=0
    #allocation3 [shape = 'u8[4096]{0}', space=vmem, size = 0x1000, scoped, tag = 'output window, operand 0, single buffered']
    #allocation4 [shape = 's32[2]{0}', space=sflag, size = 0x8, scoped, tag = 'scoped memory for transformer_classifier_forward.23']
    %8 = vsyncpa [#allocation4], 0
    loop: start=0, step=1, limit=4
    $region2: #{transformer_classifier_forward.23} parent=1 // loop_pre_header
      _
    $region3: #{transformer_classifier_forward.23} parent=1 // loop_header
      %s10 = sphi 0, %s14
      %p11 = scmp.ge.s32.totalorder %s10, 4
      %s17 = sphi 0, %s29
      %s18 = sphi 0, %s25
      %s19 = sphi 0, %s17
      %s20 = sphi 0, %s18
      %s21 = sphi 0, %s19
      %s22 = sphi 0, %s20
      %s34 = sphi 0, %s36
      %s37 = sphi 0, %s34
      %s38 = sphi 0, %s37
      %s54 = sphi 0, %s38
      %s58 = sphi 0, %s58
      %s60 = sphi 0, %s58
      %s61 = sphi 0, %s60
      %s75 = sphi 0, %s61
      %s79 = sphi 0, %s79
      %s81 = sphi 0, %s79
      %s82 = sphi 0, %s81
      %s96 = sphi 0, %s82
      %s102 = sphi 0, %s104
      %s105 = sphi 0, %s102
      %s106 = sphi 0, %s105
      %s122 = sphi 0, %s106
    $region4: #{transformer_classifier_forward.23} parent=1 // loop_header_branch
      %13 = sbr.rel (%p11) target = $region8
    $region5: #{transformer_classifier_forward.23} parent=1 // loop_body
      %s15 = ssub.s32 %s10, 1
      %s16 = ssub.s32 %s10, 2
      %s23 = sadd.s32 1, %s18
      %p24 = scmp.ge.s32.totalorder %s23, 2
      %s25 = scalar_select %p24, 0, %s23
      %s26 = sadd.s32 1, %s17
      %s27 = scalar_select %p24, %s26, %s17
      %p28 = scmp.ge.s32.totalorder %s27, 1
      %s29 = scalar_select %p28, 0, %s27
      %s30 = ssub.s32 %s18, %s25
      %s31 = ssub.s32 %s17, %s29
      %s32 = sor.u32 %s30, %s31
      %p33 = scmp.eq.s32.totalorder %s32, 0
      %s35 = sadd.s32 %s34, 1
      %s36 = scalar_select %p33, %s34, %s35
      %p39 = pneg %p33
      %p40 = scmp.eq.s32.totalorder %s10, 1
      %p41 = por %p39, %p40
      %p42 = scmp.ne.s32.totalorder %s34, %s37
      %p43 = scmp.eq.s32.totalorder %s10, 0
      %p44 = por %p42, %p43
      %p45 = scmp.ne.s32.totalorder %s34, %s37
      %p46 = scmp.eq.s32.totalorder %s15, 1
      %p47 = por %p45, %p46
      %p48 = scmp.ne.s32.totalorder %s37, %s38
      %p49 = scmp.eq.s32.totalorder %s15, 0
      %p50 = por %p48, %p49
      %p51 = scmp.ne.s32.totalorder %s37, %s38
      %p52 = scmp.eq.s32.totalorder %s16, 1
      %p53 = por %p51, %p52
      %p55 = scmp.ne.s32.totalorder %s38, %s54
      %p56 = scmp.eq.s32.totalorder %s16, 0
      %p57 = por %p55, %p56
      %s59 = sadd.s32 %s58, 1
      %p62 = scmp.eq.s32.totalorder %s10, 1
      %p63 = scmp.ne.s32.totalorder %s58, %s60
      %p64 = scmp.eq.s32.totalorder %s10, 0
      %p65 = por %p63, %p64
      %p66 = scmp.ne.s32.totalorder %s58, %s60
      %p67 = scmp.eq.s32.totalorder %s15, 1
      %p68 = por %p66, %p67
      %p69 = scmp.ne.s32.totalorder %s60, %s61
      %p70 = scmp.eq.s32.totalorder %s15, 0
      %p71 = por %p69, %p70
      %p72 = scmp.ne.s32.totalorder %s60, %s61
      %p73 = scmp.eq.s32.totalorder %s16, 1
      %p74 = por %p72, %p73
      %p76 = scmp.ne.s32.totalorder %s61, %s75
      %p77 = scmp.eq.s32.totalorder %s16, 0
      %p78 = por %p76, %p77
      %s80 = sadd.s32 %s79, 1
      %p83 = scmp.eq.s32.totalorder %s10, 1
      %p84 = scmp.ne.s32.totalorder %s79, %s81
      %p85 = scmp.eq.s32.totalorder %s10, 0
      %p86 = por %p84, %p85
      %p87 = scmp.ne.s32.totalorder %s79, %s81
      %p88 = scmp.eq.s32.totalorder %s15, 1
      %p89 = por %p87, %p88
      %p90 = scmp.ne.s32.totalorder %s81, %s82
      %p91 = scmp.eq.s32.totalorder %s15, 0
      %p92 = por %p90, %p91
      %p93 = scmp.ne.s32.totalorder %s81, %s82
      %p94 = scmp.eq.s32.totalorder %s16, 1
      %p95 = por %p93, %p94
      %p97 = scmp.ne.s32.totalorder %s82, %s96
      %p98 = scmp.eq.s32.totalorder %s16, 0
      %p99 = por %p97, %p98
      %s100 = ssub.s32 %s17, %s29
      %p101 = scmp.eq.s32.totalorder %s100, 0
      %s103 = sadd.s32 %s102, 1
      %s104 = scalar_select %p101, %s102, %s103
      %p107 = pneg %p101
      %p108 = scmp.eq.s32.totalorder %s10, 1
      %p109 = por %p107, %p108
      %p110 = scmp.ne.s32.totalorder %s102, %s105
      %p111 = scmp.eq.s32.totalorder %s10, 0
      %p112 = por %p110, %p111
      %p113 = scmp.ne.s32.totalorder %s102, %s105
      %p114 = scmp.eq.s32.totalorder %s15, 1
      %p115 = por %p113, %p114
      %p116 = scmp.ne.s32.totalorder %s105, %s106
      %p117 = scmp.eq.s32.totalorder %s15, 0
      %p118 = por %p116, %p117
      %p119 = scmp.ne.s32.totalorder %s105, %s106
      %p120 = scmp.eq.s32.totalorder %s16, 1
      %p121 = por %p119, %p120
      %p123 = scmp.ne.s32.totalorder %s106, %s122
      %p124 = scmp.eq.s32.totalorder %s16, 0
      %p125 = por %p123, %p124
      %p126 = scmp.le.s32.totalorder 1, %s10
      %p127 = scmp.lt.s32.totalorder %s10, 3
      %p128 = pnand %p126, %p127
      %p129 = pneg %p128
      // Predicated region
      $region9: #{transformer_classifier_forward.23} parent=5 // pred_check
        _
      $region10: #{transformer_classifier_forward.23} parent=5 // pred_check_branch
        %131 = sbr.rel (%p128) target = $region12
      $region11: #{transformer_classifier_forward.23} parent=5 // pred_region
        %s132 = ssub.s32 %s10, 1
        // Predicated region
        $region13: #{transformer_classifier_forward.23} parent=11 // pred_check
          %p133 = pneg %p71
        $region14: #{transformer_classifier_forward.23} parent=11 // pred_check_branch
          %135 = sbr.rel (%p133) target = $region16
        $region15: #{transformer_classifier_forward.23} parent=11 // pred_region
          _
        $region16: #{transformer_classifier_forward.23} parent=11 // pred_fallthru
          _
        // Predicated region
        $region17: #{transformer_classifier_forward.23} parent=11 // pred_check
          %p136 = pneg %p92
        $region18: #{transformer_classifier_forward.23} parent=11 // pred_check_branch
          %138 = sbr.rel (%p136) target = $region20
        $region19: #{transformer_classifier_forward.23} parent=11 // pred_region
          _
        $region20: #{transformer_classifier_forward.23} parent=11 // pred_fallthru
          _
      $region12: #{transformer_classifier_forward.23} parent=5 // pred_fallthru
        _
      %p139 = scmp.lt.s32.totalorder %s10, 2
      // Predicated region
      $region21: #{transformer_classifier_forward.23} parent=5 // pred_check
        %p140 = pneg %p139
      $region22: #{transformer_classifier_forward.23} parent=5 // pred_check_branch
        %142 = sbr.rel (%p140) target = $region24
      $region23: #{transformer_classifier_forward.23} parent=5 // pred_region
        // Predicated region
        $region25: #{transformer_classifier_forward.23} parent=23 // pred_check
          %p143 = pneg %p44
        $region26: #{transformer_classifier_forward.23} parent=23 // pred_check_branch
          %145 = sbr.rel (%p143) target = $region28
        $region27: #{transformer_classifier_forward.23} parent=23 // pred_region
          %p146 = scmp.lt.s32.totalorder %s18, 1
          %s147 = scalar_select %p146, %s18, 1
          %p148 = scmp.lt.s32.totalorder %s17, 0
          %s149 = scalar_select %p148, %s17, 0
          %s150 = sadd.s32 %s149, %s147
          %s151 = smul.addr %s150, 4
          %s152 = scalar_lea.vmem %s0, %s151
        $region28: #{transformer_classifier_forward.23} parent=23 // pred_fallthru
          _
      $region24: #{transformer_classifier_forward.23} parent=5 // pred_fallthru
        _
      %p153 = scmp.le.s32.totalorder 1, %s10
      %p154 = scmp.lt.s32.totalorder %s10, 3
      %p155 = pnand %p153, %p154
      %p156 = pneg %p155
      // Predicated region
      $region29: #{transformer_classifier_forward.23} parent=5 // pred_check
        _
      $region30: #{transformer_classifier_forward.23} parent=5 // pred_check_branch
        %158 = sbr.rel (%p155) target = $region32
      $region31: #{transformer_classifier_forward.23} parent=5 // pred_region
        %s159 = ssub.s32 %s10, 1
        %p160 = scmp.lt.s32.totalorder %s20, 1
        %s161 = scalar_select %p160, %s20, 1
        %p162 = scmp.lt.s32.totalorder %s19, 0
        %s163 = scalar_select %p162, %s19, 0
        %s164 = sadd.s32 %s163, %s161
        %s165 = smul.addr %s164, 4
        %s166 = scalar_lea.vmem %s0, %s165
        %p167 = pneg %p50
        %p168 = pneg %p47
        %p169 = pneg %p71
        %p170 = pneg %p68
        %p171 = pneg %p92
        %p172 = pneg %p89
        %p173 = pneg %p118
        %p174 = pneg %p115
        %p175 = scmp.lt.s32.totalorder %s20, 1
        %s176 = scalar_select %p175, %s20, 1
        %p177 = scmp.lt.s32.totalorder %s19, 0
        %s178 = scalar_select %p177, %s19, 0
        %s179 = sadd.s32 %s178, %s176
        %s180 = smul.addr %s179, 4
        %s181 = scalar_lea.vmem %s0, %s180
        %p183 = scmp.eq.s32.totalorder %s20, 0
        // Predicated region
        $region33: #{transformer_classifier_forward.23} parent=31 // pred_check
          %p184 = pneg %p183
        $region34: #{transformer_classifier_forward.23} parent=31 // pred_check_branch
          %186 = sbr.rel (%p184) target = $region36
        $region35: #{transformer_classifier_forward.23} parent=31 // pred_region
          %vm187 = vcmask 261120
          %188 = vst.msk [vmem:[#allocation2] sm:$0xff] %vm187, 0.0
        $region36: #{transformer_classifier_forward.23} parent=31 // pred_fallthru
          _
        %v189 = vld [vmem:[#allocation2] sm:$0xff]
        %v190 = vld [vmem:[%s181] sm:$0xf]
        %v191 = vunpack.c.l.bf16 %v190
        %v192 = vadd.f32 %v189, %v191
        %vm193 = vcmask 261120
        %194 = vst.msk [vmem:[#allocation2] sm:$0xff] %vm193, %v192
        %p195 = scmp.eq.s32.totalorder %s20, 1
        // Predicated region
        $region37: #{transformer_classifier_forward.23} parent=31 // pred_check
          %p196 = pneg %p195
        $region38: #{transformer_classifier_forward.23} parent=31 // pred_check_branch
          %198 = sbr.rel (%p196) target = $region40
        $region39: #{transformer_classifier_forward.23} parent=31 // pred_region
          %v199 = vld [vmem:[#allocation2] sm:$0xff]
          %v200 = vmul.f32 %v199, 0.5
          %v201 = vpack.c.bf16 %v200, %v200
          %v202 = vld [vmem:[%s1] sm:$0xf]
          %v203 = vld [vmem:[%s1 + $0x4] sm:$0xf]
          %v204 = vld [vmem:[%s1 + $0x8] sm:$0xf]
          %v205 = vld [vmem:[%s1 + $0xc] sm:$0xf]
          %v206 = vld [vmem:[%s2] sm:$0x1]
          %v208 = vlaneseq
          %v209 = vshrl.u32 %v208, 7
          %v210 = vsub.s32 0, %v209
          %v211 = vrot.slane %v206, %v210
          %v217 = vunpack.c.l.b16 %v202
          %v218 = vunpack.c.l.b16 %v203
          %v219 = vunpack.c.l.b16 %v204
          %v220 = vunpack.c.l.b16 %v205
          %v221 = vpack.c.b16 %v218, %v217
          %v222 = vpack.c.b16 %v220, %v219
          %v226 = vsel %vm193, %v201, 0
          %228 = vmatprep.subr.bf16.mxu0 0
          %229 = vmatpush1.bf16.msra.mxu0 0
          %230 = vmatprep.subr.bf16.mxu0 0
          %231 = vmatpush1.bf16.msra.mxu0 0
          %232 = vmatprep.subr.bf16.mxu0 0
          %233 = vmatpush1.bf16.msra.mxu0 0
          %234 = vmatprep.subr.bf16.mxu0 0
          %235 = vmatpush1.bf16.msra.mxu0 0
          %236 = vmatprep.subr.bf16.mxu0 0
          %237 = vmatpush1.bf16.msra.mxu0 0
          %238 = vmatprep.subr.bf16.mxu0 0
          %239 = vmatpush1.bf16.msra.mxu0 0
          %240 = vmatprep.subr.bf16.mxu0 0
          %241 = vmatpush1.bf16.msra.mxu0 %v222
          %242 = vmatprep.subr.bf16.mxu0 0
          %243 = vmatpush1.bf16.msra.mxu0 %v221
          %244 = vmatprep.subr.bf16.mxu0 0
          %245 = vmatpush2.bf16.msra.mxu0 0
          %246 = vmatprep.subr.bf16.mxu0 0
          %247 = vmatpush2.bf16.msra.mxu0 0
          %248 = vmatprep.subr.bf16.mxu0 0
          %249 = vmatpush2.bf16.msra.mxu0 0
          %250 = vmatprep.subr.bf16.mxu0 0
          %251 = vmatpush2.bf16.msra.mxu0 0
          %252 = vmatprep.subr.bf16.mxu0 0
          %253 = vmatpush2.bf16.msra.mxu0 0
          %254 = vmatprep.subr.bf16.mxu0 0
          %255 = vmatpush2.bf16.msra.mxu0 0
          %256 = vmatprep.subr.bf16.mxu0 0
          %257 = vmatpush2.bf16.msra.mxu0 0
          %258 = vmatprep.subr.bf16.mxu0 0
          %259 = vmatpush2.bf16.msra.mxu0 0
          %260 = vmatprep.mubr.bf16.mxu0 0
          %261 = vmatmul.mubr.bf16.gmra.mxu0 %v226
          %v262 = vpop.f32.mrf.mxu0
          %v263 = vadd.f32 %v211, %v262
          %v264 = vpop.f32.mrf.mxu0
          %v265 = vpop.f32.mrf.mxu0
          %v266 = vpop.f32.mrf.mxu0
          %267 = vdwg.mxu0
          %268 = vst [vmem:[#allocation3] sm:$0xff] %v263
        $region40: #{transformer_classifier_forward.23} parent=31 // pred_fallthru
          _
        // Predicated region
        $region41: #{transformer_classifier_forward.23} parent=31 // pred_check
          %p269 = pneg %p115
        $region42: #{transformer_classifier_forward.23} parent=31 // pred_check_branch
          %271 = sbr.rel (%p269) target = $region44
        $region43: #{transformer_classifier_forward.23} parent=31 // pred_region
          %s273 = ssub.s32 128, 128
          %274 = vsyncadd [#allocation4], %s273
          %s275 = smul.addr %s19, 128
          %s276 = scalar_lea.hbm %s3, %s275
          %s278 = sshll.u32 [#allocation3], 4
          %s279 = int_to_ptr.vmem [resolvable:$true] %s278
          %281 = dma.vmem_to_hbm [thread:$0]  %s279, 128, %s276, [#allocation4]
        $region44: #{transformer_classifier_forward.23} parent=31 // pred_fallthru
          _
        // Predicated region
        $region45: #{transformer_classifier_forward.23} parent=31 // pred_check
          %p282 = pneg %p115
        $region46: #{transformer_classifier_forward.23} parent=31 // pred_check_branch
          %284 = sbr.rel (%p282) target = $region48
        $region47: #{transformer_classifier_forward.23} parent=31 // pred_region
          %285 = dma.done [#allocation4], 128
        $region48: #{transformer_classifier_forward.23} parent=31 // pred_fallthru
          _
      $region32: #{transformer_classifier_forward.23} parent=5 // pred_fallthru
        _
      %p286 = scmp.le.s32.totalorder 2, %s10
      // Predicated region
      $region49: #{transformer_classifier_forward.23} parent=5 // pred_check
        %p287 = pneg %p286
      $region50: #{transformer_classifier_forward.23} parent=5 // pred_check_branch
        %289 = sbr.rel (%p287) target = $region52
      $region51: #{transformer_classifier_forward.23} parent=5 // pred_region
        %s290 = ssub.s32 %s10, 2
      $region52: #{transformer_classifier_forward.23} parent=5 // pred_fallthru
        _
    $region6: #{transformer_classifier_forward.23} parent=1 // loop_footer
      %s14 = sadd.s32 1, %s10
    $region7: #{transformer_classifier_forward.23} parent=1 // loop_footer_branch
      %9 = sbr.rel target = $region3
    $region8: #{transformer_classifier_forward.23} parent=1 // loop_exit
      _
    %291 = vsyncpa [#allocation4], 1
    %s292 = scalar_lea.sflag [#allocation4], 1
    %293 = vsyncpa %s292, 1

// kernel: transformer_classifier_forward.13
$region0: #{transformer_classifier_forward.13}
  #allocation0 [shape = 'u32[]', space=smem, size = 0x4, offset = 0x4, fixed_abs, tag = 'smem constant byte address 0x4 - core index']
  #allocation1 [shape = 'u32[144,128]{1,0:T(1,128)}', space=vmem, size = 0x12000, scoped, tag = 'internal scratch']
  #allocation2 [shape = 'bf16[4,8,8]{2,1,0:T(8,128)(2,1)}', space=vmem, size = 0x2000, scoped, tag = 'scratch operand']
  #allocation3 [shape = 'bf16[4,8,8]{2,1,0:T(8,128)(2,1)}', space=vmem, size = 0x2000, scoped, tag = 'scratch operand']
  #allocation4 [shape = 'bf16[8,32]{1,0:T(8,128)(2,1)}', space=vmem, size = 0x800, scoped, tag = 'scratch operand']
  %s0 = inlined_call_operand.vmem [shape: bf16[2,8,32], index: 0, kind: input, shape index: {}, may-alias: {0,1}]
  %s1 = inlined_call_operand.vmem [shape: bf16[2,8,32], index: 1, kind: input, shape index: {}, may-alias: {0,1}]
  %s2 = inlined_call_operand.vmem [shape: bf16[4,32,8], index: 2, kind: input, shape index: {}]
  %s3 = inlined_call_operand.vmem [shape: f32[4,1,8], index: 3, kind: input, shape index: {}]
  %s4 = inlined_call_operand.vmem [shape: bf16[4,32,8], index: 4, kind: input, shape index: {}]
  %s5 = inlined_call_operand.vmem [shape: f32[4,1,8], index: 5, kind: input, shape index: {}]
  %s6 = inlined_call_operand.vmem [shape: bf16[4,32,8], index: 6, kind: input, shape index: {}]
  %s7 = inlined_call_operand.vmem [shape: f32[4,1,8], index: 7, kind: input, shape index: {}]
  %s8 = inlined_call_operand.vmem [shape: bf16[32,32], index: 8, kind: input, shape index: {}]
  %s9 = inlined_call_operand.vmem [shape: f32[1,32], index: 9, kind: input, shape index: {}]
  %s10 = inlined_call_operand.vmem [shape: f32[1,32], index: 10, kind: input, shape index: {}]
  %s11 = inlined_call_operand.vmem [shape: f32[1,32], index: 11, kind: input, shape index: {}]
  %s12 = inlined_call_operand.vmem [shape: bf16[2,8,32], index: 12, kind: output, shape index: {}]
  %s13 = sld [smem:[#allocation0]]
  $region85: #{transformer_classifier_forward.13} parent=0
    _
  %s15 = ssub.s32 1, %s13
  %s16 = scalar_select 0, %s15, %s13
  loop: start=0, step=1, limit=4
  $region2: #{transformer_classifier_forward.13} parent=0 // loop_pre_header
    _
  $region3: #{transformer_classifier_forward.13} parent=0 // loop_header
    %s18 = sphi 0, %s22
    %p19 = scmp.ge.s32.totalorder %s18, 4
    %s25 = sphi 0, %s37
    %s26 = sphi 0, %s33
    %s27 = sphi 0, %s25
    %s28 = sphi 0, %s26
    %s29 = sphi 0, %s27
    %s30 = sphi 0, %s28
    %s42 = sphi 0, %s44
    %s45 = sphi 0, %s42
    %s46 = sphi 0, %s45
    %s62 = sphi 0, %s46
    %s68 = sphi 0, %s70
    %s71 = sphi 0, %s68
    %s72 = sphi 0, %s71
    %s88 = sphi 0, %s72
    %s92 = sphi 0, %s92
    %s94 = sphi 0, %s92
    %s95 = sphi 0, %s94
    %s109 = sphi 0, %s95
    %s113 = sphi 0, %s113
    %s115 = sphi 0, %s113
    %s116 = sphi 0, %s115
    %s130 = sphi 0, %s116
    %s134 = sphi 0, %s134
    %s136 = sphi 0, %s134
    %s137 = sphi 0, %s136
    %s151 = sphi 0, %s137
    %s155 = sphi 0, %s155
    %s157 = sphi 0, %s155
    %s158 = sphi 0, %s157
    %s172 = sphi 0, %s158
    %s176 = sphi 0, %s176
    %s178 = sphi 0, %s176
    %s179 = sphi 0, %s178
    %s193 = sphi 0, %s179
    %s197 = sphi 0, %s197
    %s199 = sphi 0, %s197
    %s200 = sphi 0, %s199
    %s214 = sphi 0, %s200
    %s218 = sphi 0, %s218
    %s220 = sphi 0, %s218
    %s221 = sphi 0, %s220
    %s235 = sphi 0, %s221
    %s239 = sphi 0, %s239
    %s241 = sphi 0, %s239
    %s242 = sphi 0, %s241
    %s256 = sphi 0, %s242
    %s260 = sphi 0, %s260
    %s262 = sphi 0, %s260
    %s263 = sphi 0, %s262
    %s277 = sphi 0, %s263
    %s281 = sphi 0, %s281
    %s283 = sphi 0, %s281
    %s284 = sphi 0, %s283
    %s298 = sphi 0, %s284
    %s306 = sphi 0, %s308
    %s309 = sphi 0, %s306
    %s310 = sphi 0, %s309
    %s326 = sphi 0, %s310
  $region4: #{transformer_classifier_forward.13} parent=0 // loop_header_branch
    %21 = sbr.rel (%p19) target = $region8
  $region5: #{transformer_classifier_forward.13} parent=0 // loop_body
    %s23 = ssub.s32 %s18, 1
    %s24 = ssub.s32 %s18, 2
    %s31 = sadd.s32 1, %s26
    %p32 = scmp.ge.s32.totalorder %s31, 1
    %s33 = scalar_select %p32, 0, %s31
    %s34 = sadd.s32 1, %s25
    %s35 = scalar_select %p32, %s34, %s25
    %p36 = scmp.ge.s32.totalorder %s35, 2
    %s37 = scalar_select %p36, 0, %s35
    %s38 = ssub.s32 %s25, %s37
    %s39 = ssub.s32 %s26, %s33
    %s40 = sor.u32 %s38, %s39
    %p41 = scmp.eq.s32.totalorder %s40, 0
    %s43 = sadd.s32 %s42, 1
    %s44 = scalar_select %p41, %s42, %s43
    %p47 = pneg %p41
    %p48 = scmp.eq.s32.totalorder %s18, 1
    %p49 = por %p47, %p48
    %p50 = scmp.ne.s32.totalorder %s42, %s45
    %p51 = scmp.eq.s32.totalorder %s18, 0
    %p52 = por %p50, %p51
    %p53 = scmp.ne.s32.totalorder %s42, %s45
    %p54 = scmp.eq.s32.totalorder %s23, 1
    %p55 = por %p53, %p54
    %p56 = scmp.ne.s32.totalorder %s45, %s46
    %p57 = scmp.eq.s32.totalorder %s23, 0
    %p58 = por %p56, %p57
    %p59 = scmp.ne.s32.totalorder %s45, %s46
    %p60 = scmp.eq.s32.totalorder %s24, 1
    %p61 = por %p59, %p60
    %p63 = scmp.ne.s32.totalorder %s46, %s62
    %p64 = scmp.eq.s32.totalorder %s24, 0
    %p65 = por %p63, %p64
    %s66 = ssub.s32 %s25, %s37
    %p67 = scmp.eq.s32.totalorder %s66, 0
    %s69 = sadd.s32 %s68, 1
    %s70 = scalar_select %p67, %s68, %s69
    %p73 = pneg %p67
    %p74 = scmp.eq.s32.totalorder %s18, 1
    %p75 = por %p73, %p74
    %p76 = scmp.ne.s32.totalorder %s68, %s71
    %p77 = scmp.eq.s32.totalorder %s18, 0
    %p78 = por %p76, %p77
    %p79 = scmp.ne.s32.totalorder %s68, %s71
    %p80 = scmp.eq.s32.totalorder %s23, 1
    %p81 = por %p79, %p80
    %p82 = scmp.ne.s32.totalorder %s71, %s72
    %p83 = scmp.eq.s32.totalorder %s23, 0
    %p84 = por %p82, %p83
    %p85 = scmp.ne.s32.totalorder %s71, %s72
    %p86 = scmp.eq.s32.totalorder %s24, 1
    %p87 = por %p85, %p86
    %p89 = scmp.ne.s32.totalorder %s72, %s88
    %p90 = scmp.eq.s32.totalorder %s24, 0
    %p91 = por %p89, %p90
    %s93 = sadd.s32 %s92, 1
    %p96 = scmp.eq.s32.totalorder %s18, 1
    %p97 = scmp.ne.s32.totalorder %s92, %s94
    %p98 = scmp.eq.s32.totalorder %s18, 0
    %p99 = por %p97, %p98
    %p100 = scmp.ne.s32.totalorder %s92, %s94
    %p101 = scmp.eq.s32.totalorder %s23, 1
    %p102 = por %p100, %p101
    %p103 = scmp.ne.s32.totalorder %s94, %s95
    %p104 = scmp.eq.s32.totalorder %s23, 0
    %p105 = por %p103, %p104
    %p106 = scmp.ne.s32.totalorder %s94, %s95
    %p107 = scmp.eq.s32.totalorder %s24, 1
    %p108 = por %p106, %p107
    %p110 = scmp.ne.s32.totalorder %s95, %s109
    %p111 = scmp.eq.s32.totalorder %s24, 0
    %p112 = por %p110, %p111
    %s114 = sadd.s32 %s113, 1
    %p117 = scmp.eq.s32.totalorder %s18, 1
    %p118 = scmp.ne.s32.totalorder %s113, %s115
    %p119 = scmp.eq.s32.totalorder %s18, 0
    %p120 = por %p118, %p119
    %p121 = scmp.ne.s32.totalorder %s113, %s115
    %p122 = scmp.eq.s32.totalorder %s23, 1
    %p123 = por %p121, %p122
    %p124 = scmp.ne.s32.totalorder %s115, %s116
    %p125 = scmp.eq.s32.totalorder %s23, 0
    %p126 = por %p124, %p125
    %p127 = scmp.ne.s32.totalorder %s115, %s116
    %p128 = scmp.eq.s32.totalorder %s24, 1
    %p129 = por %p127, %p128
    %p131 = scmp.ne.s32.totalorder %s116, %s130
    %p132 = scmp.eq.s32.totalorder %s24, 0
    %p133 = por %p131, %p132
    %s135 = sadd.s32 %s134, 1
    %p138 = scmp.eq.s32.totalorder %s18, 1
    %p139 = scmp.ne.s32.totalorder %s134, %s136
    %p140 = scmp.eq.s32.totalorder %s18, 0
    %p141 = por %p139, %p140
    %p142 = scmp.ne.s32.totalorder %s134, %s136
    %p143 = scmp.eq.s32.totalorder %s23, 1
    %p144 = por %p142, %p143
    %p145 = scmp.ne.s32.totalorder %s136, %s137
    %p146 = scmp.eq.s32.totalorder %s23, 0
    %p147 = por %p145, %p146
    %p148 = scmp.ne.s32.totalorder %s136, %s137
    %p149 = scmp.eq.s32.totalorder %s24, 1
    %p150 = por %p148, %p149
    %p152 = scmp.ne.s32.totalorder %s137, %s151
    %p153 = scmp.eq.s32.totalorder %s24, 0
    %p154 = por %p152, %p153
    %s156 = sadd.s32 %s155, 1
    %p159 = scmp.eq.s32.totalorder %s18, 1
    %p160 = scmp.ne.s32.totalorder %s155, %s157
    %p161 = scmp.eq.s32.totalorder %s18, 0
    %p162 = por %p160, %p161
    %p163 = scmp.ne.s32.totalorder %s155, %s157
    %p164 = scmp.eq.s32.totalorder %s23, 1
    %p165 = por %p163, %p164
    %p166 = scmp.ne.s32.totalorder %s157, %s158
    %p167 = scmp.eq.s32.totalorder %s23, 0
    %p168 = por %p166, %p167
    %p169 = scmp.ne.s32.totalorder %s157, %s158
    %p170 = scmp.eq.s32.totalorder %s24, 1
    %p171 = por %p169, %p170
    %p173 = scmp.ne.s32.totalorder %s158, %s172
    %p174 = scmp.eq.s32.totalorder %s24, 0
    %p175 = por %p173, %p174
    %s177 = sadd.s32 %s176, 1
    %p180 = scmp.eq.s32.totalorder %s18, 1
    %p181 = scmp.ne.s32.totalorder %s176, %s178
    %p182 = scmp.eq.s32.totalorder %s18, 0
    %p183 = por %p181, %p182
    %p184 = scmp.ne.s32.totalorder %s176, %s178
    %p185 = scmp.eq.s32.totalorder %s23, 1
    %p186 = por %p184, %p185
    %p187 = scmp.ne.s32.totalorder %s178, %s179
    %p188 = scmp.eq.s32.totalorder %s23, 0
    %p189 = por %p187, %p188
    %p190 = scmp.ne.s32.totalorder %s178, %s179
    %p191 = scmp.eq.s32.totalorder %s24, 1
    %p192 = por %p190, %p191
    %p194 = scmp.ne.s32.totalorder %s179, %s193
    %p195 = scmp.eq.s32.totalorder %s24, 0
    %p196 = por %p194, %p195
    %s198 = sadd.s32 %s197, 1
    %p201 = scmp.eq.s32.totalorder %s18, 1
    %p202 = scmp.ne.s32.totalorder %s197, %s199
    %p203 = scmp.eq.s32.totalorder %s18, 0
    %p204 = por %p202, %p203
    %p205 = scmp.ne.s32.totalorder %s197, %s199
    %p206 = scmp.eq.s32.totalorder %s23, 1
    %p207 = por %p205, %p206
    %p208 = scmp.ne.s32.totalorder %s199, %s200
    %p209 = scmp.eq.s32.totalorder %s23, 0
    %p210 = por %p208, %p209
    %p211 = scmp.ne.s32.totalorder %s199, %s200
    %p212 = scmp.eq.s32.totalorder %s24, 1
    %p213 = por %p211, %p212
    %p215 = scmp.ne.s32.totalorder %s200, %s214
    %p216 = scmp.eq.s32.totalorder %s24, 0
    %p217 = por %p215, %p216
    %s219 = sadd.s32 %s218, 1
    %p222 = scmp.eq.s32.totalorder %s18, 1
    %p223 = scmp.ne.s32.totalorder %s218, %s220
    %p224 = scmp.eq.s32.totalorder %s18, 0
    %p225 = por %p223, %p224
    %p226 = scmp.ne.s32.totalorder %s218, %s220
    %p227 = scmp.eq.s32.totalorder %s23, 1
    %p228 = por %p226, %p227
    %p229 = scmp.ne.s32.totalorder %s220, %s221
    %p230 = scmp.eq.s32.totalorder %s23, 0
    %p231 = por %p229, %p230
    %p232 = scmp.ne.s32.totalorder %s220, %s221
    %p233 = scmp.eq.s32.totalorder %s24, 1
    %p234 = por %p232, %p233
    %p236 = scmp.ne.s32.totalorder %s221, %s235
    %p237 = scmp.eq.s32.totalorder %s24, 0
    %p238 = por %p236, %p237
    %s240 = sadd.s32 %s239, 1
    %p243 = scmp.eq.s32.totalorder %s18, 1
    %p244 = scmp.ne.s32.totalorder %s239, %s241
    %p245 = scmp.eq.s32.totalorder %s18, 0
    %p246 = por %p244, %p245
    %p247 = scmp.ne.s32.totalorder %s239, %s241
    %p248 = scmp.eq.s32.totalorder %s23, 1
    %p249 = por %p247, %p248
    %p250 = scmp.ne.s32.totalorder %s241, %s242
    %p251 = scmp.eq.s32.totalorder %s23, 0
    %p252 = por %p250, %p251
    %p253 = scmp.ne.s32.totalorder %s241, %s242
    %p254 = scmp.eq.s32.totalorder %s24, 1
    %p255 = por %p253, %p254
    %p257 = scmp.ne.s32.totalorder %s242, %s256
    %p258 = scmp.eq.s32.totalorder %s24, 0
    %p259 = por %p257, %p258
    %s261 = sadd.s32 %s260, 1
    %p264 = scmp.eq.s32.totalorder %s18, 1
    %p265 = scmp.ne.s32.totalorder %s260, %s262
    %p266 = scmp.eq.s32.totalorder %s18, 0
    %p267 = por %p265, %p266
    %p268 = scmp.ne.s32.totalorder %s260, %s262
    %p269 = scmp.eq.s32.totalorder %s23, 1
    %p270 = por %p268, %p269
    %p271 = scmp.ne.s32.totalorder %s262, %s263
    %p272 = scmp.eq.s32.totalorder %s23, 0
    %p273 = por %p271, %p272
    %p274 = scmp.ne.s32.totalorder %s262, %s263
    %p275 = scmp.eq.s32.totalorder %s24, 1
    %p276 = por %p274, %p275
    %p278 = scmp.ne.s32.totalorder %s263, %s277
    %p279 = scmp.eq.s32.totalorder %s24, 0
    %p280 = por %p278, %p279
    %s282 = sadd.s32 %s281, 1
    %p285 = scmp.eq.s32.totalorder %s18, 1
    %p286 = scmp.ne.s32.totalorder %s281, %s283
    %p287 = scmp.eq.s32.totalorder %s18, 0
    %p288 = por %p286, %p287
    %p289 = scmp.ne.s32.totalorder %s281, %s283
    %p290 = scmp.eq.s32.totalorder %s23, 1
    %p291 = por %p289, %p290
    %p292 = scmp.ne.s32.totalorder %s283, %s284
    %p293 = scmp.eq.s32.totalorder %s23, 0
    %p294 = por %p292, %p293
    %p295 = scmp.ne.s32.totalorder %s283, %s284
    %p296 = scmp.eq.s32.totalorder %s24, 1
    %p297 = por %p295, %p296
    %p299 = scmp.ne.s32.totalorder %s284, %s298
    %p300 = scmp.eq.s32.totalorder %s24, 0
    %p301 = por %p299, %p300
    %s302 = ssub.s32 %s25, %s37
    %s303 = ssub.s32 %s26, %s33
    %s304 = sor.u32 %s302, %s303
    %p305 = scmp.eq.s32.totalorder %s304, 0
    %s307 = sadd.s32 %s306, 1
    %s308 = scalar_select %p305, %s306, %s307
    %p311 = pneg %p305
    %p312 = scmp.eq.s32.totalorder %s18, 1
    %p313 = por %p311, %p312
    %p314 = scmp.ne.s32.totalorder %s306, %s309
    %p315 = scmp.eq.s32.totalorder %s18, 0
    %p316 = por %p314, %p315
    %p317 = scmp.ne.s32.totalorder %s306, %s309
    %p318 = scmp.eq.s32.totalorder %s23, 1
    %p319 = por %p317, %p318
    %p320 = scmp.ne.s32.totalorder %s309, %s310
    %p321 = scmp.eq.s32.totalorder %s23, 0
    %p322 = por %p320, %p321
    %p323 = scmp.ne.s32.totalorder %s309, %s310
    %p324 = scmp.eq.s32.totalorder %s24, 1
    %p325 = por %p323, %p324
    %p327 = scmp.ne.s32.totalorder %s310, %s326
    %p328 = scmp.eq.s32.totalorder %s24, 0
    %p329 = por %p327, %p328
    %p330 = scmp.le.s32.totalorder 1, %s18
    %p331 = scmp.lt.s32.totalorder %s18, 3
    %p332 = pnand %p330, %p331
    %p333 = pneg %p332
    // Predicated region
    $region9: #{transformer_classifier_forward.13} parent=5 // pred_check
      _
    $region10: #{transformer_classifier_forward.13} parent=5 // pred_check_branch
      %335 = sbr.rel (%p332) target = $region12
    $region11: #{transformer_classifier_forward.13} parent=5 // pred_region
      %s336 = ssub.s32 %s18, 1
      // Predicated region
      $region13: #{transformer_classifier_forward.13} parent=11 // pred_check
        %p337 = pneg %p105
      $region14: #{transformer_classifier_forward.13} parent=11 // pred_check_branch
        %339 = sbr.rel (%p337) target = $region16
      $region15: #{transformer_classifier_forward.13} parent=11 // pred_region
        _
      $region16: #{transformer_classifier_forward.13} parent=11 // pred_fallthru
        _
      // Predicated region
      $region17: #{transformer_classifier_forward.13} parent=11 // pred_check
        %p340 = pneg %p126
      $region18: #{transformer_classifier_forward.13} parent=11 // pred_check_branch
        %342 = sbr.rel (%p340) target = $region20
      $region19: #{transformer_classifier_forward.13} parent=11 // pred_region
        _
      $region20: #{transformer_classifier_forward.13} parent=11 // pred_fallthru
        _
      // Predicated region
      $region21: #{transformer_classifier_forward.13} parent=11 // pred_check
        %p343 = pneg %p147
      $region22: #{transformer_classifier_forward.13} parent=11 // pred_check_branch
        %345 = sbr.rel (%p343) target = $region24
      $region23: #{transformer_classifier_forward.13} parent=11 // pred_region
        _
      $region24: #{transformer_classifier_forward.13} parent=11 // pred_fallthru
        _
      // Predicated region
      $region25: #{transformer_classifier_forward.13} parent=11 // pred_check
        %p346 = pneg %p168
      $region26: #{transformer_classifier_forward.13} parent=11 // pred_check_branch
        %348 = sbr.rel (%p346) target = $region28
      $region27: #{transformer_classifier_forward.13} parent=11 // pred_region
        _
      $region28: #{transformer_classifier_forward.13} parent=11 // pred_fallthru
        _
      // Predicated region
      $region29: #{transformer_classifier_forward.13} parent=11 // pred_check
        %p349 = pneg %p189
      $region30: #{transformer_classifier_forward.13} parent=11 // pred_check_branch
        %351 = sbr.rel (%p349) target = $region32
      $region31: #{transformer_classifier_forward.13} parent=11 // pred_region
        _
      $region32: #{transformer_classifier_forward.13} parent=11 // pred_fallthru
        _
      // Predicated region
      $region33: #{transformer_classifier_forward.13} parent=11 // pred_check
        %p352 = pneg %p210
      $region34: #{transformer_classifier_forward.13} parent=11 // pred_check_branch
        %354 = sbr.rel (%p352) target = $region36
      $region35: #{transformer_classifier_forward.13} parent=11 // pred_region
        _
      $region36: #{transformer_classifier_forward.13} parent=11 // pred_fallthru
        _
      // Predicated region
      $region37: #{transformer_classifier_forward.13} parent=11 // pred_check
        %p355 = pneg %p231
      $region38: #{transformer_classifier_forward.13} parent=11 // pred_check_branch
        %357 = sbr.rel (%p355) target = $region40
      $region39: #{transformer_classifier_forward.13} parent=11 // pred_region
        _
      $region40: #{transformer_classifier_forward.13} parent=11 // pred_fallthru
        _
      // Predicated region
      $region41: #{transformer_classifier_forward.13} parent=11 // pred_check
        %p358 = pneg %p252
      $region42: #{transformer_classifier_forward.13} parent=11 // pred_check_branch
        %360 = sbr.rel (%p358) target = $region44
      $region43: #{transformer_classifier_forward.13} parent=11 // pred_region
        _
      $region44: #{transformer_classifier_forward.13} parent=11 // pred_fallthru
        _
      // Predicated region
      $region45: #{transformer_classifier_forward.13} parent=11 // pred_check
        %p361 = pneg %p273
      $region46: #{transformer_classifier_forward.13} parent=11 // pred_check_branch
        %363 = sbr.rel (%p361) target = $region48
      $region47: #{transformer_classifier_forward.13} parent=11 // pred_region
        _
      $region48: #{transformer_classifier_forward.13} parent=11 // pred_fallthru
        _
      // Predicated region
      $region49: #{transformer_classifier_forward.13} parent=11 // pred_check
        %p364 = pneg %p294
      $region50: #{transformer_classifier_forward.13} parent=11 // pred_check_branch
        %366 = sbr.rel (%p364) target = $region52
      $region51: #{transformer_classifier_forward.13} parent=11 // pred_region
        _
      $region52: #{transformer_classifier_forward.13} parent=11 // pred_fallthru
        _
    $region12: #{transformer_classifier_forward.13} parent=5 // pred_fallthru
      _
    %p367 = scmp.lt.s32.totalorder %s18, 2
    // Predicated region
    $region53: #{transformer_classifier_forward.13} parent=5 // pred_check
      %p368 = pneg %p367
    $region54: #{transformer_classifier_forward.13} parent=5 // pred_check_branch
      %370 = sbr.rel (%p368) target = $region56
    $region55: #{transformer_classifier_forward.13} parent=5 // pred_region
      // Predicated region
      $region57: #{transformer_classifier_forward.13} parent=55 // pred_check
        %p371 = pneg %p52
      $region58: #{transformer_classifier_forward.13} parent=55 // pred_check_branch
        %373 = sbr.rel (%p371) target = $region60
      $region59: #{transformer_classifier_forward.13} parent=55 // pred_region
        %p374 = scmp.lt.s32.totalorder %s25, 1
        %s375 = scalar_select %p374, %s25, 1
        %p376 = scmp.lt.s32.totalorder %s26, 0
        %s377 = scalar_select %p376, %s26, 0
        %s378 = sadd.s32 %s377, %s375
        %s379 = smul.addr %s378, 4
        %s380 = scalar_lea.vmem %s0, %s379
      $region60: #{transformer_classifier_forward.13} parent=55 // pred_fallthru
        _
      // Predicated region
      $region61: #{transformer_classifier_forward.13} parent=55 // pred_check
        %p381 = pneg %p78
      $region62: #{transformer_classifier_forward.13} parent=55 // pred_check_branch
        %383 = sbr.rel (%p381) target = $region64
      $region63: #{transformer_classifier_forward.13} parent=55 // pred_region
        %p384 = scmp.lt.s32.totalorder %s25, 1
        %s385 = scalar_select %p384, %s25, 1
        %s386 = smul.addr %s385, 4
        %s387 = scalar_lea.vmem %s1, %s386
      $region64: #{transformer_classifier_forward.13} parent=55 // pred_fallthru
        _
    $region56: #{transformer_classifier_forward.13} parent=5 // pred_fallthru
      _
    %p388 = scmp.le.s32.totalorder 1, %s18
    %p389 = scmp.lt.s32.totalorder %s18, 3
    %p390 = pnand %p388, %p389
    %p391 = pneg %p390
    // Predicated region
    $region65: #{transformer_classifier_forward.13} parent=5 // pred_check
      _
    $region66: #{transformer_classifier_forward.13} parent=5 // pred_check_branch
      %393 = sbr.rel (%p390) target = $region68
    $region67: #{transformer_classifier_forward.13} parent=5 // pred_region
      %s394 = ssub.s32 %s18, 1
      %p395 = scmp.lt.s32.totalorder %s27, 1
      %s396 = scalar_select %p395, %s27, 1
      %p397 = scmp.lt.s32.totalorder %s28, 0
      %s398 = scalar_select %p397, %s28, 0
      %s399 = sadd.s32 %s398, %s396
      %s400 = smul.addr %s399, 4
      %s401 = scalar_lea.vmem %s0, %s400
      %p402 = pneg %p58
      %p403 = pneg %p55
      %p404 = scmp.lt.s32.totalorder %s27, 1
      %s405 = scalar_select %p404, %s27, 1
      %s406 = smul.addr %s405, 4
      %s407 = scalar_lea.vmem %s1, %s406
      %p408 = pneg %p84
      %p409 = pneg %p81
      %p410 = pneg %p105
      %p411 = pneg %p102
      %p412 = pneg %p126
      %p413 = pneg %p123
      %p414 = pneg %p147
      %p415 = pneg %p144
      %p416 = pneg %p168
      %p417 = pneg %p165
      %p418 = pneg %p189
      %p419 = pneg %p186
      %p420 = pneg %p210
      %p421 = pneg %p207
      %p422 = pneg %p231
      %p423 = pneg %p228
      %p424 = pneg %p252
      %p425 = pneg %p249
      %p426 = pneg %p273
      %p427 = pneg %p270
      %p428 = pneg %p294
      %p429 = pneg %p291
      %p430 = pneg %p322
      %p431 = pneg %p319
      %p432 = scmp.lt.s32.totalorder %s27, 1
      %s433 = scalar_select %p432, %s27, 1
      %p434 = scmp.lt.s32.totalorder %s28, 0
      %s435 = scalar_select %p434, %s28, 0
      %s436 = sadd.s32 %s435, %s433
      %s437 = smul.addr %s436, 4
      %s438 = scalar_lea.vmem %s12, %s437
      %p439 = scmp.lt.s32.totalorder %s27, 1
      %s440 = scalar_select %p439, %s27, 1
      %p441 = scmp.lt.s32.totalorder %s28, 0
      %s442 = scalar_select %p441, %s28, 0
      %s443 = sadd.s32 %s442, %s440
      %s444 = smul.addr %s443, 4
      %s445 = scalar_lea.vmem %s0, %s444
      %p446 = scmp.lt.s32.totalorder %s27, 1
      %s447 = scalar_select %p446, %s27, 1
      %s448 = smul.addr %s447, 4
      %s449 = scalar_lea.vmem %s1, %s448
      %p450 = scmp.lt.s32.totalorder %s27, 1
      %s451 = scalar_select %p450, %s27, 1
      %p452 = scmp.lt.s32.totalorder %s28, 0
      %s453 = scalar_select %p452, %s28, 0
      %s454 = sadd.s32 %s453, %s451
      %s455 = smul.addr %s454, 4
      %s456 = scalar_lea.vmem %s12, %s455
      %p458 = scmp.eq.s32.totalorder %s28, 0
      // Predicated region
      $region69: #{transformer_classifier_forward.13} parent=67 // pred_check
        %p459 = pneg %p458
      $region70: #{transformer_classifier_forward.13} parent=67 // pred_check_branch
        %461 = sbr.rel (%p459) target = $region72
      $region71: #{transformer_classifier_forward.13} parent=67 // pred_region
        %v462 = vld [vmem:[%s449] sm:$0xf]
        %v463 = vld [vmem:[%s4] sm:$0xf]
        %v464 = vld [vmem:[%s4 + $0x4] sm:$0xf]
        %v465 = vld [vmem:[%s4 + $0x8] sm:$0xf]
        %v466 = vld [vmem:[%s4 + $0xc] sm:$0xf]
        %v467 = vld [vmem:[%s5] sm:$0x1]
        %v469 = vlaneseq
        %v470 = vshrl.u32 %v469, 7
        %v471 = vsub.s32 0, %v470
        %v472 = vrot.slane %v467, %v471
        %v478 = vunpack.c.l.b16 %v463
        %v479 = vunpack.c.l.b16 %v464
        %v480 = vunpack.c.l.b16 %v465
        %v481 = vunpack.c.l.b16 %v466
        %v482 = vpack.c.b16 %v479, %v478
        %v483 = vpack.c.b16 %v481, %v480
        %vm486 = vcmask 261120
        %v488 = vsel %vm486, %v462, 0
        %490 = vmatprep.subr.bf16.mxu0 0
        %491 = vmatpush1.bf16.msra.mxu0 0
        %492 = vmatprep.subr.bf16.mxu0 0
        %493 = vmatpush1.bf16.msra.mxu0 0
        %494 = vmatprep.subr.bf16.mxu0 0
        %495 = vmatpush1.bf16.msra.mxu0 0
        %496 = vmatprep.subr.bf16.mxu0 0
        %497 = vmatpush1.bf16.msra.mxu0 0
        %498 = vmatprep.subr.bf16.mxu0 0
        %499 = vmatpush1.bf16.msra.mxu0 0
        %500 = vmatprep.subr.bf16.mxu0 0
        %501 = vmatpush1.bf16.msra.mxu0 0
        %502 = vmatprep.subr.bf16.mxu0 0
        %503 = vmatpush1.bf16.msra.mxu0 %v483
        %504 = vmatprep.subr.bf16.mxu0 0
        %505 = vmatpush1.bf16.msra.mxu0 %v482
        %506 = vmatprep.subr.bf16.mxu0 0
        %507 = vmatpush2.bf16.msra.mxu0 0
        %508 = vmatprep.subr.bf16.mxu0 0
        %509 = vmatpush2.bf16.msra.mxu0 0
        %510 = vmatprep.subr.bf16.mxu0 0
        %511 = vmatpush2.bf16.msra.mxu0 0
        %512 = vmatprep.subr.bf16.mxu0 0
        %513 = vmatpush2.bf16.msra.mxu0 0
        %514 = vmatprep.subr.bf16.mxu0 0
        %515 = vmatpush2.bf16.msra.mxu0 0
        %516 = vmatprep.subr.bf16.mxu0 0
        %517 = vmatpush2.bf16.msra.mxu0 0
        %518 = vmatprep.subr.bf16.mxu0 0
        %519 = vmatpush2.bf16.msra.mxu0 0
        %520 = vmatprep.subr.bf16.mxu0 0
        %521 = vmatpush2.bf16.msra.mxu0 0
        %522 = vmatprep.mubr.bf16.mxu0 0
        %523 = vmatmul.mubr.bf16.gmra.mxu0 %v488
        %v524 = vpop.f32.mrf.mxu0
        %v525 = vadd.f32 %v472, %v524
        %v526 = vpop.f32.mrf.mxu0
        %v527 = vpop.f32.mrf.mxu0
        %v528 = vpop.f32.mrf.mxu0
        %529 = vdwg.mxu0
        %v530 = vpack.c.bf16 %v525, %v525
        %vm531 = vcmask 60416
        %532 = vst.msk [vmem:[#allocation2] sm:$0xf] %vm531, %v530
        %v533 = vld [vmem:[%s6] sm:$0xf]
        %v534 = vld [vmem:[%s6 + $0x4] sm:$0xf]
        %v535 = vld [vmem:[%s6 + $0x8] sm:$0xf]
        %v536 = vld [vmem:[%s6 + $0xc] sm:$0xf]
        %v537 = vld [vmem:[%s7] sm:$0x1]
        %v539 = vlaneseq
        %v540 = vshrl.u32 %v539, 7
        %v541 = vsub.s32 0, %v540
        %v542 = vrot.slane %v537, %v541
        %v548 = vunpack.c.l.b16 %v533
        %v549 = vunpack.c.l.b16 %v534
        %v550 = vunpack.c.l.b16 %v535
        %v551 = vunpack.c.l.b16 %v536
        %v552 = vpack.c.b16 %v549, %v548
        %v553 = vpack.c.b16 %v551, %v550
        %556 = vmatprep.subr.bf16.mxu0 0
        %557 = vmatpush1.bf16.msra.mxu0 0
        %558 = vmatprep.subr.bf16.mxu0 0
        %559 = vmatpush1.bf16.msra.mxu0 0
        %560 = vmatprep.subr.bf16.mxu0 0
        %561 = vmatpush1.bf16.msra.mxu0 0
        %562 = vmatprep.subr.bf16.mxu0 0
        %563 = vmatpush1.bf16.msra.mxu0 0
        %564 = vmatprep.subr.bf16.mxu0 0
        %565 = vmatpush1.bf16.msra.mxu0 0
        %566 = vmatprep.subr.bf16.mxu0 0
        %567 = vmatpush1.bf16.msra.mxu0 0
        %568 = vmatprep.subr.bf16.mxu0 0
        %569 = vmatpush1.bf16.msra.mxu0 %v553
        %570 = vmatprep.subr.bf16.mxu0 0
        %571 = vmatpush1.bf16.msra.mxu0 %v552
        %572 = vmatprep.subr.bf16.mxu0 0
        %573 = vmatpush2.bf16.msra.mxu0 0
        %574 = vmatprep.subr.bf16.mxu0 0
        %575 = vmatpush2.bf16.msra.mxu0 0
        %576 = vmatprep.subr.bf16.mxu0 0
        %577 = vmatpush2.bf16.msra.mxu0 0
        %578 = vmatprep.subr.bf16.mxu0 0
        %579 = vmatpush2.bf16.msra.mxu0 0
        %580 = vmatprep.subr.bf16.mxu0 0
        %581 = vmatpush2.bf16.msra.mxu0 0
        %582 = vmatprep.subr.bf16.mxu0 0
        %583 = vmatpush2.bf16.msra.mxu0 0
        %584 = vmatprep.subr.bf16.mxu0 0
        %585 = vmatpush2.bf16.msra.mxu0 0
        %586 = vmatprep.subr.bf16.mxu0 0
        %587 = vmatpush2.bf16.msra.mxu0 0
        %588 = vmatprep.mubr.bf16.mxu0 0
        %589 = vmatmul.mubr.bf16.gmra.mxu0 %v488
        %v590 = vpop.f32.mrf.mxu0
        %v591 = vadd.f32 %v542, %v590
        %v592 = vpop.f32.mrf.mxu0
        %v593 = vpop.f32.mrf.mxu0
        %v594 = vpop.f32.mrf.mxu0
        %595 = vdwg.mxu0
        %v596 = vpack.c.bf16 %v591, %v591
        %597 = vst.msk [vmem:[#allocation3] sm:$0xf] %vm531, %v596
        %s598 = scalar_lea.vmem %s4, 16
        %v599 = vld [vmem:[%s598] sm:$0xf]
        %v600 = vld [vmem:[%s598 + $0x4] sm:$0xf]
        %v601 = vld [vmem:[%s598 + $0x8] sm:$0xf]
        %v602 = vld [vmem:[%s598 + $0xc] sm:$0xf]
        %s603 = scalar_lea.vmem %s5, 1
        %v604 = vld [vmem:[%s603] sm:$0x1]
        %v606 = vlaneseq
        %v607 = vshrl.u32 %v606, 7
        %v608 = vsub.s32 0, %v607
        %v609 = vrot.slane %v604, %v608
        %v615 = vunpack.c.l.b16 %v599
        %v616 = vunpack.c.l.b16 %v600
        %v617 = vunpack.c.l.b16 %v601
        %v618 = vunpack.c.l.b16 %v602
        %v619 = vpack.c.b16 %v616, %v615
        %v620 = vpack.c.b16 %v618, %v617
        %623 = vmatprep.subr.bf16.mxu0 0
        %624 = vmatpush1.bf16.msra.mxu0 0
        %625 = vmatprep.subr.bf16.mxu0 0
        %626 = vmatpush1.bf16.msra.mxu0 0
        %627 = vmatprep.subr.bf16.mxu0 0
        %628 = vmatpush1.bf16.msra.mxu0 0
        %629 = vmatprep.subr.bf16.mxu0 0
        %630 = vmatpush1.bf16.msra.mxu0 0
        %631 = vmatprep.subr.bf16.mxu0 0
        %632 = vmatpush1.bf16.msra.mxu0 0
        %633 = vmatprep.subr.bf16.mxu0 0
        %634 = vmatpush1.bf16.msra.mxu0 0
        %635 = vmatprep.subr.bf16.mxu0 0
        %636 = vmatpush1.bf16.msra.mxu0 %v620
        %637 = vmatprep.subr.bf16.mxu0 0
        %638 = vmatpush1.bf16.msra.mxu0 %v619
        %639 = vmatprep.subr.bf16.mxu0 0
        %640 = vmatpush2.bf16.msra.mxu0 0
        %641 = vmatprep.subr.bf16.mxu0 0
        %642 = vmatpush2.bf16.msra.mxu0 0
        %643 = vmatprep.subr.bf16.mxu0 0
        %644 = vmatpush2.bf16.msra.mxu0 0
        %645 = vmatprep.subr.bf16.mxu0 0
        %646 = vmatpush2.bf16.msra.mxu0 0
        %647 = vmatprep.subr.bf16.mxu0 0
        %648 = vmatpush2.bf16.msra.mxu0 0
        %649 = vmatprep.subr.bf16.mxu0 0
        %650 = vmatpush2.bf16.msra.mxu0 0
        %651 = vmatprep.subr.bf16.mxu0 0
        %652 = vmatpush2.bf16.msra.mxu0 0
        %653 = vmatprep.subr.bf16.mxu0 0
        %654 = vmatpush2.bf16.msra.mxu0 0
        %655 = vmatprep.mubr.bf16.mxu0 0
        %656 = vmatmul.mubr.bf16.gmra.mxu0 %v488
        %v657 = vpop.f32.mrf.mxu0
        %v658 = vadd.f32 %v609, %v657
        %v659 = vpop.f32.mrf.mxu0
        %v660 = vpop.f32.mrf.mxu0
        %v661 = vpop.f32.mrf.mxu0
        %662 = vdwg.mxu0
        %v663 = vpack.c.bf16 %v658, %v658
        %s664 = scalar_lea.vmem [#allocation2], 4
        %665 = vst.msk [vmem:[%s664] sm:$0xf] %vm531, %v663
        %s666 = scalar_lea.vmem %s6, 16
        %v667 = vld [vmem:[%s666] sm:$0xf]
        %v668 = vld [vmem:[%s666 + $0x4] sm:$0xf]
        %v669 = vld [vmem:[%s666 + $0x8] sm:$0xf]
        %v670 = vld [vmem:[%s666 + $0xc] sm:$0xf]
        %s671 = scalar_lea.vmem %s7, 1
        %v672 = vld [vmem:[%s671] sm:$0x1]
        %v674 = vlaneseq
        %v675 = vshrl.u32 %v674, 7
        %v676 = vsub.s32 0, %v675
        %v677 = vrot.slane %v672, %v676
        %v683 = vunpack.c.l.b16 %v667
        %v684 = vunpack.c.l.b16 %v668
        %v685 = vunpack.c.l.b16 %v669
        %v686 = vunpack.c.l.b16 %v670
        %v687 = vpack.c.b16 %v684, %v683
        %v688 = vpack.c.b16 %v686, %v685
        %691 = vmatprep.subr.bf16.mxu0 0
        %692 = vmatpush1.bf16.msra.mxu0 0
        %693 = vmatprep.subr.bf16.mxu0 0
        %694 = vmatpush1.bf16.msra.mxu0 0
        %695 = vmatprep.subr.bf16.mxu0 0
        %696 = vmatpush1.bf16.msra.mxu0 0
        %697 = vmatprep.subr.bf16.mxu0 0
        %698 = vmatpush1.bf16.msra.mxu0 0
        %699 = vmatprep.subr.bf16.mxu0 0
        %700 = vmatpush1.bf16.msra.mxu0 0
        %701 = vmatprep.subr.bf16.mxu0 0
        %702 = vmatpush1.bf16.msra.mxu0 0
        %703 = vmatprep.subr.bf16.mxu0 0
        %704 = vmatpush1.bf16.msra.mxu0 %v688
        %705 = vmatprep.subr.bf16.mxu0 0
        %706 = vmatpush1.bf16.msra.mxu0 %v687
        %707 = vmatprep.subr.bf16.mxu0 0
        %708 = vmatpush2.bf16.msra.mxu0 0
        %709 = vmatprep.subr.bf16.mxu0 0
        %710 = vmatpush2.bf16.msra.mxu0 0
        %711 = vmatprep.subr.bf16.mxu0 0
        %712 = vmatpush2.bf16.msra.mxu0 0
        %713 = vmatprep.subr.bf16.mxu0 0
        %714 = vmatpush2.bf16.msra.mxu0 0
        %715 = vmatprep.subr.bf16.mxu0 0
        %716 = vmatpush2.bf16.msra.mxu0 0
        %717 = vmatprep.subr.bf16.mxu0 0
        %718 = vmatpush2.bf16.msra.mxu0 0
        %719 = vmatprep.subr.bf16.mxu0 0
        %720 = vmatpush2.bf16.msra.mxu0 0
        %721 = vmatprep.subr.bf16.mxu0 0
        %722 = vmatpush2.bf16.msra.mxu0 0
        %723 = vmatprep.mubr.bf16.mxu0 0
        %724 = vmatmul.mubr.bf16.gmra.mxu0 %v488
        %v725 = vpop.f32.mrf.mxu0
        %v726 = vadd.f32 %v677, %v725
        %v727 = vpop.f32.mrf.mxu0
        %v728 = vpop.f32.mrf.mxu0
        %v729 = vpop.f32.mrf.mxu0
        %730 = vdwg.mxu0
        %v731 = vpack.c.bf16 %v726, %v726
        %s732 = scalar_lea.vmem [#allocation3], 4
        %733 = vst.msk [vmem:[%s732] sm:$0xf] %vm531, %v731
        %s734 = scalar_lea.vmem %s4, 32
        %v735 = vld [vmem:[%s734] sm:$0xf]
        %v736 = vld [vmem:[%s734 + $0x4] sm:$0xf]
        %v737 = vld [vmem:[%s734 + $0x8] sm:$0xf]
        %v738 = vld [vmem:[%s734 + $0xc] sm:$0xf]
        %s739 = scalar_lea.vmem %s5, 2
        %v740 = vld [vmem:[%s739] sm:$0x1]
        %v742 = vlaneseq
        %v743 = vshrl.u32 %v742, 7
        %v744 = vsub.s32 0, %v743
        %v745 = vrot.slane %v740, %v744
        %v751 = vunpack.c.l.b16 %v735
        %v752 = vunpack.c.l.b16 %v736
        %v753 = vunpack.c.l.b16 %v737
        %v754 = vunpack.c.l.b16 %v738
        %v755 = vpack.c.b16 %v752, %v751
        %v756 = vpack.c.b16 %v754, %v753
        %759 = vmatprep.subr.bf16.mxu0 0
        %760 = vmatpush1.bf16.msra.mxu0 0
        %761 = vmatprep.subr.bf16.mxu0 0
        %762 = vmatpush1.bf16.msra.mxu0 0
        %763 = vmatprep.subr.bf16.mxu0 0
        %764 = vmatpush1.bf16.msra.mxu0 0
        %765 = vmatprep.subr.bf16.mxu0 0
        %766 = vmatpush1.bf16.msra.mxu0 0
        %767 = vmatprep.subr.bf16.mxu0 0
        %768 = vmatpush1.bf16.msra.mxu0 0
        %769 = vmatprep.subr.bf16.mxu0 0
        %770 = vmatpush1.bf16.msra.mxu0 0
        %771 = vmatprep.subr.bf16.mxu0 0
        %772 = vmatpush1.bf16.msra.mxu0 %v756
        %773 = vmatprep.subr.bf16.mxu0 0
        %774 = vmatpush1.bf16.msra.mxu0 %v755
        %775 = vmatprep.subr.bf16.mxu0 0
        %776 = vmatpush2.bf16.msra.mxu0 0
        %777 = vmatprep.subr.bf16.mxu0 0
        %778 = vmatpush2.bf16.msra.mxu0 0
        %779 = vmatprep.subr.bf16.mxu0 0
        %780 = vmatpush2.bf16.msra.mxu0 0
        %781 = vmatprep.subr.bf16.mxu0 0
        %782 = vmatpush2.bf16.msra.mxu0 0
        %783 = vmatprep.subr.bf16.mxu0 0
        %784 = vmatpush2.bf16.msra.mxu0 0
        %785 = vmatprep.subr.bf16.mxu0 0
        %786 = vmatpush2.bf16.msra.mxu0 0
        %787 = vmatprep.subr.bf16.mxu0 0
        %788 = vmatpush2.bf16.msra.mxu0 0
        %789 = vmatprep.subr.bf16.mxu0 0
        %790 = vmatpush2.bf16.msra.mxu0 0
        %791 = vmatprep.mubr.bf16.mxu0 0
        %792 = vmatmul.mubr.bf16.gmra.mxu0 %v488
        %v793 = vpop.f32.mrf.mxu0
        %v794 = vadd.f32 %v745, %v793
        %v795 = vpop.f32.mrf.mxu0
        %v796 = vpop.f32.mrf.mxu0
        %v797 = vpop.f32.mrf.mxu0
        %798 = vdwg.mxu0
        %v799 = vpack.c.bf16 %v794, %v794
        %s800 = scalar_lea.vmem [#allocation2], 8
        %801 = vst.msk [vmem:[%s800] sm:$0xf] %vm531, %v799
        %s802 = scalar_lea.vmem %s6, 32
        %v803 = vld [vmem:[%s802] sm:$0xf]
        %v804 = vld [vmem:[%s802 + $0x4] sm:$0xf]
        %v805 = vld [vmem:[%s802 + $0x8] sm:$0xf]
        %v806 = vld [vmem:[%s802 + $0xc] sm:$0xf]
        %s807 = scalar_lea.vmem %s7, 2
        %v808 = vld [vmem:[%s807] sm:$0x1]
        %v810 = vlaneseq
        %v811 = vshrl.u32 %v810, 7
        %v812 = vsub.s32 0, %v811
        %v813 = vrot.slane %v808, %v812
        %v819 = vunpack.c.l.b16 %v803
        %v820 = vunpack.c.l.b16 %v804
        %v821 = vunpack.c.l.b16 %v805
        %v822 = vunpack.c.l.b16 %v806
        %v823 = vpack.c.b16 %v820, %v819
        %v824 = vpack.c.b16 %v822, %v821
        %827 = vmatprep.subr.bf16.mxu0 0
        %828 = vmatpush1.bf16.msra.mxu0 0
        %829 = vmatprep.subr.bf16.mxu0 0
        %830 = vmatpush1.bf16.msra.mxu0 0
        %831 = vmatprep.subr.bf16.mxu0 0
        %832 = vmatpush1.bf16.msra.mxu0 0
        %833 = vmatprep.subr.bf16.mxu0 0
        %834 = vmatpush1.bf16.msra.mxu0 0
        %835 = vmatprep.subr.bf16.mxu0 0
        %836 = vmatpush1.bf16.msra.mxu0 0
        %837 = vmatprep.subr.bf16.mxu0 0
        %838 = vmatpush1.bf16.msra.mxu0 0
        %839 = vmatprep.subr.bf16.mxu0 0
        %840 = vmatpush1.bf16.msra.mxu0 %v824
        %841 = vmatprep.subr.bf16.mxu0 0
        %842 = vmatpush1.bf16.msra.mxu0 %v823
        %843 = vmatprep.subr.bf16.mxu0 0
        %844 = vmatpush2.bf16.msra.mxu0 0
        %845 = vmatprep.subr.bf16.mxu0 0
        %846 = vmatpush2.bf16.msra.mxu0 0
        %847 = vmatprep.subr.bf16.mxu0 0
        %848 = vmatpush2.bf16.msra.mxu0 0
        %849 = vmatprep.subr.bf16.mxu0 0
        %850 = vmatpush2.bf16.msra.mxu0 0
        %851 = vmatprep.subr.bf16.mxu0 0
        %852 = vmatpush2.bf16.msra.mxu0 0
        %853 = vmatprep.subr.bf16.mxu0 0
        %854 = vmatpush2.bf16.msra.mxu0 0
        %855 = vmatprep.subr.bf16.mxu0 0
        %856 = vmatpush2.bf16.msra.mxu0 0
        %857 = vmatprep.subr.bf16.mxu0 0
        %858 = vmatpush2.bf16.msra.mxu0 0
        %859 = vmatprep.mubr.bf16.mxu0 0
        %860 = vmatmul.mubr.bf16.gmra.mxu0 %v488
        %v861 = vpop.f32.mrf.mxu0
        %v862 = vadd.f32 %v813, %v861
        %v863 = vpop.f32.mrf.mxu0
        %v864 = vpop.f32.mrf.mxu0
        %v865 = vpop.f32.mrf.mxu0
        %866 = vdwg.mxu0
        %v867 = vpack.c.bf16 %v862, %v862
        %s868 = scalar_lea.vmem [#allocation3], 8
        %869 = vst.msk [vmem:[%s868] sm:$0xf] %vm531, %v867
        %s870 = scalar_lea.vmem %s4, 48
        %v871 = vld [vmem:[%s870] sm:$0xf]
        %v872 = vld [vmem:[%s870 + $0x4] sm:$0xf]
        %v873 = vld [vmem:[%s870 + $0x8] sm:$0xf]
        %v874 = vld [vmem:[%s870 + $0xc] sm:$0xf]
        %s875 = scalar_lea.vmem %s5, 3
        %v876 = vld [vmem:[%s875] sm:$0x1]
        %v878 = vlaneseq
        %v879 = vshrl.u32 %v878, 7
        %v880 = vsub.s32 0, %v879
        %v881 = vrot.slane %v876, %v880
        %v887 = vunpack.c.l.b16 %v871
        %v888 = vunpack.c.l.b16 %v872
        %v889 = vunpack.c.l.b16 %v873
        %v890 = vunpack.c.l.b16 %v874
        %v891 = vpack.c.b16 %v888, %v887
        %v892 = vpack.c.b16 %v890, %v889
        %895 = vmatprep.subr.bf16.mxu0 0
        %896 = vmatpush1.bf16.msra.mxu0 0
        %897 = vmatprep.subr.bf16.mxu0 0
        %898 = vmatpush1.bf16.msra.mxu0 0
        %899 = vmatprep.subr.bf16.mxu0 0
        %900 = vmatpush1.bf16.msra.mxu0 0
        %901 = vmatprep.subr.bf16.mxu0 0
        %902 = vmatpush1.bf16.msra.mxu0 0
        %903 = vmatprep.subr.bf16.mxu0 0
        %904 = vmatpush1.bf16.msra.mxu0 0
        %905 = vmatprep.subr.bf16.mxu0 0
        %906 = vmatpush1.bf16.msra.mxu0 0
        %907 = vmatprep.subr.bf16.mxu0 0
        %908 = vmatpush1.bf16.msra.mxu0 %v892
        %909 = vmatprep.subr.bf16.mxu0 0
        %910 = vmatpush1.bf16.msra.mxu0 %v891
        %911 = vmatprep.subr.bf16.mxu0 0
        %912 = vmatpush2.bf16.msra.mxu0 0
        %913 = vmatprep.subr.bf16.mxu0 0
        %914 = vmatpush2.bf16.msra.mxu0 0
        %915 = vmatprep.subr.bf16.mxu0 0
        %916 = vmatpush2.bf16.msra.mxu0 0
        %917 = vmatprep.subr.bf16.mxu0 0
        %918 = vmatpush2.bf16.msra.mxu0 0
        %919 = vmatprep.subr.bf16.mxu0 0
        %920 = vmatpush2.bf16.msra.mxu0 0
        %921 = vmatprep.subr.bf16.mxu0 0
        %922 = vmatpush2.bf16.msra.mxu0 0
        %923 = vmatprep.subr.bf16.mxu0 0
        %924 = vmatpush2.bf16.msra.mxu0 0
        %925 = vmatprep.subr.bf16.mxu0 0
        %926 = vmatpush2.bf16.msra.mxu0 0
        %927 = vmatprep.mubr.bf16.mxu0 0
        %928 = vmatmul.mubr.bf16.gmra.mxu0 %v488
        %v929 = vpop.f32.mrf.mxu0
        %v930 = vadd.f32 %v881, %v929
        %v931 = vpop.f32.mrf.mxu0
        %v932 = vpop.f32.mrf.mxu0
        %v933 = vpop.f32.mrf.mxu0
        %934 = vdwg.mxu0
        %v935 = vpack.c.bf16 %v930, %v930
        %s936 = scalar_lea.vmem [#allocation2], 12
        %937 = vst.msk [vmem:[%s936] sm:$0xf] %vm531, %v935
        %s938 = scalar_lea.vmem %s6, 48
        %v939 = vld [vmem:[%s938] sm:$0xf]
        %v940 = vld [vmem:[%s938 + $0x4] sm:$0xf]
        %v941 = vld [vmem:[%s938 + $0x8] sm:$0xf]
        %v942 = vld [vmem:[%s938 + $0xc] sm:$0xf]
        %s943 = scalar_lea.vmem %s7, 3
        %v944 = vld [vmem:[%s943] sm:$0x1]
        %v946 = vlaneseq
        %v947 = vshrl.u32 %v946, 7
        %v948 = vsub.s32 0, %v947
        %v949 = vrot.slane %v944, %v948
        %v955 = vunpack.c.l.b16 %v939
        %v956 = vunpack.c.l.b16 %v940
        %v957 = vunpack.c.l.b16 %v941
        %v958 = vunpack.c.l.b16 %v942
        %v959 = vpack.c.b16 %v956, %v955
        %v960 = vpack.c.b16 %v958, %v957
        %963 = vmatprep.subr.bf16.mxu0 0
        %964 = vmatpush1.bf16.msra.mxu0 0
        %965 = vmatprep.subr.bf16.mxu0 0
        %966 = vmatpush1.bf16.msra.mxu0 0
        %967 = vmatprep.subr.bf16.mxu0 0
        %968 = vmatpush1.bf16.msra.mxu0 0
        %969 = vmatprep.subr.bf16.mxu0 0
        %970 = vmatpush1.bf16.msra.mxu0 0
        %971 = vmatprep.subr.bf16.mxu0 0
        %972 = vmatpush1.bf16.msra.mxu0 0
        %973 = vmatprep.subr.bf16.mxu0 0
        %974 = vmatpush1.bf16.msra.mxu0 0
        %975 = vmatprep.subr.bf16.mxu0 0
        %976 = vmatpush1.bf16.msra.mxu0 %v960
        %977 = vmatprep.subr.bf16.mxu0 0
        %978 = vmatpush1.bf16.msra.mxu0 %v959
        %979 = vmatprep.subr.bf16.mxu0 0
        %980 = vmatpush2.bf16.msra.mxu0 0
        %981 = vmatprep.subr.bf16.mxu0 0
        %982 = vmatpush2.bf16.msra.mxu0 0
        %983 = vmatprep.subr.bf16.mxu0 0
        %984 = vmatpush2.bf16.msra.mxu0 0
        %985 = vmatprep.subr.bf16.mxu0 0
        %986 = vmatpush2.bf16.msra.mxu0 0
        %987 = vmatprep.subr.bf16.mxu0 0
        %988 = vmatpush2.bf16.msra.mxu0 0
        %989 = vmatprep.subr.bf16.mxu0 0
        %990 = vmatpush2.bf16.msra.mxu0 0
        %991 = vmatprep.subr.bf16.mxu0 0
        %992 = vmatpush2.bf16.msra.mxu0 0
        %993 = vmatprep.subr.bf16.mxu0 0
        %994 = vmatpush2.bf16.msra.mxu0 0
        %995 = vmatprep.mubr.bf16.mxu0 0
        %996 = vmatmul.mubr.bf16.gmra.mxu0 %v488
        %v997 = vpop.f32.mrf.mxu0
        %v998 = vadd.f32 %v949, %v997
        %v999 = vpop.f32.mrf.mxu0
        %v1000 = vpop.f32.mrf.mxu0
        %v1001 = vpop.f32.mrf.mxu0
        %1002 = vdwg.mxu0
        %v1003 = vpack.c.bf16 %v998, %v998
        %s1004 = scalar_lea.vmem [#allocation3], 12
        %1005 = vst.msk [vmem:[%s1004] sm:$0xf] %vm531, %v1003
      $region72: #{transformer_classifier_forward.13} parent=67 // pred_fallthru
        _
      %v1006 = vld [vmem:[%s445] sm:$0xf]
      %v1007 = vld [vmem:[%s2] sm:$0xf]
      %v1008 = vld [vmem:[%s2 + $0x4] sm:$0xf]
      %v1009 = vld [vmem:[%s2 + $0x8] sm:$0xf]
      %v1010 = vld [vmem:[%s2 + $0xc] sm:$0xf]
      %v1011 = vld [vmem:[%s3] sm:$0x1]
      %v1013 = vlaneseq
      %v1014 = vshrl.u32 %v1013, 7
      %v1015 = vsub.s32 0, %v1014
      %v1016 = vrot.slane %v1011, %v1015
      %v1022 = vunpack.c.l.b16 %v1007
      %v1023 = vunpack.c.l.b16 %v1008
      %v1024 = vunpack.c.l.b16 %v1009
      %v1025 = vunpack.c.l.b16 %v1010
      %v1026 = vpack.c.b16 %v1023, %v1022
      %v1027 = vpack.c.b16 %v1025, %v1024
      %vm1030 = vcmask 261120
      %v1032 = vsel %vm1030, %v1006, 0
      %1034 = vmatprep.subr.bf16.mxu0 0
      %1035 = vmatpush1.bf16.msra.mxu0 0
      %1036 = vmatprep.subr.bf16.mxu0 0
      %1037 = vmatpush1.bf16.msra.mxu0 0
      %1038 = vmatprep.subr.bf16.mxu0 0
      %1039 = vmatpush1.bf16.msra.mxu0 0
      %1040 = vmatprep.subr.bf16.mxu0 0
      %1041 = vmatpush1.bf16.msra.mxu0 0
      %1042 = vmatprep.subr.bf16.mxu0 0
      %1043 = vmatpush1.bf16.msra.mxu0 0
      %1044 = vmatprep.subr.bf16.mxu0 0
      %1045 = vmatpush1.bf16.msra.mxu0 0
      %1046 = vmatprep.subr.bf16.mxu0 0
      %1047 = vmatpush1.bf16.msra.mxu0 %v1027
      %1048 = vmatprep.subr.bf16.mxu0 0
      %1049 = vmatpush1.bf16.msra.mxu0 %v1026
      %1050 = vmatprep.subr.bf16.mxu0 0
      %1051 = vmatpush2.bf16.msra.mxu0 0
      %1052 = vmatprep.subr.bf16.mxu0 0
      %1053 = vmatpush2.bf16.msra.mxu0 0
      %1054 = vmatprep.subr.bf16.mxu0 0
      %1055 = vmatpush2.bf16.msra.mxu0 0
      %1056 = vmatprep.subr.bf16.mxu0 0
      %1057 = vmatpush2.bf16.msra.mxu0 0
      %1058 = vmatprep.subr.bf16.mxu0 0
      %1059 = vmatpush2.bf16.msra.mxu0 0
      %1060 = vmatprep.subr.bf16.mxu0 0
      %1061 = vmatpush2.bf16.msra.mxu0 0
      %1062 = vmatprep.subr.bf16.mxu0 0
      %1063 = vmatpush2.bf16.msra.mxu0 0
      %1064 = vmatprep.subr.bf16.mxu0 0
      %1065 = vmatpush2.bf16.msra.mxu0 0
      %1066 = vmatprep.mubr.bf16.mxu0 0
      %1067 = vmatmul.mubr.bf16.gmra.mxu0 %v1032
      %v1068 = vpop.f32.mrf.mxu0
      %v1069 = vadd.f32 %v1016, %v1068
      %v1070 = vpop.f32.mrf.mxu0
      %v1071 = vpop.f32.mrf.mxu0
      %v1072 = vpop.f32.mrf.mxu0
      %1073 = vdwg.mxu0
      %v1074 = vpack.c.bf16 %v1069, %v1069
      %v1075 = vld [vmem:[#allocation2] sm:$0xf]
      %vm1076 = vcmask 64512
      %v1078 = vsel %vm1076, %v1074, 0
      %v1081 = vsel %vm1076, %v1075, 0
      %1083 = vmatprep.subr.bf16.mxu0 0
      %1084 = vmatpush1.bf16.xpose.msra.mxu0 0
      %1085 = vmatprep.subr.bf16.mxu0 0
      %1086 = vmatpush1.bf16.xpose.msra.mxu0 0
      %1087 = vmatprep.subr.bf16.mxu0 0
      %1088 = vmatpush1.bf16.xpose.msra.mxu0 0
      %1089 = vmatprep.subr.bf16.mxu0 0
      %1090 = vmatpush1.bf16.xpose.msra.mxu0 0
      %1091 = vmatprep.subr.bf16.mxu0 0
      %1092 = vmatpush1.bf16.xpose.msra.mxu0 0
      %1093 = vmatprep.subr.bf16.mxu0 0
      %1094 = vmatpush1.bf16.xpose.msra.mxu0 0
      %1095 = vmatprep.subr.bf16.mxu0 0
      %1096 = vmatpush1.bf16.xpose.msra.mxu0 0
      %1097 = vmatprep.subr.bf16.mxu0 0
      %1098 = vmatpush1.bf16.xpose.msra.mxu0 %v1081
      %1099 = vmatprep.subr.bf16.mxu0 0
      %1100 = vmatpush2.bf16.xpose.msra.mxu0 0
      %1101 = vmatprep.subr.bf16.mxu0 0
      %1102 = vmatpush2.bf16.xpose.msra.mxu0 0
      %1103 = vmatprep.subr.bf16.mxu0 0
      %1104 = vmatpush2.bf16.xpose.msra.mxu0 0
      %1105 = vmatprep.subr.bf16.mxu0 0
      %1106 = vmatpush2.bf16.xpose.msra.mxu0 0
      %1107 = vmatprep.subr.bf16.mxu0 0
      %1108 = vmatpush2.bf16.xpose.msra.mxu0 0
      %1109 = vmatprep.subr.bf16.mxu0 0
      %1110 = vmatpush2.bf16.xpose.msra.mxu0 0
      %1111 = vmatprep.subr.bf16.mxu0 0
      %1112 = vmatpush2.bf16.xpose.msra.mxu0 0
      %1113 = vmatprep.subr.bf16.mxu0 0
      %1114 = vmatpush2.bf16.xpose.msra.mxu0 0
      %1115 = vmatprep.mubr.bf16.mxu0 0
      %1116 = vmatmul.mubr.bf16.gmra.mxu0 %v1078
      %v1117 = vpop.f32.mrf.mxu0
      %v1118 = vadd.f32 0.0, %v1117
      %v1119 = vpop.f32.mrf.mxu0
      %v1120 = vpop.f32.mrf.mxu0
      %v1121 = vpop.f32.mrf.mxu0
      %1122 = vdwg.mxu0
      %v1123 = vsel %vm1076, %v1118, -inf
      %1124 = vmax.xlane.f32.xlu0 %v1123
      %v1125 = vpop.xlane.xlu0 %1124
      %v1126 = vsub.f32 %v1118, %v1125
      %v1127 = vmul.f32 %v1126, 1.442695
      %v1128 = vpow.pop %v1127
      %v1129 = vsel %vm1076, %v1128, 0.0
      %1130 = vadd.xlane.f32.xlu0 %v1129
      %v1131 = vpop.xlane.xlu0 %1130
      %v1132 = vrcp.pop %v1131
      %v1133 = vmul.f32 %v1128, %v1132
      %v1134 = vpack.c.bf16 %v1133, %v1133
      %v1135 = vld [vmem:[#allocation3] sm:$0xf]
      %v1137 = vsel %vm1076, %v1134, 0
      %vm1139 = vcmask 1043456
      %v1141 = vsel %vm1139, %v1135, 0
      %1143 = vmatprep.subr.bf16.mxu0 0
      %1144 = vmatpush1.bf16.msra.mxu0 0
      %1145 = vmatprep.subr.bf16.mxu0 0
      %1146 = vmatpush1.bf16.msra.mxu0 0
      %1147 = vmatprep.subr.bf16.mxu0 0
      %1148 = vmatpush1.bf16.msra.mxu0 0
      %1149 = vmatprep.subr.bf16.mxu0 0
      %1150 = vmatpush1.bf16.msra.mxu0 0
      %1151 = vmatprep.subr.bf16.mxu0 0
      %1152 = vmatpush1.bf16.msra.mxu0 0
      %1153 = vmatprep.subr.bf16.mxu0 0
      %1154 = vmatpush1.bf16.msra.mxu0 0
      %1155 = vmatprep.subr.bf16.mxu0 0
      %1156 = vmatpush1.bf16.msra.mxu0 0
      %1157 = vmatprep.subr.bf16.mxu0 0
      %1158 = vmatpush1.bf16.msra.mxu0 %v1141
      %1159 = vmatprep.subr.bf16.mxu0 0
      %1160 = vmatpush2.bf16.msra.mxu0 0
      %1161 = vmatprep.subr.bf16.mxu0 0
      %1162 = vmatpush2.bf16.msra.mxu0 0
      %1163 = vmatprep.subr.bf16.mxu0 0
      %1164 = vmatpush2.bf16.msra.mxu0 0
      %1165 = vmatprep.subr.bf16.mxu0 0
      %1166 = vmatpush2.bf16.msra.mxu0 0
      %1167 = vmatprep.subr.bf16.mxu0 0
      %1168 = vmatpush2.bf16.msra.mxu0 0
      %1169 = vmatprep.subr.bf16.mxu0 0
      %1170 = vmatpush2.bf16.msra.mxu0 0
      %1171 = vmatprep.subr.bf16.mxu0 0
      %1172 = vmatpush2.bf16.msra.mxu0 0
      %1173 = vmatprep.subr.bf16.mxu0 0
      %1174 = vmatpush2.bf16.msra.mxu0 0
      %1175 = vmatprep.mubr.bf16.mxu0 0
      %1176 = vmatmul.mubr.bf16.gmra.mxu0 %v1137
      %v1177 = vpop.f32.mrf.mxu0
      %v1178 = vadd.f32 0.0, %v1177
      %v1179 = vpop.f32.mrf.mxu0
      %v1180 = vpop.f32.mrf.mxu0
      %v1181 = vpop.f32.mrf.mxu0
      %1182 = vdwg.mxu0
      %v1183 = vpack.c.bf16 %v1178, %v1178
      %vm1184 = vcmask 60416
      %1185 = vst.msk [vmem:[#allocation4] sm:$0xf] %vm1184, %v1183
      %s1186 = scalar_lea.vmem %s2, 16
      %v1187 = vld [vmem:[%s1186] sm:$0xf]
      %v1188 = vld [vmem:[%s1186 + $0x4] sm:$0xf]
      %v1189 = vld [vmem:[%s1186 + $0x8] sm:$0xf]
      %v1190 = vld [vmem:[%s1186 + $0xc] sm:$0xf]
      %s1191 = scalar_lea.vmem %s3, 1
      %v1192 = vld [vmem:[%s1191] sm:$0x1]
      %v1194 = vlaneseq
      %v1195 = vshrl.u32 %v1194, 7
      %v1196 = vsub.s32 0, %v1195
      %v1197 = vrot.slane %v1192, %v1196
      %v1203 = vunpack.c.l.b16 %v1187
      %v1204 = vunpack.c.l.b16 %v1188
      %v1205 = vunpack.c.l.b16 %v1189
      %v1206 = vunpack.c.l.b16 %v1190
      %v1207 = vpack.c.b16 %v1204, %v1203
      %v1208 = vpack.c.b16 %v1206, %v1205
      %1211 = vmatprep.subr.bf16.mxu0 0
      %1212 = vmatpush1.bf16.msra.mxu0 0
      %1213 = vmatprep.subr.bf16.mxu0 0
      %1214 = vmatpush1.bf16.msra.mxu0 0
      %1215 = vmatprep.subr.bf16.mxu0 0
      %1216 = vmatpush1.bf16.msra.mxu0 0
      %1217 = vmatprep.subr.bf16.mxu0 0
      %1218 = vmatpush1.bf16.msra.mxu0 0
      %1219 = vmatprep.subr.bf16.mxu0 0
      %1220 = vmatpush1.bf16.msra.mxu0 0
      %1221 = vmatprep.subr.bf16.mxu0 0
      %1222 = vmatpush1.bf16.msra.mxu0 0
      %1223 = vmatprep.subr.bf16.mxu0 0
      %1224 = vmatpush1.bf16.msra.mxu0 %v1208
      %1225 = vmatprep.subr.bf16.mxu0 0
      %1226 = vmatpush1.bf16.msra.mxu0 %v1207
      %1227 = vmatprep.subr.bf16.mxu0 0
      %1228 = vmatpush2.bf16.msra.mxu0 0
      %1229 = vmatprep.subr.bf16.mxu0 0
      %1230 = vmatpush2.bf16.msra.mxu0 0
      %1231 = vmatprep.subr.bf16.mxu0 0
      %1232 = vmatpush2.bf16.msra.mxu0 0
      %1233 = vmatprep.subr.bf16.mxu0 0
      %1234 = vmatpush2.bf16.msra.mxu0 0
      %1235 = vmatprep.subr.bf16.mxu0 0
      %1236 = vmatpush2.bf16.msra.mxu0 0
      %1237 = vmatprep.subr.bf16.mxu0 0
      %1238 = vmatpush2.bf16.msra.mxu0 0
      %1239 = vmatprep.subr.bf16.mxu0 0
      %1240 = vmatpush2.bf16.msra.mxu0 0
      %1241 = vmatprep.subr.bf16.mxu0 0
      %1242 = vmatpush2.bf16.msra.mxu0 0
      %1243 = vmatprep.mubr.bf16.mxu0 0
      %1244 = vmatmul.mubr.bf16.gmra.mxu0 %v1032
      %v1245 = vpop.f32.mrf.mxu0
      %v1246 = vadd.f32 %v1197, %v1245
      %v1247 = vpop.f32.mrf.mxu0
      %v1248 = vpop.f32.mrf.mxu0
      %v1249 = vpop.f32.mrf.mxu0
      %1250 = vdwg.mxu0
      %v1251 = vpack.c.bf16 %v1246, %v1246
      %s1252 = scalar_lea.vmem [#allocation2], 4
      %v1253 = vld [vmem:[%s1252] sm:$0xf]
      %v1255 = vsel %vm1076, %v1251, 0
      %v1258 = vsel %vm1076, %v1253, 0
      %1260 = vmatprep.subr.bf16.mxu0 0
      %1261 = vmatpush1.bf16.xpose.msra.mxu0 0
      %1262 = vmatprep.subr.bf16.mxu0 0
      %1263 = vmatpush1.bf16.xpose.msra.mxu0 0
      %1264 = vmatprep.subr.bf16.mxu0 0
      %1265 = vmatpush1.bf16.xpose.msra.mxu0 0
      %1266 = vmatprep.subr.bf16.mxu0 0
      %1267 = vmatpush1.bf16.xpose.msra.mxu0 0
      %1268 = vmatprep.subr.bf16.mxu0 0
      %1269 = vmatpush1.bf16.xpose.msra.mxu0 0
      %1270 = vmatprep.subr.bf16.mxu0 0
      %1271 = vmatpush1.bf16.xpose.msra.mxu0 0
      %1272 = vmatprep.subr.bf16.mxu0 0
      %1273 = vmatpush1.bf16.xpose.msra.mxu0 0
      %1274 = vmatprep.subr.bf16.mxu0 0
      %1275 = vmatpush1.bf16.xpose.msra.mxu0 %v1258
      %1276 = vmatprep.subr.bf16.mxu0 0
      %1277 = vmatpush2.bf16.xpose.msra.mxu0 0
      %1278 = vmatprep.subr.bf16.mxu0 0
      %1279 = vmatpush2.bf16.xpose.msra.mxu0 0
      %1280 = vmatprep.subr.bf16.mxu0 0
      %1281 = vmatpush2.bf16.xpose.msra.mxu0 0
      %1282 = vmatprep.subr.bf16.mxu0 0
      %1283 = vmatpush2.bf16.xpose.msra.mxu0 0
      %1284 = vmatprep.subr.bf16.mxu0 0
      %1285 = vmatpush2.bf16.xpose.msra.mxu0 0
      %1286 = vmatprep.subr.bf16.mxu0 0
      %1287 = vmatpush2.bf16.xpose.msra.mxu0 0
      %1288 = vmatprep.subr.bf16.mxu0 0
      %1289 = vmatpush2.bf16.xpose.msra.mxu0 0
      %1290 = vmatprep.subr.bf16.mxu0 0
      %1291 = vmatpush2.bf16.xpose.msra.mxu0 0
      %1292 = vmatprep.mubr.bf16.mxu0 0
      %1293 = vmatmul.mubr.bf16.gmra.mxu0 %v1255
      %v1294 = vpop.f32.mrf.mxu0
      %v1295 = vadd.f32 0.0, %v1294
      %v1296 = vpop.f32.mrf.mxu0
      %v1297 = vpop.f32.mrf.mxu0
      %v1298 = vpop.f32.mrf.mxu0
      %1299 = vdwg.mxu0
      %v1300 = vsel %vm1076, %v1295, -inf
      %1301 = vmax.xlane.f32.xlu0 %v1300
      %v1302 = vpop.xlane.xlu0 %1301
      %v1303 = vsub.f32 %v1295, %v1302
      %v1304 = vmul.f32 %v1303, 1.442695
      %v1305 = vpow.pop %v1304
      %v1306 = vsel %vm1076, %v1305, 0.0
      %1307 = vadd.xlane.f32.xlu0 %v1306
      %v1308 = vpop.xlane.xlu0 %1307
      %v1309 = vrcp.pop %v1308
      %v1310 = vmul.f32 %v1305, %v1309
      %v1311 = vpack.c.bf16 %v1310, %v1310
      %s1312 = scalar_lea.vmem [#allocation3], 4
      %v1313 = vld [vmem:[%s1312] sm:$0xf]
      %v1315 = vsel %vm1076, %v1311, 0
      %v1318 = vsel %vm1139, %v1313, 0
      %1320 = vmatprep.subr.bf16.mxu0 0
      %1321 = vmatpush1.bf16.msra.mxu0 0
      %1322 = vmatprep.subr.bf16.mxu0 0
      %1323 = vmatpush1.bf16.msra.mxu0 0
      %1324 = vmatprep.subr.bf16.mxu0 0
      %1325 = vmatpush1.bf16.msra.mxu0 0
      %1326 = vmatprep.subr.bf16.mxu0 0
      %1327 = vmatpush1.bf16.msra.mxu0 0
      %1328 = vmatprep.subr.bf16.mxu0 0
      %1329 = vmatpush1.bf16.msra.mxu0 0
      %1330 = vmatprep.subr.bf16.mxu0 0
      %1331 = vmatpush1.bf16.msra.mxu0 0
      %1332 = vmatprep.subr.bf16.mxu0 0
      %1333 = vmatpush1.bf16.msra.mxu0 0
      %1334 = vmatprep.subr.bf16.mxu0 0
      %1335 = vmatpush1.bf16.msra.mxu0 %v1318
      %1336 = vmatprep.subr.bf16.mxu0 0
      %1337 = vmatpush2.bf16.msra.mxu0 0
      %1338 = vmatprep.subr.bf16.mxu0 0
      %1339 = vmatpush2.bf16.msra.mxu0 0
      %1340 = vmatprep.subr.bf16.mxu0 0
      %1341 = vmatpush2.bf16.msra.mxu0 0
      %1342 = vmatprep.subr.bf16.mxu0 0
      %1343 = vmatpush2.bf16.msra.mxu0 0
      %1344 = vmatprep.subr.bf16.mxu0 0
      %1345 = vmatpush2.bf16.msra.mxu0 0
      %1346 = vmatprep.subr.bf16.mxu0 0
      %1347 = vmatpush2.bf16.msra.mxu0 0
      %1348 = vmatprep.subr.bf16.mxu0 0
      %1349 = vmatpush2.bf16.msra.mxu0 0
      %1350 = vmatprep.subr.bf16.mxu0 0
      %1351 = vmatpush2.bf16.msra.mxu0 0
      %1352 = vmatprep.mubr.bf16.mxu0 0
      %1353 = vmatmul.mubr.bf16.gmra.mxu0 %v1315
      %v1354 = vpop.f32.mrf.mxu0
      %v1355 = vadd.f32 0.0, %v1354
      %v1356 = vpop.f32.mrf.mxu0
      %v1357 = vpop.f32.mrf.mxu0
      %v1358 = vpop.f32.mrf.mxu0
      %1359 = vdwg.mxu0
      %v1360 = vpack.c.bf16 %v1355, %v1355
      %v1362 = vunpack.c.l.b16 %v1360
      %v1363 = vpack.c.b16 %v1362, %v1362
      %1364 = vrot.lane.b32.xlu0 %v1363, 8
      %v1365 = vpop.permute.xlu0 %1364
      %vm1367 = vcmask 126016
      %1368 = vst.msk [vmem:[#allocation4] sm:$0xf] %vm1367, %v1365
      %s1369 = scalar_lea.vmem %s2, 32
      %v1370 = vld [vmem:[%s1369] sm:$0xf]
      %v1371 = vld [vmem:[%s1369 + $0x4] sm:$0xf]
      %v1372 = vld [vmem:[%s1369 + $0x8] sm:$0xf]
      %v1373 = vld [vmem:[%s1369 + $0xc] sm:$0xf]
      %s1374 = scalar_lea.vmem %s3, 2
      %v1375 = vld [vmem:[%s1374] sm:$0x1]
      %v1377 = vlaneseq
      %v1378 = vshrl.u32 %v1377, 7
      %v1379 = vsub.s32 0, %v1378
      %v1380 = vrot.slane %v1375, %v1379
      %v1386 = vunpack.c.l.b16 %v1370
      %v1387 = vunpack.c.l.b16 %v1371
      %v1388 = vunpack.c.l.b16 %v1372
      %v1389 = vunpack.c.l.b16 %v1373
      %v1390 = vpack.c.b16 %v1387, %v1386
      %v1391 = vpack.c.b16 %v1389, %v1388
      %1394 = vmatprep.subr.bf16.mxu0 0
      %1395 = vmatpush1.bf16.msra.mxu0 0
      %1396 = vmatprep.subr.bf16.mxu0 0
      %1397 = vmatpush1.bf16.msra.mxu0 0
      %1398 = vmatprep.subr.bf16.mxu0 0
      %1399 = vmatpush1.bf16.msra.mxu0 0
      %1400 = vmatprep.subr.bf16.mxu0 0
      %1401 = vmatpush1.bf16.msra.mxu0 0
      %1402 = vmatprep.subr.bf16.mxu0 0
      %1403 = vmatpush1.bf16.msra.mxu0 0
      %1404 = vmatprep.subr.bf16.mxu0 0
      %1405 = vmatpush1.bf16.msra.mxu0 0
      %1406 = vmatprep.subr.bf16.mxu0 0
      %1407 = vmatpush1.bf16.msra.mxu0 %v1391
      %1408 = vmatprep.subr.bf16.mxu0 0
      %1409 = vmatpush1.bf16.msra.mxu0 %v1390
      %1410 = vmatprep.subr.bf16.mxu0 0
      %1411 = vmatpush2.bf16.msra.mxu0 0
      %1412 = vmatprep.subr.bf16.mxu0 0
      %1413 = vmatpush2.bf16.msra.mxu0 0
      %1414 = vmatprep.subr.bf16.mxu0 0
      %1415 = vmatpush2.bf16.msra.mxu0 0
      %1416 = vmatprep.subr.bf16.mxu0 0
      %1417 = vmatpush2.bf16.msra.mxu0 0
      %1418 = vmatprep.subr.bf16.mxu0 0
      %1419 = vmatpush2.bf16.msra.mxu0 0
      %1420 = vmatprep.subr.bf16.mxu0 0
      %1421 = vmatpush2.bf16.msra.mxu0 0
      %1422 = vmatprep.subr.bf16.mxu0 0
      %1423 = vmatpush2.bf16.msra.mxu0 0
      %1424 = vmatprep.subr.bf16.mxu0 0
      %1425 = vmatpush2.bf16.msra.mxu0 0
      %1426 = vmatprep.mubr.bf16.mxu0 0
      %1427 = vmatmul.mubr.bf16.gmra.mxu0 %v1032
      %v1428 = vpop.f32.mrf.mxu0
      %v1429 = vadd.f32 %v1380, %v1428
      %v1430 = vpop.f32.mrf.mxu0
      %v1431 = vpop.f32.mrf.mxu0
      %v1432 = vpop.f32.mrf.mxu0
      %1433 = vdwg.mxu0
      %v1434 = vpack.c.bf16 %v1429, %v1429
      %s1435 = scalar_lea.vmem [#allocation2], 8
      %v1436 = vld [vmem:[%s1435] sm:$0xf]
      %v1438 = vsel %vm1076, %v1434, 0
      %v1441 = vsel %vm1076, %v1436, 0
      %1443 = vmatprep.subr.bf16.mxu0 0
      %1444 = vmatpush1.bf16.xpose.msra.mxu0 0
      %1445 = vmatprep.subr.bf16.mxu0 0
      %1446 = vmatpush1.bf16.xpose.msra.mxu0 0
      %1447 = vmatprep.subr.bf16.mxu0 0
      %1448 = vmatpush1.bf16.xpose.msra.mxu0 0
      %1449 = vmatprep.subr.bf16.mxu0 0
      %1450 = vmatpush1.bf16.xpose.msra.mxu0 0
      %1451 = vmatprep.subr.bf16.mxu0 0
      %1452 = vmatpush1.bf16.xpose.msra.mxu0 0
      %1453 = vmatprep.subr.bf16.mxu0 0
      %1454 = vmatpush1.bf16.xpose.msra.mxu0 0
      %1455 = vmatprep.subr.bf16.mxu0 0
      %1456 = vmatpush1.bf16.xpose.msra.mxu0 0
      %1457 = vmatprep.subr.bf16.mxu0 0
      %1458 = vmatpush1.bf16.xpose.msra.mxu0 %v1441
      %1459 = vmatprep.subr.bf16.mxu0 0
      %1460 = vmatpush2.bf16.xpose.msra.mxu0 0
      %1461 = vmatprep.subr.bf16.mxu0 0
      %1462 = vmatpush2.bf16.xpose.msra.mxu0 0
      %1463 = vmatprep.subr.bf16.mxu0 0
      %1464 = vmatpush2.bf16.xpose.msra.mxu0 0
      %1465 = vmatprep.subr.bf16.mxu0 0
      %1466 = vmatpush2.bf16.xpose.msra.mxu0 0
      %1467 = vmatprep.subr.bf16.mxu0 0
      %1468 = vmatpush2.bf16.xpose.msra.mxu0 0
      %1469 = vmatprep.subr.bf16.mxu0 0
      %1470 = vmatpush2.bf16.xpose.msra.mxu0 0
      %1471 = vmatprep.subr.bf16.mxu0 0
      %1472 = vmatpush2.bf16.xpose.msra.mxu0 0
      %1473 = vmatprep.subr.bf16.mxu0 0
      %1474 = vmatpush2.bf16.xpose.msra.mxu0 0
      %1475 = vmatprep.mubr.bf16.mxu0 0
      %1476 = vmatmul.mubr.bf16.gmra.mxu0 %v1438
      %v1477 = vpop.f32.mrf.mxu0
      %v1478 = vadd.f32 0.0, %v1477
      %v1479 = vpop.f32.mrf.mxu0
      %v1480 = vpop.f32.mrf.mxu0
      %v1481 = vpop.f32.mrf.mxu0
      %1482 = vdwg.mxu0
      %v1483 = vsel %vm1076, %v1478, -inf
      %1484 = vmax.xlane.f32.xlu0 %v1483
      %v1485 = vpop.xlane.xlu0 %1484
      %v1486 = vsub.f32 %v1478, %v1485
      %v1487 = vmul.f32 %v1486, 1.442695
      %v1488 = vpow.pop %v1487
      %v1489 = vsel %vm1076, %v1488, 0.0
      %1490 = vadd.xlane.f32.xlu0 %v1489
      %v1491 = vpop.xlane.xlu0 %1490
      %v1492 = vrcp.pop %v1491
      %v1493 = vmul.f32 %v1488, %v1492
      %v1494 = vpack.c.bf16 %v1493, %v1493
      %s1495 = scalar_lea.vmem [#allocation3], 8
      %v1496 = vld [vmem:[%s1495] sm:$0xf]
      %v1498 = vsel %vm1076, %v1494, 0
      %v1501 = vsel %vm1139, %v1496, 0
      %1503 = vmatprep.subr.bf16.mxu0 0
      %1504 = vmatpush1.bf16.msra.mxu0 0
      %1505 = vmatprep.subr.bf16.mxu0 0
      %1506 = vmatpush1.bf16.msra.mxu0 0
      %1507 = vmatprep.subr.bf16.mxu0 0
      %1508 = vmatpush1.bf16.msra.mxu0 0
      %1509 = vmatprep.subr.bf16.mxu0 0
      %1510 = vmatpush1.bf16.msra.mxu0 0
      %1511 = vmatprep.subr.bf16.mxu0 0
      %1512 = vmatpush1.bf16.msra.mxu0 0
      %1513 = vmatprep.subr.bf16.mxu0 0
      %1514 = vmatpush1.bf16.msra.mxu0 0
      %1515 = vmatprep.subr.bf16.mxu0 0
      %1516 = vmatpush1.bf16.msra.mxu0 0
      %1517 = vmatprep.subr.bf16.mxu0 0
      %1518 = vmatpush1.bf16.msra.mxu0 %v1501
      %1519 = vmatprep.subr.bf16.mxu0 0
      %1520 = vmatpush2.bf16.msra.mxu0 0
      %1521 = vmatprep.subr.bf16.mxu0 0
      %1522 = vmatpush2.bf16.msra.mxu0 0
      %1523 = vmatprep.subr.bf16.mxu0 0
      %1524 = vmatpush2.bf16.msra.mxu0 0
      %1525 = vmatprep.subr.bf16.mxu0 0
      %1526 = vmatpush2.bf16.msra.mxu0 0
      %1527 = vmatprep.subr.bf16.mxu0 0
      %1528 = vmatpush2.bf16.msra.mxu0 0
      %1529 = vmatprep.subr.bf16.mxu0 0
      %1530 = vmatpush2.bf16.msra.mxu0 0
      %1531 = vmatprep.subr.bf16.mxu0 0
      %1532 = vmatpush2.bf16.msra.mxu0 0
      %1533 = vmatprep.subr.bf16.mxu0 0
      %1534 = vmatpush2.bf16.msra.mxu0 0
      %1535 = vmatprep.mubr.bf16.mxu0 0
      %1536 = vmatmul.mubr.bf16.gmra.mxu0 %v1498
      %v1537 = vpop.f32.mrf.mxu0
      %v1538 = vadd.f32 0.0, %v1537
      %v1539 = vpop.f32.mrf.mxu0
      %v1540 = vpop.f32.mrf.mxu0
      %v1541 = vpop.f32.mrf.mxu0
      %1542 = vdwg.mxu0
      %v1543 = vpack.c.bf16 %v1538, %v1538
      %v1545 = vunpack.c.l.b16 %v1543
      %v1546 = vpack.c.b16 %v1545, %v1545
      %1547 = vrot.lane.b32.xlu0 %v1546, 16
      %v1548 = vpop.permute.xlu0 %1547
      %vm1550 = vcmask 191616
      %1551 = vst.msk [vmem:[#allocation4] sm:$0xf] %vm1550, %v1548
      %s1552 = scalar_lea.vmem %s2, 48
      %v1553 = vld [vmem:[%s1552] sm:$0xf]
      %v1554 = vld [vmem:[%s1552 + $0x4] sm:$0xf]
      %v1555 = vld [vmem:[%s1552 + $0x8] sm:$0xf]
      %v1556 = vld [vmem:[%s1552 + $0xc] sm:$0xf]
      %s1557 = scalar_lea.vmem %s3, 3
      %v1558 = vld [vmem:[%s1557] sm:$0x1]
      %v1560 = vlaneseq
      %v1561 = vshrl.u32 %v1560, 7
      %v1562 = vsub.s32 0, %v1561
      %v1563 = vrot.slane %v1558, %v1562
      %v1569 = vunpack.c.l.b16 %v1553
      %v1570 = vunpack.c.l.b16 %v1554
      %v1571 = vunpack.c.l.b16 %v1555
      %v1572 = vunpack.c.l.b16 %v1556
      %v1573 = vpack.c.b16 %v1570, %v1569
      %v1574 = vpack.c.b16 %v1572, %v1571
      %1577 = vmatprep.subr.bf16.mxu0 0
      %1578 = vmatpush1.bf16.msra.mxu0 0
      %1579 = vmatprep.subr.bf16.mxu0 0
      %1580 = vmatpush1.bf16.msra.mxu0 0
      %1581 = vmatprep.subr.bf16.mxu0 0
      %1582 = vmatpush1.bf16.msra.mxu0 0
      %1583 = vmatprep.subr.bf16.mxu0 0
      %1584 = vmatpush1.bf16.msra.mxu0 0
      %1585 = vmatprep.subr.bf16.mxu0 0
      %1586 = vmatpush1.bf16.msra.mxu0 0
      %1587 = vmatprep.subr.bf16.mxu0 0
      %1588 = vmatpush1.bf16.msra.mxu0 0
      %1589 = vmatprep.subr.bf16.mxu0 0
      %1590 = vmatpush1.bf16.msra.mxu0 %v1574
      %1591 = vmatprep.subr.bf16.mxu0 0
      %1592 = vmatpush1.bf16.msra.mxu0 %v1573
      %1593 = vmatprep.subr.bf16.mxu0 0
      %1594 = vmatpush2.bf16.msra.mxu0 0
      %1595 = vmatprep.subr.bf16.mxu0 0
      %1596 = vmatpush2.bf16.msra.mxu0 0
      %1597 = vmatprep.subr.bf16.mxu0 0
      %1598 = vmatpush2.bf16.msra.mxu0 0
      %1599 = vmatprep.subr.bf16.mxu0 0
      %1600 = vmatpush2.bf16.msra.mxu0 0
      %1601 = vmatprep.subr.bf16.mxu0 0
      %1602 = vmatpush2.bf16.msra.mxu0 0
      %1603 = vmatprep.subr.bf16.mxu0 0
      %1604 = vmatpush2.bf16.msra.mxu0 0
      %1605 = vmatprep.subr.bf16.mxu0 0
      %1606 = vmatpush2.bf16.msra.mxu0 0
      %1607 = vmatprep.subr.bf16.mxu0 0
      %1608 = vmatpush2.bf16.msra.mxu0 0
      %1609 = vmatprep.mubr.bf16.mxu0 0
      %1610 = vmatmul.mubr.bf16.gmra.mxu0 %v1032
      %v1611 = vpop.f32.mrf.mxu0
      %v1612 = vadd.f32 %v1563, %v1611
      %v1613 = vpop.f32.mrf.mxu0
      %v1614 = vpop.f32.mrf.mxu0
      %v1615 = vpop.f32.mrf.mxu0
      %1616 = vdwg.mxu0
      %v1617 = vpack.c.bf16 %v1612, %v1612
      %s1618 = scalar_lea.vmem [#allocation2], 12
      %v1619 = vld [vmem:[%s1618] sm:$0xf]
      %v1621 = vsel %vm1076, %v1617, 0
      %v1624 = vsel %vm1076, %v1619, 0
      %1626 = vmatprep.subr.bf16.mxu0 0
      %1627 = vmatpush1.bf16.xpose.msra.mxu0 0
      %1628 = vmatprep.subr.bf16.mxu0 0
      %1629 = vmatpush1.bf16.xpose.msra.mxu0 0
      %1630 = vmatprep.subr.bf16.mxu0 0
      %1631 = vmatpush1.bf16.xpose.msra.mxu0 0
      %1632 = vmatprep.subr.bf16.mxu0 0
      %1633 = vmatpush1.bf16.xpose.msra.mxu0 0
      %1634 = vmatprep.subr.bf16.mxu0 0
      %1635 = vmatpush1.bf16.xpose.msra.mxu0 0
      %1636 = vmatprep.subr.bf16.mxu0 0
      %1637 = vmatpush1.bf16.xpose.msra.mxu0 0
      %1638 = vmatprep.subr.bf16.mxu0 0
      %1639 = vmatpush1.bf16.xpose.msra.mxu0 0
      %1640 = vmatprep.subr.bf16.mxu0 0
      %1641 = vmatpush1.bf16.xpose.msra.mxu0 %v1624
      %1642 = vmatprep.subr.bf16.mxu0 0
      %1643 = vmatpush2.bf16.xpose.msra.mxu0 0
      %1644 = vmatprep.subr.bf16.mxu0 0
      %1645 = vmatpush2.bf16.xpose.msra.mxu0 0
      %1646 = vmatprep.subr.bf16.mxu0 0
      %1647 = vmatpush2.bf16.xpose.msra.mxu0 0
      %1648 = vmatprep.subr.bf16.mxu0 0
      %1649 = vmatpush2.bf16.xpose.msra.mxu0 0
      %1650 = vmatprep.subr.bf16.mxu0 0
      %1651 = vmatpush2.bf16.xpose.msra.mxu0 0
      %1652 = vmatprep.subr.bf16.mxu0 0
      %1653 = vmatpush2.bf16.xpose.msra.mxu0 0
      %1654 = vmatprep.subr.bf16.mxu0 0
      %1655 = vmatpush2.bf16.xpose.msra.mxu0 0
      %1656 = vmatprep.subr.bf16.mxu0 0
      %1657 = vmatpush2.bf16.xpose.msra.mxu0 0
      %1658 = vmatprep.mubr.bf16.mxu0 0
      %1659 = vmatmul.mubr.bf16.gmra.mxu0 %v1621
      %v1660 = vpop.f32.mrf.mxu0
      %v1661 = vadd.f32 0.0, %v1660
      %v1662 = vpop.f32.mrf.mxu0
      %v1663 = vpop.f32.mrf.mxu0
      %v1664 = vpop.f32.mrf.mxu0
      %1665 = vdwg.mxu0
      %v1666 = vsel %vm1076, %v1661, -inf
      %1667 = vmax.xlane.f32.xlu0 %v1666
      %v1668 = vpop.xlane.xlu0 %1667
      %v1669 = vsub.f32 %v1661, %v1668
      %v1670 = vmul.f32 %v1669, 1.442695
      %v1671 = vpow.pop %v1670
      %v1672 = vsel %vm1076, %v1671, 0.0
      %1673 = vadd.xlane.f32.xlu0 %v1672
      %v1674 = vpop.xlane.xlu0 %1673
      %v1675 = vrcp.pop %v1674
      %v1676 = vmul.f32 %v1671, %v1675
      %v1677 = vpack.c.bf16 %v1676, %v1676
      %s1678 = scalar_lea.vmem [#allocation3], 12
      %v1679 = vld [vmem:[%s1678] sm:$0xf]
      %v1681 = vsel %vm1076, %v1677, 0
      %v1684 = vsel %vm1139, %v1679, 0
      %1686 = vmatprep.subr.bf16.mxu0 0
      %1687 = vmatpush1.bf16.msra.mxu0 0
      %1688 = vmatprep.subr.bf16.mxu0 0
      %1689 = vmatpush1.bf16.msra.mxu0 0
      %1690 = vmatprep.subr.bf16.mxu0 0
      %1691 = vmatpush1.bf16.msra.mxu0 0
      %1692 = vmatprep.subr.bf16.mxu0 0
      %1693 = vmatpush1.bf16.msra.mxu0 0
      %1694 = vmatprep.subr.bf16.mxu0 0
      %1695 = vmatpush1.bf16.msra.mxu0 0
      %1696 = vmatprep.subr.bf16.mxu0 0
      %1697 = vmatpush1.bf16.msra.mxu0 0
      %1698 = vmatprep.subr.bf16.mxu0 0
      %1699 = vmatpush1.bf16.msra.mxu0 0
      %1700 = vmatprep.subr.bf16.mxu0 0
      %1701 = vmatpush1.bf16.msra.mxu0 %v1684
      %1702 = vmatprep.subr.bf16.mxu0 0
      %1703 = vmatpush2.bf16.msra.mxu0 0
      %1704 = vmatprep.subr.bf16.mxu0 0
      %1705 = vmatpush2.bf16.msra.mxu0 0
      %1706 = vmatprep.subr.bf16.mxu0 0
      %1707 = vmatpush2.bf16.msra.mxu0 0
      %1708 = vmatprep.subr.bf16.mxu0 0
      %1709 = vmatpush2.bf16.msra.mxu0 0
      %1710 = vmatprep.subr.bf16.mxu0 0
      %1711 = vmatpush2.bf16.msra.mxu0 0
      %1712 = vmatprep.subr.bf16.mxu0 0
      %1713 = vmatpush2.bf16.msra.mxu0 0
      %1714 = vmatprep.subr.bf16.mxu0 0
      %1715 = vmatpush2.bf16.msra.mxu0 0
      %1716 = vmatprep.subr.bf16.mxu0 0
      %1717 = vmatpush2.bf16.msra.mxu0 0
      %1718 = vmatprep.mubr.bf16.mxu0 0
      %1719 = vmatmul.mubr.bf16.gmra.mxu0 %v1681
      %v1720 = vpop.f32.mrf.mxu0
      %v1721 = vadd.f32 0.0, %v1720
      %v1722 = vpop.f32.mrf.mxu0
      %v1723 = vpop.f32.mrf.mxu0
      %v1724 = vpop.f32.mrf.mxu0
      %1725 = vdwg.mxu0
      %v1726 = vpack.c.bf16 %v1721, %v1721
      %v1728 = vunpack.c.l.b16 %v1726
      %v1729 = vpack.c.b16 %v1728, %v1728
      %1730 = vrot.lane.b32.xlu0 %v1729, 24
      %v1731 = vpop.permute.xlu0 %1730
      %vm1733 = vcmask 257216
      %1734 = vst.msk [vmem:[#allocation4] sm:$0xf] %vm1733, %v1731
      %v1735 = vld [vmem:[#allocation4] sm:$0xf]
      %v1736 = vld [vmem:[%s8] sm:$0xf]
      %v1737 = vld [vmem:[%s8 + $0x4] sm:$0xf]
      %v1738 = vld [vmem:[%s8 + $0x8] sm:$0xf]
      %v1739 = vld [vmem:[%s8 + $0xc] sm:$0xf]
      %v1740 = vld [vmem:[%s9] sm:$0x1]
      %v1742 = vlaneseq
      %v1743 = vshrl.u32 %v1742, 7
      %v1744 = vsub.s32 0, %v1743
      %v1745 = vrot.slane %v1740, %v1744
      %v1751 = vunpack.c.l.b16 %v1736
      %v1752 = vunpack.c.l.b16 %v1737
      %v1753 = vunpack.c.l.b16 %v1738
      %v1754 = vunpack.c.l.b16 %v1739
      %v1755 = vpack.c.b16 %v1752, %v1751
      %v1756 = vpack.c.b16 %v1754, %v1753
      %v1760 = vsel %vm1030, %v1735, 0
      %1762 = vmatprep.subr.bf16.mxu0 0
      %1763 = vmatpush1.bf16.msra.mxu0 0
      %1764 = vmatprep.subr.bf16.mxu0 0
      %1765 = vmatpush1.bf16.msra.mxu0 0
      %1766 = vmatprep.subr.bf16.mxu0 0
      %1767 = vmatpush1.bf16.msra.mxu0 0
      %1768 = vmatprep.subr.bf16.mxu0 0
      %1769 = vmatpush1.bf16.msra.mxu0 0
      %1770 = vmatprep.subr.bf16.mxu0 0
      %1771 = vmatpush1.bf16.msra.mxu0 0
      %1772 = vmatprep.subr.bf16.mxu0 0
      %1773 = vmatpush1.bf16.msra.mxu0 0
      %1774 = vmatprep.subr.bf16.mxu0 0
      %1775 = vmatpush1.bf16.msra.mxu0 %v1756
      %1776 = vmatprep.subr.bf16.mxu0 0
      %1777 = vmatpush1.bf16.msra.mxu0 %v1755
      %1778 = vmatprep.subr.bf16.mxu0 0
      %1779 = vmatpush2.bf16.msra.mxu0 0
      %1780 = vmatprep.subr.bf16.mxu0 0
      %1781 = vmatpush2.bf16.msra.mxu0 0
      %1782 = vmatprep.subr.bf16.mxu0 0
      %1783 = vmatpush2.bf16.msra.mxu0 0
      %1784 = vmatprep.subr.bf16.mxu0 0
      %1785 = vmatpush2.bf16.msra.mxu0 0
      %1786 = vmatprep.subr.bf16.mxu0 0
      %1787 = vmatpush2.bf16.msra.mxu0 0
      %1788 = vmatprep.subr.bf16.mxu0 0
      %1789 = vmatpush2.bf16.msra.mxu0 0
      %1790 = vmatprep.subr.bf16.mxu0 0
      %1791 = vmatpush2.bf16.msra.mxu0 0
      %1792 = vmatprep.subr.bf16.mxu0 0
      %1793 = vmatpush2.bf16.msra.mxu0 0
      %1794 = vmatprep.mubr.bf16.mxu0 0
      %1795 = vmatmul.mubr.bf16.gmra.mxu0 %v1760
      %v1796 = vpop.f32.mrf.mxu0
      %v1797 = vadd.f32 %v1745, %v1796
      %v1798 = vpop.f32.mrf.mxu0
      %v1799 = vpop.f32.mrf.mxu0
      %v1800 = vpop.f32.mrf.mxu0
      %1801 = vdwg.mxu0
      %v1802 = vunpack.c.l.bf16 %v1006
      %v1803 = vadd.f32 %v1802, %v1797
      %v1804 = vld [vmem:[%s10] sm:$0x1]
      %v1805 = vld [vmem:[%s11] sm:$0x1]
      %v1806 = vsel %vm1030, %v1803, 0.0
      %1807 = vadd.xlane.f32.xlu0 %v1806
      %v1808 = vpop.xlane.xlu0 %1807
      %v1809 = vrcp.pop 32.0
      %v1810 = vmul.f32 %v1808, %v1809
      %v1811 = vsub.f32 %v1803, %v1810
      %v1812 = vmul.f32 %v1811, %v1811
      %v1813 = vsel %vm1030, %v1812, 0.0
      %1814 = vadd.xlane.f32.xlu0 %v1813
      %v1815 = vpop.xlane.xlu0 %1814
      %v1816 = vmul.f32 %v1815, %v1809
      %v1817 = vadd.f32 %v1816, 1e-05
      %v1818 = vrsqrt.pop %v1817
      %v1819 = vmul.f32 %v1811, %v1818
      %v1821 = vlaneseq
      %v1822 = vshrl.u32 %v1821, 7
      %v1823 = vsub.s32 0, %v1822
      %v1824 = vrot.slane %v1804, %v1823
      %v1826 = vmul.f32 %v1819, %v1824
      %v1828 = vlaneseq
      %v1829 = vshrl.u32 %v1828, 7
      %v1830 = vsub.s32 0, %v1829
      %v1831 = vrot.slane %v1805, %v1830
      %v1833 = vadd.f32 %v1826, %v1831
      %v1834 = vpack.c.bf16 %v1833, %v1833
      %vm1835 = vcmask 257024
      %1836 = vst.msk [vmem:[%s456] sm:$0xf] %vm1835, %v1834
      %p1837 = scmp.lt.s32.totalorder %s27, 1
      %s1838 = scalar_select %p1837, %s27, 1
      %p1839 = scmp.lt.s32.totalorder %s28, 0
      %s1840 = scalar_select %p1839, %s28, 0
      %s1841 = sadd.s32 %s1840, %s1838
      %s1842 = smul.addr %s1841, 4
      %s1843 = scalar_lea.vmem %s12, %s1842
      // Predicated region
      $region73: #{transformer_classifier_forward.13} parent=67 // pred_check
        %p1844 = pneg %p319
      $region74: #{transformer_classifier_forward.13} parent=67 // pred_check_branch
        %1846 = sbr.rel (%p1844) target = $region76
      $region75: #{transformer_classifier_forward.13} parent=67 // pred_region
        _
      $region76: #{transformer_classifier_forward.13} parent=67 // pred_fallthru
        _
    $region68: #{transformer_classifier_forward.13} parent=5 // pred_fallthru
      _
    %p1847 = scmp.le.s32.totalorder 2, %s18
    // Predicated region
    $region77: #{transformer_classifier_forward.13} parent=5 // pred_check
      %p1848 = pneg %p1847
    $region78: #{transformer_classifier_forward.13} parent=5 // pred_check_branch
      %1850 = sbr.rel (%p1848) target = $region80
    $region79: #{transformer_classifier_forward.13} parent=5 // pred_region
      %s1851 = ssub.s32 %s18, 2
      // Predicated region
      $region81: #{transformer_classifier_forward.13} parent=79 // pred_check
        %p1852 = pneg %p325
      $region82: #{transformer_classifier_forward.13} parent=79 // pred_check_branch
        %1854 = sbr.rel (%p1852) target = $region84
      $region83: #{transformer_classifier_forward.13} parent=79 // pred_region
        %p1855 = scmp.lt.s32.totalorder %s29, 1
        %s1856 = scalar_select %p1855, %s29, 1
        %p1857 = scmp.lt.s32.totalorder %s30, 0
        %s1858 = scalar_select %p1857, %s30, 0
        %s1859 = sadd.s32 %s1858, %s1856
        %s1860 = smul.addr %s1859, 4
        %s1861 = scalar_lea.vmem %s12, %s1860
      $region84: #{transformer_classifier_forward.13} parent=79 // pred_fallthru
        _
    $region80: #{transformer_classifier_forward.13} parent=5 // pred_fallthru
      _
  $region6: #{transformer_classifier_forward.13} parent=0 // loop_footer
    %s22 = sadd.s32 1, %s18
  $region7: #{transformer_classifier_forward.13} parent=0 // loop_footer_branch
    %17 = sbr.rel target = $region3
  $region8: #{transformer_classifier_forward.13} parent=0 // loop_exit
    _

// kernel: transformer_classifier_forward.12
$region0: #{transformer_classifier_forward.12}
  #allocation0 [shape = 'u32[]', space=smem, size = 0x4, offset = 0x4, fixed_abs, tag = 'smem constant byte address 0x4 - core index']
  #allocation1 [shape = 'u32[144,128]{1,0:T(1,128)}', space=vmem, size = 0x12000, scoped, tag = 'internal scratch']
  %s0 = inlined_call_operand.vmem [shape: bf16[16,16], index: 0, kind: input, shape index: {}]
  %s1 = inlined_call_operand.vmem [shape: bf16[16,32], index: 1, kind: input, shape index: {}]
  %s2 = inlined_call_operand.vmem [shape: f32[1,32], index: 2, kind: input, shape index: {}]
  %s3 = inlined_call_operand.vmem [shape: bf16[16,32], index: 3, kind: output, shape index: {}]
  %s4 = sld [smem:[#allocation0]]
  $region22: #{transformer_classifier_forward.12} parent=0
    _
  %s6 = ssub.s32 1, %s4
  %s7 = scalar_select 0, %s6, %s4
  // Predicated region
  $region2: #{transformer_classifier_forward.12} parent=0 // pred_check
    _
  $region3: #{transformer_classifier_forward.12} parent=0 // pred_check_branch
    %9 = sbr.rel (0) target = $region5
  $region4: #{transformer_classifier_forward.12} parent=0 // pred_region
    _
  $region5: #{transformer_classifier_forward.12} parent=0 // pred_fallthru
    _
  // Predicated region
  $region6: #{transformer_classifier_forward.12} parent=0 // pred_check
    _
  $region7: #{transformer_classifier_forward.12} parent=0 // pred_check_branch
    %11 = sbr.rel (0) target = $region9
  $region8: #{transformer_classifier_forward.12} parent=0 // pred_region
    _
  $region9: #{transformer_classifier_forward.12} parent=0 // pred_fallthru
    _
  // Predicated region
  $region10: #{transformer_classifier_forward.12} parent=0 // pred_check
    _
  $region11: #{transformer_classifier_forward.12} parent=0 // pred_check_branch
    %13 = sbr.rel (0) target = $region13
  $region12: #{transformer_classifier_forward.12} parent=0 // pred_region
    _
  $region13: #{transformer_classifier_forward.12} parent=0 // pred_fallthru
    _
  %v15 = vld [vmem:[%s0] sm:$0xf]
  %v16 = vld [vmem:[%s0 + $0x4] sm:$0xf]
  %v17 = vld [vmem:[%s1] sm:$0xf]
  %v18 = vld [vmem:[%s1 + $0x4] sm:$0xf]
  %v19 = vld [vmem:[%s2] sm:$0x1]
  %v21 = vlaneseq
  %v22 = vshrl.u32 %v21, 7
  %v23 = vsub.s32 0, %v22
  %v24 = vrot.slane %v19, %v23
  %v28 = vunpack.c.l.b16 %v15
  %v29 = vunpack.c.l.b16 %v16
  %v30 = vpack.c.b16 %v29, %v28
  %v33 = vunpack.c.l.b16 %v17
  %v34 = vunpack.c.l.b16 %v18
  %v35 = vpack.c.b16 %v34, %v33
  %vm37 = vcmask 130048
  %v39 = vsel %vm37, %v30, 0
  %41 = vmatprep.subr.bf16.mxu0 0
  %42 = vmatpush1.bf16.msra.mxu0 0
  %43 = vmatprep.subr.bf16.mxu0 0
  %44 = vmatpush1.bf16.msra.mxu0 0
  %45 = vmatprep.subr.bf16.mxu0 0
  %46 = vmatpush1.bf16.msra.mxu0 0
  %47 = vmatprep.subr.bf16.mxu0 0
  %48 = vmatpush1.bf16.msra.mxu0 0
  %49 = vmatprep.subr.bf16.mxu0 0
  %50 = vmatpush1.bf16.msra.mxu0 0
  %51 = vmatprep.subr.bf16.mxu0 0
  %52 = vmatpush1.bf16.msra.mxu0 0
  %53 = vmatprep.subr.bf16.mxu0 0
  %54 = vmatpush1.bf16.msra.mxu0 0
  %55 = vmatprep.subr.bf16.mxu0 0
  %56 = vmatpush1.bf16.msra.mxu0 %v35
  %57 = vmatprep.subr.bf16.mxu0 0
  %58 = vmatpush2.bf16.msra.mxu0 0
  %59 = vmatprep.subr.bf16.mxu0 0
  %60 = vmatpush2.bf16.msra.mxu0 0
  %61 = vmatprep.subr.bf16.mxu0 0
  %62 = vmatpush2.bf16.msra.mxu0 0
  %63 = vmatprep.subr.bf16.mxu0 0
  %64 = vmatpush2.bf16.msra.mxu0 0
  %65 = vmatprep.subr.bf16.mxu0 0
  %66 = vmatpush2.bf16.msra.mxu0 0
  %67 = vmatprep.subr.bf16.mxu0 0
  %68 = vmatpush2.bf16.msra.mxu0 0
  %69 = vmatprep.subr.bf16.mxu0 0
  %70 = vmatpush2.bf16.msra.mxu0 0
  %71 = vmatprep.subr.bf16.mxu0 0
  %72 = vmatpush2.bf16.msra.mxu0 0
  %73 = vmatprep.mubr.bf16.mxu0 0
  %74 = vmatmul.mubr.bf16.gmra.mxu0 %v39
  %v75 = vpop.f32.mrf.mxu0
  %v76 = vadd.f32 %v24, %v75
  %v77 = vpop.f32.mrf.mxu0
  %v78 = vpop.f32.mrf.mxu0
  %v79 = vadd.f32 %v24, %v78
  %v80 = vpop.f32.mrf.mxu0
  %81 = vdwg.mxu0
  %v82 = vmax.f32 %v76, 0.0
  %v83 = vmax.f32 %v79, 0.0
  %v84 = vpack.c.bf16 %v83, %v82
  %v86 = vunpack.c.l.b16 %v84
  %v87 = vunpack.c.h.b16 %v84
  %v88 = vpack.c.b16 %v86, %v86
  %v89 = vpack.c.b16 %v87, %v87
  %vm92 = vcmask 257024
  %93 = vst.msk [vmem:[%s3] sm:$0xf] %vm92, %v88
  %94 = vst.msk [vmem:[%s3 + $0x4] sm:$0xf] %vm92, %v89
  // Predicated region
  $region14: #{transformer_classifier_forward.12} parent=0 // pred_check
    _
  $region15: #{transformer_classifier_forward.12} parent=0 // pred_check_branch
    %96 = sbr.rel (0) target = $region17
  $region16: #{transformer_classifier_forward.12} parent=0 // pred_region
    _
  $region17: #{transformer_classifier_forward.12} parent=0 // pred_fallthru
    _
  // Predicated region
  $region18: #{transformer_classifier_forward.12} parent=0 // pred_check
    _
  $region19: #{transformer_classifier_forward.12} parent=0 // pred_check_branch
    %98 = sbr.rel (0) target = $region21
  $region20: #{transformer_classifier_forward.12} parent=0 // pred_region
    _
  $region21: #{transformer_classifier_forward.12} parent=0 // pred_fallthru
    _

// kernel: transformer_classifier_forward.23
$region0: #{transformer_classifier_forward.23}
  #allocation0 [shape = 'u32[]', space=smem, size = 0x4, offset = 0x4, fixed_abs, tag = 'smem constant byte address 0x4 - core index']
  #allocation1 [shape = 'u32[144,128]{1,0:T(1,128)}', space=vmem, size = 0x12000, scoped, tag = 'internal scratch']
  #allocation2 [shape = 'f32[8,32]{1,0:T(8,128)}', space=vmem, size = 0x1000, scoped, tag = 'scratch operand']
  %s0 = inlined_call_operand.vmem [shape: bf16[2,8,32], index: 0, kind: input, shape index: {}]
  %s1 = inlined_call_operand.vmem [shape: bf16[32,128], index: 1, kind: input, shape index: {}]
  %s2 = inlined_call_operand.vmem [shape: f32[1,128], index: 2, kind: input, shape index: {}]
  %s3 = inlined_call_operand.hbm [shape: f32[8,128], index: 3, kind: output, shape index: {}]
  %s4 = sld [smem:[#allocation0]]
  $region53: #{transformer_classifier_forward.23} parent=0
    _
  %s6 = ssub.s32 1, %s4
  %s7 = scalar_select 0, %s6, %s4
  $region1: #{transformer_classifier_forward.23} parent=0
    #allocation3 [shape = 'u8[4096]{0}', space=vmem, size = 0x1000, scoped, tag = 'output window, operand 0, single buffered']
    #allocation4 [shape = 's32[2]{0}', space=sflag, size = 0x8, scoped, tag = 'scoped memory for transformer_classifier_forward.23']
    %8 = vsyncpa [#allocation4], 0
    loop: start=0, step=1, limit=4
    $region2: #{transformer_classifier_forward.23} parent=1 // loop_pre_header
      _
    $region3: #{transformer_classifier_forward.23} parent=1 // loop_header
      %s10 = sphi 0, %s14
      %p11 = scmp.ge.s32.totalorder %s10, 4
      %s17 = sphi 0, %s29
      %s18 = sphi 0, %s25
      %s19 = sphi 0, %s17
      %s20 = sphi 0, %s18
      %s21 = sphi 0, %s19
      %s22 = sphi 0, %s20
      %s34 = sphi 0, %s36
      %s37 = sphi 0, %s34
      %s38 = sphi 0, %s37
      %s54 = sphi 0, %s38
      %s58 = sphi 0, %s58
      %s60 = sphi 0, %s58
      %s61 = sphi 0, %s60
      %s75 = sphi 0, %s61
      %s79 = sphi 0, %s79
      %s81 = sphi 0, %s79
      %s82 = sphi 0, %s81
      %s96 = sphi 0, %s82
      %s102 = sphi 0, %s104
      %s105 = sphi 0, %s102
      %s106 = sphi 0, %s105
      %s122 = sphi 0, %s106
    $region4: #{transformer_classifier_forward.23} parent=1 // loop_header_branch
      %13 = sbr.rel (%p11) target = $region8
    $region5: #{transformer_classifier_forward.23} parent=1 // loop_body
      %s15 = ssub.s32 %s10, 1
      %s16 = ssub.s32 %s10, 2
      %s23 = sadd.s32 1, %s18
      %p24 = scmp.ge.s32.totalorder %s23, 2
      %s25 = scalar_select %p24, 0, %s23
      %s26 = sadd.s32 1, %s17
      %s27 = scalar_select %p24, %s26, %s17
      %p28 = scmp.ge.s32.totalorder %s27, 1
      %s29 = scalar_select %p28, 0, %s27
      %s30 = ssub.s32 %s18, %s25
      %s31 = ssub.s32 %s17, %s29
      %s32 = sor.u32 %s30, %s31
      %p33 = scmp.eq.s32.totalorder %s32, 0
      %s35 = sadd.s32 %s34, 1
      %s36 = scalar_select %p33, %s34, %s35
      %p39 = pneg %p33
      %p40 = scmp.eq.s32.totalorder %s10, 1
      %p41 = por %p39, %p40
      %p42 = scmp.ne.s32.totalorder %s34, %s37
      %p43 = scmp.eq.s32.totalorder %s10, 0
      %p44 = por %p42, %p43
      %p45 = scmp.ne.s32.totalorder %s34, %s37
      %p46 = scmp.eq.s32.totalorder %s15, 1
      %p47 = por %p45, %p46
      %p48 = scmp.ne.s32.totalorder %s37, %s38
      %p49 = scmp.eq.s32.totalorder %s15, 0
      %p50 = por %p48, %p49
      %p51 = scmp.ne.s32.totalorder %s37, %s38
      %p52 = scmp.eq.s32.totalorder %s16, 1
      %p53 = por %p51, %p52
      %p55 = scmp.ne.s32.totalorder %s38, %s54
      %p56 = scmp.eq.s32.totalorder %s16, 0
      %p57 = por %p55, %p56
      %s59 = sadd.s32 %s58, 1
      %p62 = scmp.eq.s32.totalorder %s10, 1
      %p63 = scmp.ne.s32.totalorder %s58, %s60
      %p64 = scmp.eq.s32.totalorder %s10, 0
      %p65 = por %p63, %p64
      %p66 = scmp.ne.s32.totalorder %s58, %s60
      %p67 = scmp.eq.s32.totalorder %s15, 1
      %p68 = por %p66, %p67
      %p69 = scmp.ne.s32.totalorder %s60, %s61
      %p70 = scmp.eq.s32.totalorder %s15, 0
      %p71 = por %p69, %p70
      %p72 = scmp.ne.s32.totalorder %s60, %s61
      %p73 = scmp.eq.s32.totalorder %s16, 1
      %p74 = por %p72, %p73
      %p76 = scmp.ne.s32.totalorder %s61, %s75
      %p77 = scmp.eq.s32.totalorder %s16, 0
      %p78 = por %p76, %p77
      %s80 = sadd.s32 %s79, 1
      %p83 = scmp.eq.s32.totalorder %s10, 1
      %p84 = scmp.ne.s32.totalorder %s79, %s81
      %p85 = scmp.eq.s32.totalorder %s10, 0
      %p86 = por %p84, %p85
      %p87 = scmp.ne.s32.totalorder %s79, %s81
      %p88 = scmp.eq.s32.totalorder %s15, 1
      %p89 = por %p87, %p88
      %p90 = scmp.ne.s32.totalorder %s81, %s82
      %p91 = scmp.eq.s32.totalorder %s15, 0
      %p92 = por %p90, %p91
      %p93 = scmp.ne.s32.totalorder %s81, %s82
      %p94 = scmp.eq.s32.totalorder %s16, 1
      %p95 = por %p93, %p94
      %p97 = scmp.ne.s32.totalorder %s82, %s96
      %p98 = scmp.eq.s32.totalorder %s16, 0
      %p99 = por %p97, %p98
      %s100 = ssub.s32 %s17, %s29
      %p101 = scmp.eq.s32.totalorder %s100, 0
      %s103 = sadd.s32 %s102, 1
      %s104 = scalar_select %p101, %s102, %s103
      %p107 = pneg %p101
      %p108 = scmp.eq.s32.totalorder %s10, 1
      %p109 = por %p107, %p108
      %p110 = scmp.ne.s32.totalorder %s102, %s105
      %p111 = scmp.eq.s32.totalorder %s10, 0
      %p112 = por %p110, %p111
      %p113 = scmp.ne.s32.totalorder %s102, %s105
      %p114 = scmp.eq.s32.totalorder %s15, 1
      %p115 = por %p113, %p114
      %p116 = scmp.ne.s32.totalorder %s105, %s106
      %p117 = scmp.eq.s32.totalorder %s15, 0
      %p118 = por %p116, %p117
      %p119 = scmp.ne.s32.totalorder %s105, %s106
      %p120 = scmp.eq.s32.totalorder %s16, 1
      %p121 = por %p119, %p120
      %p123 = scmp.ne.s32.totalorder %s106, %s122
      %p124 = scmp.eq.s32.totalorder %s16, 0
      %p125 = por %p123, %p124
      %p126 = scmp.le.s32.totalorder 1, %s10
      %p127 = scmp.lt.s32.totalorder %s10, 3
      %p128 = pnand %p126, %p127
      %p129 = pneg %p128
      // Predicated region
      $region9: #{transformer_classifier_forward.23} parent=5 // pred_check
        _
      $region10: #{transformer_classifier_forward.23} parent=5 // pred_check_branch
        %131 = sbr.rel (%p128) target = $region12
      $region11: #{transformer_classifier_forward.23} parent=5 // pred_region
        %s132 = ssub.s32 %s10, 1
        // Predicated region
        $region13: #{transformer_classifier_forward.23} parent=11 // pred_check
          %p133 = pneg %p71
        $region14: #{transformer_classifier_forward.23} parent=11 // pred_check_branch
          %135 = sbr.rel (%p133) target = $region16
        $region15: #{transformer_classifier_forward.23} parent=11 // pred_region
          _
        $region16: #{transformer_classifier_forward.23} parent=11 // pred_fallthru
          _
        // Predicated region
        $region17: #{transformer_classifier_forward.23} parent=11 // pred_check
          %p136 = pneg %p92
        $region18: #{transformer_classifier_forward.23} parent=11 // pred_check_branch
          %138 = sbr.rel (%p136) target = $region20
        $region19: #{transformer_classifier_forward.23} parent=11 // pred_region
          _
        $region20: #{transformer_classifier_forward.23} parent=11 // pred_fallthru
          _
      $region12: #{transformer_classifier_forward.23} parent=5 // pred_fallthru
        _
      %p139 = scmp.lt.s32.totalorder %s10, 2
      // Predicated region
      $region21: #{transformer_classifier_forward.23} parent=5 // pred_check
        %p140 = pneg %p139
      $region22: #{transformer_classifier_forward.23} parent=5 // pred_check_branch
        %142 = sbr.rel (%p140) target = $region24
      $region23: #{transformer_classifier_forward.23} parent=5 // pred_region
        // Predicated region
        $region25: #{transformer_classifier_forward.23} parent=23 // pred_check
          %p143 = pneg %p44
        $region26: #{transformer_classifier_forward.23} parent=23 // pred_check_branch
          %145 = sbr.rel (%p143) target = $region28
        $region27: #{transformer_classifier_forward.23} parent=23 // pred_region
          %p146 = scmp.lt.s32.totalorder %s18, 1
          %s147 = scalar_select %p146, %s18, 1
          %p148 = scmp.lt.s32.totalorder %s17, 0
          %s149 = scalar_select %p148, %s17, 0
          %s150 = sadd.s32 %s149, %s147
          %s151 = smul.addr %s150, 4
          %s152 = scalar_lea.vmem %s0, %s151
        $region28: #{transformer_classifier_forward.23} parent=23 // pred_fallthru
          _
      $region24: #{transformer_classifier_forward.23} parent=5 // pred_fallthru
        _
      %p153 = scmp.le.s32.totalorder 1, %s10
      %p154 = scmp.lt.s32.totalorder %s10, 3
      %p155 = pnand %p153, %p154
      %p156 = pneg %p155
      // Predicated region
      $region29: #{transformer_classifier_forward.23} parent=5 // pred_check
        _
      $region30: #{transformer_classifier_forward.23} parent=5 // pred_check_branch
        %158 = sbr.rel (%p155) target = $region32
      $region31: #{transformer_classifier_forward.23} parent=5 // pred_region
        %s159 = ssub.s32 %s10, 1
        %p160 = scmp.lt.s32.totalorder %s20, 1
        %s161 = scalar_select %p160, %s20, 1
        %p162 = scmp.lt.s32.totalorder %s19, 0
        %s163 = scalar_select %p162, %s19, 0
        %s164 = sadd.s32 %s163, %s161
        %s165 = smul.addr %s164, 4
        %s166 = scalar_lea.vmem %s0, %s165
        %p167 = pneg %p50
        %p168 = pneg %p47
        %p169 = pneg %p71
        %p170 = pneg %p68
        %p171 = pneg %p92
        %p172 = pneg %p89
        %p173 = pneg %p118
        %p174 = pneg %p115
        %p175 = scmp.lt.s32.totalorder %s20, 1
        %s176 = scalar_select %p175, %s20, 1
        %p177 = scmp.lt.s32.totalorder %s19, 0
        %s178 = scalar_select %p177, %s19, 0
        %s179 = sadd.s32 %s178, %s176
        %s180 = smul.addr %s179, 4
        %s181 = scalar_lea.vmem %s0, %s180
        %p183 = scmp.eq.s32.totalorder %s20, 0
        // Predicated region
        $region33: #{transformer_classifier_forward.23} parent=31 // pred_check
          %p184 = pneg %p183
        $region34: #{transformer_classifier_forward.23} parent=31 // pred_check_branch
          %186 = sbr.rel (%p184) target = $region36
        $region35: #{transformer_classifier_forward.23} parent=31 // pred_region
          %vm187 = vcmask 261120
          %188 = vst.msk [vmem:[#allocation2] sm:$0xff] %vm187, 0.0
        $region36: #{transformer_classifier_forward.23} parent=31 // pred_fallthru
          _
        %v189 = vld [vmem:[#allocation2] sm:$0xff]
        %v190 = vld [vmem:[%s181] sm:$0xf]
        %v191 = vunpack.c.l.bf16 %v190
        %v192 = vadd.f32 %v189, %v191
        %vm193 = vcmask 261120
        %194 = vst.msk [vmem:[#allocation2] sm:$0xff] %vm193, %v192
        %p195 = scmp.eq.s32.totalorder %s20, 1
        // Predicated region
        $region37: #{transformer_classifier_forward.23} parent=31 // pred_check
          %p196 = pneg %p195
        $region38: #{transformer_classifier_forward.23} parent=31 // pred_check_branch
          %198 = sbr.rel (%p196) target = $region40
        $region39: #{transformer_classifier_forward.23} parent=31 // pred_region
          %v199 = vld [vmem:[#allocation2] sm:$0xff]
          %v200 = vmul.f32 %v199, 0.5
          %v201 = vpack.c.bf16 %v200, %v200
          %v202 = vld [vmem:[%s1] sm:$0xf]
          %v203 = vld [vmem:[%s1 + $0x4] sm:$0xf]
          %v204 = vld [vmem:[%s1 + $0x8] sm:$0xf]
          %v205 = vld [vmem:[%s1 + $0xc] sm:$0xf]
          %v206 = vld [vmem:[%s2] sm:$0x1]
          %v208 = vlaneseq
          %v209 = vshrl.u32 %v208, 7
          %v210 = vsub.s32 0, %v209
          %v211 = vrot.slane %v206, %v210
          %v217 = vunpack.c.l.b16 %v202
          %v218 = vunpack.c.l.b16 %v203
          %v219 = vunpack.c.l.b16 %v204
          %v220 = vunpack.c.l.b16 %v205
          %v221 = vpack.c.b16 %v218, %v217
          %v222 = vpack.c.b16 %v220, %v219
          %v226 = vsel %vm193, %v201, 0
          %228 = vmatprep.subr.bf16.mxu0 0
          %229 = vmatpush1.bf16.msra.mxu0 0
          %230 = vmatprep.subr.bf16.mxu0 0
          %231 = vmatpush1.bf16.msra.mxu0 0
          %232 = vmatprep.subr.bf16.mxu0 0
          %233 = vmatpush1.bf16.msra.mxu0 0
          %234 = vmatprep.subr.bf16.mxu0 0
          %235 = vmatpush1.bf16.msra.mxu0 0
          %236 = vmatprep.subr.bf16.mxu0 0
          %237 = vmatpush1.bf16.msra.mxu0 0
          %238 = vmatprep.subr.bf16.mxu0 0
          %239 = vmatpush1.bf16.msra.mxu0 0
          %240 = vmatprep.subr.bf16.mxu0 0
          %241 = vmatpush1.bf16.msra.mxu0 %v222
          %242 = vmatprep.subr.bf16.mxu0 0
          %243 = vmatpush1.bf16.msra.mxu0 %v221
          %244 = vmatprep.subr.bf16.mxu0 0
          %245 = vmatpush2.bf16.msra.mxu0 0
          %246 = vmatprep.subr.bf16.mxu0 0
          %247 = vmatpush2.bf16.msra.mxu0 0
          %248 = vmatprep.subr.bf16.mxu0 0
          %249 = vmatpush2.bf16.msra.mxu0 0
          %250 = vmatprep.subr.bf16.mxu0 0
          %251 = vmatpush2.bf16.msra.mxu0 0
          %252 = vmatprep.subr.bf16.mxu0 0
          %253 = vmatpush2.bf16.msra.mxu0 0
          %254 = vmatprep.subr.bf16.mxu0 0
          %255 = vmatpush2.bf16.msra.mxu0 0
          %256 = vmatprep.subr.bf16.mxu0 0
          %257 = vmatpush2.bf16.msra.mxu0 0
          %258 = vmatprep.subr.bf16.mxu0 0
          %259 = vmatpush2.bf16.msra.mxu0 0
          %260 = vmatprep.mubr.bf16.mxu0 0
          %261 = vmatmul.mubr.bf16.gmra.mxu0 %v226
          %v262 = vpop.f32.mrf.mxu0
          %v263 = vadd.f32 %v211, %v262
          %v264 = vpop.f32.mrf.mxu0
          %v265 = vpop.f32.mrf.mxu0
          %v266 = vpop.f32.mrf.mxu0
          %267 = vdwg.mxu0
          %268 = vst [vmem:[#allocation3] sm:$0xff] %v263
        $region40: #{transformer_classifier_forward.23} parent=31 // pred_fallthru
          _
        // Predicated region
        $region41: #{transformer_classifier_forward.23} parent=31 // pred_check
          %p269 = pneg %p115
        $region42: #{transformer_classifier_forward.23} parent=31 // pred_check_branch
          %271 = sbr.rel (%p269) target = $region44
        $region43: #{transformer_classifier_forward.23} parent=31 // pred_region
          %s273 = ssub.s32 128, 128
          %274 = vsyncadd [#allocation4], %s273
          %s275 = smul.addr %s19, 128
          %s276 = scalar_lea.hbm %s3, %s275
          %s278 = sshll.u32 [#allocation3], 4
          %s279 = int_to_ptr.vmem [resolvable:$true] %s278
          %281 = dma.vmem_to_hbm [thread:$0]  %s279, 128, %s276, [#allocation4]
        $region44: #{transformer_classifier_forward.23} parent=31 // pred_fallthru
          _
        // Predicated region
        $region45: #{transformer_classifier_forward.23} parent=31 // pred_check
          %p282 = pneg %p115
        $region46: #{transformer_classifier_forward.23} parent=31 // pred_check_branch
          %284 = sbr.rel (%p282) target = $region48
        $region47: #{transformer_classifier_forward.23} parent=31 // pred_region
          %285 = dma.done [#allocation4], 128
        $region48: #{transformer_classifier_forward.23} parent=31 // pred_fallthru
          _
      $region32: #{transformer_classifier_forward.23} parent=5 // pred_fallthru
        _
      %p286 = scmp.le.s32.totalorder 2, %s10
      // Predicated region
      $region49: #{transformer_classifier_forward.23} parent=5 // pred_check
        %p287 = pneg %p286
      $region50: #{transformer_classifier_forward.23} parent=5 // pred_check_branch
        %289 = sbr.rel (%p287) target = $region52
      $region51: #{transformer_classifier_forward.23} parent=5 // pred_region
        %s290 = ssub.s32 %s10, 2
      $region52: #{transformer_classifier_forward.23} parent=5 // pred_fallthru
        _
    $region6: #{transformer_classifier_forward.23} parent=1 // loop_footer
      %s14 = sadd.s32 1, %s10
    $region7: #{transformer_classifier_forward.23} parent=1 // loop_footer_branch
      %9 = sbr.rel target = $region3
    $region8: #{transformer_classifier_forward.23} parent=1 // loop_exit
      _
    %291 = vsyncpa [#allocation4], 1
    %s292 = scalar_lea.sflag [#allocation4], 1
    %293 = vsyncpa %s292, 1

// kernel: transformer_classifier_forward.14
$region0: #{transformer_classifier_forward.14}
  #allocation0 [shape = 'u32[]', space=smem, size = 0x4, offset = 0x4, fixed_abs, tag = 'smem constant byte address 0x4 - core index']
  #allocation1 [shape = 'u32[144,128]{1,0:T(1,128)}', space=vmem, size = 0x12000, scoped, tag = 'internal scratch']
  %s0 = inlined_call_operand.vmem [shape: bf16[16,32], index: 0, kind: input, shape index: {}]
  %s1 = inlined_call_operand.vmem [shape: bf16[32,64], index: 1, kind: input, shape index: {}]
  %s2 = inlined_call_operand.vmem [shape: f32[1,64], index: 2, kind: input, shape index: {}]
  %s3 = inlined_call_operand.vmem [shape: bf16[64,32], index: 3, kind: input, shape index: {}]
  %s4 = inlined_call_operand.vmem [shape: f32[1,32], index: 4, kind: input, shape index: {}]
  %s5 = inlined_call_operand.vmem [shape: f32[1,32], index: 5, kind: input, shape index: {}]
  %s6 = inlined_call_operand.vmem [shape: f32[1,32], index: 6, kind: input, shape index: {}]
  %s7 = inlined_call_operand.vmem [shape: bf16[16,32], index: 7, kind: output, shape index: {}]
  %s8 = sld [smem:[#allocation0]]
  $region38: #{transformer_classifier_forward.14} parent=0
    _
  %s10 = ssub.s32 1, %s8
  %s11 = scalar_select 0, %s10, %s8
  // Predicated region
  $region2: #{transformer_classifier_forward.14} parent=0 // pred_check
    _
  $region3: #{transformer_classifier_forward.14} parent=0 // pred_check_branch
    %13 = sbr.rel (0) target = $region5
  $region4: #{transformer_classifier_forward.14} parent=0 // pred_region
    _
  $region5: #{transformer_classifier_forward.14} parent=0 // pred_fallthru
    _
  // Predicated region
  $region6: #{transformer_classifier_forward.14} parent=0 // pred_check
    _
  $region7: #{transformer_classifier_forward.14} parent=0 // pred_check_branch
    %15 = sbr.rel (0) target = $region9
  $region8: #{transformer_classifier_forward.14} parent=0 // pred_region
    _
  $region9: #{transformer_classifier_forward.14} parent=0 // pred_fallthru
    _
  // Predicated region
  $region10: #{transformer_classifier_forward.14} parent=0 // pred_check
    _
  $region11: #{transformer_classifier_forward.14} parent=0 // pred_check_branch
    %17 = sbr.rel (0) target = $region13
  $region12: #{transformer_classifier_forward.14} parent=0 // pred_region
    _
  $region13: #{transformer_classifier_forward.14} parent=0 // pred_fallthru
    _
  // Predicated region
  $region14: #{transformer_classifier_forward.14} parent=0 // pred_check
    _
  $region15: #{transformer_classifier_forward.14} parent=0 // pred_check_branch
    %19 = sbr.rel (0) target = $region17
  $region16: #{transformer_classifier_forward.14} parent=0 // pred_region
    _
  $region17: #{transformer_classifier_forward.14} parent=0 // pred_fallthru
    _
  // Predicated region
  $region18: #{transformer_classifier_forward.14} parent=0 // pred_check
    _
  $region19: #{transformer_classifier_forward.14} parent=0 // pred_check_branch
    %21 = sbr.rel (0) target = $region21
  $region20: #{transformer_classifier_forward.14} parent=0 // pred_region
    _
  $region21: #{transformer_classifier_forward.14} parent=0 // pred_fallthru
    _
  // Predicated region
  $region22: #{transformer_classifier_forward.14} parent=0 // pred_check
    _
  $region23: #{transformer_classifier_forward.14} parent=0 // pred_check_branch
    %23 = sbr.rel (0) target = $region25
  $region24: #{transformer_classifier_forward.14} parent=0 // pred_region
    _
  $region25: #{transformer_classifier_forward.14} parent=0 // pred_fallthru
    _
  // Predicated region
  $region26: #{transformer_classifier_forward.14} parent=0 // pred_check
    _
  $region27: #{transformer_classifier_forward.14} parent=0 // pred_check_branch
    %25 = sbr.rel (0) target = $region29
  $region28: #{transformer_classifier_forward.14} parent=0 // pred_region
    _
  $region29: #{transformer_classifier_forward.14} parent=0 // pred_fallthru
    _
  %v27 = vld [vmem:[%s0] sm:$0xf]
  %v28 = vld [vmem:[%s0 + $0x4] sm:$0xf]
  %v29 = vld [vmem:[%s1] sm:$0xf]
  %v30 = vld [vmem:[%s1 + $0x4] sm:$0xf]
  %v31 = vld [vmem:[%s1 + $0x8] sm:$0xf]
  %v32 = vld [vmem:[%s1 + $0xc] sm:$0xf]
  %v33 = vld [vmem:[%s2] sm:$0x1]
  %v35 = vlaneseq
  %v36 = vshrl.u32 %v35, 7
  %v37 = vsub.s32 0, %v36
  %v38 = vrot.slane %v33, %v37
  %v42 = vunpack.c.l.b16 %v27
  %v43 = vunpack.c.l.b16 %v28
  %v44 = vpack.c.b16 %v43, %v42
  %v49 = vunpack.c.l.b16 %v29
  %v50 = vunpack.c.l.b16 %v30
  %v51 = vunpack.c.l.b16 %v31
  %v52 = vunpack.c.l.b16 %v32
  %v53 = vpack.c.b16 %v50, %v49
  %v54 = vpack.c.b16 %v52, %v51
  %vm57 = vcmask 261120
  %v59 = vsel %vm57, %v44, 0
  %61 = vmatprep.subr.bf16.mxu0 0
  %62 = vmatpush1.bf16.msra.mxu0 0
  %63 = vmatprep.subr.bf16.mxu0 0
  %64 = vmatpush1.bf16.msra.mxu0 0
  %65 = vmatprep.subr.bf16.mxu0 0
  %66 = vmatpush1.bf16.msra.mxu0 0
  %67 = vmatprep.subr.bf16.mxu0 0
  %68 = vmatpush1.bf16.msra.mxu0 0
  %69 = vmatprep.subr.bf16.mxu0 0
  %70 = vmatpush1.bf16.msra.mxu0 0
  %71 = vmatprep.subr.bf16.mxu0 0
  %72 = vmatpush1.bf16.msra.mxu0 0
  %73 = vmatprep.subr.bf16.mxu0 0
  %74 = vmatpush1.bf16.msra.mxu0 %v54
  %75 = vmatprep.subr.bf16.mxu0 0
  %76 = vmatpush1.bf16.msra.mxu0 %v53
  %77 = vmatprep.subr.bf16.mxu0 0
  %78 = vmatpush2.bf16.msra.mxu0 0
  %79 = vmatprep.subr.bf16.mxu0 0
  %80 = vmatpush2.bf16.msra.mxu0 0
  %81 = vmatprep.subr.bf16.mxu0 0
  %82 = vmatpush2.bf16.msra.mxu0 0
  %83 = vmatprep.subr.bf16.mxu0 0
  %84 = vmatpush2.bf16.msra.mxu0 0
  %85 = vmatprep.subr.bf16.mxu0 0
  %86 = vmatpush2.bf16.msra.mxu0 0
  %87 = vmatprep.subr.bf16.mxu0 0
  %88 = vmatpush2.bf16.msra.mxu0 0
  %89 = vmatprep.subr.bf16.mxu0 0
  %90 = vmatpush2.bf16.msra.mxu0 0
  %91 = vmatprep.subr.bf16.mxu0 0
  %92 = vmatpush2.bf16.msra.mxu0 0
  %93 = vmatprep.mubr.bf16.mxu0 0
  %94 = vmatmul.mubr.bf16.gmra.mxu0 %v59
  %v95 = vpop.f32.mrf.mxu0
  %v96 = vadd.f32 %v38, %v95
  %v97 = vpop.f32.mrf.mxu0
  %v98 = vpop.f32.mrf.mxu0
  %v99 = vadd.f32 %v38, %v98
  %v100 = vpop.f32.mrf.mxu0
  %101 = vdwg.mxu0
  %v102 = vmax.f32 %v96, 0.0
  %v103 = vmax.f32 %v99, 0.0
  %v104 = vpack.c.bf16 %v103, %v102
  %v105 = vld [vmem:[%s3] sm:$0xf]
  %v106 = vld [vmem:[%s3 + $0x4] sm:$0xf]
  %v107 = vld [vmem:[%s3 + $0x8] sm:$0xf]
  %v108 = vld [vmem:[%s3 + $0xc] sm:$0xf]
  %v109 = vld [vmem:[%s3 + $0x10] sm:$0xf]
  %v110 = vld [vmem:[%s3 + $0x14] sm:$0xf]
  %v111 = vld [vmem:[%s3 + $0x18] sm:$0xf]
  %v112 = vld [vmem:[%s3 + $0x1c] sm:$0xf]
  %v113 = vld [vmem:[%s4] sm:$0x1]
  %v115 = vlaneseq
  %v116 = vshrl.u32 %v115, 7
  %v117 = vsub.s32 0, %v116
  %v118 = vrot.slane %v113, %v117
  %v128 = vunpack.c.l.b16 %v105
  %v129 = vunpack.c.l.b16 %v106
  %v130 = vunpack.c.l.b16 %v107
  %v131 = vunpack.c.l.b16 %v108
  %v132 = vunpack.c.l.b16 %v109
  %v133 = vunpack.c.l.b16 %v110
  %v134 = vunpack.c.l.b16 %v111
  %v135 = vunpack.c.l.b16 %v112
  %v136 = vpack.c.b16 %v129, %v128
  %v137 = vpack.c.b16 %v131, %v130
  %v138 = vpack.c.b16 %v133, %v132
  %v139 = vpack.c.b16 %v135, %v134
  %vm144 = vcmask 523264
  %v146 = vsel %vm144, %v104, 0
  %148 = vmatprep.subr.bf16.mxu0 0
  %149 = vmatpush1.bf16.msra.mxu0 0
  %150 = vmatprep.subr.bf16.mxu0 0
  %151 = vmatpush1.bf16.msra.mxu0 0
  %152 = vmatprep.subr.bf16.mxu0 0
  %153 = vmatpush1.bf16.msra.mxu0 0
  %154 = vmatprep.subr.bf16.mxu0 0
  %155 = vmatpush1.bf16.msra.mxu0 0
  %156 = vmatprep.subr.bf16.mxu0 0
  %157 = vmatpush1.bf16.msra.mxu0 %v139
  %158 = vmatprep.subr.bf16.mxu0 0
  %159 = vmatpush1.bf16.msra.mxu0 %v138
  %160 = vmatprep.subr.bf16.mxu0 0
  %161 = vmatpush1.bf16.msra.mxu0 %v137
  %162 = vmatprep.subr.bf16.mxu0 0
  %163 = vmatpush1.bf16.msra.mxu0 %v136
  %164 = vmatprep.subr.bf16.mxu0 0
  %165 = vmatpush2.bf16.msra.mxu0 0
  %166 = vmatprep.subr.bf16.mxu0 0
  %167 = vmatpush2.bf16.msra.mxu0 0
  %168 = vmatprep.subr.bf16.mxu0 0
  %169 = vmatpush2.bf16.msra.mxu0 0
  %170 = vmatprep.subr.bf16.mxu0 0
  %171 = vmatpush2.bf16.msra.mxu0 0
  %172 = vmatprep.subr.bf16.mxu0 0
  %173 = vmatpush2.bf16.msra.mxu0 0
  %174 = vmatprep.subr.bf16.mxu0 0
  %175 = vmatpush2.bf16.msra.mxu0 0
  %176 = vmatprep.subr.bf16.mxu0 0
  %177 = vmatpush2.bf16.msra.mxu0 0
  %178 = vmatprep.subr.bf16.mxu0 0
  %179 = vmatpush2.bf16.msra.mxu0 0
  %180 = vmatprep.mubr.bf16.mxu0 0
  %181 = vmatmul.mubr.bf16.gmra.mxu0 %v146
  %v182 = vpop.f32.mrf.mxu0
  %v183 = vadd.f32 %v118, %v182
  %v184 = vpop.f32.mrf.mxu0
  %v185 = vpop.f32.mrf.mxu0
  %v186 = vadd.f32 %v118, %v185
  %v187 = vpop.f32.mrf.mxu0
  %188 = vdwg.mxu0
  %v189 = vunpack.c.l.bf16 %v27
  %v190 = vunpack.c.l.bf16 %v28
  %v191 = vadd.f32 %v189, %v183
  %v192 = vadd.f32 %v190, %v186
  %v193 = vld [vmem:[%s5] sm:$0x1]
  %v194 = vld [vmem:[%s6] sm:$0x1]
  %v195 = vsel %vm57, %v191, 0.0
  %196 = vadd.xlane.f32.xlu0 %v195
  %v197 = vpop.xlane.xlu0 %196
  %v198 = vsel %vm57, %v192, 0.0
  %199 = vadd.xlane.f32.xlu0 %v198
  %v200 = vpop.xlane.xlu0 %199
  %v201 = vrcp.pop 32.0
  %v202 = vmul.f32 %v197, %v201
  %v203 = vmul.f32 %v200, %v201
  %v204 = vsub.f32 %v191, %v202
  %v205 = vsub.f32 %v192, %v203
  %v206 = vmul.f32 %v204, %v204
  %v207 = vmul.f32 %v205, %v205
  %v208 = vsel %vm57, %v206, 0.0
  %209 = vadd.xlane.f32.xlu0 %v208
  %v210 = vpop.xlane.xlu0 %209
  %v211 = vsel %vm57, %v207, 0.0
  %212 = vadd.xlane.f32.xlu0 %v211
  %v213 = vpop.xlane.xlu0 %212
  %v214 = vmul.f32 %v210, %v201
  %v215 = vmul.f32 %v213, %v201
  %v216 = vadd.f32 %v214, 1e-05
  %v217 = vadd.f32 %v215, 1e-05
  %v218 = vrsqrt.pop %v216
  %v219 = vrsqrt.pop %v217
  %v220 = vmul.f32 %v204, %v218
  %v221 = vmul.f32 %v205, %v219
  %v223 = vlaneseq
  %v224 = vshrl.u32 %v223, 7
  %v225 = vsub.s32 0, %v224
  %v226 = vrot.slane %v193, %v225
  %v228 = vmul.f32 %v220, %v226
  %v229 = vmul.f32 %v221, %v226
  %v231 = vlaneseq
  %v232 = vshrl.u32 %v231, 7
  %v233 = vsub.s32 0, %v232
  %v234 = vrot.slane %v194, %v233
  %v236 = vadd.f32 %v228, %v234
  %v237 = vadd.f32 %v229, %v234
  %v238 = vpack.c.bf16 %v237, %v236
  %v240 = vunpack.c.l.b16 %v238
  %v241 = vunpack.c.h.b16 %v238
  %v242 = vpack.c.b16 %v240, %v240
  %v243 = vpack.c.b16 %v241, %v241
  %vm246 = vcmask 257024
  %247 = vst.msk [vmem:[%s7] sm:$0xf] %vm246, %v242
  %248 = vst.msk [vmem:[%s7 + $0x4] sm:$0xf] %vm246, %v243
  // Predicated region
  $region30: #{transformer_classifier_forward.14} parent=0 // pred_check
    _
  $region31: #{transformer_classifier_forward.14} parent=0 // pred_check_branch
    %250 = sbr.rel (0) target = $region33
  $region32: #{transformer_classifier_forward.14} parent=0 // pred_region
    _
  $region33: #{transformer_classifier_forward.14} parent=0 // pred_fallthru
    _
  // Predicated region
  $region34: #{transformer_classifier_forward.14} parent=0 // pred_check
    _
  $region35: #{transformer_classifier_forward.14} parent=0 // pred_check_branch
    %252 = sbr.rel (0) target = $region37
  $region36: #{transformer_classifier_forward.14} parent=0 // pred_region
    _
  $region37: #{transformer_classifier_forward.14} parent=0 // pred_fallthru
    _

// kernel: transformer_classifier_forward.13
$region0: #{transformer_classifier_forward.13}
  #allocation0 [shape = 'u32[]', space=smem, size = 0x4, offset = 0x4, fixed_abs, tag = 'smem constant byte address 0x4 - core index']
  #allocation1 [shape = 'u32[144,128]{1,0:T(1,128)}', space=vmem, size = 0x12000, scoped, tag = 'internal scratch']
  #allocation2 [shape = 'bf16[4,8,8]{2,1,0:T(8,128)(2,1)}', space=vmem, size = 0x2000, scoped, tag = 'scratch operand']
  #allocation3 [shape = 'bf16[4,8,8]{2,1,0:T(8,128)(2,1)}', space=vmem, size = 0x2000, scoped, tag = 'scratch operand']
  #allocation4 [shape = 'bf16[8,32]{1,0:T(8,128)(2,1)}', space=vmem, size = 0x800, scoped, tag = 'scratch operand']
  %s0 = inlined_call_operand.vmem [shape: bf16[2,8,32], index: 0, kind: input, shape index: {}, may-alias: {0,1}]
  %s1 = inlined_call_operand.vmem [shape: bf16[2,8,32], index: 1, kind: input, shape index: {}, may-alias: {0,1}]
  %s2 = inlined_call_operand.vmem [shape: bf16[4,32,8], index: 2, kind: input, shape index: {}]
  %s3 = inlined_call_operand.vmem [shape: f32[4,1,8], index: 3, kind: input, shape index: {}]
  %s4 = inlined_call_operand.vmem [shape: bf16[4,32,8], index: 4, kind: input, shape index: {}]
  %s5 = inlined_call_operand.vmem [shape: f32[4,1,8], index: 5, kind: input, shape index: {}]
  %s6 = inlined_call_operand.vmem [shape: bf16[4,32,8], index: 6, kind: input, shape index: {}]
  %s7 = inlined_call_operand.vmem [shape: f32[4,1,8], index: 7, kind: input, shape index: {}]
  %s8 = inlined_call_operand.vmem [shape: bf16[32,32], index: 8, kind: input, shape index: {}]
  %s9 = inlined_call_operand.vmem [shape: f32[1,32], index: 9, kind: input, shape index: {}]
  %s10 = inlined_call_operand.vmem [shape: f32[1,32], index: 10, kind: input, shape index: {}]
  %s11 = inlined_call_operand.vmem [shape: f32[1,32], index: 11, kind: input, shape index: {}]
  %s12 = inlined_call_operand.vmem [shape: bf16[2,8,32], index: 12, kind: output, shape index: {}]
  %s13 = sld [smem:[#allocation0]]
  $region85: #{transformer_classifier_forward.13} parent=0
    _
  %s15 = ssub.s32 1, %s13
  %s16 = scalar_select 0, %s15, %s13
  loop: start=0, step=1, limit=4
  $region2: #{transformer_classifier_forward.13} parent=0 // loop_pre_header
    _
  $region3: #{transformer_classifier_forward.13} parent=0 // loop_header
    %s18 = sphi 0, %s22
    %p19 = scmp.ge.s32.totalorder %s18, 4
    %s25 = sphi 0, %s37
    %s26 = sphi 0, %s33
    %s27 = sphi 0, %s25
    %s28 = sphi 0, %s26
    %s29 = sphi 0, %s27
    %s30 = sphi 0, %s28
    %s42 = sphi 0, %s44
    %s45 = sphi 0, %s42
    %s46 = sphi 0, %s45
    %s62 = sphi 0, %s46
    %s68 = sphi 0, %s70
    %s71 = sphi 0, %s68
    %s72 = sphi 0, %s71
    %s88 = sphi 0, %s72
    %s92 = sphi 0, %s92
    %s94 = sphi 0, %s92
    %s95 = sphi 0, %s94
    %s109 = sphi 0, %s95
    %s113 = sphi 0, %s113
    %s115 = sphi 0, %s113
    %s116 = sphi 0, %s115
    %s130 = sphi 0, %s116
    %s134 = sphi 0, %s134
    %s136 = sphi 0, %s134
    %s137 = sphi 0, %s136
    %s151 = sphi 0, %s137
    %s155 = sphi 0, %s155
    %s157 = sphi 0, %s155
    %s158 = sphi 0, %s157
    %s172 = sphi 0, %s158
    %s176 = sphi 0, %s176
    %s178 = sphi 0, %s176
    %s179 = sphi 0, %s178
    %s193 = sphi 0, %s179
    %s197 = sphi 0, %s197
    %s199 = sphi 0, %s197
    %s200 = sphi 0, %s199
    %s214 = sphi 0, %s200
    %s218 = sphi 0, %s218
    %s220 = sphi 0, %s218
    %s221 = sphi 0, %s220
    %s235 = sphi 0, %s221
    %s239 = sphi 0, %s239
    %s241 = sphi 0, %s239
    %s242 = sphi 0, %s241
    %s256 = sphi 0, %s242
    %s260 = sphi 0, %s260
    %s262 = sphi 0, %s260
    %s263 = sphi 0, %s262
    %s277 = sphi 0, %s263
    %s281 = sphi 0, %s281
    %s283 = sphi 0, %s281
    %s284 = sphi 0, %s283
    %s298 = sphi 0, %s284
    %s306 = sphi 0, %s308
    %s309 = sphi 0, %s306
    %s310 = sphi 0, %s309
    %s326 = sphi 0, %s310
  $region4: #{transformer_classifier_forward.13} parent=0 // loop_header_branch
    %21 = sbr.rel (%p19) target = $region8
  $region5: #{transformer_classifier_forward.13} parent=0 // loop_body
    %s23 = ssub.s32 %s18, 1
    %s24 = ssub.s32 %s18, 2
    %s31 = sadd.s32 1, %s26
    %p32 = scmp.ge.s32.totalorder %s31, 1
    %s33 = scalar_select %p32, 0, %s31
    %s34 = sadd.s32 1, %s25
    %s35 = scalar_select %p32, %s34, %s25
    %p36 = scmp.ge.s32.totalorder %s35, 2
    %s37 = scalar_select %p36, 0, %s35
    %s38 = ssub.s32 %s25, %s37
    %s39 = ssub.s32 %s26, %s33
    %s40 = sor.u32 %s38, %s39
    %p41 = scmp.eq.s32.totalorder %s40, 0
    %s43 = sadd.s32 %s42, 1
    %s44 = scalar_select %p41, %s42, %s43
    %p47 = pneg %p41
    %p48 = scmp.eq.s32.totalorder %s18, 1
    %p49 = por %p47, %p48
    %p50 = scmp.ne.s32.totalorder %s42, %s45
    %p51 = scmp.eq.s32.totalorder %s18, 0
    %p52 = por %p50, %p51
    %p53 = scmp.ne.s32.totalorder %s42, %s45
    %p54 = scmp.eq.s32.totalorder %s23, 1
    %p55 = por %p53, %p54
    %p56 = scmp.ne.s32.totalorder %s45, %s46
    %p57 = scmp.eq.s32.totalorder %s23, 0
    %p58 = por %p56, %p57
    %p59 = scmp.ne.s32.totalorder %s45, %s46
    %p60 = scmp.eq.s32.totalorder %s24, 1
    %p61 = por %p59, %p60
    %p63 = scmp.ne.s32.totalorder %s46, %s62
    %p64 = scmp.eq.s32.totalorder %s24, 0
    %p65 = por %p63, %p64
    %s66 = ssub.s32 %s25, %s37
    %p67 = scmp.eq.s32.totalorder %s66, 0
    %s69 = sadd.s32 %s68, 1
    %s70 = scalar_select %p67, %s68, %s69
    %p73 = pneg %p67
    %p74 = scmp.eq.s32.totalorder %s18, 1
    %p75 = por %p73, %p74
    %p76 = scmp.ne.s32.totalorder %s68, %s71
    %p77 = scmp.eq.s32.totalorder %s18, 0
    %p78 = por %p76, %p77
    %p79 = scmp.ne.s32.totalorder %s68, %s71
    %p80 = scmp.eq.s32.totalorder %s23, 1
    %p81 = por %p79, %p80
    %p82 = scmp.ne.s32.totalorder %s71, %s72
    %p83 = scmp.eq.s32.totalorder %s23, 0
    %p84 = por %p82, %p83
    %p85 = scmp.ne.s32.totalorder %s71, %s72
    %p86 = scmp.eq.s32.totalorder %s24, 1
    %p87 = por %p85, %p86
    %p89 = scmp.ne.s32.totalorder %s72, %s88
    %p90 = scmp.eq.s32.totalorder %s24, 0
    %p91 = por %p89, %p90
    %s93 = sadd.s32 %s92, 1
    %p96 = scmp.eq.s32.totalorder %s18, 1
    %p97 = scmp.ne.s32.totalorder %s92, %s94
    %p98 = scmp.eq.s32.totalorder %s18, 0
    %p99 = por %p97, %p98
    %p100 = scmp.ne.s32.totalorder %s92, %s94
    %p101 = scmp.eq.s32.totalorder %s23, 1
    %p102 = por %p100, %p101
    %p103 = scmp.ne.s32.totalorder %s94, %s95
    %p104 = scmp.eq.s32.totalorder %s23, 0
    %p105 = por %p103, %p104
    %p106 = scmp.ne.s32.totalorder %s94, %s95
    %p107 = scmp.eq.s32.totalorder %s24, 1
    %p108 = por %p106, %p107
    %p110 = scmp.ne.s32.totalorder %s95, %s109
    %p111 = scmp.eq.s32.totalorder %s24, 0
    %p112 = por %p110, %p111
    %s114 = sadd.s32 %s113, 1
    %p117 = scmp.eq.s32.totalorder %s18, 1
    %p118 = scmp.ne.s32.totalorder %s113, %s115
    %p119 = scmp.eq.s32.totalorder %s18, 0
    %p120 = por %p118, %p119
    %p121 = scmp.ne.s32.totalorder %s113, %s115
    %p122 = scmp.eq.s32.totalorder %s23, 1
    %p123 = por %p121, %p122
    %p124 = scmp.ne.s32.totalorder %s115, %s116
    %p125 = scmp.eq.s32.totalorder %s23, 0
    %p126 = por %p124, %p125
    %p127 = scmp.ne.s32.totalorder %s115, %s116
    %p128 = scmp.eq.s32.totalorder %s24, 1
    %p129 = por %p127, %p128
    %p131 = scmp.ne.s32.totalorder %s116, %s130
    %p132 = scmp.eq.s32.totalorder %s24, 0
    %p133 = por %p131, %p132
    %s135 = sadd.s32 %s134, 1
    %p138 = scmp.eq.s32.totalorder %s18, 1
    %p139 = scmp.ne.s32.totalorder %s134, %s136
    %p140 = scmp.eq.s32.totalorder %s18, 0
    %p141 = por %p139, %p140
    %p142 = scmp.ne.s32.totalorder %s134, %s136
    %p143 = scmp.eq.s32.totalorder %s23, 1
    %p144 = por %p142, %p143
    %p145 = scmp.ne.s32.totalorder %s136, %s137
    %p146 = scmp.eq.s32.totalorder %s23, 0
    %p147 = por %p145, %p146
    %p148 = scmp.ne.s32.totalorder %s136, %s137
    %p149 = scmp.eq.s32.totalorder %s24, 1
    %p150 = por %p148, %p149
    %p152 = scmp.ne.s32.totalorder %s137, %s151
    %p153 = scmp.eq.s32.totalorder %s24, 0
    %p154 = por %p152, %p153
    %s156 = sadd.s32 %s155, 1
    %p159 = scmp.eq.s32.totalorder %s18, 1
    %p160 = scmp.ne.s32.totalorder %s155, %s157
    %p161 = scmp.eq.s32.totalorder %s18, 0
    %p162 = por %p160, %p161
    %p163 = scmp.ne.s32.totalorder %s155, %s157
    %p164 = scmp.eq.s32.totalorder %s23, 1
    %p165 = por %p163, %p164
    %p166 = scmp.ne.s32.totalorder %s157, %s158
    %p167 = scmp.eq.s32.totalorder %s23, 0
    %p168 = por %p166, %p167
    %p169 = scmp.ne.s32.totalorder %s157, %s158
    %p170 = scmp.eq.s32.totalorder %s24, 1
    %p171 = por %p169, %p170
    %p173 = scmp.ne.s32.totalorder %s158, %s172
    %p174 = scmp.eq.s32.totalorder %s24, 0
    %p175 = por %p173, %p174
    %s177 = sadd.s32 %s176, 1
    %p180 = scmp.eq.s32.totalorder %s18, 1
    %p181 = scmp.ne.s32.totalorder %s176, %s178
    %p182 = scmp.eq.s32.totalorder %s18, 0
    %p183 = por %p181, %p182
    %p184 = scmp.ne.s32.totalorder %s176, %s178
    %p185 = scmp.eq.s32.totalorder %s23, 1
    %p186 = por %p184, %p185
    %p187 = scmp.ne.s32.totalorder %s178, %s179
    %p188 = scmp.eq.s32.totalorder %s23, 0
    %p189 = por %p187, %p188
    %p190 = scmp.ne.s32.totalorder %s178, %s179
    %p191 = scmp.eq.s32.totalorder %s24, 1
    %p192 = por %p190, %p191
    %p194 = scmp.ne.s32.totalorder %s179, %s193
    %p195 = scmp.eq.s32.totalorder %s24, 0
    %p196 = por %p194, %p195
    %s198 = sadd.s32 %s197, 1
    %p201 = scmp.eq.s32.totalorder %s18, 1
    %p202 = scmp.ne.s32.totalorder %s197, %s199
    %p203 = scmp.eq.s32.totalorder %s18, 0
    %p204 = por %p202, %p203
    %p205 = scmp.ne.s32.totalorder %s197, %s199
    %p206 = scmp.eq.s32.totalorder %s23, 1
    %p207 = por %p205, %p206
    %p208 = scmp.ne.s32.totalorder %s199, %s200
    %p209 = scmp.eq.s32.totalorder %s23, 0
    %p210 = por %p208, %p209
    %p211 = scmp.ne.s32.totalorder %s199, %s200
    %p212 = scmp.eq.s32.totalorder %s24, 1
    %p213 = por %p211, %p212
    %p215 = scmp.ne.s32.totalorder %s200, %s214
    %p216 = scmp.eq.s32.totalorder %s24, 0
    %p217 = por %p215, %p216
    %s219 = sadd.s32 %s218, 1
    %p222 = scmp.eq.s32.totalorder %s18, 1
    %p223 = scmp.ne.s32.totalorder %s218, %s220
    %p224 = scmp.eq.s32.totalorder %s18, 0
    %p225 = por %p223, %p224
    %p226 = scmp.ne.s32.totalorder %s218, %s220
    %p227 = scmp.eq.s32.totalorder %s23, 1
    %p228 = por %p226, %p227
    %p229 = scmp.ne.s32.totalorder %s220, %s221
    %p230 = scmp.eq.s32.totalorder %s23, 0
    %p231 = por %p229, %p230
    %p232 = scmp.ne.s32.totalorder %s220, %s221
    %p233 = scmp.eq.s32.totalorder %s24, 1
    %p234 = por %p232, %p233
    %p236 = scmp.ne.s32.totalorder %s221, %s235
    %p237 = scmp.eq.s32.totalorder %s24, 0
    %p238 = por %p236, %p237
    %s240 = sadd.s32 %s239, 1
    %p243 = scmp.eq.s32.totalorder %s18, 1
    %p244 = scmp.ne.s32.totalorder %s239, %s241
    %p245 = scmp.eq.s32.totalorder %s18, 0
    %p246 = por %p244, %p245
    %p247 = scmp.ne.s32.totalorder %s239, %s241
    %p248 = scmp.eq.s32.totalorder %s23, 1
    %p249 = por %p247, %p248
    %p250 = scmp.ne.s32.totalorder %s241, %s242
    %p251 = scmp.eq.s32.totalorder %s23, 0
    %p252 = por %p250, %p251
    %p253 = scmp.ne.s32.totalorder %s241, %s242
    %p254 = scmp.eq.s32.totalorder %s24, 1
    %p255 = por %p253, %p254
    %p257 = scmp.ne.s32.totalorder %s242, %s256
    %p258 = scmp.eq.s32.totalorder %s24, 0
    %p259 = por %p257, %p258
    %s261 = sadd.s32 %s260, 1
    %p264 = scmp.eq.s32.totalorder %s18, 1
    %p265 = scmp.ne.s32.totalorder %s260, %s262
    %p266 = scmp.eq.s32.totalorder %s18, 0
    %p267 = por %p265, %p266
    %p268 = scmp.ne.s32.totalorder %s260, %s262
    %p269 = scmp.eq.s32.totalorder %s23, 1
    %p270 = por %p268, %p269
    %p271 = scmp.ne.s32.totalorder %s262, %s263
    %p272 = scmp.eq.s32.totalorder %s23, 0
    %p273 = por %p271, %p272
    %p274 = scmp.ne.s32.totalorder %s262, %s263
    %p275 = scmp.eq.s32.totalorder %s24, 1
    %p276 = por %p274, %p275
    %p278 = scmp.ne.s32.totalorder %s263, %s277
    %p279 = scmp.eq.s32.totalorder %s24, 0
    %p280 = por %p278, %p279
    %s282 = sadd.s32 %s281, 1
    %p285 = scmp.eq.s32.totalorder %s18, 1
    %p286 = scmp.ne.s32.totalorder %s281, %s283
    %p287 = scmp.eq.s32.totalorder %s18, 0
    %p288 = por %p286, %p287
    %p289 = scmp.ne.s32.totalorder %s281, %s283
    %p290 = scmp.eq.s32.totalorder %s23, 1
    %p291 = por %p289, %p290
    %p292 = scmp.ne.s32.totalorder %s283, %s284
    %p293 = scmp.eq.s32.totalorder %s23, 0
    %p294 = por %p292, %p293
    %p295 = scmp.ne.s32.totalorder %s283, %s284
    %p296 = scmp.eq.s32.totalorder %s24, 1
    %p297 = por %p295, %p296
    %p299 = scmp.ne.s32.totalorder %s284, %s298
    %p300 = scmp.eq.s32.totalorder %s24, 0
    %p301 = por %p299, %p300
    %s302 = ssub.s32 %s25, %s37
    %s303 = ssub.s32 %s26, %s33
    %s304 = sor.u32 %s302, %s303
    %p305 = scmp.eq.s32.totalorder %s304, 0
    %s307 = sadd.s32 %s306, 1
    %s308 = scalar_select %p305, %s306, %s307
    %p311 = pneg %p305
    %p312 = scmp.eq.s32.totalorder %s18, 1
    %p313 = por %p311, %p312
    %p314 = scmp.ne.s32.totalorder %s306, %s309
    %p315 = scmp.eq.s32.totalorder %s18, 0
    %p316 = por %p314, %p315
    %p317 = scmp.ne.s32.totalorder %s306, %s309
    %p318 = scmp.eq.s32.totalorder %s23, 1
    %p319 = por %p317, %p318
    %p320 = scmp.ne.s32.totalorder %s309, %s310
    %p321 = scmp.eq.s32.totalorder %s23, 0
    %p322 = por %p320, %p321
    %p323 = scmp.ne.s32.totalorder %s309, %s310
    %p324 = scmp.eq.s32.totalorder %s24, 1
    %p325 = por %p323, %p324
    %p327 = scmp.ne.s32.totalorder %s310, %s326
    %p328 = scmp.eq.s32.totalorder %s24, 0
    %p329 = por %p327, %p328
    %p330 = scmp.le.s32.totalorder 1, %s18
    %p331 = scmp.lt.s32.totalorder %s18, 3
    %p332 = pnand %p330, %p331
    %p333 = pneg %p332
    // Predicated region
    $region9: #{transformer_classifier_forward.13} parent=5 // pred_check
      _
    $region10: #{transformer_classifier_forward.13} parent=5 // pred_check_branch
      %335 = sbr.rel (%p332) target = $region12
    $region11: #{transformer_classifier_forward.13} parent=5 // pred_region
      %s336 = ssub.s32 %s18, 1
      // Predicated region
      $region13: #{transformer_classifier_forward.13} parent=11 // pred_check
        %p337 = pneg %p105
      $region14: #{transformer_classifier_forward.13} parent=11 // pred_check_branch
        %339 = sbr.rel (%p337) target = $region16
      $region15: #{transformer_classifier_forward.13} parent=11 // pred_region
        _
      $region16: #{transformer_classifier_forward.13} parent=11 // pred_fallthru
        _
      // Predicated region
      $region17: #{transformer_classifier_forward.13} parent=11 // pred_check
        %p340 = pneg %p126
      $region18: #{transformer_classifier_forward.13} parent=11 // pred_check_branch
        %342 = sbr.rel (%p340) target = $region20
      $region19: #{transformer_classifier_forward.13} parent=11 // pred_region
        _
      $region20: #{transformer_classifier_forward.13} parent=11 // pred_fallthru
        _
      // Predicated region
      $region21: #{transformer_classifier_forward.13} parent=11 // pred_check
        %p343 = pneg %p147
      $region22: #{transformer_classifier_forward.13} parent=11 // pred_check_branch
        %345 = sbr.rel (%p343) target = $region24
      $region23: #{transformer_classifier_forward.13} parent=11 // pred_region
        _
      $region24: #{transformer_classifier_forward.13} parent=11 // pred_fallthru
        _
      // Predicated region
      $region25: #{transformer_classifier_forward.13} parent=11 // pred_check
        %p346 = pneg %p168
      $region26: #{transformer_classifier_forward.13} parent=11 // pred_check_branch
        %348 = sbr.rel (%p346) target = $region28
      $region27: #{transformer_classifier_forward.13} parent=11 // pred_region
        _
      $region28: #{transformer_classifier_forward.13} parent=11 // pred_fallthru
        _
      // Predicated region
      $region29: #{transformer_classifier_forward.13} parent=11 // pred_check
        %p349 = pneg %p189
      $region30: #{transformer_classifier_forward.13} parent=11 // pred_check_branch
        %351 = sbr.rel (%p349) target = $region32
      $region31: #{transformer_classifier_forward.13} parent=11 // pred_region
        _
      $region32: #{transformer_classifier_forward.13} parent=11 // pred_fallthru
        _
      // Predicated region
      $region33: #{transformer_classifier_forward.13} parent=11 // pred_check
        %p352 = pneg %p210
      $region34: #{transformer_classifier_forward.13} parent=11 // pred_check_branch
        %354 = sbr.rel (%p352) target = $region36
      $region35: #{transformer_classifier_forward.13} parent=11 // pred_region
        _
      $region36: #{transformer_classifier_forward.13} parent=11 // pred_fallthru
        _
      // Predicated region
      $region37: #{transformer_classifier_forward.13} parent=11 // pred_check
        %p355 = pneg %p231
      $region38: #{transformer_classifier_forward.13} parent=11 // pred_check_branch
        %357 = sbr.rel (%p355) target = $region40
      $region39: #{transformer_classifier_forward.13} parent=11 // pred_region
        _
      $region40: #{transformer_classifier_forward.13} parent=11 // pred_fallthru
        _
      // Predicated region
      $region41: #{transformer_classifier_forward.13} parent=11 // pred_check
        %p358 = pneg %p252
      $region42: #{transformer_classifier_forward.13} parent=11 // pred_check_branch
        %360 = sbr.rel (%p358) target = $region44
      $region43: #{transformer_classifier_forward.13} parent=11 // pred_region
        _
      $region44: #{transformer_classifier_forward.13} parent=11 // pred_fallthru
        _
      // Predicated region
      $region45: #{transformer_classifier_forward.13} parent=11 // pred_check
        %p361 = pneg %p273
      $region46: #{transformer_classifier_forward.13} parent=11 // pred_check_branch
        %363 = sbr.rel (%p361) target = $region48
      $region47: #{transformer_classifier_forward.13} parent=11 // pred_region
        _
      $region48: #{transformer_classifier_forward.13} parent=11 // pred_fallthru
        _
      // Predicated region
      $region49: #{transformer_classifier_forward.13} parent=11 // pred_check
        %p364 = pneg %p294
      $region50: #{transformer_classifier_forward.13} parent=11 // pred_check_branch
        %366 = sbr.rel (%p364) target = $region52
      $region51: #{transformer_classifier_forward.13} parent=11 // pred_region
        _
      $region52: #{transformer_classifier_forward.13} parent=11 // pred_fallthru
        _
    $region12: #{transformer_classifier_forward.13} parent=5 // pred_fallthru
      _
    %p367 = scmp.lt.s32.totalorder %s18, 2
    // Predicated region
    $region53: #{transformer_classifier_forward.13} parent=5 // pred_check
      %p368 = pneg %p367
    $region54: #{transformer_classifier_forward.13} parent=5 // pred_check_branch
      %370 = sbr.rel (%p368) target = $region56
    $region55: #{transformer_classifier_forward.13} parent=5 // pred_region
      // Predicated region
      $region57: #{transformer_classifier_forward.13} parent=55 // pred_check
        %p371 = pneg %p52
      $region58: #{transformer_classifier_forward.13} parent=55 // pred_check_branch
        %373 = sbr.rel (%p371) target = $region60
      $region59: #{transformer_classifier_forward.13} parent=55 // pred_region
        %p374 = scmp.lt.s32.totalorder %s25, 1
        %s375 = scalar_select %p374, %s25, 1
        %p376 = scmp.lt.s32.totalorder %s26, 0
        %s377 = scalar_select %p376, %s26, 0
        %s378 = sadd.s32 %s377, %s375
        %s379 = smul.addr %s378, 4
        %s380 = scalar_lea.vmem %s0, %s379
      $region60: #{transformer_classifier_forward.13} parent=55 // pred_fallthru
        _
      // Predicated region
      $region61: #{transformer_classifier_forward.13} parent=55 // pred_check
        %p381 = pneg %p78
      $region62: #{transformer_classifier_forward.13} parent=55 // pred_check_branch
        %383 = sbr.rel (%p381) target = $region64
      $region63: #{transformer_classifier_forward.13} parent=55 // pred_region
        %p384 = scmp.lt.s32.totalorder %s25, 1
        %s385 = scalar_select %p384, %s25, 1
        %s386 = smul.addr %s385, 4
        %s387 = scalar_lea.vmem %s1, %s386
      $region64: #{transformer_classifier_forward.13} parent=55 // pred_fallthru
        _
    $region56: #{transformer_classifier_forward.13} parent=5 // pred_fallthru
      _
    %p388 = scmp.le.s32.totalorder 1, %s18
    %p389 = scmp.lt.s32.totalorder %s18, 3
    %p390 = pnand %p388, %p389
    %p391 = pneg %p390
    // Predicated region
    $region65: #{transformer_classifier_forward.13} parent=5 // pred_check
      _
    $region66: #{transformer_classifier_forward.13} parent=5 // pred_check_branch
      %393 = sbr.rel (%p390) target = $region68
    $region67: #{transformer_classifier_forward.13} parent=5 // pred_region
      %s394 = ssub.s32 %s18, 1
      %p395 = scmp.lt.s32.totalorder %s27, 1
      %s396 = scalar_select %p395, %s27, 1
      %p397 = scmp.lt.s32.totalorder %s28, 0
      %s398 = scalar_select %p397, %s28, 0
      %s399 = sadd.s32 %s398, %s396
      %s400 = smul.addr %s399, 4
      %s401 = scalar_lea.vmem %s0, %s400
      %p402 = pneg %p58
      %p403 = pneg %p55
      %p404 = scmp.lt.s32.totalorder %s27, 1
      %s405 = scalar_select %p404, %s27, 1
      %s406 = smul.addr %s405, 4
      %s407 = scalar_lea.vmem %s1, %s406
      %p408 = pneg %p84
      %p409 = pneg %p81
      %p410 = pneg %p105
      %p411 = pneg %p102
      %p412 = pneg %p126
      %p413 = pneg %p123
      %p414 = pneg %p147
      %p415 = pneg %p144
      %p416 = pneg %p168
      %p417 = pneg %p165
      %p418 = pneg %p189
      %p419 = pneg %p186
      %p420 = pneg %p210
      %p421 = pneg %p207
      %p422 = pneg %p231
      %p423 = pneg %p228
      %p424 = pneg %p252
      %p425 = pneg %p249
      %p426 = pneg %p273
      %p427 = pneg %p270
      %p428 = pneg %p294
      %p429 = pneg %p291
      %p430 = pneg %p322
      %p431 = pneg %p319
      %p432 = scmp.lt.s32.totalorder %s27, 1
      %s433 = scalar_select %p432, %s27, 1
      %p434 = scmp.lt.s32.totalorder %s28, 0
      %s435 = scalar_select %p434, %s28, 0
      %s436 = sadd.s32 %s435, %s433
      %s437 = smul.addr %s436, 4
      %s438 = scalar_lea.vmem %s12, %s437
      %p439 = scmp.lt.s32.totalorder %s27, 1
      %s440 = scalar_select %p439, %s27, 1
      %p441 = scmp.lt.s32.totalorder %s28, 0
      %s442 = scalar_select %p441, %s28, 0
      %s443 = sadd.s32 %s442, %s440
      %s444 = smul.addr %s443, 4
      %s445 = scalar_lea.vmem %s0, %s444
      %p446 = scmp.lt.s32.totalorder %s27, 1
      %s447 = scalar_select %p446, %s27, 1
      %s448 = smul.addr %s447, 4
      %s449 = scalar_lea.vmem %s1, %s448
      %p450 = scmp.lt.s32.totalorder %s27, 1
      %s451 = scalar_select %p450, %s27, 1
      %p452 = scmp.lt.s32.totalorder %s28, 0
      %s453 = scalar_select %p452, %s28, 0
      %s454 = sadd.s32 %s453, %s451
      %s455 = smul.addr %s454, 4
      %s456 = scalar_lea.vmem %s12, %s455
      %p458 = scmp.eq.s32.totalorder %s28, 0
      // Predicated region
      $region69: #{transformer_classifier_forward.13} parent=67 // pred_check
        %p459 = pneg %p458
      $region70: #{transformer_classifier_forward.13} parent=67 // pred_check_branch
        %461 = sbr.rel (%p459) target = $region72
      $region71: #{transformer_classifier_forward.13} parent=67 // pred_region
        %v462 = vld [vmem:[%s449] sm:$0xf]
        %v463 = vld [vmem:[%s4] sm:$0xf]
        %v464 = vld [vmem:[%s4 + $0x4] sm:$0xf]
        %v465 = vld [vmem:[%s4 + $0x8] sm:$0xf]
        %v466 = vld [vmem:[%s4 + $0xc] sm:$0xf]
        %v467 = vld [vmem:[%s5] sm:$0x1]
        %v469 = vlaneseq
        %v470 = vshrl.u32 %v469, 7
        %v471 = vsub.s32 0, %v470
        %v472 = vrot.slane %v467, %v471
        %v478 = vunpack.c.l.b16 %v463
        %v479 = vunpack.c.l.b16 %v464
        %v480 = vunpack.c.l.b16 %v465
        %v481 = vunpack.c.l.b16 %v466
        %v482 = vpack.c.b16 %v479, %v478
        %v483 = vpack.c.b16 %v481, %v480
        %vm486 = vcmask 261120
        %v488 = vsel %vm486, %v462, 0
        %490 = vmatprep.subr.bf16.mxu0 0
        %491 = vmatpush1.bf16.msra.mxu0 0
        %492 = vmatprep.subr.bf16.mxu0 0
        %493 = vmatpush1.bf16.msra.mxu0 0
        %494 = vmatprep.subr.bf16.mxu0 0
        %495 = vmatpush1.bf16.msra.mxu0 0
        %496 = vmatprep.subr.bf16.mxu0 0
        %497 = vmatpush1.bf16.msra.mxu0 0
        %498 = vmatprep.subr.bf16.mxu0 0
        %499 = vmatpush1.bf16.msra.mxu0 0
        %500 = vmatprep.subr.bf16.mxu0 0
        %501 = vmatpush1.bf16.msra.mxu0 0
        %502 = vmatprep.subr.bf16.mxu0 0
        %503 = vmatpush1.bf16.msra.mxu0 %v483
        %504 = vmatprep.subr.bf16.mxu0 0
        %505 = vmatpush1.bf16.msra.mxu0 %v482
        %506 = vmatprep.subr.bf16.mxu0 0
        %507 = vmatpush2.bf16.msra.mxu0 0
        %508 = vmatprep.subr.bf16.mxu0 0
        %509 = vmatpush2.bf16.msra.mxu0 0
        %510 = vmatprep.subr.bf16.mxu0 0
        %511 = vmatpush2.bf16.msra.mxu0 0
        %512 = vmatprep.subr.bf16.mxu0 0
        %513 = vmatpush2.bf16.msra.mxu0 0
        %514 = vmatprep.subr.bf16.mxu0 0
        %515 = vmatpush2.bf16.msra.mxu0 0
        %516 = vmatprep.subr.bf16.mxu0 0
        %517 = vmatpush2.bf16.msra.mxu0 0
        %518 = vmatprep.subr.bf16.mxu0 0
        %519 = vmatpush2.bf16.msra.mxu0 0
        %520 = vmatprep.subr.bf16.mxu0 0
        %521 = vmatpush2.bf16.msra.mxu0 0
        %522 = vmatprep.mubr.bf16.mxu0 0
        %523 = vmatmul.mubr.bf16.gmra.mxu0 %v488
        %v524 = vpop.f32.mrf.mxu0
        %v525 = vadd.f32 %v472, %v524
        %v526 = vpop.f32.mrf.mxu0
        %v527 = vpop.f32.mrf.mxu0
        %v528 = vpop.f32.mrf.mxu0
        %529 = vdwg.mxu0
        %v530 = vpack.c.bf16 %v525, %v525
        %vm531 = vcmask 60416
        %532 = vst.msk [vmem:[#allocation2] sm:$0xf] %vm531, %v530
        %v533 = vld [vmem:[%s6] sm:$0xf]
        %v534 = vld [vmem:[%s6 + $0x4] sm:$0xf]
        %v535 = vld [vmem:[%s6 + $0x8] sm:$0xf]
        %v536 = vld [vmem:[%s6 + $0xc] sm:$0xf]
        %v537 = vld [vmem:[%s7] sm:$0x1]
        %v539 = vlaneseq
        %v540 = vshrl.u32 %v539, 7
        %v541 = vsub.s32 0, %v540
        %v542 = vrot.slane %v537, %v541
        %v548 = vunpack.c.l.b16 %v533
        %v549 = vunpack.c.l.b16 %v534
        %v550 = vunpack.c.l.b16 %v535
        %v551 = vunpack.c.l.b16 %v536
        %v552 = vpack.c.b16 %v549, %v548
        %v553 = vpack.c.b16 %v551, %v550
        %556 = vmatprep.subr.bf16.mxu0 0
        %557 = vmatpush1.bf16.msra.mxu0 0
        %558 = vmatprep.subr.bf16.mxu0 0
        %559 = vmatpush1.bf16.msra.mxu0 0
        %560 = vmatprep.subr.bf16.mxu0 0
        %561 = vmatpush1.bf16.msra.mxu0 0
        %562 = vmatprep.subr.bf16.mxu0 0
        %563 = vmatpush1.bf16.msra.mxu0 0
        %564 = vmatprep.subr.bf16.mxu0 0
        %565 = vmatpush1.bf16.msra.mxu0 0
        %566 = vmatprep.subr.bf16.mxu0 0
        %567 = vmatpush1.bf16.msra.mxu0 0
        %568 = vmatprep.subr.bf16.mxu0 0
        %569 = vmatpush1.bf16.msra.mxu0 %v553
        %570 = vmatprep.subr.bf16.mxu0 0
        %571 = vmatpush1.bf16.msra.mxu0 %v552
        %572 = vmatprep.subr.bf16.mxu0 0
        %573 = vmatpush2.bf16.msra.mxu0 0
        %574 = vmatprep.subr.bf16.mxu0 0
        %575 = vmatpush2.bf16.msra.mxu0 0
        %576 = vmatprep.subr.bf16.mxu0 0
        %577 = vmatpush2.bf16.msra.mxu0 0
        %578 = vmatprep.subr.bf16.mxu0 0
        %579 = vmatpush2.bf16.msra.mxu0 0
        %580 = vmatprep.subr.bf16.mxu0 0
        %581 = vmatpush2.bf16.msra.mxu0 0
        %582 = vmatprep.subr.bf16.mxu0 0
        %583 = vmatpush2.bf16.msra.mxu0 0
        %584 = vmatprep.subr.bf16.mxu0 0
        %585 = vmatpush2.bf16.msra.mxu0 0
        %586 = vmatprep.subr.bf16.mxu0 0
        %587 = vmatpush2.bf16.msra.mxu0 0
        %588 = vmatprep.mubr.bf16.mxu0 0
        %589 = vmatmul.mubr.bf16.gmra.mxu0 %v488
        %v590 = vpop.f32.mrf.mxu0
        %v591 = vadd.f32 %v542, %v590
        %v592 = vpop.f32.mrf.mxu0
        %v593 = vpop.f32.mrf.mxu0
        %v594 = vpop.f32.mrf.mxu0
        %595 = vdwg.mxu0
        %v596 = vpack.c.bf16 %v591, %v591
        %597 = vst.msk [vmem:[#allocation3] sm:$0xf] %vm531, %v596
        %s598 = scalar_lea.vmem %s4, 16
        %v599 = vld [vmem:[%s598] sm:$0xf]
        %v600 = vld [vmem:[%s598 + $0x4] sm:$0xf]
        %v601 = vld [vmem:[%s598 + $0x8] sm:$0xf]
        %v602 = vld [vmem:[%s598 + $0xc] sm:$0xf]
        %s603 = scalar_lea.vmem %s5, 1
        %v604 = vld [vmem:[%s603] sm:$0x1]
        %v606 = vlaneseq
        %v607 = vshrl.u32 %v606, 7
        %v608 = vsub.s32 0, %v607
        %v609 = vrot.slane %v604, %v608
        %v615 = vunpack.c.l.b16 %v599
        %v616 = vunpack.c.l.b16 %v600
        %v617 = vunpack.c.l.b16 %v601
        %v618 = vunpack.c.l.b16 %v602
        %v619 = vpack.c.b16 %v616, %v615
        %v620 = vpack.c.b16 %v618, %v617
        %623 = vmatprep.subr.bf16.mxu0 0
        %624 = vmatpush1.bf16.msra.mxu0 0
        %625 = vmatprep.subr.bf16.mxu0 0
        %626 = vmatpush1.bf16.msra.mxu0 0
        %627 = vmatprep.subr.bf16.mxu0 0
        %628 = vmatpush1.bf16.msra.mxu0 0
        %629 = vmatprep.subr.bf16.mxu0 0
        %630 = vmatpush1.bf16.msra.mxu0 0
        %631 = vmatprep.subr.bf16.mxu0 0
        %632 = vmatpush1.bf16.msra.mxu0 0
        %633 = vmatprep.subr.bf16.mxu0 0
        %634 = vmatpush1.bf16.msra.mxu0 0
        %635 = vmatprep.subr.bf16.mxu0 0
        %636 = vmatpush1.bf16.msra.mxu0 %v620
        %637 = vmatprep.subr.bf16.mxu0 0
        %638 = vmatpush1.bf16.msra.mxu0 %v619
        %639 = vmatprep.subr.bf16.mxu0 0
        %640 = vmatpush2.bf16.msra.mxu0 0
        %641 = vmatprep.subr.bf16.mxu0 0
        %642 = vmatpush2.bf16.msra.mxu0 0
        %643 = vmatprep.subr.bf16.mxu0 0
        %644 = vmatpush2.bf16.msra.mxu0 0
        %645 = vmatprep.subr.bf16.mxu0 0
        %646 = vmatpush2.bf16.msra.mxu0 0
        %647 = vmatprep.subr.bf16.mxu0 0
        %648 = vmatpush2.bf16.msra.mxu0 0
        %649 = vmatprep.subr.bf16.mxu0 0
        %650 = vmatpush2.bf16.msra.mxu0 0
        %651 = vmatprep.subr.bf16.mxu0 0
        %652 = vmatpush2.bf16.msra.mxu0 0
        %653 = vmatprep.subr.bf16.mxu0 0
        %654 = vmatpush2.bf16.msra.mxu0 0
        %655 = vmatprep.mubr.bf16.mxu0 0
        %656 = vmatmul.mubr.bf16.gmra.mxu0 %v488
        %v657 = vpop.f32.mrf.mxu0
        %v658 = vadd.f32 %v609, %v657
        %v659 = vpop.f32.mrf.mxu0
        %v660 = vpop.f32.mrf.mxu0
        %v661 = vpop.f32.mrf.mxu0
        %662 = vdwg.mxu0
        %v663 = vpack.c.bf16 %v658, %v658
        %s664 = scalar_lea.vmem [#allocation2], 4
        %665 = vst.msk [vmem:[%s664] sm:$0xf] %vm531, %v663
        %s666 = scalar_lea.vmem %s6, 16
        %v667 = vld [vmem:[%s666] sm:$0xf]
        %v668 = vld [vmem:[%s666 + $0x4] sm:$0xf]
        %v669 = vld [vmem:[%s666 + $0x8] sm:$0xf]
        %v670 = vld [vmem:[%s666 + $0xc] sm:$0xf]
        %s671 = scalar_lea.vmem %s7, 1
        %v672 = vld [vmem:[%s671] sm:$0x1]
        %v674 = vlaneseq
        %v675 = vshrl.u32 %v674, 7
        %v676 = vsub.s32 0, %v675
        %v677 = vrot.slane %v672, %v676
        %v683 = vunpack.c.l.b16 %v667
        %v684 = vunpack.c.l.b16 %v668
        %v685 = vunpack.c.l.b16 %v669
        %v686 = vunpack.c.l.b16 %v670
        %v687 = vpack.c.b16 %v684, %v683
        %v688 = vpack.c.b16 %v686, %v685
        %691 = vmatprep.subr.bf16.mxu0 0
        %692 = vmatpush1.bf16.msra.mxu0 0
        %693 = vmatprep.subr.bf16.mxu0 0
        %694 = vmatpush1.bf16.msra.mxu0 0
        %695 = vmatprep.subr.bf16.mxu0 0
        %696 = vmatpush1.bf16.msra.mxu0 0
        %697 = vmatprep.subr.bf16.mxu0 0
        %698 = vmatpush1.bf16.msra.mxu0 0
        %699 = vmatprep.subr.bf16.mxu0 0
        %700 = vmatpush1.bf16.msra.mxu0 0
        %701 = vmatprep.subr.bf16.mxu0 0
        %702 = vmatpush1.bf16.msra.mxu0 0
        %703 = vmatprep.subr.bf16.mxu0 0
        %704 = vmatpush1.bf16.msra.mxu0 %v688
        %705 = vmatprep.subr.bf16.mxu0 0
        %706 = vmatpush1.bf16.msra.mxu0 %v687
        %707 = vmatprep.subr.bf16.mxu0 0
        %708 = vmatpush2.bf16.msra.mxu0 0
        %709 = vmatprep.subr.bf16.mxu0 0
        %710 = vmatpush2.bf16.msra.mxu0 0
        %711 = vmatprep.subr.bf16.mxu0 0
        %712 = vmatpush2.bf16.msra.mxu0 0
        %713 = vmatprep.subr.bf16.mxu0 0
        %714 = vmatpush2.bf16.msra.mxu0 0
        %715 = vmatprep.subr.bf16.mxu0 0
        %716 = vmatpush2.bf16.msra.mxu0 0
        %717 = vmatprep.subr.bf16.mxu0 0
        %718 = vmatpush2.bf16.msra.mxu0 0
        %719 = vmatprep.subr.bf16.mxu0 0
        %720 = vmatpush2.bf16.msra.mxu0 0
        %721 = vmatprep.subr.bf16.mxu0 0
        %722 = vmatpush2.bf16.msra.mxu0 0
        %723 = vmatprep.mubr.bf16.mxu0 0
        %724 = vmatmul.mubr.bf16.gmra.mxu0 %v488
        %v725 = vpop.f32.mrf.mxu0
        %v726 = vadd.f32 %v677, %v725
        %v727 = vpop.f32.mrf.mxu0
        %v728 = vpop.f32.mrf.mxu0
        %v729 = vpop.f32.mrf.mxu0
        %730 = vdwg.mxu0
        %v731 = vpack.c.bf16 %v726, %v726
        %s732 = scalar_lea.vmem [#allocation3], 4
        %733 = vst.msk [vmem:[%s732] sm:$0xf] %vm531, %v731
        %s734 = scalar_lea.vmem %s4, 32
        %v735 = vld [vmem:[%s734] sm:$0xf]
        %v736 = vld [vmem:[%s734 + $0x4] sm:$0xf]
        %v737 = vld [vmem:[%s734 + $0x8] sm:$0xf]
        %v738 = vld [vmem:[%s734 + $0xc] sm:$0xf]
        %s739 = scalar_lea.vmem %s5, 2
        %v740 = vld [vmem:[%s739] sm:$0x1]
        %v742 = vlaneseq
        %v743 = vshrl.u32 %v742, 7
        %v744 = vsub.s32 0, %v743
        %v745 = vrot.slane %v740, %v744
        %v751 = vunpack.c.l.b16 %v735
        %v752 = vunpack.c.l.b16 %v736
        %v753 = vunpack.c.l.b16 %v737
        %v754 = vunpack.c.l.b16 %v738
        %v755 = vpack.c.b16 %v752, %v751
        %v756 = vpack.c.b16 %v754, %v753
        %759 = vmatprep.subr.bf16.mxu0 0
        %760 = vmatpush1.bf16.msra.mxu0 0
        %761 = vmatprep.subr.bf16.mxu0 0
        %762 = vmatpush1.bf16.msra.mxu0 0
        %763 = vmatprep.subr.bf16.mxu0 0
        %764 = vmatpush1.bf16.msra.mxu0 0
        %765 = vmatprep.subr.bf16.mxu0 0
        %766 = vmatpush1.bf16.msra.mxu0 0
        %767 = vmatprep.subr.bf16.mxu0 0
        %768 = vmatpush1.bf16.msra.mxu0 0
        %769 = vmatprep.subr.bf16.mxu0 0
        %770 = vmatpush1.bf16.msra.mxu0 0
        %771 = vmatprep.subr.bf16.mxu0 0
        %772 = vmatpush1.bf16.msra.mxu0 %v756
        %773 = vmatprep.subr.bf16.mxu0 0
        %774 = vmatpush1.bf16.msra.mxu0 %v755
        %775 = vmatprep.subr.bf16.mxu0 0
        %776 = vmatpush2.bf16.msra.mxu0 0
        %777 = vmatprep.subr.bf16.mxu0 0
        %778 = vmatpush2.bf16.msra.mxu0 0
        %779 = vmatprep.subr.bf16.mxu0 0
        %780 = vmatpush2.bf16.msra.mxu0 0
        %781 = vmatprep.subr.bf16.mxu0 0
        %782 = vmatpush2.bf16.msra.mxu0 0
        %783 = vmatprep.subr.bf16.mxu0 0
        %784 = vmatpush2.bf16.msra.mxu0 0
        %785 = vmatprep.subr.bf16.mxu0 0
        %786 = vmatpush2.bf16.msra.mxu0 0
        %787 = vmatprep.subr.bf16.mxu0 0
        %788 = vmatpush2.bf16.msra.mxu0 0
        %789 = vmatprep.subr.bf16.mxu0 0
        %790 = vmatpush2.bf16.msra.mxu0 0
        %791 = vmatprep.mubr.bf16.mxu0 0
        %792 = vmatmul.mubr.bf16.gmra.mxu0 %v488
        %v793 = vpop.f32.mrf.mxu0
        %v794 = vadd.f32 %v745, %v793
        %v795 = vpop.f32.mrf.mxu0
        %v796 = vpop.f32.mrf.mxu0
        %v797 = vpop.f32.mrf.mxu0
        %798 = vdwg.mxu0
        %v799 = vpack.c.bf16 %v794, %v794
        %s800 = scalar_lea.vmem [#allocation2], 8
        %801 = vst.msk [vmem:[%s800] sm:$0xf] %vm531, %v799
        %s802 = scalar_lea.vmem %s6, 32
        %v803 = vld [vmem:[%s802] sm:$0xf]
        %v804 = vld [vmem:[%s802 + $0x4] sm:$0xf]
        %v805 = vld [vmem:[%s802 + $0x8] sm:$0xf]
        %v806 = vld [vmem:[%s802 + $0xc] sm:$0xf]
        %s807 = scalar_lea.vmem %s7, 2
        %v808 = vld [vmem:[%s807] sm:$0x1]
        %v810 = vlaneseq
        %v811 = vshrl.u32 %v810, 7
        %v812 = vsub.s32 0, %v811
        %v813 = vrot.slane %v808, %v812
        %v819 = vunpack.c.l.b16 %v803
        %v820 = vunpack.c.l.b16 %v804
        %v821 = vunpack.c.l.b16 %v805
        %v822 = vunpack.c.l.b16 %v806
        %v823 = vpack.c.b16 %v820, %v819
        %v824 = vpack.c.b16 %v822, %v821
        %827 = vmatprep.subr.bf16.mxu0 0
        %828 = vmatpush1.bf16.msra.mxu0 0
        %829 = vmatprep.subr.bf16.mxu0 0
        %830 = vmatpush1.bf16.msra.mxu0 0
        %831 = vmatprep.subr.bf16.mxu0 0
        %832 = vmatpush1.bf16.msra.mxu0 0
        %833 = vmatprep.subr.bf16.mxu0 0
        %834 = vmatpush1.bf16.msra.mxu0 0
        %835 = vmatprep.subr.bf16.mxu0 0
        %836 = vmatpush1.bf16.msra.mxu0 0
        %837 = vmatprep.subr.bf16.mxu0 0
        %838 = vmatpush1.bf16.msra.mxu0 0
        %839 = vmatprep.subr.bf16.mxu0 0
        %840 = vmatpush1.bf16.msra.mxu0 %v824
        %841 = vmatprep.subr.bf16.mxu0 0
        %842 = vmatpush1.bf16.msra.mxu0 %v823
        %843 = vmatprep.subr.bf16.mxu0 0
        %844 = vmatpush2.bf16.msra.mxu0 0
        %845 = vmatprep.subr.bf16.mxu0 0
        %846 = vmatpush2.bf16.msra.mxu0 0
        %847 = vmatprep.subr.bf16.mxu0 0
        %848 = vmatpush2.bf16.msra.mxu0 0
        %849 = vmatprep.subr.bf16.mxu0 0
        %850 = vmatpush2.bf16.msra.mxu0 0
        %851 = vmatprep.subr.bf16.mxu0 0
        %852 = vmatpush2.bf16.msra.mxu0 0
        %853 = vmatprep.subr.bf16.mxu0 0
        %854 = vmatpush2.bf16.msra.mxu0 0
        %855 = vmatprep.subr.bf16.mxu0 0
        %856 = vmatpush2.bf16.msra.mxu0 0
        %857 = vmatprep.subr.bf16.mxu0 0
        %858 = vmatpush2.bf16.msra.mxu0 0
        %859 = vmatprep.mubr.bf16.mxu0 0
        %860 = vmatmul.mubr.bf16.gmra.mxu0 %v488
        %v861 = vpop.f32.mrf.mxu0
        %v862 = vadd.f32 %v813, %v861
        %v863 = vpop.f32.mrf.mxu0
        %v864 = vpop.f32.mrf.mxu0
        %v865 = vpop.f32.mrf.mxu0
        %866 = vdwg.mxu0
        %v867 = vpack.c.bf16 %v862, %v862
        %s868 = scalar_lea.vmem [#allocation3], 8
        %869 = vst.msk [vmem:[%s868] sm:$0xf] %vm531, %v867
        %s870 = scalar_lea.vmem %s4, 48
        %v871 = vld [vmem:[%s870] sm:$0xf]
        %v872 = vld [vmem:[%s870 + $0x4] sm:$0xf]
        %v873 = vld [vmem:[%s870 + $0x8] sm:$0xf]
        %v874 = vld [vmem:[%s870 + $0xc] sm:$0xf]
        %s875 = scalar_lea.vmem %s5, 3
        %v876 = vld [vmem:[%s875] sm:$0x1]
        %v878 = vlaneseq
        %v879 = vshrl.u32 %v878, 7
        %v880 = vsub.s32 0, %v879
        %v881 = vrot.slane %v876, %v880
        %v887 = vunpack.c.l.b16 %v871
        %v888 = vunpack.c.l.b16 %v872
        %v889 = vunpack.c.l.b16 %v873
        %v890 = vunpack.c.l.b16 %v874
        %v891 = vpack.c.b16 %v888, %v887
        %v892 = vpack.c.b16 %v890, %v889
        %895 = vmatprep.subr.bf16.mxu0 0
        %896 = vmatpush1.bf16.msra.mxu0 0
        %897 = vmatprep.subr.bf16.mxu0 0
        %898 = vmatpush1.bf16.msra.mxu0 0
        %899 = vmatprep.subr.bf16.mxu0 0
        %900 = vmatpush1.bf16.msra.mxu0 0
        %901 = vmatprep.subr.bf16.mxu0 0
        %902 = vmatpush1.bf16.msra.mxu0 0
        %903 = vmatprep.subr.bf16.mxu0 0
        %904 = vmatpush1.bf16.msra.mxu0 0
        %905 = vmatprep.subr.bf16.mxu0 0
        %906 = vmatpush1.bf16.msra.mxu0 0
        %907 = vmatprep.subr.bf16.mxu0 0
        %908 = vmatpush1.bf16.msra.mxu0 %v892
        %909 = vmatprep.subr.bf16.mxu0 0
        %910 = vmatpush1.bf16.msra.mxu0 %v891
        %911 = vmatprep.subr.bf16.mxu0 0
        %912 = vmatpush2.bf16.msra.mxu0 0
        %913 = vmatprep.subr.bf16.mxu0 0
        %914 = vmatpush2.bf16.msra.mxu0 0
        %915 = vmatprep.subr.bf16.mxu0 0
        %916 = vmatpush2.bf16.msra.mxu0 0
        %917 = vmatprep.subr.bf16.mxu0 0
        %918 = vmatpush2.bf16.msra.mxu0 0
        %919 = vmatprep.subr.bf16.mxu0 0
        %920 = vmatpush2.bf16.msra.mxu0 0
        %921 = vmatprep.subr.bf16.mxu0 0
        %922 = vmatpush2.bf16.msra.mxu0 0
        %923 = vmatprep.subr.bf16.mxu0 0
        %924 = vmatpush2.bf16.msra.mxu0 0
        %925 = vmatprep.subr.bf16.mxu0 0
        %926 = vmatpush2.bf16.msra.mxu0 0
        %927 = vmatprep.mubr.bf16.mxu0 0
        %928 = vmatmul.mubr.bf16.gmra.mxu0 %v488
        %v929 = vpop.f32.mrf.mxu0
        %v930 = vadd.f32 %v881, %v929
        %v931 = vpop.f32.mrf.mxu0
        %v932 = vpop.f32.mrf.mxu0
        %v933 = vpop.f32.mrf.mxu0
        %934 = vdwg.mxu0
        %v935 = vpack.c.bf16 %v930, %v930
        %s936 = scalar_lea.vmem [#allocation2], 12
        %937 = vst.msk [vmem:[%s936] sm:$0xf] %vm531, %v935
        %s938 = scalar_lea.vmem %s6, 48
        %v939 = vld [vmem:[%s938] sm:$0xf]
        %v940 = vld [vmem:[%s938 + $0x4] sm:$0xf]
        %v941 = vld [vmem:[%s938 + $0x8] sm:$0xf]
        %v942 = vld [vmem:[%s938 + $0xc] sm:$0xf]
        %s943 = scalar_lea.vmem %s7, 3
        %v944 = vld [vmem:[%s943] sm:$0x1]
        %v946 = vlaneseq
        %v947 = vshrl.u32 %v946, 7
        %v948 = vsub.s32 0, %v947
        %v949 = vrot.slane %v944, %v948
        %v955 = vunpack.c.l.b16 %v939
        %v956 = vunpack.c.l.b16 %v940
        %v957 = vunpack.c.l.b16 %v941
        %v958 = vunpack.c.l.b16 %v942
        %v959 = vpack.c.b16 %v956, %v955
        %v960 = vpack.c.b16 %v958, %v957
        %963 = vmatprep.subr.bf16.mxu0 0
        %964 = vmatpush1.bf16.msra.mxu0 0
        %965 = vmatprep.subr.bf16.mxu0 0
        %966 = vmatpush1.bf16.msra.mxu0 0
        %967 = vmatprep.subr.bf16.mxu0 0
        %968 = vmatpush1.bf16.msra.mxu0 0
        %969 = vmatprep.subr.bf16.mxu0 0
        %970 = vmatpush1.bf16.msra.mxu0 0
        %971 = vmatprep.subr.bf16.mxu0 0
        %972 = vmatpush1.bf16.msra.mxu0 0
        %973 = vmatprep.subr.bf16.mxu0 0
        %974 = vmatpush1.bf16.msra.mxu0 0
        %975 = vmatprep.subr.bf16.mxu0 0
        %976 = vmatpush1.bf16.msra.mxu0 %v960
        %977 = vmatprep.subr.bf16.mxu0 0
        %978 = vmatpush1.bf16.msra.mxu0 %v959
        %979 = vmatprep.subr.bf16.mxu0 0
        %980 = vmatpush2.bf16.msra.mxu0 0
        %981 = vmatprep.subr.bf16.mxu0 0
        %982 = vmatpush2.bf16.msra.mxu0 0
        %983 = vmatprep.subr.bf16.mxu0 0
        %984 = vmatpush2.bf16.msra.mxu0 0
        %985 = vmatprep.subr.bf16.mxu0 0
        %986 = vmatpush2.bf16.msra.mxu0 0
        %987 = vmatprep.subr.bf16.mxu0 0
        %988 = vmatpush2.bf16.msra.mxu0 0
        %989 = vmatprep.subr.bf16.mxu0 0
        %990 = vmatpush2.bf16.msra.mxu0 0
        %991 = vmatprep.subr.bf16.mxu0 0
        %992 = vmatpush2.bf16.msra.mxu0 0
        %993 = vmatprep.subr.bf16.mxu0 0
        %994 = vmatpush2.bf16.msra.mxu0 0
        %995 = vmatprep.mubr.bf16.mxu0 0
        %996 = vmatmul.mubr.bf16.gmra.mxu0 %v488
        %v997 = vpop.f32.mrf.mxu0
        %v998 = vadd.f32 %v949, %v997
        %v999 = vpop.f32.mrf.mxu0
        %v1000 = vpop.f32.mrf.mxu0
        %v1001 = vpop.f32.mrf.mxu0
        %1002 = vdwg.mxu0
        %v1003 = vpack.c.bf16 %v998, %v998
        %s1004 = scalar_lea.vmem [#allocation3], 12
        %1005 = vst.msk [vmem:[%s1004] sm:$0xf] %vm531, %v1003
      $region72: #{transformer_classifier_forward.13} parent=67 // pred_fallthru
        _
      %v1006 = vld [vmem:[%s445] sm:$0xf]
      %v1007 = vld [vmem:[%s2] sm:$0xf]
      %v1008 = vld [vmem:[%s2 + $0x4] sm:$0xf]
      %v1009 = vld [vmem:[%s2 + $0x8] sm:$0xf]
      %v1010 = vld [vmem:[%s2 + $0xc] sm:$0xf]
      %v1011 = vld [vmem:[%s3] sm:$0x1]
      %v1013 = vlaneseq
      %v1014 = vshrl.u32 %v1013, 7
      %v1015 = vsub.s32 0, %v1014
      %v1016 = vrot.slane %v1011, %v1015
      %v1022 = vunpack.c.l.b16 %v1007
      %v1023 = vunpack.c.l.b16 %v1008
      %v1024 = vunpack.c.l.b16 %v1009
      %v1025 = vunpack.c.l.b16 %v1010
      %v1026 = vpack.c.b16 %v1023, %v1022
      %v1027 = vpack.c.b16 %v1025, %v1024
      %vm1030 = vcmask 261120
      %v1032 = vsel %vm1030, %v1006, 0
      %1034 = vmatprep.subr.bf16.mxu0 0
      %1035 = vmatpush1.bf16.msra.mxu0 0
      %1036 = vmatprep.subr.bf16.mxu0 0
      %1037 = vmatpush1.bf16.msra.mxu0 0
      %1038 = vmatprep.subr.bf16.mxu0 0
      %1039 = vmatpush1.bf16.msra.mxu0 0
      %1040 = vmatprep.subr.bf16.mxu0 0
      %1041 = vmatpush1.bf16.msra.mxu0 0
      %1042 = vmatprep.subr.bf16.mxu0 0
      %1043 = vmatpush1.bf16.msra.mxu0 0
      %1044 = vmatprep.subr.bf16.mxu0 0
      %1045 = vmatpush1.bf16.msra.mxu0 0
      %1046 = vmatprep.subr.bf16.mxu0 0
      %1047 = vmatpush1.bf16.msra.mxu0 %v1027
      %1048 = vmatprep.subr.bf16.mxu0 0
      %1049 = vmatpush1.bf16.msra.mxu0 %v1026
      %1050 = vmatprep.subr.bf16.mxu0 0
      %1051 = vmatpush2.bf16.msra.mxu0 0
      %1052 = vmatprep.subr.bf16.mxu0 0
      %1053 = vmatpush2.bf16.msra.mxu0 0
      %1054 = vmatprep.subr.bf16.mxu0 0
      %1055 = vmatpush2.bf16.msra.mxu0 0
      %1056 = vmatprep.subr.bf16.mxu0 0
      %1057 = vmatpush2.bf16.msra.mxu0 0
      %1058 = vmatprep.subr.bf16.mxu0 0
      %1059 = vmatpush2.bf16.msra.mxu0 0
      %1060 = vmatprep.subr.bf16.mxu0 0
      %1061 = vmatpush2.bf16.msra.mxu0 0
      %1062 = vmatprep.subr.bf16.mxu0 0
      %1063 = vmatpush2.bf16.msra.mxu0 0
      %1064 = vmatprep.subr.bf16.mxu0 0
      %1065 = vmatpush2.bf16.msra.mxu0 0
      %1066 = vmatprep.mubr.bf16.mxu0 0
      %1067 = vmatmul.mubr.bf16.gmra.mxu0 %v1032
      %v1068 = vpop.f32.mrf.mxu0
      %v1069 = vadd.f32 %v1016, %v1068
      %v1070 = vpop.f32.mrf.mxu0
      %v1071 = vpop.f32.mrf.mxu0
      %v1072 = vpop.f32.mrf.mxu0
      %1073 = vdwg.mxu0
      %v1074 = vpack.c.bf16 %v1069, %v1069
      %v1075 = vld [vmem:[#allocation2] sm:$0xf]
      %vm1076 = vcmask 64512
      %v1078 = vsel %vm1076, %v1074, 0
      %v1081 = vsel %vm1076, %v1075, 0
      %1083 = vmatprep.subr.bf16.mxu0 0
      %1084 = vmatpush1.bf16.xpose.msra.mxu0 0
      %1085 = vmatprep.subr.bf16.mxu0 0
      %1086 = vmatpush1.bf16.xpose.msra.mxu0 0
      %1087 = vmatprep.subr.bf16.mxu0 0
      %1088 = vmatpush1.bf16.xpose.msra.mxu0 0
      %1089 = vmatprep.subr.bf16.mxu0 0
      %1090 = vmatpush1.bf16.xpose.msra.mxu0 0
      %1091 = vmatprep.subr.bf16.mxu0 0
      %1092 = vmatpush1.bf16.xpose.msra.mxu0 0
      %1093 = vmatprep.subr.bf16.mxu0 0
      %1094 = vmatpush1.bf16.xpose.msra.mxu0 0
      %1095 = vmatprep.subr.bf16.mxu0 0
      %1096 = vmatpush1.bf16.xpose.msra.mxu0 0
      %1097 = vmatprep.subr.bf16.mxu0 0
      %1098 = vmatpush1.bf16.xpose.msra.mxu0 %v1081
      %1099 = vmatprep.subr.bf16.mxu0 0
      %1100 = vmatpush2.bf16.xpose.msra.mxu0 0
      %1101 = vmatprep.subr.bf16.mxu0 0
      %1102 = vmatpush2.bf16.xpose.msra.mxu0 0
      %1103 = vmatprep.subr.bf16.mxu0 0
      %1104 = vmatpush2.bf16.xpose.msra.mxu0 0
      %1105 = vmatprep.subr.bf16.mxu0 0
      %1106 = vmatpush2.bf16.xpose.msra.mxu0 0
      %1107 = vmatprep.subr.bf16.mxu0 0
      %1108 = vmatpush2.bf16.xpose.msra.mxu0 0
      %1109 = vmatprep.subr.bf16.mxu0 0
      %1110 = vmatpush2.bf16.xpose.msra.mxu0 0
      %1111 = vmatprep.subr.bf16.mxu0 0
      %1112 = vmatpush2.bf16.xpose.msra.mxu0 0
      %1113 = vmatprep.subr.bf16.mxu0 0
      %1114 = vmatpush2.bf16.xpose.msra.mxu0 0
      %1115 = vmatprep.mubr.bf16.mxu0 0
      %1116 = vmatmul.mubr.bf16.gmra.mxu0 %v1078
      %v1117 = vpop.f32.mrf.mxu0
      %v1118 = vadd.f32 0.0, %v1117
      %v1119 = vpop.f32.mrf.mxu0
      %v1120 = vpop.f32.mrf.mxu0
      %v1121 = vpop.f32.mrf.mxu0
      %1122 = vdwg.mxu0
      %v1123 = vsel %vm1076, %v1118, -inf
      %1124 = vmax.xlane.f32.xlu0 %v1123
      %v1125 = vpop.xlane.xlu0 %1124
      %v1126 = vsub.f32 %v1118, %v1125
      %v1127 = vmul.f32 %v1126, 1.442695
      %v1128 = vpow.pop %v1127
      %v1129 = vsel %vm1076, %v1128, 0.0
      %1130 = vadd.xlane.f32.xlu0 %v1129
      %v1131 = vpop.xlane.xlu0 %1130
      %v1132 = vrcp.pop %v1131
      %v1133 = vmul.f32 %v1128, %v1132
      %v1134 = vpack.c.bf16 %v1133, %v1133
      %v1135 = vld [vmem:[#allocation3] sm:$0xf]
      %v1137 = vsel %vm1076, %v1134, 0
      %vm1139 = vcmask 1043456
      %v1141 = vsel %vm1139, %v1135, 0
      %1143 = vmatprep.subr.bf16.mxu0 0
      %1144 = vmatpush1.bf16.msra.mxu0 0
      %1145 = vmatprep.subr.bf16.mxu0 0
      %1146 = vmatpush1.bf16.msra.mxu0 0
      %1147 = vmatprep.subr.bf16.mxu0 0
      %1148 = vmatpush1.bf16.msra.mxu0 0
      %1149 = vmatprep.subr.bf16.mxu0 0
      %1150 = vmatpush1.bf16.msra.mxu0 0
      %1151 = vmatprep.subr.bf16.mxu0 0
      %1152 = vmatpush1.bf16.msra.mxu0 0
      %1153 = vmatprep.subr.bf16.mxu0 0
      %1154 = vmatpush1.bf16.msra.mxu0 0
      %1155 = vmatprep.subr.bf16.mxu0 0
      %1156 = vmatpush1.bf16.msra.mxu0 0
      %1157 = vmatprep.subr.bf16.mxu0 0
      %1158 = vmatpush1.bf16.msra.mxu0 %v1141
      %1159 = vmatprep.subr.bf16.mxu0 0
      %1160 = vmatpush2.bf16.msra.mxu0 0
      %1161 = vmatprep.subr.bf16.mxu0 0
      %1162 = vmatpush2.bf16.msra.mxu0 0
      %1163 = vmatprep.subr.bf16.mxu0 0
      %1164 = vmatpush2.bf16.msra.mxu0 0
      %1165 = vmatprep.subr.bf16.mxu0 0
      %1166 = vmatpush2.bf16.msra.mxu0 0
      %1167 = vmatprep.subr.bf16.mxu0 0
      %1168 = vmatpush2.bf16.msra.mxu0 0
      %1169 = vmatprep.subr.bf16.mxu0 0
      %1170 = vmatpush2.bf16.msra.mxu0 0
      %1171 = vmatprep.subr.bf16.mxu0 0
      %1172 = vmatpush2.bf16.msra.mxu0 0
      %1173 = vmatprep.subr.bf16.mxu0 0
      %1174 = vmatpush2.bf16.msra.mxu0 0
      %1175 = vmatprep.mubr.bf16.mxu0 0
      %1176 = vmatmul.mubr.bf16.gmra.mxu0 %v1137
      %v1177 = vpop.f32.mrf.mxu0
      %v1178 = vadd.f32 0.0, %v1177
      %v1179 = vpop.f32.mrf.mxu0
      %v1180 = vpop.f32.mrf.mxu0
      %v1181 = vpop.f32.mrf.mxu0
      %1182 = vdwg.mxu0
      %v1183 = vpack.c.bf16 %v1178, %v1178
      %vm1184 = vcmask 60416
      %1185 = vst.msk [vmem:[#allocation4] sm:$0xf] %vm1184, %v1183
      %s1186 = scalar_lea.vmem %s2, 16
      %v1187 = vld [vmem:[%s1186] sm:$0xf]
      %v1188 = vld [vmem:[%s1186 + $0x4] sm:$0xf]
      %v1189 = vld [vmem:[%s1186 + $0x8] sm:$0xf]
      %v1190 = vld [vmem:[%s1186 + $0xc] sm:$0xf]
      %s1191 = scalar_lea.vmem %s3, 1
      %v1192 = vld [vmem:[%s1191] sm:$0x1]
      %v1194 = vlaneseq
      %v1195 = vshrl.u32 %v1194, 7
      %v1196 = vsub.s32 0, %v1195
      %v1197 = vrot.slane %v1192, %v1196
      %v1203 = vunpack.c.l.b16 %v1187
      %v1204 = vunpack.c.l.b16 %v1188
      %v1205 = vunpack.c.l.b16 %v1189
      %v1206 = vunpack.c.l.b16 %v1190
      %v1207 = vpack.c.b16 %v1204, %v1203
      %v1208 = vpack.c.b16 %v1206, %v1205
      %1211 = vmatprep.subr.bf16.mxu0 0
      %1212 = vmatpush1.bf16.msra.mxu0 0
      %1213 = vmatprep.subr.bf16.mxu0 0
      %1214 = vmatpush1.bf16.msra.mxu0 0
      %1215 = vmatprep.subr.bf16.mxu0 0
      %1216 = vmatpush1.bf16.msra.mxu0 0
      %1217 = vmatprep.subr.bf16.mxu0 0
      %1218 = vmatpush1.bf16.msra.mxu0 0
      %1219 = vmatprep.subr.bf16.mxu0 0
      %1220 = vmatpush1.bf16.msra.mxu0 0
      %1221 = vmatprep.subr.bf16.mxu0 0
      %1222 = vmatpush1.bf16.msra.mxu0 0
      %1223 = vmatprep.subr.bf16.mxu0 0
      %1224 = vmatpush1.bf16.msra.mxu0 %v1208
      %1225 = vmatprep.subr.bf16.mxu0 0
      %1226 = vmatpush1.bf16.msra.mxu0 %v1207
      %1227 = vmatprep.subr.bf16.mxu0 0
      %1228 = vmatpush2.bf16.msra.mxu0 0
      %1229 = vmatprep.subr.bf16.mxu0 0
      %1230 = vmatpush2.bf16.msra.mxu0 0
      %1231 = vmatprep.subr.bf16.mxu0 0
      %1232 = vmatpush2.bf16.msra.mxu0 0
      %1233 = vmatprep.subr.bf16.mxu0 0
      %1234 = vmatpush2.bf16.msra.mxu0 0
      %1235 = vmatprep.subr.bf16.mxu0 0
      %1236 = vmatpush2.bf16.msra.mxu0 0
      %1237 = vmatprep.subr.bf16.mxu0 0
      %1238 = vmatpush2.bf16.msra.mxu0 0
      %1239 = vmatprep.subr.bf16.mxu0 0
      %1240 = vmatpush2.bf16.msra.mxu0 0
      %1241 = vmatprep.subr.bf16.mxu0 0
      %1242 = vmatpush2.bf16.msra.mxu0 0
      %1243 = vmatprep.mubr.bf16.mxu0 0
      %1244 = vmatmul.mubr.bf16.gmra.mxu0 %v1032
      %v1245 = vpop.f32.mrf.mxu0
      %v1246 = vadd.f32 %v1197, %v1245
      %v1247 = vpop.f32.mrf.mxu0
      %v1248 = vpop.f32.mrf.mxu0
      %v1249 = vpop.f32.mrf.mxu0
      %1250 = vdwg.mxu0
      %v1251 = vpack.c.bf16 %v1246, %v1246
      %s1252 = scalar_lea.vmem [#allocation2], 4
      %v1253 = vld [vmem:[%s1252] sm:$0xf]
      %v1255 = vsel %vm1076, %v1251, 0
      %v1258 = vsel %vm1076, %v1253, 0
      %1260 = vmatprep.subr.bf16.mxu0 0
      %1261 = vmatpush1.bf16.xpose.msra.mxu0 0
      %1262 = vmatprep.subr.bf16.mxu0 0
      %1263 = vmatpush1.bf16.xpose.msra.mxu0 0
      %1264 = vmatprep.subr.bf16.mxu0 0
      %1265 = vmatpush1.bf16.xpose.msra.mxu0 0
      %1266 = vmatprep.subr.bf16.mxu0 0
      %1267 = vmatpush1.bf16.xpose.msra.mxu0 0
      %1268 = vmatprep.subr.bf16.mxu0 0
      %1269 = vmatpush1.bf16.xpose.msra.mxu0 0
      %1270 = vmatprep.subr.bf16.mxu0 0
      %1271 = vmatpush1.bf16.xpose.msra.mxu0 0
      %1272 = vmatprep.subr.bf16.mxu0 0
      %1273 = vmatpush1.bf16.xpose.msra.mxu0 0
      %1274 = vmatprep.subr.bf16.mxu0 0
      %1275 = vmatpush1.bf16.xpose.msra.mxu0 %v1258
      %1276 = vmatprep.subr.bf16.mxu0 0
      %1277 = vmatpush2.bf16.xpose.msra.mxu0 0
      %1278 = vmatprep.subr.bf16.mxu0 0
      %1279 = vmatpush2.bf16.xpose.msra.mxu0 0
      %1280 = vmatprep.subr.bf16.mxu0 0
      %1281 = vmatpush2.bf16.xpose.msra.mxu0 0
      %1282 = vmatprep.subr.bf16.mxu0 0
      %1283 = vmatpush2.bf16.xpose.msra.mxu0 0
      %1284 = vmatprep.subr.bf16.mxu0 0
      %1285 = vmatpush2.bf16.xpose.msra.mxu0 0
      %1286 = vmatprep.subr.bf16.mxu0 0
      %1287 = vmatpush2.bf16.xpose.msra.mxu0 0
      %1288 = vmatprep.subr.bf16.mxu0 0
      %1289 = vmatpush2.bf16.xpose.msra.mxu0 0
      %1290 = vmatprep.subr.bf16.mxu0 0
      %1291 = vmatpush2.bf16.xpose.msra.mxu0 0
      %1292 = vmatprep.mubr.bf16.mxu0 0
      %1293 = vmatmul.mubr.bf16.gmra.mxu0 %v1255
      %v1294 = vpop.f32.mrf.mxu0
      %v1295 = vadd.f32 0.0, %v1294
      %v1296 = vpop.f32.mrf.mxu0
      %v1297 = vpop.f32.mrf.mxu0
      %v1298 = vpop.f32.mrf.mxu0
      %1299 = vdwg.mxu0
      %v1300 = vsel %vm1076, %v1295, -inf
      %1301 = vmax.xlane.f32.xlu0 %v1300
      %v1302 = vpop.xlane.xlu0 %1301
      %v1303 = vsub.f32 %v1295, %v1302
      %v1304 = vmul.f32 %v1303, 1.442695
      %v1305 = vpow.pop %v1304
      %v1306 = vsel %vm1076, %v1305, 0.0
      %1307 = vadd.xlane.f32.xlu0 %v1306
      %v1308 = vpop.xlane.xlu0 %1307
      %v1309 = vrcp.pop %v1308
      %v1310 = vmul.f32 %v1305, %v1309
      %v1311 = vpack.c.bf16 %v1310, %v1310
      %s1312 = scalar_lea.vmem [#allocation3], 4
      %v1313 = vld [vmem:[%s1312] sm:$0xf]
      %v1315 = vsel %vm1076, %v1311, 0
      %v1318 = vsel %vm1139, %v1313, 0
      %1320 = vmatprep.subr.bf16.mxu0 0
      %1321 = vmatpush1.bf16.msra.mxu0 0
      %1322 = vmatprep.subr.bf16.mxu0 0
      %1323 = vmatpush1.bf16.msra.mxu0 0
      %1324 = vmatprep.subr.bf16.mxu0 0
      %1325 = vmatpush1.bf16.msra.mxu0 0
      %1326 = vmatprep.subr.bf16.mxu0 0
      %1327 = vmatpush1.bf16.msra.mxu0 0
      %1328 = vmatprep.subr.bf16.mxu0 0
      %1329 = vmatpush1.bf16.msra.mxu0 0
      %1330 = vmatprep.subr.bf16.mxu0 0
      %1331 = vmatpush1.bf16.msra.mxu0 0
      %1332 = vmatprep.subr.bf16.mxu0 0
      %1333 = vmatpush1.bf16.msra.mxu0 0
      %1334 = vmatprep.subr.bf16.mxu0 0
      %1335 = vmatpush1.bf16.msra.mxu0 %v1318
      %1336 = vmatprep.subr.bf16.mxu0 0
      %1337 = vmatpush2.bf16.msra.mxu0 0
      %1338 = vmatprep.subr.bf16.mxu0 0
      %1339 = vmatpush2.bf16.msra.mxu0 0
      %1340 = vmatprep.subr.bf16.mxu0 0
      %1341 = vmatpush2.bf16.msra.mxu0 0
      %1342 = vmatprep.subr.bf16.mxu0 0
      %1343 = vmatpush2.bf16.msra.mxu0 0
      %1344 = vmatprep.subr.bf16.mxu0 0
      %1345 = vmatpush2.bf16.msra.mxu0 0
      %1346 = vmatprep.subr.bf16.mxu0 0
      %1347 = vmatpush2.bf16.msra.mxu0 0
      %1348 = vmatprep.subr.bf16.mxu0 0
      %1349 = vmatpush2.bf16.msra.mxu0 0
      %1350 = vmatprep.subr.bf16.mxu0 0
      %1351 = vmatpush2.bf16.msra.mxu0 0
      %1352 = vmatprep.mubr.bf16.mxu0 0
      %1353 = vmatmul.mubr.bf16.gmra.mxu0 %v1315
      %v1354 = vpop.f32.mrf.mxu0
      %v1355 = vadd.f32 0.0, %v1354
      %v1356 = vpop.f32.mrf.mxu0
      %v1357 = vpop.f32.mrf.mxu0
      %v1358 = vpop.f32.mrf.mxu0
      %1359 = vdwg.mxu0
      %v1360 = vpack.c.bf16 %v1355, %v1355
      %v1362 = vunpack.c.l.b16 %v1360
      %v1363 = vpack.c.b16 %v1362, %v1362
      %1364 = vrot.lane.b32.xlu0 %v1363, 8
      %v1365 = vpop.permute.xlu0 %1364
      %vm1367 = vcmask 126016
      %1368 = vst.msk [vmem:[#allocation4] sm:$0xf] %vm1367, %v1365
      %s1369 = scalar_lea.vmem %s2, 32
      %v1370 = vld [vmem:[%s1369] sm:$0xf]
      %v1371 = vld [vmem:[%s1369 + $0x4] sm:$0xf]
      %v1372 = vld [vmem:[%s1369 + $0x8] sm:$0xf]
      %v1373 = vld [vmem:[%s1369 + $0xc] sm:$0xf]
      %s1374 = scalar_lea.vmem %s3, 2
      %v1375 = vld [vmem:[%s1374] sm:$0x1]
      %v1377 = vlaneseq
      %v1378 = vshrl.u32 %v1377, 7
      %v1379 = vsub.s32 0, %v1378
      %v1380 = vrot.slane %v1375, %v1379
      %v1386 = vunpack.c.l.b16 %v1370
      %v1387 = vunpack.c.l.b16 %v1371
      %v1388 = vunpack.c.l.b16 %v1372
      %v1389 = vunpack.c.l.b16 %v1373
      %v1390 = vpack.c.b16 %v1387, %v1386
      %v1391 = vpack.c.b16 %v1389, %v1388
      %1394 = vmatprep.subr.bf16.mxu0 0
      %1395 = vmatpush1.bf16.msra.mxu0 0
      %1396 = vmatprep.subr.bf16.mxu0 0
      %1397 = vmatpush1.bf16.msra.mxu0 0
      %1398 = vmatprep.subr.bf16.mxu0 0
      %1399 = vmatpush1.bf16.msra.mxu0 0
      %1400 = vmatprep.subr.bf16.mxu0 0
      %1401 = vmatpush1.bf16.msra.mxu0 0
      %1402 = vmatprep.subr.bf16.mxu0 0
      %1403 = vmatpush1.bf16.msra.mxu0 0
      %1404 = vmatprep.subr.bf16.mxu0 0
      %1405 = vmatpush1.bf16.msra.mxu0 0
      %1406 = vmatprep.subr.bf16.mxu0 0
      %1407 = vmatpush1.bf16.msra.mxu0 %v1391
      %1408 = vmatprep.subr.bf16.mxu0 0
      %1409 = vmatpush1.bf16.msra.mxu0 %v1390
      %1410 = vmatprep.subr.bf16.mxu0 0
      %1411 = vmatpush2.bf16.msra.mxu0 0
      %1412 = vmatprep.subr.bf16.mxu0 0
      %1413 = vmatpush2.bf16.msra.mxu0 0
      %1414 = vmatprep.subr.bf16.mxu0 0
      %1415 = vmatpush2.bf16.msra.mxu0 0
      %1416 = vmatprep.subr.bf16.mxu0 0
      %1417 = vmatpush2.bf16.msra.mxu0 0
      %1418 = vmatprep.subr.bf16.mxu0 0
      %1419 = vmatpush2.bf16.msra.mxu0 0
      %1420 = vmatprep.subr.bf16.mxu0 0
      %1421 = vmatpush2.bf16.msra.mxu0 0
      %1422 = vmatprep.subr.bf16.mxu0 0
      %1423 = vmatpush2.bf16.msra.mxu0 0
      %1424 = vmatprep.subr.bf16.mxu0 0
      %1425 = vmatpush2.bf16.msra.mxu0 0
      %1426 = vmatprep.mubr.bf16.mxu0 0
      %1427 = vmatmul.mubr.bf16.gmra.mxu0 %v1032
      %v1428 = vpop.f32.mrf.mxu0
      %v1429 = vadd.f32 %v1380, %v1428
      %v1430 = vpop.f32.mrf.mxu0
      %v1431 = vpop.f32.mrf.mxu0
      %v1432 = vpop.f32.mrf.mxu0
      %1433 = vdwg.mxu0
      %v1434 = vpack.c.bf16 %v1429, %v1429
      %s1435 = scalar_lea.vmem [#allocation2], 8
      %v1436 = vld [vmem:[%s1435] sm:$0xf]
      %v1438 = vsel %vm1076, %v1434, 0
      %v1441 = vsel %vm1076, %v1436, 0
      %1443 = vmatprep.subr.bf16.mxu0 0
      %1444 = vmatpush1.bf16.xpose.msra.mxu0 0
      %1445 = vmatprep.subr.bf16.mxu0 0
      %1446 = vmatpush1.bf16.xpose.msra.mxu0 0
      %1447 = vmatprep.subr.bf16.mxu0 0
      %1448 = vmatpush1.bf16.xpose.msra.mxu0 0
      %1449 = vmatprep.subr.bf16.mxu0 0
      %1450 = vmatpush1.bf16.xpose.msra.mxu0 0
      %1451 = vmatprep.subr.bf16.mxu0 0
      %1452 = vmatpush1.bf16.xpose.msra.mxu0 0
      %1453 = vmatprep.subr.bf16.mxu0 0
      %1454 = vmatpush1.bf16.xpose.msra.mxu0 0
      %1455 = vmatprep.subr.bf16.mxu0 0
      %1456 = vmatpush1.bf16.xpose.msra.mxu0 0
      %1457 = vmatprep.subr.bf16.mxu0 0
      %1458 = vmatpush1.bf16.xpose.msra.mxu0 %v1441
      %1459 = vmatprep.subr.bf16.mxu0 0
      %1460 = vmatpush2.bf16.xpose.msra.mxu0 0
      %1461 = vmatprep.subr.bf16.mxu0 0
      %1462 = vmatpush2.bf16.xpose.msra.mxu0 0
      %1463 = vmatprep.subr.bf16.mxu0 0
      %1464 = vmatpush2.bf16.xpose.msra.mxu0 0
      %1465 = vmatprep.subr.bf16.mxu0 0
      %1466 = vmatpush2.bf16.xpose.msra.mxu0 0
      %1467 = vmatprep.subr.bf16.mxu0 0
      %1468 = vmatpush2.bf16.xpose.msra.mxu0 0
      %1469 = vmatprep.subr.bf16.mxu0 0
      %1470 = vmatpush2.bf16.xpose.msra.mxu0 0
      %1471 = vmatprep.subr.bf16.mxu0 0
      %1472 = vmatpush2.bf16.xpose.msra.mxu0 0
      %1473 = vmatprep.subr.bf16.mxu0 0
      %1474 = vmatpush2.bf16.xpose.msra.mxu0 0
      %1475 = vmatprep.mubr.bf16.mxu0 0
      %1476 = vmatmul.mubr.bf16.gmra.mxu0 %v1438
      %v1477 = vpop.f32.mrf.mxu0
      %v1478 = vadd.f32 0.0, %v1477
      %v1479 = vpop.f32.mrf.mxu0
      %v1480 = vpop.f32.mrf.mxu0
      %v1481 = vpop.f32.mrf.mxu0
      %1482 = vdwg.mxu0
      %v1483 = vsel %vm1076, %v1478, -inf
      %1484 = vmax.xlane.f32.xlu0 %v1483
      %v1485 = vpop.xlane.xlu0 %1484
      %v1486 = vsub.f32 %v1478, %v1485
      %v1487 = vmul.f32 %v1486, 1.442695
      %v1488 = vpow.pop %v1487
      %v1489 = vsel %vm1076, %v1488, 0.0
      %1490 = vadd.xlane.f32.xlu0 %v1489
      %v1491 = vpop.xlane.xlu0 %1490
      %v1492 = vrcp.pop %v1491
      %v1493 = vmul.f32 %v1488, %v1492
      %v1494 = vpack.c.bf16 %v1493, %v1493
      %s1495 = scalar_lea.vmem [#allocation3], 8
      %v1496 = vld [vmem:[%s1495] sm:$0xf]
      %v1498 = vsel %vm1076, %v1494, 0
      %v1501 = vsel %vm1139, %v1496, 0
      %1503 = vmatprep.subr.bf16.mxu0 0
      %1504 = vmatpush1.bf16.msra.mxu0 0
      %1505 = vmatprep.subr.bf16.mxu0 0
      %1506 = vmatpush1.bf16.msra.mxu0 0
      %1507 = vmatprep.subr.bf16.mxu0 0
      %1508 = vmatpush1.bf16.msra.mxu0 0
      %1509 = vmatprep.subr.bf16.mxu0 0
      %1510 = vmatpush1.bf16.msra.mxu0 0
      %1511 = vmatprep.subr.bf16.mxu0 0
      %1512 = vmatpush1.bf16.msra.mxu0 0
      %1513 = vmatprep.subr.bf16.mxu0 0
      %1514 = vmatpush1.bf16.msra.mxu0 0
      %1515 = vmatprep.subr.bf16.mxu0 0
      %1516 = vmatpush1.bf16.msra.mxu0 0
      %1517 = vmatprep.subr.bf16.mxu0 0
      %1518 = vmatpush1.bf16.msra.mxu0 %v1501
      %1519 = vmatprep.subr.bf16.mxu0 0
      %1520 = vmatpush2.bf16.msra.mxu0 0
      %1521 = vmatprep.subr.bf16.mxu0 0
      %1522 = vmatpush2.bf16.msra.mxu0 0
      %1523 = vmatprep.subr.bf16.mxu0 0
      %1524 = vmatpush2.bf16.msra.mxu0 0
      %1525 = vmatprep.subr.bf16.mxu0 0
      %1526 = vmatpush2.bf16.msra.mxu0 0
      %1527 = vmatprep.subr.bf16.mxu0 0
      %1528 = vmatpush2.bf16.msra.mxu0 0
      %1529 = vmatprep.subr.bf16.mxu0 0
      %1530 = vmatpush2.bf16.msra.mxu0 0
      %1531 = vmatprep.subr.bf16.mxu0 0
      %1532 = vmatpush2.bf16.msra.mxu0 0
      %1533 = vmatprep.subr.bf16.mxu0 0
      %1534 = vmatpush2.bf16.msra.mxu0 0
      %1535 = vmatprep.mubr.bf16.mxu0 0
      %1536 = vmatmul.mubr.bf16.gmra.mxu0 %v1498
      %v1537 = vpop.f32.mrf.mxu0
      %v1538 = vadd.f32 0.0, %v1537
      %v1539 = vpop.f32.mrf.mxu0
      %v1540 = vpop.f32.mrf.mxu0
      %v1541 = vpop.f32.mrf.mxu0
      %1542 = vdwg.mxu0
      %v1543 = vpack.c.bf16 %v1538, %v1538
      %v1545 = vunpack.c.l.b16 %v1543
      %v1546 = vpack.c.b16 %v1545, %v1545
      %1547 = vrot.lane.b32.xlu0 %v1546, 16
      %v1548 = vpop.permute.xlu0 %1547
      %vm1550 = vcmask 191616
      %1551 = vst.msk [vmem:[#allocation4] sm:$0xf] %vm1550, %v1548
      %s1552 = scalar_lea.vmem %s2, 48
      %v1553 = vld [vmem:[%s1552] sm:$0xf]
      %v1554 = vld [vmem:[%s1552 + $0x4] sm:$0xf]
      %v1555 = vld [vmem:[%s1552 + $0x8] sm:$0xf]
      %v1556 = vld [vmem:[%s1552 + $0xc] sm:$0xf]
      %s1557 = scalar_lea.vmem %s3, 3
      %v1558 = vld [vmem:[%s1557] sm:$0x1]
      %v1560 = vlaneseq
      %v1561 = vshrl.u32 %v1560, 7
      %v1562 = vsub.s32 0, %v1561
      %v1563 = vrot.slane %v1558, %v1562
      %v1569 = vunpack.c.l.b16 %v1553
      %v1570 = vunpack.c.l.b16 %v1554
      %v1571 = vunpack.c.l.b16 %v1555
      %v1572 = vunpack.c.l.b16 %v1556
      %v1573 = vpack.c.b16 %v1570, %v1569
      %v1574 = vpack.c.b16 %v1572, %v1571
      %1577 = vmatprep.subr.bf16.mxu0 0
      %1578 = vmatpush1.bf16.msra.mxu0 0
      %1579 = vmatprep.subr.bf16.mxu0 0
      %1580 = vmatpush1.bf16.msra.mxu0 0
      %1581 = vmatprep.subr.bf16.mxu0 0
      %1582 = vmatpush1.bf16.msra.mxu0 0
      %1583 = vmatprep.subr.bf16.mxu0 0
      %1584 = vmatpush1.bf16.msra.mxu0 0
      %1585 = vmatprep.subr.bf16.mxu0 0
      %1586 = vmatpush1.bf16.msra.mxu0 0
      %1587 = vmatprep.subr.bf16.mxu0 0
      %1588 = vmatpush1.bf16.msra.mxu0 0
      %1589 = vmatprep.subr.bf16.mxu0 0
      %1590 = vmatpush1.bf16.msra.mxu0 %v1574
      %1591 = vmatprep.subr.bf16.mxu0 0
      %1592 = vmatpush1.bf16.msra.mxu0 %v1573
      %1593 = vmatprep.subr.bf16.mxu0 0
      %1594 = vmatpush2.bf16.msra.mxu0 0
      %1595 = vmatprep.subr.bf16.mxu0 0
      %1596 = vmatpush2.bf16.msra.mxu0 0
      %1597 = vmatprep.subr.bf16.mxu0 0
      %1598 = vmatpush2.bf16.msra.mxu0 0
      %1599 = vmatprep.subr.bf16.mxu0 0
      %1600 = vmatpush2.bf16.msra.mxu0 0
      %1601 = vmatprep.subr.bf16.mxu0 0
      %1602 = vmatpush2.bf16.msra.mxu0 0
      %1603 = vmatprep.subr.bf16.mxu0 0
      %1604 = vmatpush2.bf16.msra.mxu0 0
      %1605 = vmatprep.subr.bf16.mxu0 0
      %1606 = vmatpush2.bf16.msra.mxu0 0
      %1607 = vmatprep.subr.bf16.mxu0 0
      %1608 = vmatpush2.bf16.msra.mxu0 0
      %1609 = vmatprep.mubr.bf16.mxu0 0
      %1610 = vmatmul.mubr.bf16.gmra.mxu0 %v1032
      %v1611 = vpop.f32.mrf.mxu0
      %v1612 = vadd.f32 %v1563, %v1611
      %v1613 = vpop.f32.mrf.mxu0
      %v1614 = vpop.f32.mrf.mxu0
      %v1615 = vpop.f32.mrf.mxu0
      %1616 = vdwg.mxu0
      %v1617 = vpack.c.bf16 %v1612, %v1612
      %s1618 = scalar_lea.vmem [#allocation2], 12
      %v1619 = vld [vmem:[%s1618] sm:$0xf]
      %v1621 = vsel %vm1076, %v1617, 0
      %v1624 = vsel %vm1076, %v1619, 0
      %1626 = vmatprep.subr.bf16.mxu0 0
      %1627 = vmatpush1.bf16.xpose.msra.mxu0 0
      %1628 = vmatprep.subr.bf16.mxu0 0
      %1629 = vmatpush1.bf16.xpose.msra.mxu0 0
      %1630 = vmatprep.subr.bf16.mxu0 0
      %1631 = vmatpush1.bf16.xpose.msra.mxu0 0
      %1632 = vmatprep.subr.bf16.mxu0 0
      %1633 = vmatpush1.bf16.xpose.msra.mxu0 0
      %1634 = vmatprep.subr.bf16.mxu0 0
      %1635 = vmatpush1.bf16.xpose.msra.mxu0 0
      %1636 = vmatprep.subr.bf16.mxu0 0
      %1637 = vmatpush1.bf16.xpose.msra.mxu0 0
      %1638 = vmatprep.subr.bf16.mxu0 0
      %1639 = vmatpush1.bf16.xpose.msra.mxu0 0
      %1640 = vmatprep.subr.bf16.mxu0 0
      %1641 = vmatpush1.bf16.xpose.msra.mxu0 %v1624
      %1642 = vmatprep.subr.bf16.mxu0 0
      %1643 = vmatpush2.bf16.xpose.msra.mxu0 0
      %1644 = vmatprep.subr.bf16.mxu0 0
      %1645 = vmatpush2.bf16.xpose.msra.mxu0 0
      %1646 = vmatprep.subr.bf16.mxu0 0
      %1647 = vmatpush2.bf16.xpose.msra.mxu0 0
      %1648 = vmatprep.subr.bf16.mxu0 0
      %1649 = vmatpush2.bf16.xpose.msra.mxu0 0
      %1650 = vmatprep.subr.bf16.mxu0 0
      %1651 = vmatpush2.bf16.xpose.msra.mxu0 0
      %1652 = vmatprep.subr.bf16.mxu0 0
      %1653 = vmatpush2.bf16.xpose.msra.mxu0 0
      %1654 = vmatprep.subr.bf16.mxu0 0
      %1655 = vmatpush2.bf16.xpose.msra.mxu0 0
      %1656 = vmatprep.subr.bf16.mxu0 0
      %1657 = vmatpush2.bf16.xpose.msra.mxu0 0
      %1658 = vmatprep.mubr.bf16.mxu0 0
      %1659 = vmatmul.mubr.bf16.gmra.mxu0 %v1621
      %v1660 = vpop.f32.mrf.mxu0
      %v1661 = vadd.f32 0.0, %v1660
      %v1662 = vpop.f32.mrf.mxu0
      %v1663 = vpop.f32.mrf.mxu0
      %v1664 = vpop.f32.mrf.mxu0
      %1665 = vdwg.mxu0
      %v1666 = vsel %vm1076, %v1661, -inf
      %1667 = vmax.xlane.f32.xlu0 %v1666
      %v1668 = vpop.xlane.xlu0 %1667
      %v1669 = vsub.f32 %v1661, %v1668
      %v1670 = vmul.f32 %v1669, 1.442695
      %v1671 = vpow.pop %v1670
      %v1672 = vsel %vm1076, %v1671, 0.0
      %1673 = vadd.xlane.f32.xlu0 %v1672
      %v1674 = vpop.xlane.xlu0 %1673
      %v1675 = vrcp.pop %v1674
      %v1676 = vmul.f32 %v1671, %v1675
      %v1677 = vpack.c.bf16 %v1676, %v1676
      %s1678 = scalar_lea.vmem [#allocation3], 12
      %v1679 = vld [vmem:[%s1678] sm:$0xf]
      %v1681 = vsel %vm1076, %v1677, 0
      %v1684 = vsel %vm1139, %v1679, 0
      %1686 = vmatprep.subr.bf16.mxu0 0
      %1687 = vmatpush1.bf16.msra.mxu0 0
      %1688 = vmatprep.subr.bf16.mxu0 0
      %1689 = vmatpush1.bf16.msra.mxu0 0
      %1690 = vmatprep.subr.bf16.mxu0 0
      %1691 = vmatpush1.bf16.msra.mxu0 0
      %1692 = vmatprep.subr.bf16.mxu0 0
      %1693 = vmatpush1.bf16.msra.mxu0 0
      %1694 = vmatprep.subr.bf16.mxu0 0
      %1695 = vmatpush1.bf16.msra.mxu0 0
      %1696 = vmatprep.subr.bf16.mxu0 0
      %1697 = vmatpush1.bf16.msra.mxu0 0
      %1698 = vmatprep.subr.bf16.mxu0 0
      %1699 = vmatpush1.bf16.msra.mxu0 0
      %1700 = vmatprep.subr.bf16.mxu0 0
      %1701 = vmatpush1.bf16.msra.mxu0 %v1684
      %1702 = vmatprep.subr.bf16.mxu0 0
      %1703 = vmatpush2.bf16.msra.mxu0 0
      %1704 = vmatprep.subr.bf16.mxu0 0
      %1705 = vmatpush2.bf16.msra.mxu0 0
      %1706 = vmatprep.subr.bf16.mxu0 0
      %1707 = vmatpush2.bf16.msra.mxu0 0
      %1708 = vmatprep.subr.bf16.mxu0 0
      %1709 = vmatpush2.bf16.msra.mxu0 0
      %1710 = vmatprep.subr.bf16.mxu0 0
      %1711 = vmatpush2.bf16.msra.mxu0 0
      %1712 = vmatprep.subr.bf16.mxu0 0
      %1713 = vmatpush2.bf16.msra.mxu0 0
      %1714 = vmatprep.subr.bf16.mxu0 0
      %1715 = vmatpush2.bf16.msra.mxu0 0
      %1716 = vmatprep.subr.bf16.mxu0 0
      %1717 = vmatpush2.bf16.msra.mxu0 0
      %1718 = vmatprep.mubr.bf16.mxu0 0
      %1719 = vmatmul.mubr.bf16.gmra.mxu0 %v1681
      %v1720 = vpop.f32.mrf.mxu0
      %v1721 = vadd.f32 0.0, %v1720
      %v1722 = vpop.f32.mrf.mxu0
      %v1723 = vpop.f32.mrf.mxu0
      %v1724 = vpop.f32.mrf.mxu0
      %1725 = vdwg.mxu0
      %v1726 = vpack.c.bf16 %v1721, %v1721
      %v1728 = vunpack.c.l.b16 %v1726
      %v1729 = vpack.c.b16 %v1728, %v1728
      %1730 = vrot.lane.b32.xlu0 %v1729, 24
      %v1731 = vpop.permute.xlu0 %1730
      %vm1733 = vcmask 257216
      %1734 = vst.msk [vmem:[#allocation4] sm:$0xf] %vm1733, %v1731
      %v1735 = vld [vmem:[#allocation4] sm:$0xf]
      %v1736 = vld [vmem:[%s8] sm:$0xf]
      %v1737 = vld [vmem:[%s8 + $0x4] sm:$0xf]
      %v1738 = vld [vmem:[%s8 + $0x8] sm:$0xf]
      %v1739 = vld [vmem:[%s8 + $0xc] sm:$0xf]
      %v1740 = vld [vmem:[%s9] sm:$0x1]
      %v1742 = vlaneseq
      %v1743 = vshrl.u32 %v1742, 7
      %v1744 = vsub.s32 0, %v1743
      %v1745 = vrot.slane %v1740, %v1744
      %v1751 = vunpack.c.l.b16 %v1736
      %v1752 = vunpack.c.l.b16 %v1737
      %v1753 = vunpack.c.l.b16 %v1738
      %v1754 = vunpack.c.l.b16 %v1739
      %v1755 = vpack.c.b16 %v1752, %v1751
      %v1756 = vpack.c.b16 %v1754, %v1753
      %v1760 = vsel %vm1030, %v1735, 0
      %1762 = vmatprep.subr.bf16.mxu0 0
      %1763 = vmatpush1.bf16.msra.mxu0 0
      %1764 = vmatprep.subr.bf16.mxu0 0
      %1765 = vmatpush1.bf16.msra.mxu0 0
      %1766 = vmatprep.subr.bf16.mxu0 0
      %1767 = vmatpush1.bf16.msra.mxu0 0
      %1768 = vmatprep.subr.bf16.mxu0 0
      %1769 = vmatpush1.bf16.msra.mxu0 0
      %1770 = vmatprep.subr.bf16.mxu0 0
      %1771 = vmatpush1.bf16.msra.mxu0 0
      %1772 = vmatprep.subr.bf16.mxu0 0
      %1773 = vmatpush1.bf16.msra.mxu0 0
      %1774 = vmatprep.subr.bf16.mxu0 0
      %1775 = vmatpush1.bf16.msra.mxu0 %v1756
      %1776 = vmatprep.subr.bf16.mxu0 0
      %1777 = vmatpush1.bf16.msra.mxu0 %v1755
      %1778 = vmatprep.subr.bf16.mxu0 0
      %1779 = vmatpush2.bf16.msra.mxu0 0
      %1780 = vmatprep.subr.bf16.mxu0 0
      %1781 = vmatpush2.bf16.msra.mxu0 0
      %1782 = vmatprep.subr.bf16.mxu0 0
      %1783 = vmatpush2.bf16.msra.mxu0 0
      %1784 = vmatprep.subr.bf16.mxu0 0
      %1785 = vmatpush2.bf16.msra.mxu0 0
      %1786 = vmatprep.subr.bf16.mxu0 0
      %1787 = vmatpush2.bf16.msra.mxu0 0
      %1788 = vmatprep.subr.bf16.mxu0 0
      %1789 = vmatpush2.bf16.msra.mxu0 0
      %1790 = vmatprep.subr.bf16.mxu0 0
      %1791 = vmatpush2.bf16.msra.mxu0 0
      %1792 = vmatprep.subr.bf16.mxu0 0
      %1793 = vmatpush2.bf16.msra.mxu0 0
      %1794 = vmatprep.mubr.bf16.mxu0 0
      %1795 = vmatmul.mubr.bf16.gmra.mxu0 %v1760
      %v1796 = vpop.f32.mrf.mxu0
      %v1797 = vadd.f32 %v1745, %v1796
      %v1798 = vpop.f32.mrf.mxu0
      %v1799 = vpop.f32.mrf.mxu0
      %v1800 = vpop.f32.mrf.mxu0
      %1801 = vdwg.mxu0
      %v1802 = vunpack.c.l.bf16 %v1006
      %v1803 = vadd.f32 %v1802, %v1797
      %v1804 = vld [vmem:[%s10] sm:$0x1]
      %v1805 = vld [vmem:[%s11] sm:$0x1]
      %v1806 = vsel %vm1030, %v1803, 0.0
      %1807 = vadd.xlane.f32.xlu0 %v1806
      %v1808 = vpop.xlane.xlu0 %1807
      %v1809 = vrcp.pop 32.0
      %v1810 = vmul.f32 %v1808, %v1809
      %v1811 = vsub.f32 %v1803, %v1810
      %v1812 = vmul.f32 %v1811, %v1811
      %v1813 = vsel %vm1030, %v1812, 0.0
      %1814 = vadd.xlane.f32.xlu0 %v1813
      %v1815 = vpop.xlane.xlu0 %1814
      %v1816 = vmul.f32 %v1815, %v1809
      %v1817 = vadd.f32 %v1816, 1e-05
      %v1818 = vrsqrt.pop %v1817
      %v1819 = vmul.f32 %v1811, %v1818
      %v1821 = vlaneseq
      %v1822 = vshrl.u32 %v1821, 7
      %v1823 = vsub.s32 0, %v1822
      %v1824 = vrot.slane %v1804, %v1823
      %v1826 = vmul.f32 %v1819, %v1824
      %v1828 = vlaneseq
      %v1829 = vshrl.u32 %v1828, 7
      %v1830 = vsub.s32 0, %v1829
      %v1831 = vrot.slane %v1805, %v1830
      %v1833 = vadd.f32 %v1826, %v1831
      %v1834 = vpack.c.bf16 %v1833, %v1833
      %vm1835 = vcmask 257024
      %1836 = vst.msk [vmem:[%s456] sm:$0xf] %vm1835, %v1834
      %p1837 = scmp.lt.s32.totalorder %s27, 1
      %s1838 = scalar_select %p1837, %s27, 1
      %p1839 = scmp.lt.s32.totalorder %s28, 0
      %s1840 = scalar_select %p1839, %s28, 0
      %s1841 = sadd.s32 %s1840, %s1838
      %s1842 = smul.addr %s1841, 4
      %s1843 = scalar_lea.vmem %s12, %s1842
      // Predicated region
      $region73: #{transformer_classifier_forward.13} parent=67 // pred_check
        %p1844 = pneg %p319
      $region74: #{transformer_classifier_forward.13} parent=67 // pred_check_branch
        %1846 = sbr.rel (%p1844) target = $region76
      $region75: #{transformer_classifier_forward.13} parent=67 // pred_region
        _
      $region76: #{transformer_classifier_forward.13} parent=67 // pred_fallthru
        _
    $region68: #{transformer_classifier_forward.13} parent=5 // pred_fallthru
      _
    %p1847 = scmp.le.s32.totalorder 2, %s18
    // Predicated region
    $region77: #{transformer_classifier_forward.13} parent=5 // pred_check
      %p1848 = pneg %p1847
    $region78: #{transformer_classifier_forward.13} parent=5 // pred_check_branch
      %1850 = sbr.rel (%p1848) target = $region80
    $region79: #{transformer_classifier_forward.13} parent=5 // pred_region
      %s1851 = ssub.s32 %s18, 2
      // Predicated region
      $region81: #{transformer_classifier_forward.13} parent=79 // pred_check
        %p1852 = pneg %p325
      $region82: #{transformer_classifier_forward.13} parent=79 // pred_check_branch
        %1854 = sbr.rel (%p1852) target = $region84
      $region83: #{transformer_classifier_forward.13} parent=79 // pred_region
        %p1855 = scmp.lt.s32.totalorder %s29, 1
        %s1856 = scalar_select %p1855, %s29, 1
        %p1857 = scmp.lt.s32.totalorder %s30, 0
        %s1858 = scalar_select %p1857, %s30, 0
        %s1859 = sadd.s32 %s1858, %s1856
        %s1860 = smul.addr %s1859, 4
        %s1861 = scalar_lea.vmem %s12, %s1860
      $region84: #{transformer_classifier_forward.13} parent=79 // pred_fallthru
        _
    $region80: #{transformer_classifier_forward.13} parent=5 // pred_fallthru
      _
  $region6: #{transformer_classifier_forward.13} parent=0 // loop_footer
    %s22 = sadd.s32 1, %s18
  $region7: #{transformer_classifier_forward.13} parent=0 // loop_footer_branch
    %17 = sbr.rel target = $region3
  $region8: #{transformer_classifier_forward.13} parent=0 // loop_exit
    _

</llo_original>
